<compile_context>
chip_gen: v7x
topology: tpu7x:2x2x1
jax: 0.10.0
libtpu: 0.0.40
codegen_flags: <defaults>
</compile_context>

<pallas_src>
import functools

import jax
import jax.numpy as jnp
from jax.experimental import pallas as pl
from jax.experimental.pallas import tpu as pltpu


def _resblock_kernel(x_ref, w1_ref, b1_ref, w2_ref, b2_ref, o_ref,
                     qin_ref, qmid_ref, *, res_scale):
    # x_ref   : (1, H, W, Cp)   input block (lane-dense channels)
    # w*_ref  : (K, K, Cp, Cp)  conv weights, (kh, kw, cin, cout)
    # b*_ref  : (1, Cp)         conv biases
    # o_ref   : (1, H, W, Cp)   output block
    # qin_ref, qmid_ref : (Hp, Wb, Cp) f32 VMEM scratch (padded input / ReLU)
    _, H, W, C = x_ref.shape
    K = w1_ref.shape[0]
    p = K // 2
    Hp = H + 2 * p
    Wb = qin_ref.shape[1]
    lpad = ((p + 7) // 8) * 8        # aligned left zero pad (>= p)
    col0 = lpad - p                  # leftmost tap column (kw == 0)

    # Refresh only the zero border of the scratches (interiors are fully
    # overwritten below).  Done every step so each TensorCore's private
    # scratch is valid even when the parallel batch axis is split.
    zrow = jnp.zeros((p, Wb, C), jnp.float32)
    zleft = jnp.zeros((Hp, lpad, C), jnp.float32)
    zright = jnp.zeros((Hp, Wb - lpad - W, C), jnp.float32)
    for buf in (qin_ref, qmid_ref):
        buf[0:p, :, :] = zrow
        buf[Hp - p:Hp, :, :] = zrow
        buf[:, 0:lpad, :] = zleft
        buf[:, lpad + W:Wb, :] = zright

    # Stage the (unpadded) input into the aligned scratch interior.
    qin_ref[p:p + H, lpad:lpad + W, :] = x_ref[0].astype(jnp.float32)

    def conv_same(src_ref, w_ref, b_ref):
        # "same" conv: one MXU matmul per kernel tap.  The two misaligned
        # column shifts are materialised once and reused for all row taps;
        # the aligned shift (kw == p) is read straight from the scratch ref.
        shifted = {}
        for kw in range(K):
            if kw != p:
                shifted[kw] = src_ref[:, col0 + kw:col0 + kw + W, :]
        acc = None
        for kh in range(K):
            for kw in range(K):
                if kw == p:
                    lhs = src_ref[kh:kh + H, col0 + kw:col0 + kw + W, :]
                else:
                    lhs = shifted[kw][kh:kh + H]
                t = jnp.dot(lhs.reshape(H * W, C), w_ref[kh, kw],
                            preferred_element_type=jnp.float32)
                acc = t if acc is None else acc + t
        return acc + b_ref[...]

    # conv1 -> ReLU, staged (aligned) into the second padded scratch.
    act = jnp.maximum(conv_same(qin_ref, w1_ref, b1_ref), 0.0)
    qmid_ref[p:p + H, lpad:lpad + W, :] = act.reshape(H, W, C)

    # conv2 -> residual: res * res_scale + x  (lane-dense store).
    y = conv_same(qmid_ref, w2_ref, b2_ref)
    res = y.reshape(H, W, C) * res_scale + x_ref[0].astype(jnp.float32)
    o_ref[0] = res.astype(o_ref.dtype)


def resblock_forward(x_nchw, w1, b1, w2, b2, *, res_scale=0.2):
    """x_nchw: (N, C, H, W); w*: (Cout, Cin, K, K) PyTorch layout; b*: (C,)."""
    N, C, H, W = x_nchw.shape
    K = w1.shape[-1]
    p = K // 2
    Hp = H + 2 * p
    lpad = ((p + 7) // 8) * 8                       # aligned left zero pad
    Wb = lpad + ((W + p + 7) // 8) * 8              # >= p zero cols on right

    # Pad channels up to a multiple of 128: dense lane dim + MXU-native
    # contraction.  Zero padding keeps the math exact.
    Cp = max(128, ((C + 127) // 128) * 128)
    pc = Cp - C

    # NCHW -> NHWC (+channel pad);  OIHW -> (KH, KW, Cin, Cout) (+pad).
    x = jnp.transpose(x_nchw, (0, 2, 3, 1))
    x = jnp.pad(x, ((0, 0), (0, 0), (0, 0), (0, pc)))

    def prep_w(w):
        wk = jnp.transpose(w, (2, 3, 1, 0))
        return jnp.pad(wk, ((0, 0), (0, 0), (0, pc), (0, pc)))

    w1k, w2k = prep_w(w1), prep_w(w2)
    b1k = jnp.pad(b1, (0, pc)).reshape(1, Cp)
    b2k = jnp.pad(b2, (0, pc)).reshape(1, Cp)

    kernel = functools.partial(_resblock_kernel, res_scale=res_scale)

    out = pl.pallas_call(
        kernel,
        out_shape=jax.ShapeDtypeStruct((N, H, W, Cp), x_nchw.dtype),
        grid_spec=pltpu.PrefetchScalarGridSpec(
            num_scalar_prefetch=0,
            grid=(N,),  # one grid step per batch image
            in_specs=[
                pl.BlockSpec((1, H, W, Cp), lambda n: (n, 0, 0, 0)),
                pl.BlockSpec((K, K, Cp, Cp), lambda n: (0, 0, 0, 0)),
                pl.BlockSpec((1, Cp), lambda n: (0, 0)),
                pl.BlockSpec((K, K, Cp, Cp), lambda n: (0, 0, 0, 0)),
                pl.BlockSpec((1, Cp), lambda n: (0, 0)),
            ],
            out_specs=pl.BlockSpec((1, H, W, Cp), lambda n: (n, 0, 0, 0)),
            scratch_shapes=[pltpu.VMEM((Hp, Wb, Cp), jnp.float32),
                            pltpu.VMEM((Hp, Wb, Cp), jnp.float32)],
        ),
        compiler_params=pltpu.CompilerParams(
            dimension_semantics=("parallel",),
            vmem_limit_bytes=32 * 1024 * 1024),
    )(x, w1k, b1k, w2k, b2k)

    # Strip channel padding, back to NCHW.
    return jnp.transpose(out[..., :C], (0, 3, 1, 2))


def _reference_forward(x, w1, b1, w2, b2, res_scale=0.2):
    """Pure-JAX reference matching nn.Conv2d(padding=K//2) semantics."""
    dn = ("NCHW", "OIHW", "NCHW")
    y = jax.lax.conv_general_dilated(x, w1, (1, 1), "SAME",
                                     dimension_numbers=dn)
    y = y + b1[None, :, None, None]
    y = jnp.maximum(y, 0.0)
    y = jax.lax.conv_general_dilated(y, w2, (1, 1), "SAME",
                                     dimension_numbers=dn)
    y = y + b2[None, :, None, None]
    return y * res_scale + x


if __name__ == "__main__":
    # Small shapes consistent with the module: N=2, n_feats=64, 16x16, K=3.
    N, C, H, W, K = 2, 64, 16, 16, 3
    res_scale = 0.2

    key = jax.random.PRNGKey(0)
    kx, kw1, kb1, kw2, kb2 = jax.random.split(key, 5)
    x = jax.random.normal(kx, (N, C, H, W), jnp.float32)
    w1 = jax.random.normal(kw1, (C, C, K, K), jnp.float32) * 0.1
    b1 = jax.random.normal(kb1, (C,), jnp.float32) * 0.1
    w2 = jax.random.normal(kw2, (C, C, K, K), jnp.float32) * 0.1
    b2 = jax.random.normal(kb2, (C,), jnp.float32) * 0.1

    out = resblock_forward(x, w1, b1, w2, b2, res_scale=res_scale)
    out = jax.block_until_ready(out)

    ref = _reference_forward(x, w1, b1, w2, b2, res_scale=res_scale)
    if not jnp.allclose(out, ref, atol=1e-3, rtol=1e-3):
        err = jnp.max(jnp.abs(out - ref))
        raise AssertionError(
            f"Pallas ResBlock output mismatch vs reference (max abs err {err})")

    print("KERNEL_OK")
</pallas_src>

<mosaic_0001>
module attributes {stable_mosaic.version = 11 : i64} {
  func.func @_resblock_kernel(%arg0: i32, %arg1: memref<1x16x16x128xf32, #tpu.memory_space<vmem>>, %arg2: memref<3x3x128x128xf32, #tpu.memory_space<vmem>>, %arg3: memref<1x128xf32, #tpu.memory_space<vmem>>, %arg4: memref<3x3x128x128xf32, #tpu.memory_space<vmem>>, %arg5: memref<1x128xf32, #tpu.memory_space<vmem>>, %arg6: memref<1x16x16x128xf32, #tpu.memory_space<vmem>>, %arg7: memref<18x32x128xf32, #tpu.memory_space<vmem>>, %arg8: memref<18x32x128xf32, #tpu.memory_space<vmem>>) attributes {dimension_semantics = [#tpu.dimension_semantics<parallel>], iteration_bounds = array<i64: 2>, scalar_prefetch = 0 : i64, scratch_operands = 2 : i64, tpu.core_type = #tpu.core_type<tc>, window_params = [{transform_indices = @transform_0, window_bounds = array<i64: 1, 16, 16, 128>}, {pipeline_mode = #tpu.pipeline_mode<synchronous>, transform_indices = @transform_1, window_bounds = array<i64: 3, 3, 128, 128>}, {pipeline_mode = #tpu.pipeline_mode<synchronous>, transform_indices = @transform_2, window_bounds = array<i64: 1, 128>}, {pipeline_mode = #tpu.pipeline_mode<synchronous>, transform_indices = @transform_3, window_bounds = array<i64: 3, 3, 128, 128>}, {pipeline_mode = #tpu.pipeline_mode<synchronous>, transform_indices = @transform_4, window_bounds = array<i64: 1, 128>}, {transform_indices = @transform_5, window_bounds = array<i64: 1, 16, 16, 128>}]} {
    %cst = arith.constant 0.000000e+00 : f32
    %0 = vector.broadcast %cst : f32 to vector<1x32x128xf32>
    %cst_0 = arith.constant 0.000000e+00 : f32
    %1 = vector.broadcast %cst_0 : f32 to vector<18x8x128xf32>
    %cst_1 = arith.constant 0.000000e+00 : f32
    %2 = vector.broadcast %cst_1 : f32 to vector<18x8x128xf32>
    %c0 = arith.constant 0 : index
    %c0_2 = arith.constant 0 : index
    %c0_3 = arith.constant 0 : index
    %3 = vector.load %arg7[%c0, %c0_2, %c0_3] : memref<18x32x128xf32, #tpu.memory_space<vmem>>, vector<1x32x128xf32>
    tpu.vector_store %arg7[%c0, %c0_2, %c0_3], %0 {strides = array<i32>} : memref<18x32x128xf32, #tpu.memory_space<vmem>>, vector<1x32x128xf32>,
    %c17 = arith.constant 17 : index
    %c0_4 = arith.constant 0 : index
    %c0_5 = arith.constant 0 : index
    %4 = vector.load %arg7[%c17, %c0_4, %c0_5] : memref<18x32x128xf32, #tpu.memory_space<vmem>>, vector<1x32x128xf32>
    tpu.vector_store %arg7[%c17, %c0_4, %c0_5], %0 {strides = array<i32>} : memref<18x32x128xf32, #tpu.memory_space<vmem>>, vector<1x32x128xf32>,
    %c0_6 = arith.constant 0 : index
    %c0_7 = arith.constant 0 : index
    %c0_8 = arith.constant 0 : index
    %5 = vector.load %arg7[%c0_6, %c0_7, %c0_8] : memref<18x32x128xf32, #tpu.memory_space<vmem>>, vector<18x8x128xf32>
    tpu.vector_store %arg7[%c0_6, %c0_7, %c0_8], %1 {strides = array<i32>} : memref<18x32x128xf32, #tpu.memory_space<vmem>>, vector<18x8x128xf32>,
    %c0_9 = arith.constant 0 : index
    %c24 = arith.constant 24 : index
    %c0_10 = arith.constant 0 : index
    %6 = vector.load %arg7[%c0_9, %c24, %c0_10] : memref<18x32x128xf32, #tpu.memory_space<vmem>>, vector<18x8x128xf32>
    tpu.vector_store %arg7[%c0_9, %c24, %c0_10], %2 {strides = array<i32>} : memref<18x32x128xf32, #tpu.memory_space<vmem>>, vector<18x8x128xf32>,
    %c0_11 = arith.constant 0 : index
    %c0_12 = arith.constant 0 : index
    %c0_13 = arith.constant 0 : index
    %7 = vector.load %arg8[%c0_11, %c0_12, %c0_13] : memref<18x32x128xf32, #tpu.memory_space<vmem>>, vector<1x32x128xf32>
    tpu.vector_store %arg8[%c0_11, %c0_12, %c0_13], %0 {strides = array<i32>} : memref<18x32x128xf32, #tpu.memory_space<vmem>>, vector<1x32x128xf32>,
    %c17_14 = arith.constant 17 : index
    %c0_15 = arith.constant 0 : index
    %c0_16 = arith.constant 0 : index
    %8 = vector.load %arg8[%c17_14, %c0_15, %c0_16] : memref<18x32x128xf32, #tpu.memory_space<vmem>>, vector<1x32x128xf32>
    tpu.vector_store %arg8[%c17_14, %c0_15, %c0_16], %0 {strides = array<i32>} : memref<18x32x128xf32, #tpu.memory_space<vmem>>, vector<1x32x128xf32>,
    %c0_17 = arith.constant 0 : index
    %c0_18 = arith.constant 0 : index
    %c0_19 = arith.constant 0 : index
    %9 = vector.load %arg8[%c0_17, %c0_18, %c0_19] : memref<18x32x128xf32, #tpu.memory_space<vmem>>, vector<18x8x128xf32>
    tpu.vector_store %arg8[%c0_17, %c0_18, %c0_19], %1 {strides = array<i32>} : memref<18x32x128xf32, #tpu.memory_space<vmem>>, vector<18x8x128xf32>,
    %c0_20 = arith.constant 0 : index
    %c24_21 = arith.constant 24 : index
    %c0_22 = arith.constant 0 : index
    %10 = vector.load %arg8[%c0_20, %c24_21, %c0_22] : memref<18x32x128xf32, #tpu.memory_space<vmem>>, vector<18x8x128xf32>
    tpu.vector_store %arg8[%c0_20, %c24_21, %c0_22], %2 {strides = array<i32>} : memref<18x32x128xf32, #tpu.memory_space<vmem>>, vector<18x8x128xf32>,
    %c0_23 = arith.constant 0 : index
    %c0_24 = arith.constant 0 : index
    %c0_25 = arith.constant 0 : index
    %c0_26 = arith.constant 0 : index
    %11 = vector.load %arg1[%c0_23, %c0_24, %c0_25, %c0_26] : memref<1x16x16x128xf32, #tpu.memory_space<vmem>>, vector<1x16x16x128xf32>
    %12 = vector.shape_cast %11 : vector<1x16x16x128xf32> to vector<16x16x128xf32>
    %c1 = arith.constant 1 : index
    %c8 = arith.constant 8 : index
    %c0_27 = arith.constant 0 : index
    %13 = vector.load %arg7[%c1, %c8, %c0_27] : memref<18x32x128xf32, #tpu.memory_space<vmem>>, vector<16x16x128xf32>
    tpu.vector_store %arg7[%c1, %c8, %c0_27], %12 {strides = array<i32>} : memref<18x32x128xf32, #tpu.memory_space<vmem>>, vector<16x16x128xf32>,
    %c0_28 = arith.constant 0 : index
    %c7 = arith.constant 7 : index
    %c0_29 = arith.constant 0 : index
    %14 = vector.load %arg7[%c0_28, %c7, %c0_29] : memref<18x32x128xf32, #tpu.memory_space<vmem>>, vector<18x16x128xf32>
    %c0_30 = arith.constant 0 : index
    %c9 = arith.constant 9 : index
    %c0_31 = arith.constant 0 : index
    %15 = vector.load %arg7[%c0_30, %c9, %c0_31] : memref<18x32x128xf32, #tpu.memory_space<vmem>>, vector<18x16x128xf32>
    %16 = vector.extract_strided_slice %14 {offsets = [0, 0, 0], sizes = [16, 16, 128], strides = [1, 1, 1]} : vector<18x16x128xf32> to vector<16x16x128xf32>
    %17 = vector.shape_cast %16 : vector<16x16x128xf32> to vector<256x128xf32>
    %c0_32 = arith.constant 0 : index
    %c0_33 = arith.constant 0 : index
    %c0_34 = arith.constant 0 : index
    %c0_35 = arith.constant 0 : index
    %18 = vector.load %arg2[%c0_32, %c0_33, %c0_34, %c0_35] : memref<3x3x128x128xf32, #tpu.memory_space<vmem>>, vector<1x1x128x128xf32>
    %19 = vector.shape_cast %18 : vector<1x1x128x128xf32> to vector<128x128xf32>
    %cst_36 = arith.constant dense<0.000000e+00> : vector<256x128xf32>
    %20 = tpu.matmul %17, %19, %cst_36 {dimension_numbers = #tpu.dot_dimension_numbers<[1], [0], [0], [1], [0, 0, 1, 1], [], []>} : vector<256x128xf32>, vector<128x128xf32>, vector<256x128xf32> -> vector<256x128xf32>
    %c0_37 = arith.constant 0 : index
    %c8_38 = arith.constant 8 : index
    %c0_39 = arith.constant 0 : index
    %21 = vector.load %arg7[%c0_37, %c8_38, %c0_39] : memref<18x32x128xf32, #tpu.memory_space<vmem>>, vector<16x16x128xf32>
    %22 = vector.shape_cast %21 : vector<16x16x128xf32> to vector<256x128xf32>
    %c0_40 = arith.constant 0 : index
    %c1_41 = arith.constant 1 : index
    %c0_42 = arith.constant 0 : index
    %c0_43 = arith.constant 0 : index
    %23 = vector.load %arg2[%c0_40, %c1_41, %c0_42, %c0_43] : memref<3x3x128x128xf32, #tpu.memory_space<vmem>>, vector<1x1x128x128xf32>
    %24 = vector.shape_cast %23 : vector<1x1x128x128xf32> to vector<128x128xf32>
    %cst_44 = arith.constant dense<0.000000e+00> : vector<256x128xf32>
    %25 = tpu.matmul %22, %24, %cst_44 {dimension_numbers = #tpu.dot_dimension_numbers<[1], [0], [0], [1], [0, 0, 1, 1], [], []>} : vector<256x128xf32>, vector<128x128xf32>, vector<256x128xf32> -> vector<256x128xf32>
    %26 = arith.addf %20, %25 : vector<256x128xf32>
    %27 = vector.extract_strided_slice %15 {offsets = [0, 0, 0], sizes = [16, 16, 128], strides = [1, 1, 1]} : vector<18x16x128xf32> to vector<16x16x128xf32>
    %28 = vector.shape_cast %27 : vector<16x16x128xf32> to vector<256x128xf32>
    %c0_45 = arith.constant 0 : index
    %c2 = arith.constant 2 : index
    %c0_46 = arith.constant 0 : index
    %c0_47 = arith.constant 0 : index
    %29 = vector.load %arg2[%c0_45, %c2, %c0_46, %c0_47] : memref<3x3x128x128xf32, #tpu.memory_space<vmem>>, vector<1x1x128x128xf32>
    %30 = vector.shape_cast %29 : vector<1x1x128x128xf32> to vector<128x128xf32>
    %cst_48 = arith.constant dense<0.000000e+00> : vector<256x128xf32>
    %31 = tpu.matmul %28, %30, %cst_48 {dimension_numbers = #tpu.dot_dimension_numbers<[1], [0], [0], [1], [0, 0, 1, 1], [], []>} : vector<256x128xf32>, vector<128x128xf32>, vector<256x128xf32> -> vector<256x128xf32>
    %32 = arith.addf %26, %31 : vector<256x128xf32>
    %33 = vector.extract_strided_slice %14 {offsets = [1, 0, 0], sizes = [16, 16, 128], strides = [1, 1, 1]} : vector<18x16x128xf32> to vector<16x16x128xf32>
    %34 = vector.shape_cast %33 : vector<16x16x128xf32> to vector<256x128xf32>
    %c1_49 = arith.constant 1 : index
    %c0_50 = arith.constant 0 : index
    %c0_51 = arith.constant 0 : index
    %c0_52 = arith.constant 0 : index
    %35 = vector.load %arg2[%c1_49, %c0_50, %c0_51, %c0_52] : memref<3x3x128x128xf32, #tpu.memory_space<vmem>>, vector<1x1x128x128xf32>
    %36 = vector.shape_cast %35 : vector<1x1x128x128xf32> to vector<128x128xf32>
    %cst_53 = arith.constant dense<0.000000e+00> : vector<256x128xf32>
    %37 = tpu.matmul %34, %36, %cst_53 {dimension_numbers = #tpu.dot_dimension_numbers<[1], [0], [0], [1], [0, 0, 1, 1], [], []>} : vector<256x128xf32>, vector<128x128xf32>, vector<256x128xf32> -> vector<256x128xf32>
    %38 = arith.addf %32, %37 : vector<256x128xf32>
    %c1_54 = arith.constant 1 : index
    %c8_55 = arith.constant 8 : index
    %c0_56 = arith.constant 0 : index
    %39 = vector.load %arg7[%c1_54, %c8_55, %c0_56] : memref<18x32x128xf32, #tpu.memory_space<vmem>>, vector<16x16x128xf32>
    %40 = vector.shape_cast %39 : vector<16x16x128xf32> to vector<256x128xf32>
    %c1_57 = arith.constant 1 : index
    %c1_58 = arith.constant 1 : index
    %c0_59 = arith.constant 0 : index
    %c0_60 = arith.constant 0 : index
    %41 = vector.load %arg2[%c1_57, %c1_58, %c0_59, %c0_60] : memref<3x3x128x128xf32, #tpu.memory_space<vmem>>, vector<1x1x128x128xf32>
    %42 = vector.shape_cast %41 : vector<1x1x128x128xf32> to vector<128x128xf32>
    %cst_61 = arith.constant dense<0.000000e+00> : vector<256x128xf32>
    %43 = tpu.matmul %40, %42, %cst_61 {dimension_numbers = #tpu.dot_dimension_numbers<[1], [0], [0], [1], [0, 0, 1, 1], [], []>} : vector<256x128xf32>, vector<128x128xf32>, vector<256x128xf32> -> vector<256x128xf32>
    %44 = arith.addf %38, %43 : vector<256x128xf32>
    %45 = vector.extract_strided_slice %15 {offsets = [1, 0, 0], sizes = [16, 16, 128], strides = [1, 1, 1]} : vector<18x16x128xf32> to vector<16x16x128xf32>
    %46 = vector.shape_cast %45 : vector<16x16x128xf32> to vector<256x128xf32>
    %c1_62 = arith.constant 1 : index
    %c2_63 = arith.constant 2 : index
    %c0_64 = arith.constant 0 : index
    %c0_65 = arith.constant 0 : index
    %47 = vector.load %arg2[%c1_62, %c2_63, %c0_64, %c0_65] : memref<3x3x128x128xf32, #tpu.memory_space<vmem>>, vector<1x1x128x128xf32>
    %48 = vector.shape_cast %47 : vector<1x1x128x128xf32> to vector<128x128xf32>
    %cst_66 = arith.constant dense<0.000000e+00> : vector<256x128xf32>
    %49 = tpu.matmul %46, %48, %cst_66 {dimension_numbers = #tpu.dot_dimension_numbers<[1], [0], [0], [1], [0, 0, 1, 1], [], []>} : vector<256x128xf32>, vector<128x128xf32>, vector<256x128xf32> -> vector<256x128xf32>
    %50 = arith.addf %44, %49 : vector<256x128xf32>
    %51 = vector.extract_strided_slice %14 {offsets = [2, 0, 0], sizes = [16, 16, 128], strides = [1, 1, 1]} : vector<18x16x128xf32> to vector<16x16x128xf32>
    %52 = vector.shape_cast %51 : vector<16x16x128xf32> to vector<256x128xf32>
    %c2_67 = arith.constant 2 : index
    %c0_68 = arith.constant 0 : index
    %c0_69 = arith.constant 0 : index
    %c0_70 = arith.constant 0 : index
    %53 = vector.load %arg2[%c2_67, %c0_68, %c0_69, %c0_70] : memref<3x3x128x128xf32, #tpu.memory_space<vmem>>, vector<1x1x128x128xf32>
    %54 = vector.shape_cast %53 : vector<1x1x128x128xf32> to vector<128x128xf32>
    %cst_71 = arith.constant dense<0.000000e+00> : vector<256x128xf32>
    %55 = tpu.matmul %52, %54, %cst_71 {dimension_numbers = #tpu.dot_dimension_numbers<[1], [0], [0], [1], [0, 0, 1, 1], [], []>} : vector<256x128xf32>, vector<128x128xf32>, vector<256x128xf32> -> vector<256x128xf32>
    %56 = arith.addf %50, %55 : vector<256x128xf32>
    %c2_72 = arith.constant 2 : index
    %c8_73 = arith.constant 8 : index
    %c0_74 = arith.constant 0 : index
    %57 = vector.load %arg7[%c2_72, %c8_73, %c0_74] : memref<18x32x128xf32, #tpu.memory_space<vmem>>, vector<16x16x128xf32>
    %58 = vector.shape_cast %57 : vector<16x16x128xf32> to vector<256x128xf32>
    %c2_75 = arith.constant 2 : index
    %c1_76 = arith.constant 1 : index
    %c0_77 = arith.constant 0 : index
    %c0_78 = arith.constant 0 : index
    %59 = vector.load %arg2[%c2_75, %c1_76, %c0_77, %c0_78] : memref<3x3x128x128xf32, #tpu.memory_space<vmem>>, vector<1x1x128x128xf32>
    %60 = vector.shape_cast %59 : vector<1x1x128x128xf32> to vector<128x128xf32>
    %cst_79 = arith.constant dense<0.000000e+00> : vector<256x128xf32>
    %61 = tpu.matmul %58, %60, %cst_79 {dimension_numbers = #tpu.dot_dimension_numbers<[1], [0], [0], [1], [0, 0, 1, 1], [], []>} : vector<256x128xf32>, vector<128x128xf32>, vector<256x128xf32> -> vector<256x128xf32>
    %62 = arith.addf %56, %61 : vector<256x128xf32>
    %63 = vector.extract_strided_slice %15 {offsets = [2, 0, 0], sizes = [16, 16, 128], strides = [1, 1, 1]} : vector<18x16x128xf32> to vector<16x16x128xf32>
    %64 = vector.shape_cast %63 : vector<16x16x128xf32> to vector<256x128xf32>
    %c2_80 = arith.constant 2 : index
    %c2_81 = arith.constant 2 : index
    %c0_82 = arith.constant 0 : index
    %c0_83 = arith.constant 0 : index
    %65 = vector.load %arg2[%c2_80, %c2_81, %c0_82, %c0_83] : memref<3x3x128x128xf32, #tpu.memory_space<vmem>>, vector<1x1x128x128xf32>
    %66 = vector.shape_cast %65 : vector<1x1x128x128xf32> to vector<128x128xf32>
    %cst_84 = arith.constant dense<0.000000e+00> : vector<256x128xf32>
    %67 = tpu.matmul %64, %66, %cst_84 {dimension_numbers = #tpu.dot_dimension_numbers<[1], [0], [0], [1], [0, 0, 1, 1], [], []>} : vector<256x128xf32>, vector<128x128xf32>, vector<256x128xf32> -> vector<256x128xf32>
    %68 = arith.addf %62, %67 : vector<256x128xf32>
    %c0_85 = arith.constant 0 : index
    %c0_86 = arith.constant 0 : index
    %69 = vector.load %arg3[%c0_85, %c0_86] : memref<1x128xf32, #tpu.memory_space<vmem>>, vector<1x128xf32>
    %70 = vector.broadcast %69 : vector<1x128xf32> to vector<256x128xf32>
    %71 = arith.addf %68, %70 : vector<256x128xf32>
    %cst_87 = arith.constant 0.000000e+00 : f32
    %72 = vector.broadcast %cst_87 : f32 to vector<256x128xf32>
    %73 = arith.maximumf %71, %72 : vector<256x128xf32>
    %74 = vector.shape_cast %73 : vector<256x128xf32> to vector<16x16x128xf32>
    %c1_88 = arith.constant 1 : index
    %c8_89 = arith.constant 8 : index
    %c0_90 = arith.constant 0 : index
    %75 = vector.load %arg8[%c1_88, %c8_89, %c0_90] : memref<18x32x128xf32, #tpu.memory_space<vmem>>, vector<16x16x128xf32>
    tpu.vector_store %arg8[%c1_88, %c8_89, %c0_90], %74 {strides = array<i32>} : memref<18x32x128xf32, #tpu.memory_space<vmem>>, vector<16x16x128xf32>,
    %c0_91 = arith.constant 0 : index
    %c7_92 = arith.constant 7 : index
    %c0_93 = arith.constant 0 : index
    %76 = vector.load %arg8[%c0_91, %c7_92, %c0_93] : memref<18x32x128xf32, #tpu.memory_space<vmem>>, vector<18x16x128xf32>
    %c0_94 = arith.constant 0 : index
    %c9_95 = arith.constant 9 : index
    %c0_96 = arith.constant 0 : index
    %77 = vector.load %arg8[%c0_94, %c9_95, %c0_96] : memref<18x32x128xf32, #tpu.memory_space<vmem>>, vector<18x16x128xf32>
    %78 = vector.extract_strided_slice %76 {offsets = [0, 0, 0], sizes = [16, 16, 128], strides = [1, 1, 1]} : vector<18x16x128xf32> to vector<16x16x128xf32>
    %79 = vector.shape_cast %78 : vector<16x16x128xf32> to vector<256x128xf32>
    %c0_97 = arith.constant 0 : index
    %c0_98 = arith.constant 0 : index
    %c0_99 = arith.constant 0 : index
    %c0_100 = arith.constant 0 : index
    %80 = vector.load %arg4[%c0_97, %c0_98, %c0_99, %c0_100] : memref<3x3x128x128xf32, #tpu.memory_space<vmem>>, vector<1x1x128x128xf32>
    %81 = vector.shape_cast %80 : vector<1x1x128x128xf32> to vector<128x128xf32>
    %cst_101 = arith.constant dense<0.000000e+00> : vector<256x128xf32>
    %82 = tpu.matmul %79, %81, %cst_101 {dimension_numbers = #tpu.dot_dimension_numbers<[1], [0], [0], [1], [0, 0, 1, 1], [], []>} : vector<256x128xf32>, vector<128x128xf32>, vector<256x128xf32> -> vector<256x128xf32>
    %c0_102 = arith.constant 0 : index
    %c8_103 = arith.constant 8 : index
    %c0_104 = arith.constant 0 : index
    %83 = vector.load %arg8[%c0_102, %c8_103, %c0_104] : memref<18x32x128xf32, #tpu.memory_space<vmem>>, vector<16x16x128xf32>
    %84 = vector.shape_cast %83 : vector<16x16x128xf32> to vector<256x128xf32>
    %c0_105 = arith.constant 0 : index
    %c1_106 = arith.constant 1 : index
    %c0_107 = arith.constant 0 : index
    %c0_108 = arith.constant 0 : index
    %85 = vector.load %arg4[%c0_105, %c1_106, %c0_107, %c0_108] : memref<3x3x128x128xf32, #tpu.memory_space<vmem>>, vector<1x1x128x128xf32>
    %86 = vector.shape_cast %85 : vector<1x1x128x128xf32> to vector<128x128xf32>
    %cst_109 = arith.constant dense<0.000000e+00> : vector<256x128xf32>
    %87 = tpu.matmul %84, %86, %cst_109 {dimension_numbers = #tpu.dot_dimension_numbers<[1], [0], [0], [1], [0, 0, 1, 1], [], []>} : vector<256x128xf32>, vector<128x128xf32>, vector<256x128xf32> -> vector<256x128xf32>
    %88 = arith.addf %82, %87 : vector<256x128xf32>
    %89 = vector.extract_strided_slice %77 {offsets = [0, 0, 0], sizes = [16, 16, 128], strides = [1, 1, 1]} : vector<18x16x128xf32> to vector<16x16x128xf32>
    %90 = vector.shape_cast %89 : vector<16x16x128xf32> to vector<256x128xf32>
    %c0_110 = arith.constant 0 : index
    %c2_111 = arith.constant 2 : index
    %c0_112 = arith.constant 0 : index
    %c0_113 = arith.constant 0 : index
    %91 = vector.load %arg4[%c0_110, %c2_111, %c0_112, %c0_113] : memref<3x3x128x128xf32, #tpu.memory_space<vmem>>, vector<1x1x128x128xf32>
    %92 = vector.shape_cast %91 : vector<1x1x128x128xf32> to vector<128x128xf32>
    %cst_114 = arith.constant dense<0.000000e+00> : vector<256x128xf32>
    %93 = tpu.matmul %90, %92, %cst_114 {dimension_numbers = #tpu.dot_dimension_numbers<[1], [0], [0], [1], [0, 0, 1, 1], [], []>} : vector<256x128xf32>, vector<128x128xf32>, vector<256x128xf32> -> vector<256x128xf32>
    %94 = arith.addf %88, %93 : vector<256x128xf32>
    %95 = vector.extract_strided_slice %76 {offsets = [1, 0, 0], sizes = [16, 16, 128], strides = [1, 1, 1]} : vector<18x16x128xf32> to vector<16x16x128xf32>
    %96 = vector.shape_cast %95 : vector<16x16x128xf32> to vector<256x128xf32>
    %c1_115 = arith.constant 1 : index
    %c0_116 = arith.constant 0 : index
    %c0_117 = arith.constant 0 : index
    %c0_118 = arith.constant 0 : index
    %97 = vector.load %arg4[%c1_115, %c0_116, %c0_117, %c0_118] : memref<3x3x128x128xf32, #tpu.memory_space<vmem>>, vector<1x1x128x128xf32>
    %98 = vector.shape_cast %97 : vector<1x1x128x128xf32> to vector<128x128xf32>
    %cst_119 = arith.constant dense<0.000000e+00> : vector<256x128xf32>
    %99 = tpu.matmul %96, %98, %cst_119 {dimension_numbers = #tpu.dot_dimension_numbers<[1], [0], [0], [1], [0, 0, 1, 1], [], []>} : vector<256x128xf32>, vector<128x128xf32>, vector<256x128xf32> -> vector<256x128xf32>
    %100 = arith.addf %94, %99 : vector<256x128xf32>
    %c1_120 = arith.constant 1 : index
    %c8_121 = arith.constant 8 : index
    %c0_122 = arith.constant 0 : index
    %101 = vector.load %arg8[%c1_120, %c8_121, %c0_122] : memref<18x32x128xf32, #tpu.memory_space<vmem>>, vector<16x16x128xf32>
    %102 = vector.shape_cast %101 : vector<16x16x128xf32> to vector<256x128xf32>
    %c1_123 = arith.constant 1 : index
    %c1_124 = arith.constant 1 : index
    %c0_125 = arith.constant 0 : index
    %c0_126 = arith.constant 0 : index
    %103 = vector.load %arg4[%c1_123, %c1_124, %c0_125, %c0_126] : memref<3x3x128x128xf32, #tpu.memory_space<vmem>>, vector<1x1x128x128xf32>
    %104 = vector.shape_cast %103 : vector<1x1x128x128xf32> to vector<128x128xf32>
    %cst_127 = arith.constant dense<0.000000e+00> : vector<256x128xf32>
    %105 = tpu.matmul %102, %104, %cst_127 {dimension_numbers = #tpu.dot_dimension_numbers<[1], [0], [0], [1], [0, 0, 1, 1], [], []>} : vector<256x128xf32>, vector<128x128xf32>, vector<256x128xf32> -> vector<256x128xf32>
    %106 = arith.addf %100, %105 : vector<256x128xf32>
    %107 = vector.extract_strided_slice %77 {offsets = [1, 0, 0], sizes = [16, 16, 128], strides = [1, 1, 1]} : vector<18x16x128xf32> to vector<16x16x128xf32>
    %108 = vector.shape_cast %107 : vector<16x16x128xf32> to vector<256x128xf32>
    %c1_128 = arith.constant 1 : index
    %c2_129 = arith.constant 2 : index
    %c0_130 = arith.constant 0 : index
    %c0_131 = arith.constant 0 : index
    %109 = vector.load %arg4[%c1_128, %c2_129, %c0_130, %c0_131] : memref<3x3x128x128xf32, #tpu.memory_space<vmem>>, vector<1x1x128x128xf32>
    %110 = vector.shape_cast %109 : vector<1x1x128x128xf32> to vector<128x128xf32>
    %cst_132 = arith.constant dense<0.000000e+00> : vector<256x128xf32>
    %111 = tpu.matmul %108, %110, %cst_132 {dimension_numbers = #tpu.dot_dimension_numbers<[1], [0], [0], [1], [0, 0, 1, 1], [], []>} : vector<256x128xf32>, vector<128x128xf32>, vector<256x128xf32> -> vector<256x128xf32>
    %112 = arith.addf %106, %111 : vector<256x128xf32>
    %113 = vector.extract_strided_slice %76 {offsets = [2, 0, 0], sizes = [16, 16, 128], strides = [1, 1, 1]} : vector<18x16x128xf32> to vector<16x16x128xf32>
    %114 = vector.shape_cast %113 : vector<16x16x128xf32> to vector<256x128xf32>
    %c2_133 = arith.constant 2 : index
    %c0_134 = arith.constant 0 : index
    %c0_135 = arith.constant 0 : index
    %c0_136 = arith.constant 0 : index
    %115 = vector.load %arg4[%c2_133, %c0_134, %c0_135, %c0_136] : memref<3x3x128x128xf32, #tpu.memory_space<vmem>>, vector<1x1x128x128xf32>
    %116 = vector.shape_cast %115 : vector<1x1x128x128xf32> to vector<128x128xf32>
    %cst_137 = arith.constant dense<0.000000e+00> : vector<256x128xf32>
    %117 = tpu.matmul %114, %116, %cst_137 {dimension_numbers = #tpu.dot_dimension_numbers<[1], [0], [0], [1], [0, 0, 1, 1], [], []>} : vector<256x128xf32>, vector<128x128xf32>, vector<256x128xf32> -> vector<256x128xf32>
    %118 = arith.addf %112, %117 : vector<256x128xf32>
    %c2_138 = arith.constant 2 : index
    %c8_139 = arith.constant 8 : index
    %c0_140 = arith.constant 0 : index
    %119 = vector.load %arg8[%c2_138, %c8_139, %c0_140] : memref<18x32x128xf32, #tpu.memory_space<vmem>>, vector<16x16x128xf32>
    %120 = vector.shape_cast %119 : vector<16x16x128xf32> to vector<256x128xf32>
    %c2_141 = arith.constant 2 : index
    %c1_142 = arith.constant 1 : index
    %c0_143 = arith.constant 0 : index
    %c0_144 = arith.constant 0 : index
    %121 = vector.load %arg4[%c2_141, %c1_142, %c0_143, %c0_144] : memref<3x3x128x128xf32, #tpu.memory_space<vmem>>, vector<1x1x128x128xf32>
    %122 = vector.shape_cast %121 : vector<1x1x128x128xf32> to vector<128x128xf32>
    %cst_145 = arith.constant dense<0.000000e+00> : vector<256x128xf32>
    %123 = tpu.matmul %120, %122, %cst_145 {dimension_numbers = #tpu.dot_dimension_numbers<[1], [0], [0], [1], [0, 0, 1, 1], [], []>} : vector<256x128xf32>, vector<128x128xf32>, vector<256x128xf32> -> vector<256x128xf32>
    %124 = arith.addf %118, %123 : vector<256x128xf32>
    %125 = vector.extract_strided_slice %77 {offsets = [2, 0, 0], sizes = [16, 16, 128], strides = [1, 1, 1]} : vector<18x16x128xf32> to vector<16x16x128xf32>
    %126 = vector.shape_cast %125 : vector<16x16x128xf32> to vector<256x128xf32>
    %c2_146 = arith.constant 2 : index
    %c2_147 = arith.constant 2 : index
    %c0_148 = arith.constant 0 : index
    %c0_149 = arith.constant 0 : index
    %127 = vector.load %arg4[%c2_146, %c2_147, %c0_148, %c0_149] : memref<3x3x128x128xf32, #tpu.memory_space<vmem>>, vector<1x1x128x128xf32>
    %128 = vector.shape_cast %127 : vector<1x1x128x128xf32> to vector<128x128xf32>
    %cst_150 = arith.constant dense<0.000000e+00> : vector<256x128xf32>
    %129 = tpu.matmul %126, %128, %cst_150 {dimension_numbers = #tpu.dot_dimension_numbers<[1], [0], [0], [1], [0, 0, 1, 1], [], []>} : vector<256x128xf32>, vector<128x128xf32>, vector<256x128xf32> -> vector<256x128xf32>
    %130 = arith.addf %124, %129 : vector<256x128xf32>
    %c0_151 = arith.constant 0 : index
    %c0_152 = arith.constant 0 : index
    %131 = vector.load %arg5[%c0_151, %c0_152] : memref<1x128xf32, #tpu.memory_space<vmem>>, vector<1x128xf32>
    %132 = vector.broadcast %131 : vector<1x128xf32> to vector<256x128xf32>
    %133 = arith.addf %130, %132 : vector<256x128xf32>
    %134 = vector.shape_cast %133 : vector<256x128xf32> to vector<16x16x128xf32>
    %cst_153 = arith.constant 2.000000e-01 : f32
    %135 = vector.broadcast %cst_153 : f32 to vector<16x16x128xf32>
    %136 = arith.mulf %134, %135 : vector<16x16x128xf32>
    %c0_154 = arith.constant 0 : index
    %c0_155 = arith.constant 0 : index
    %c0_156 = arith.constant 0 : index
    %c0_157 = arith.constant 0 : index
    %137 = vector.load %arg1[%c0_154, %c0_155, %c0_156, %c0_157] : memref<1x16x16x128xf32, #tpu.memory_space<vmem>>, vector<1x16x16x128xf32>
    %138 = vector.shape_cast %137 : vector<1x16x16x128xf32> to vector<16x16x128xf32>
    %139 = arith.addf %136, %138 : vector<16x16x128xf32>
    %c0_158 = arith.constant 0 : index
    %c0_159 = arith.constant 0 : index
    %c0_160 = arith.constant 0 : index
    %c0_161 = arith.constant 0 : index
    %140 = vector.load %arg6[%c0_158, %c0_159, %c0_160, %c0_161] : memref<1x16x16x128xf32, #tpu.memory_space<vmem>>, vector<1x16x16x128xf32>
    %141 = vector.shape_cast %140 : vector<1x16x16x128xf32> to vector<16x16x128xf32>
    %142 = vector.shape_cast %139 : vector<16x16x128xf32> to vector<1x16x16x128xf32>
    tpu.vector_store %arg6[%c0_158, %c0_159, %c0_160, %c0_161], %142 {strides = array<i32>} : memref<1x16x16x128xf32, #tpu.memory_space<vmem>>, vector<1x16x16x128xf32>,
    return
  }
  func.func @transform_0(%arg0: i32) -> (i32, i32, i32, i32) {
    %c0_i32 = arith.constant 0 : i32
    %c0_i32_0 = arith.constant 0 : i32
    %c0_i32_1 = arith.constant 0 : i32
    %c0_i32_2 = arith.constant 0 : i32
    return %arg0, %c0_i32, %c0_i32_0, %c0_i32_1 : i32, i32, i32, i32
  }
  func.func @transform_1(%arg0: i32) -> (i32, i32, i32, i32) {
    %c0_i32 = arith.constant 0 : i32
    %c0_i32_0 = arith.constant 0 : i32
    %c0_i32_1 = arith.constant 0 : i32
    %c0_i32_2 = arith.constant 0 : i32
    %c0_i32_3 = arith.constant 0 : i32
    return %c0_i32, %c0_i32_0, %c0_i32_1, %c0_i32_2 : i32, i32, i32, i32
  }
  func.func @transform_2(%arg0: i32) -> (i32, i32) {
    %c0_i32 = arith.constant 0 : i32
    %c0_i32_0 = arith.constant 0 : i32
    %c0_i32_1 = arith.constant 0 : i32
    return %c0_i32, %c0_i32_0 : i32, i32
  }
  func.func @transform_3(%arg0: i32) -> (i32, i32, i32, i32) {
    %c0_i32 = arith.constant 0 : i32
    %c0_i32_0 = arith.constant 0 : i32
    %c0_i32_1 = arith.constant 0 : i32
    %c0_i32_2 = arith.constant 0 : i32
    %c0_i32_3 = arith.constant 0 : i32
    return %c0_i32, %c0_i32_0, %c0_i32_1, %c0_i32_2 : i32, i32, i32, i32
  }
  func.func @transform_4(%arg0: i32) -> (i32, i32) {
    %c0_i32 = arith.constant 0 : i32
    %c0_i32_0 = arith.constant 0 : i32
    %c0_i32_1 = arith.constant 0 : i32
    return %c0_i32, %c0_i32_0 : i32, i32
  }
  func.func @transform_5(%arg0: i32) -> (i32, i32, i32, i32) {
    %c0_i32 = arith.constant 0 : i32
    %c0_i32_0 = arith.constant 0 : i32
    %c0_i32_1 = arith.constant 0 : i32
    %c0_i32_2 = arith.constant 0 : i32
    return %arg0, %c0_i32, %c0_i32_0, %c0_i32_1 : i32, i32, i32, i32
  }
}

</mosaic_0001>

<llo_original>
// kernel: tpu_custom_call.1
$region0: #{tpu_custom_call.1}
  #allocation0 [shape = 'u32[]', space=smem, size = 0x4, offset = 0x4, fixed_abs, tag = 'smem constant byte address 0x4 - core index']
  #allocation1 [shape = 'u32[144,128]{1,0:T(1,128)}', space=vmem, size = 0x12000, scoped, tag = 'internal scratch']
  #allocation2 [shape = 'f32[18,32,128]{2,1,0:T(8,128)}', space=vmem, size = 0x48000, scoped, tag = 'scratch operand']
  #allocation3 [shape = 'f32[18,32,128]{2,1,0:T(8,128)}', space=vmem, size = 0x48000, scoped, tag = 'scratch operand']
  %s0 = inlined_call_operand.hbm [shape: f32[2,16,16,128], index: 0, kind: input, shape index: {}]
  %s1 = inlined_call_operand.hbm [shape: f32[3,3,128,128], index: 1, kind: input, shape index: {}]
  %s2 = inlined_call_operand.vmem [shape: f32[1,128], index: 2, kind: input, shape index: {}]
  %s3 = inlined_call_operand.hbm [shape: f32[3,3,128,128], index: 3, kind: input, shape index: {}]
  %s4 = inlined_call_operand.vmem [shape: f32[1,128], index: 4, kind: input, shape index: {}]
  %s5 = inlined_call_operand.hbm [shape: f32[2,16,16,128], index: 5, kind: output, shape index: {}]
  %s6 = sld [smem:[#allocation0]]
  $region65: #{tpu_custom_call.1} parent=0
    _
  %s8 = ssub.s32 1, %s6
  %s9 = scalar_select 0, %s8, %s6
  $region1: #{tpu_custom_call.1} parent=0
    #allocation4 [shape = 'u8[262144]{0}', space=vmem, size = 0x40000, scoped, tag = 'input window, operand 0']
    #allocation5 [shape = 's32[2]{0}', space=sflag, size = 0x8, scoped, tag = 'scoped memory for tpu_custom_call.1']
    #allocation6 [shape = 's32[2]{0}', space=sflag, size = 0x8, scoped, tag = 'scoped memory for tpu_custom_call.1']
    #allocation7 [shape = 'u8[589824]{0}', space=vmem, size = 0x90000, scoped, tag = 'input window, operand 1, single buffered']
    #allocation8 [shape = 's32[1]{0}', space=sflag, size = 0x4, scoped, tag = 'scoped memory for tpu_custom_call.1']
    #allocation9 [shape = 'u8[589824]{0}', space=vmem, size = 0x90000, scoped, tag = 'input window, operand 3, single buffered']
    #allocation10 [shape = 'u8[262144]{0}', space=vmem, size = 0x40000, scoped, tag = 'output window, operand 0']
    %10 = vsyncpa [#allocation5], 0
    %s11 = scalar_lea.sflag [#allocation5], 1
    %12 = vsyncpa %s11, 0
    %13 = vsyncpa [#allocation8], 0
    %14 = vsyncpa [#allocation6], 0
    %s15 = scalar_lea.sflag [#allocation6], 1
    %16 = vsyncpa %s15, 0
    loop: start=0, step=1, limit=4
    $region2: #{tpu_custom_call.1} parent=1 // loop_pre_header
      _
    $region3: #{tpu_custom_call.1} parent=1 // loop_header
      %s18 = sphi 0, %s22
      %p19 = scmp.ge.s32.totalorder %s18, 4
      %s28 = sphi 0, %s30
      %s31 = sphi 0, %s28
      %s32 = sphi 0, %s31
      %s48 = sphi 0, %s32
      %s52 = sphi 0, %s52
      %s54 = sphi 0, %s52
      %s55 = sphi 0, %s54
      %s69 = sphi 0, %s55
      %s73 = sphi 0, %s73
      %s75 = sphi 0, %s73
      %s76 = sphi 0, %s75
      %s90 = sphi 0, %s76
      %s94 = sphi 0, %s94
      %s96 = sphi 0, %s94
      %s97 = sphi 0, %s96
      %s111 = sphi 0, %s97
      %s115 = sphi 0, %s115
      %s117 = sphi 0, %s115
      %s118 = sphi 0, %s117
      %s132 = sphi 0, %s118
      %s138 = sphi 0, %s140
      %s141 = sphi 0, %s138
      %s142 = sphi 0, %s141
      %s158 = sphi 0, %s142
    $region4: #{tpu_custom_call.1} parent=1 // loop_header_branch
      %21 = sbr.rel (%p19) target = $region8
    $region5: #{tpu_custom_call.1} parent=1 // loop_body
      %s23 = ssub.s32 %s18, 1
      %s24 = ssub.s32 %s18, 2
      %s25 = sadd.s32 %s18, 1
      %s26 = ssub.s32 %s18, %s25
      %p27 = scmp.eq.s32.totalorder %s26, 0
      %s29 = sadd.s32 %s28, 1
      %s30 = scalar_select %p27, %s28, %s29
      %p33 = pneg %p27
      %p34 = scmp.eq.s32.totalorder %s18, 1
      %p35 = por %p33, %p34
      %p36 = scmp.ne.s32.totalorder %s28, %s31
      %p37 = scmp.eq.s32.totalorder %s18, 0
      %p38 = por %p36, %p37
      %p39 = scmp.ne.s32.totalorder %s28, %s31
      %p40 = scmp.eq.s32.totalorder %s23, 1
      %p41 = por %p39, %p40
      %p42 = scmp.ne.s32.totalorder %s31, %s32
      %p43 = scmp.eq.s32.totalorder %s23, 0
      %p44 = por %p42, %p43
      %p45 = scmp.ne.s32.totalorder %s31, %s32
      %p46 = scmp.eq.s32.totalorder %s24, 1
      %p47 = por %p45, %p46
      %p49 = scmp.ne.s32.totalorder %s32, %s48
      %p50 = scmp.eq.s32.totalorder %s24, 0
      %p51 = por %p49, %p50
      %s53 = sadd.s32 %s52, 1
      %p56 = scmp.eq.s32.totalorder %s18, 1
      %p57 = scmp.ne.s32.totalorder %s52, %s54
      %p58 = scmp.eq.s32.totalorder %s18, 0
      %p59 = por %p57, %p58
      %p60 = scmp.ne.s32.totalorder %s52, %s54
      %p61 = scmp.eq.s32.totalorder %s23, 1
      %p62 = por %p60, %p61
      %p63 = scmp.ne.s32.totalorder %s54, %s55
      %p64 = scmp.eq.s32.totalorder %s23, 0
      %p65 = por %p63, %p64
      %p66 = scmp.ne.s32.totalorder %s54, %s55
      %p67 = scmp.eq.s32.totalorder %s24, 1
      %p68 = por %p66, %p67
      %p70 = scmp.ne.s32.totalorder %s55, %s69
      %p71 = scmp.eq.s32.totalorder %s24, 0
      %p72 = por %p70, %p71
      %s74 = sadd.s32 %s73, 1
      %p77 = scmp.eq.s32.totalorder %s18, 1
      %p78 = scmp.ne.s32.totalorder %s73, %s75
      %p79 = scmp.eq.s32.totalorder %s18, 0
      %p80 = por %p78, %p79
      %p81 = scmp.ne.s32.totalorder %s73, %s75
      %p82 = scmp.eq.s32.totalorder %s23, 1
      %p83 = por %p81, %p82
      %p84 = scmp.ne.s32.totalorder %s75, %s76
      %p85 = scmp.eq.s32.totalorder %s23, 0
      %p86 = por %p84, %p85
      %p87 = scmp.ne.s32.totalorder %s75, %s76
      %p88 = scmp.eq.s32.totalorder %s24, 1
      %p89 = por %p87, %p88
      %p91 = scmp.ne.s32.totalorder %s76, %s90
      %p92 = scmp.eq.s32.totalorder %s24, 0
      %p93 = por %p91, %p92
      %s95 = sadd.s32 %s94, 1
      %p98 = scmp.eq.s32.totalorder %s18, 1
      %p99 = scmp.ne.s32.totalorder %s94, %s96
      %p100 = scmp.eq.s32.totalorder %s18, 0
      %p101 = por %p99, %p100
      %p102 = scmp.ne.s32.totalorder %s94, %s96
      %p103 = scmp.eq.s32.totalorder %s23, 1
      %p104 = por %p102, %p103
      %p105 = scmp.ne.s32.totalorder %s96, %s97
      %p106 = scmp.eq.s32.totalorder %s23, 0
      %p107 = por %p105, %p106
      %p108 = scmp.ne.s32.totalorder %s96, %s97
      %p109 = scmp.eq.s32.totalorder %s24, 1
      %p110 = por %p108, %p109
      %p112 = scmp.ne.s32.totalorder %s97, %s111
      %p113 = scmp.eq.s32.totalorder %s24, 0
      %p114 = por %p112, %p113
      %s116 = sadd.s32 %s115, 1
      %p119 = scmp.eq.s32.totalorder %s18, 1
      %p120 = scmp.ne.s32.totalorder %s115, %s117
      %p121 = scmp.eq.s32.totalorder %s18, 0
      %p122 = por %p120, %p121
      %p123 = scmp.ne.s32.totalorder %s115, %s117
      %p124 = scmp.eq.s32.totalorder %s23, 1
      %p125 = por %p123, %p124
      %p126 = scmp.ne.s32.totalorder %s117, %s118
      %p127 = scmp.eq.s32.totalorder %s23, 0
      %p128 = por %p126, %p127
      %p129 = scmp.ne.s32.totalorder %s117, %s118
      %p130 = scmp.eq.s32.totalorder %s24, 1
      %p131 = por %p129, %p130
      %p133 = scmp.ne.s32.totalorder %s118, %s132
      %p134 = scmp.eq.s32.totalorder %s24, 0
      %p135 = por %p133, %p134
      %s136 = ssub.s32 %s18, %s25
      %p137 = scmp.eq.s32.totalorder %s136, 0
      %s139 = sadd.s32 %s138, 1
      %s140 = scalar_select %p137, %s138, %s139
      %p143 = pneg %p137
      %p144 = scmp.eq.s32.totalorder %s18, 1
      %p145 = por %p143, %p144
      %p146 = scmp.ne.s32.totalorder %s138, %s141
      %p147 = scmp.eq.s32.totalorder %s18, 0
      %p148 = por %p146, %p147
      %p149 = scmp.ne.s32.totalorder %s138, %s141
      %p150 = scmp.eq.s32.totalorder %s23, 1
      %p151 = por %p149, %p150
      %p152 = scmp.ne.s32.totalorder %s141, %s142
      %p153 = scmp.eq.s32.totalorder %s23, 0
      %p154 = por %p152, %p153
      %p155 = scmp.ne.s32.totalorder %s141, %s142
      %p156 = scmp.eq.s32.totalorder %s24, 1
      %p157 = por %p155, %p156
      %p159 = scmp.ne.s32.totalorder %s142, %s158
      %p160 = scmp.eq.s32.totalorder %s24, 0
      %p161 = por %p159, %p160
      %p162 = scmp.le.s32.totalorder 1, %s18
      %p163 = scmp.lt.s32.totalorder %s18, 3
      %p164 = pnand %p162, %p163
      %p165 = pneg %p164
      // Predicated region
      $region9: #{tpu_custom_call.1} parent=5 // pred_check
        _
      $region10: #{tpu_custom_call.1} parent=5 // pred_check_branch
        %167 = sbr.rel (%p164) target = $region12
      $region11: #{tpu_custom_call.1} parent=5 // pred_region
        %s168 = ssub.s32 %s18, 1
        // Predicated region
        $region13: #{tpu_custom_call.1} parent=11 // pred_check
          %p169 = pneg %p65
        $region14: #{tpu_custom_call.1} parent=11 // pred_check_branch
          %171 = sbr.rel (%p169) target = $region16
        $region15: #{tpu_custom_call.1} parent=11 // pred_region
          %s173 = ssub.s32 18432, 18432
          %174 = vsyncadd [#allocation8], %s173
          %s175 = sshll.u32 [#allocation7], 4
          %s176 = int_to_ptr.vmem [resolvable:$true] %s175
          %181 = dma.hbm_to_vmem [thread:$0]  %s1, 18432, %s176, [#allocation8], 128, 128, 8
        $region16: #{tpu_custom_call.1} parent=11 // pred_fallthru
          _
        // Predicated region
        $region17: #{tpu_custom_call.1} parent=11 // pred_check
          %p182 = pneg %p86
        $region18: #{tpu_custom_call.1} parent=11 // pred_check_branch
          %184 = sbr.rel (%p182) target = $region20
        $region19: #{tpu_custom_call.1} parent=11 // pred_region
          _
        $region20: #{tpu_custom_call.1} parent=11 // pred_fallthru
          _
        // Predicated region
        $region21: #{tpu_custom_call.1} parent=11 // pred_check
          %p185 = pneg %p107
        $region22: #{tpu_custom_call.1} parent=11 // pred_check_branch
          %187 = sbr.rel (%p185) target = $region24
        $region23: #{tpu_custom_call.1} parent=11 // pred_region
          %s189 = ssub.s32 18432, 18432
          %190 = vsyncadd [#allocation8], %s189
          %s191 = sshll.u32 [#allocation9], 4
          %s192 = int_to_ptr.vmem [resolvable:$true] %s191
          %197 = dma.hbm_to_vmem [thread:$0]  %s3, 18432, %s192, [#allocation8], 128, 128, 8
        $region24: #{tpu_custom_call.1} parent=11 // pred_fallthru
          _
        // Predicated region
        $region25: #{tpu_custom_call.1} parent=11 // pred_check
          %p198 = pneg %p128
        $region26: #{tpu_custom_call.1} parent=11 // pred_check_branch
          %200 = sbr.rel (%p198) target = $region28
        $region27: #{tpu_custom_call.1} parent=11 // pred_region
          _
        $region28: #{tpu_custom_call.1} parent=11 // pred_fallthru
          _
      $region12: #{tpu_custom_call.1} parent=5 // pred_fallthru
        _
      %p201 = scmp.lt.s32.totalorder %s18, 2
      // Predicated region
      $region29: #{tpu_custom_call.1} parent=5 // pred_check
        %p202 = pneg %p201
      $region30: #{tpu_custom_call.1} parent=5 // pred_check_branch
        %204 = sbr.rel (%p202) target = $region32
      $region31: #{tpu_custom_call.1} parent=5 // pred_region
        // Predicated region
        $region33: #{tpu_custom_call.1} parent=31 // pred_check
          %p205 = pneg %p38
        $region34: #{tpu_custom_call.1} parent=31 // pred_check_branch
          %207 = sbr.rel (%p205) target = $region36
        $region35: #{tpu_custom_call.1} parent=31 // pred_region
          %s208 = sand.u32 %s28, 1
          %s209 = scalar_lea.sflag [#allocation5], %s208
          %s210 = sand.u32 %s28, 1
          %s211 = smul.addr %s210, 256
          %s212 = scalar_lea.vmem [#allocation4], %s211
          %s214 = ssub.s32 4096, 4096
          %215 = vsyncadd %s209, %s214
          %s216 = smul.addr %s18, 32
          %s217 = smul.addr %s216, 128
          %s218 = scalar_lea.hbm %s0, %s217
          %s219 = sshll.u32 %s212, 4
          %s220 = int_to_ptr.vmem [resolvable:$true] %s219
          %225 = dma.hbm_to_vmem [thread:$0]  %s218, 4096, %s220, %s209, 128, 128, 8
        $region36: #{tpu_custom_call.1} parent=31 // pred_fallthru
          _
      $region32: #{tpu_custom_call.1} parent=5 // pred_fallthru
        _
      %p226 = scmp.le.s32.totalorder 1, %s18
      %p227 = scmp.lt.s32.totalorder %s18, 3
      %p228 = pnand %p226, %p227
      %p229 = pneg %p228
      // Predicated region
      $region37: #{tpu_custom_call.1} parent=5 // pred_check
        _
      $region38: #{tpu_custom_call.1} parent=5 // pred_check_branch
        %231 = sbr.rel (%p228) target = $region40
      $region39: #{tpu_custom_call.1} parent=5 // pred_region
        %s232 = ssub.s32 %s18, 1
        %s233 = sand.u32 %s31, 1
        %s234 = scalar_lea.sflag [#allocation5], %s233
        %s235 = sand.u32 %s31, 1
        %s236 = smul.addr %s235, 256
        %s237 = scalar_lea.vmem [#allocation4], %s236
        // Predicated region
        $region41: #{tpu_custom_call.1} parent=39 // pred_check
          %p238 = pneg %p44
        $region42: #{tpu_custom_call.1} parent=39 // pred_check_branch
          %240 = sbr.rel (%p238) target = $region44
        $region43: #{tpu_custom_call.1} parent=39 // pred_region
          %241 = dma.done %s234, 4096
        $region44: #{tpu_custom_call.1} parent=39 // pred_fallthru
          _
        // Predicated region
        $region45: #{tpu_custom_call.1} parent=39 // pred_check
          %p242 = pneg %p65
        $region46: #{tpu_custom_call.1} parent=39 // pred_check_branch
          %244 = sbr.rel (%p242) target = $region48
        $region47: #{tpu_custom_call.1} parent=39 // pred_region
          %245 = dma.done [#allocation8], 18432
        $region48: #{tpu_custom_call.1} parent=39 // pred_fallthru
          _
        // Predicated region
        $region49: #{tpu_custom_call.1} parent=39 // pred_check
          %p246 = pneg %p107
        $region50: #{tpu_custom_call.1} parent=39 // pred_check_branch
          %248 = sbr.rel (%p246) target = $region52
        $region51: #{tpu_custom_call.1} parent=39 // pred_region
          %249 = dma.done [#allocation8], 18432
        $region52: #{tpu_custom_call.1} parent=39 // pred_fallthru
          _
        %s250 = sand.u32 %s31, 1
        %s251 = scalar_lea.sflag [#allocation5], %s250
        %s252 = sand.u32 %s31, 1
        %s253 = smul.addr %s252, 256
        %s254 = scalar_lea.vmem [#allocation4], %s253
        %p255 = pneg %p44
        %p256 = pneg %p41
        %p257 = pneg %p65
        %p258 = pneg %p62
        %p259 = pneg %p86
        %p260 = pneg %p83
        %p261 = pneg %p107
        %p262 = pneg %p104
        %p263 = pneg %p128
        %p264 = pneg %p125
        %p265 = pneg %p154
        %p266 = pneg %p151
        %s267 = sand.u32 %s141, 1
        %s268 = scalar_lea.sflag [#allocation6], %s267
        %s269 = sand.u32 %s141, 1
        %s270 = smul.addr %s269, 256
        %s271 = scalar_lea.vmem [#allocation10], %s270
        %272 = vst [vmem:[#allocation2] sm:$0xff] 0.0
        %273 = vst [vmem:[#allocation2 + $0x8] sm:$0xff] 0.0
        %274 = vst [vmem:[#allocation2 + $0x10] sm:$0xff] 0.0
        %275 = vst [vmem:[#allocation2 + $0x18] sm:$0xff] 0.0
        %s276 = scalar_lea.vmem [#allocation2], 544
        %277 = vst [vmem:[%s276] sm:$0xff] 0.0
        %278 = vst [vmem:[%s276 + $0x8] sm:$0xff] 0.0
        %279 = vst [vmem:[%s276 + $0x10] sm:$0xff] 0.0
        %280 = vst [vmem:[%s276 + $0x18] sm:$0xff] 0.0
        %281 = vst [vmem:[#allocation2] sm:$0xff] 0.0
        %282 = vst [vmem:[#allocation2 + $0x20] sm:$0xff] 0.0
        %283 = vst [vmem:[#allocation2 + $0x40] sm:$0xff] 0.0
        %284 = vst [vmem:[#allocation2 + $0x60] sm:$0xff] 0.0
        %285 = vst [vmem:[#allocation2 + $0x80] sm:$0xff] 0.0
        %286 = vst [vmem:[#allocation2 + $0xa0] sm:$0xff] 0.0
        %287 = vst [vmem:[#allocation2 + $0xc0] sm:$0xff] 0.0
        %288 = vst [vmem:[#allocation2 + $0xe0] sm:$0xff] 0.0
        %289 = vst [vmem:[#allocation2 + $0x100] sm:$0xff] 0.0
        %290 = vst [vmem:[#allocation2 + $0x120] sm:$0xff] 0.0
        %291 = vst [vmem:[#allocation2 + $0x140] sm:$0xff] 0.0
        %292 = vst [vmem:[#allocation2 + $0x160] sm:$0xff] 0.0
        %293 = vst [vmem:[#allocation2 + $0x180] sm:$0xff] 0.0
        %294 = vst [vmem:[#allocation2 + $0x1a0] sm:$0xff] 0.0
        %295 = vst [vmem:[#allocation2 + $0x1c0] sm:$0xff] 0.0
        %296 = vst [vmem:[#allocation2 + $0x1e0] sm:$0xff] 0.0
        %297 = vst [vmem:[#allocation2 + $0x200] sm:$0xff] 0.0
        %298 = vst [vmem:[#allocation2 + $0x220] sm:$0xff] 0.0
        %299 = vst [vmem:[#allocation2 + $0x18] sm:$0xff] 0.0
        %300 = vst [vmem:[#allocation2 + $0x38] sm:$0xff] 0.0
        %301 = vst [vmem:[#allocation2 + $0x58] sm:$0xff] 0.0
        %302 = vst [vmem:[#allocation2 + $0x78] sm:$0xff] 0.0
        %303 = vst [vmem:[#allocation2 + $0x98] sm:$0xff] 0.0
        %304 = vst [vmem:[#allocation2 + $0xb8] sm:$0xff] 0.0
        %305 = vst [vmem:[#allocation2 + $0xd8] sm:$0xff] 0.0
        %306 = vst [vmem:[#allocation2 + $0xf8] sm:$0xff] 0.0
        %307 = vst [vmem:[#allocation2 + $0x118] sm:$0xff] 0.0
        %308 = vst [vmem:[#allocation2 + $0x138] sm:$0xff] 0.0
        %309 = vst [vmem:[#allocation2 + $0x158] sm:$0xff] 0.0
        %310 = vst [vmem:[#allocation2 + $0x178] sm:$0xff] 0.0
        %311 = vst [vmem:[#allocation2 + $0x198] sm:$0xff] 0.0
        %312 = vst [vmem:[#allocation2 + $0x1b8] sm:$0xff] 0.0
        %313 = vst [vmem:[#allocation2 + $0x1d8] sm:$0xff] 0.0
        %314 = vst [vmem:[#allocation2 + $0x1f8] sm:$0xff] 0.0
        %315 = vst [vmem:[#allocation2 + $0x218] sm:$0xff] 0.0
        %316 = vst [vmem:[#allocation2 + $0x238] sm:$0xff] 0.0
        %317 = vst [vmem:[#allocation3] sm:$0xff] 0.0
        %318 = vst [vmem:[#allocation3 + $0x8] sm:$0xff] 0.0
        %319 = vst [vmem:[#allocation3 + $0x10] sm:$0xff] 0.0
        %320 = vst [vmem:[#allocation3 + $0x18] sm:$0xff] 0.0
        %s321 = scalar_lea.vmem [#allocation3], 544
        %322 = vst [vmem:[%s321] sm:$0xff] 0.0
        %323 = vst [vmem:[%s321 + $0x8] sm:$0xff] 0.0
        %324 = vst [vmem:[%s321 + $0x10] sm:$0xff] 0.0
        %325 = vst [vmem:[%s321 + $0x18] sm:$0xff] 0.0
        %326 = vst [vmem:[#allocation3] sm:$0xff] 0.0
        %327 = vst [vmem:[#allocation3 + $0x20] sm:$0xff] 0.0
        %328 = vst [vmem:[#allocation3 + $0x40] sm:$0xff] 0.0
        %329 = vst [vmem:[#allocation3 + $0x60] sm:$0xff] 0.0
        %330 = vst [vmem:[#allocation3 + $0x80] sm:$0xff] 0.0
        %331 = vst [vmem:[#allocation3 + $0xa0] sm:$0xff] 0.0
        %332 = vst [vmem:[#allocation3 + $0xc0] sm:$0xff] 0.0
        %333 = vst [vmem:[#allocation3 + $0xe0] sm:$0xff] 0.0
        %334 = vst [vmem:[#allocation3 + $0x100] sm:$0xff] 0.0
        %335 = vst [vmem:[#allocation3 + $0x120] sm:$0xff] 0.0
        %336 = vst [vmem:[#allocation3 + $0x140] sm:$0xff] 0.0
        %337 = vst [vmem:[#allocation3 + $0x160] sm:$0xff] 0.0
        %338 = vst [vmem:[#allocation3 + $0x180] sm:$0xff] 0.0
        %339 = vst [vmem:[#allocation3 + $0x1a0] sm:$0xff] 0.0
        %340 = vst [vmem:[#allocation3 + $0x1c0] sm:$0xff] 0.0
        %341 = vst [vmem:[#allocation3 + $0x1e0] sm:$0xff] 0.0
        %342 = vst [vmem:[#allocation3 + $0x200] sm:$0xff] 0.0
        %343 = vst [vmem:[#allocation3 + $0x220] sm:$0xff] 0.0
        %344 = vst [vmem:[#allocation3 + $0x18] sm:$0xff] 0.0
        %345 = vst [vmem:[#allocation3 + $0x38] sm:$0xff] 0.0
        %346 = vst [vmem:[#allocation3 + $0x58] sm:$0xff] 0.0
        %347 = vst [vmem:[#allocation3 + $0x78] sm:$0xff] 0.0
        %348 = vst [vmem:[#allocation3 + $0x98] sm:$0xff] 0.0
        %349 = vst [vmem:[#allocation3 + $0xb8] sm:$0xff] 0.0
        %350 = vst [vmem:[#allocation3 + $0xd8] sm:$0xff] 0.0
        %351 = vst [vmem:[#allocation3 + $0xf8] sm:$0xff] 0.0
        %352 = vst [vmem:[#allocation3 + $0x118] sm:$0xff] 0.0
        %353 = vst [vmem:[#allocation3 + $0x138] sm:$0xff] 0.0
        %354 = vst [vmem:[#allocation3 + $0x158] sm:$0xff] 0.0
        %355 = vst [vmem:[#allocation3 + $0x178] sm:$0xff] 0.0
        %356 = vst [vmem:[#allocation3 + $0x198] sm:$0xff] 0.0
        %357 = vst [vmem:[#allocation3 + $0x1b8] sm:$0xff] 0.0
        %358 = vst [vmem:[#allocation3 + $0x1d8] sm:$0xff] 0.0
        %359 = vst [vmem:[#allocation3 + $0x1f8] sm:$0xff] 0.0
        %360 = vst [vmem:[#allocation3 + $0x218] sm:$0xff] 0.0
        %361 = vst [vmem:[#allocation3 + $0x238] sm:$0xff] 0.0
        %v362 = vld [vmem:[%s237] sm:$0xff]
        %v363 = vld [vmem:[%s237 + $0x8] sm:$0xff]
        %v364 = vld [vmem:[%s237 + $0x10] sm:$0xff]
        %v365 = vld [vmem:[%s237 + $0x18] sm:$0xff]
        %v366 = vld [vmem:[%s237 + $0x20] sm:$0xff]
        %v367 = vld [vmem:[%s237 + $0x28] sm:$0xff]
        %v368 = vld [vmem:[%s237 + $0x30] sm:$0xff]
        %v369 = vld [vmem:[%s237 + $0x38] sm:$0xff]
        %v370 = vld [vmem:[%s237 + $0x40] sm:$0xff]
        %v371 = vld [vmem:[%s237 + $0x48] sm:$0xff]
        %v372 = vld [vmem:[%s237 + $0x50] sm:$0xff]
        %v373 = vld [vmem:[%s237 + $0x58] sm:$0xff]
        %v374 = vld [vmem:[%s237 + $0x60] sm:$0xff]
        %v375 = vld [vmem:[%s237 + $0x68] sm:$0xff]
        %v376 = vld [vmem:[%s237 + $0x70] sm:$0xff]
        %v377 = vld [vmem:[%s237 + $0x78] sm:$0xff]
        %v378 = vld [vmem:[%s237 + $0x80] sm:$0xff]
        %v379 = vld [vmem:[%s237 + $0x88] sm:$0xff]
        %v380 = vld [vmem:[%s237 + $0x90] sm:$0xff]
        %v381 = vld [vmem:[%s237 + $0x98] sm:$0xff]
        %v382 = vld [vmem:[%s237 + $0xa0] sm:$0xff]
        %v383 = vld [vmem:[%s237 + $0xa8] sm:$0xff]
        %v384 = vld [vmem:[%s237 + $0xb0] sm:$0xff]
        %v385 = vld [vmem:[%s237 + $0xb8] sm:$0xff]
        %v386 = vld [vmem:[%s237 + $0xc0] sm:$0xff]
        %v387 = vld [vmem:[%s237 + $0xc8] sm:$0xff]
        %v388 = vld [vmem:[%s237 + $0xd0] sm:$0xff]
        %v389 = vld [vmem:[%s237 + $0xd8] sm:$0xff]
        %v390 = vld [vmem:[%s237 + $0xe0] sm:$0xff]
        %v391 = vld [vmem:[%s237 + $0xe8] sm:$0xff]
        %v392 = vld [vmem:[%s237 + $0xf0] sm:$0xff]
        %v393 = vld [vmem:[%s237 + $0xf8] sm:$0xff]
        %s394 = scalar_lea.vmem [#allocation2], 32
        %395 = vst [vmem:[%s394 + $0x8] sm:$0xff] %v362
        %396 = vst [vmem:[%s394 + $0x10] sm:$0xff] %v363
        %397 = vst [vmem:[%s394 + $0x28] sm:$0xff] %v364
        %398 = vst [vmem:[%s394 + $0x30] sm:$0xff] %v365
        %399 = vst [vmem:[%s394 + $0x48] sm:$0xff] %v366
        %400 = vst [vmem:[%s394 + $0x50] sm:$0xff] %v367
        %401 = vst [vmem:[%s394 + $0x68] sm:$0xff] %v368
        %402 = vst [vmem:[%s394 + $0x70] sm:$0xff] %v369
        %403 = vst [vmem:[%s394 + $0x88] sm:$0xff] %v370
        %404 = vst [vmem:[%s394 + $0x90] sm:$0xff] %v371
        %405 = vst [vmem:[%s394 + $0xa8] sm:$0xff] %v372
        %406 = vst [vmem:[%s394 + $0xb0] sm:$0xff] %v373
        %407 = vst [vmem:[%s394 + $0xc8] sm:$0xff] %v374
        %408 = vst [vmem:[%s394 + $0xd0] sm:$0xff] %v375
        %409 = vst [vmem:[%s394 + $0xe8] sm:$0xff] %v376
        %410 = vst [vmem:[%s394 + $0xf0] sm:$0xff] %v377
        %411 = vst [vmem:[%s394 + $0x108] sm:$0xff] %v378
        %412 = vst [vmem:[%s394 + $0x110] sm:$0xff] %v379
        %413 = vst [vmem:[%s394 + $0x128] sm:$0xff] %v380
        %414 = vst [vmem:[%s394 + $0x130] sm:$0xff] %v381
        %415 = vst [vmem:[%s394 + $0x148] sm:$0xff] %v382
        %416 = vst [vmem:[%s394 + $0x150] sm:$0xff] %v383
        %417 = vst [vmem:[%s394 + $0x168] sm:$0xff] %v384
        %418 = vst [vmem:[%s394 + $0x170] sm:$0xff] %v385
        %419 = vst [vmem:[%s394 + $0x188] sm:$0xff] %v386
        %420 = vst [vmem:[%s394 + $0x190] sm:$0xff] %v387
        %421 = vst [vmem:[%s394 + $0x1a8] sm:$0xff] %v388
        %422 = vst [vmem:[%s394 + $0x1b0] sm:$0xff] %v389
        %423 = vst [vmem:[%s394 + $0x1c8] sm:$0xff] %v390
        %424 = vst [vmem:[%s394 + $0x1d0] sm:$0xff] %v391
        %425 = vst [vmem:[%s394 + $0x1e8] sm:$0xff] %v392
        %426 = vst [vmem:[%s394 + $0x1f0] sm:$0xff] %v393
        %v427 = vld [vmem:[#allocation2 + $0x7] sm:$0xff]
        %v428 = vld [vmem:[#allocation2 + $0xf] sm:$0xff]
        %v429 = vld [vmem:[#allocation2 + $0x27] sm:$0xff]
        %v430 = vld [vmem:[#allocation2 + $0x2f] sm:$0xff]
        %v431 = vld [vmem:[#allocation2 + $0x47] sm:$0xff]
        %v432 = vld [vmem:[#allocation2 + $0x4f] sm:$0xff]
        %v433 = vld [vmem:[#allocation2 + $0x67] sm:$0xff]
        %v434 = vld [vmem:[#allocation2 + $0x6f] sm:$0xff]
        %v435 = vld [vmem:[#allocation2 + $0x87] sm:$0xff]
        %v436 = vld [vmem:[#allocation2 + $0x8f] sm:$0xff]
        %v437 = vld [vmem:[#allocation2 + $0xa7] sm:$0xff]
        %v438 = vld [vmem:[#allocation2 + $0xaf] sm:$0xff]
        %v439 = vld [vmem:[#allocation2 + $0xc7] sm:$0xff]
        %v440 = vld [vmem:[#allocation2 + $0xcf] sm:$0xff]
        %v441 = vld [vmem:[#allocation2 + $0xe7] sm:$0xff]
        %v442 = vld [vmem:[#allocation2 + $0xef] sm:$0xff]
        %v443 = vld [vmem:[#allocation2 + $0x107] sm:$0xff]
        %v444 = vld [vmem:[#allocation2 + $0x10f] sm:$0xff]
        %v445 = vld [vmem:[#allocation2 + $0x127] sm:$0xff]
        %v446 = vld [vmem:[#allocation2 + $0x12f] sm:$0xff]
        %v447 = vld [vmem:[#allocation2 + $0x147] sm:$0xff]
        %v448 = vld [vmem:[#allocation2 + $0x14f] sm:$0xff]
        %v449 = vld [vmem:[#allocation2 + $0x167] sm:$0xff]
        %v450 = vld [vmem:[#allocation2 + $0x16f] sm:$0xff]
        %v451 = vld [vmem:[#allocation2 + $0x187] sm:$0xff]
        %v452 = vld [vmem:[#allocation2 + $0x18f] sm:$0xff]
        %v453 = vld [vmem:[#allocation2 + $0x1a7] sm:$0xff]
        %v454 = vld [vmem:[#allocation2 + $0x1af] sm:$0xff]
        %v455 = vld [vmem:[#allocation2 + $0x1c7] sm:$0xff]
        %v456 = vld [vmem:[#allocation2 + $0x1cf] sm:$0xff]
        %v457 = vld [vmem:[#allocation2 + $0x1e7] sm:$0xff]
        %v458 = vld [vmem:[#allocation2 + $0x1ef] sm:$0xff]
        %v459 = vld [vmem:[#allocation2 + $0x207] sm:$0xff]
        %v460 = vld [vmem:[#allocation2 + $0x20f] sm:$0xff]
        %v461 = vld [vmem:[#allocation2 + $0x227] sm:$0xff]
        %v462 = vld [vmem:[#allocation2 + $0x22f] sm:$0xff]
        %v463 = vld [vmem:[#allocation2 + $0x9] sm:$0xff]
        %v464 = vld [vmem:[#allocation2 + $0x11] sm:$0xff]
        %v465 = vld [vmem:[#allocation2 + $0x29] sm:$0xff]
        %v466 = vld [vmem:[#allocation2 + $0x31] sm:$0xff]
        %v467 = vld [vmem:[#allocation2 + $0x49] sm:$0xff]
        %v468 = vld [vmem:[#allocation2 + $0x51] sm:$0xff]
        %v469 = vld [vmem:[#allocation2 + $0x69] sm:$0xff]
        %v470 = vld [vmem:[#allocation2 + $0x71] sm:$0xff]
        %v471 = vld [vmem:[#allocation2 + $0x89] sm:$0xff]
        %v472 = vld [vmem:[#allocation2 + $0x91] sm:$0xff]
        %v473 = vld [vmem:[#allocation2 + $0xa9] sm:$0xff]
        %v474 = vld [vmem:[#allocation2 + $0xb1] sm:$0xff]
        %v475 = vld [vmem:[#allocation2 + $0xc9] sm:$0xff]
        %v476 = vld [vmem:[#allocation2 + $0xd1] sm:$0xff]
        %v477 = vld [vmem:[#allocation2 + $0xe9] sm:$0xff]
        %v478 = vld [vmem:[#allocation2 + $0xf1] sm:$0xff]
        %v479 = vld [vmem:[#allocation2 + $0x109] sm:$0xff]
        %v480 = vld [vmem:[#allocation2 + $0x111] sm:$0xff]
        %v481 = vld [vmem:[#allocation2 + $0x129] sm:$0xff]
        %v482 = vld [vmem:[#allocation2 + $0x131] sm:$0xff]
        %v483 = vld [vmem:[#allocation2 + $0x149] sm:$0xff]
        %v484 = vld [vmem:[#allocation2 + $0x151] sm:$0xff]
        %v485 = vld [vmem:[#allocation2 + $0x169] sm:$0xff]
        %v486 = vld [vmem:[#allocation2 + $0x171] sm:$0xff]
        %v487 = vld [vmem:[#allocation2 + $0x189] sm:$0xff]
        %v488 = vld [vmem:[#allocation2 + $0x191] sm:$0xff]
        %v489 = vld [vmem:[#allocation2 + $0x1a9] sm:$0xff]
        %v490 = vld [vmem:[#allocation2 + $0x1b1] sm:$0xff]
        %v491 = vld [vmem:[#allocation2 + $0x1c9] sm:$0xff]
        %v492 = vld [vmem:[#allocation2 + $0x1d1] sm:$0xff]
        %v493 = vld [vmem:[#allocation2 + $0x1e9] sm:$0xff]
        %v494 = vld [vmem:[#allocation2 + $0x1f1] sm:$0xff]
        %v495 = vld [vmem:[#allocation2 + $0x209] sm:$0xff]
        %v496 = vld [vmem:[#allocation2 + $0x211] sm:$0xff]
        %v497 = vld [vmem:[#allocation2 + $0x229] sm:$0xff]
        %v498 = vld [vmem:[#allocation2 + $0x231] sm:$0xff]
        %v499 = vld [vmem:[#allocation7] sm:$0xff]
        %v500 = vld [vmem:[#allocation7 + $0x8] sm:$0xff]
        %v501 = vld [vmem:[#allocation7 + $0x10] sm:$0xff]
        %v502 = vld [vmem:[#allocation7 + $0x18] sm:$0xff]
        %v503 = vld [vmem:[#allocation7 + $0x20] sm:$0xff]
        %v504 = vld [vmem:[#allocation7 + $0x28] sm:$0xff]
        %v505 = vld [vmem:[#allocation7 + $0x30] sm:$0xff]
        %v506 = vld [vmem:[#allocation7 + $0x38] sm:$0xff]
        %v507 = vld [vmem:[#allocation7 + $0x40] sm:$0xff]
        %v508 = vld [vmem:[#allocation7 + $0x48] sm:$0xff]
        %v509 = vld [vmem:[#allocation7 + $0x50] sm:$0xff]
        %v510 = vld [vmem:[#allocation7 + $0x58] sm:$0xff]
        %v511 = vld [vmem:[#allocation7 + $0x60] sm:$0xff]
        %v512 = vld [vmem:[#allocation7 + $0x68] sm:$0xff]
        %v513 = vld [vmem:[#allocation7 + $0x70] sm:$0xff]
        %v514 = vld [vmem:[#allocation7 + $0x78] sm:$0xff]
        %v515 = vld [vmem:[#allocation2 + $0x8] sm:$0xff]
        %v516 = vld [vmem:[#allocation2 + $0x10] sm:$0xff]
        %v517 = vld [vmem:[#allocation2 + $0x28] sm:$0xff]
        %v518 = vld [vmem:[#allocation2 + $0x30] sm:$0xff]
        %v519 = vld [vmem:[#allocation2 + $0x48] sm:$0xff]
        %v520 = vld [vmem:[#allocation2 + $0x50] sm:$0xff]
        %v521 = vld [vmem:[#allocation2 + $0x68] sm:$0xff]
        %v522 = vld [vmem:[#allocation2 + $0x70] sm:$0xff]
        %v523 = vld [vmem:[#allocation2 + $0x88] sm:$0xff]
        %v524 = vld [vmem:[#allocation2 + $0x90] sm:$0xff]
        %v525 = vld [vmem:[#allocation2 + $0xa8] sm:$0xff]
        %v526 = vld [vmem:[#allocation2 + $0xb0] sm:$0xff]
        %v527 = vld [vmem:[#allocation2 + $0xc8] sm:$0xff]
        %v528 = vld [vmem:[#allocation2 + $0xd0] sm:$0xff]
        %v529 = vld [vmem:[#allocation2 + $0xe8] sm:$0xff]
        %v530 = vld [vmem:[#allocation2 + $0xf0] sm:$0xff]
        %v531 = vld [vmem:[#allocation2 + $0x108] sm:$0xff]
        %v532 = vld [vmem:[#allocation2 + $0x110] sm:$0xff]
        %v533 = vld [vmem:[#allocation2 + $0x128] sm:$0xff]
        %v534 = vld [vmem:[#allocation2 + $0x130] sm:$0xff]
        %v535 = vld [vmem:[#allocation2 + $0x148] sm:$0xff]
        %v536 = vld [vmem:[#allocation2 + $0x150] sm:$0xff]
        %v537 = vld [vmem:[#allocation2 + $0x168] sm:$0xff]
        %v538 = vld [vmem:[#allocation2 + $0x170] sm:$0xff]
        %v539 = vld [vmem:[#allocation2 + $0x188] sm:$0xff]
        %v540 = vld [vmem:[#allocation2 + $0x190] sm:$0xff]
        %v541 = vld [vmem:[#allocation2 + $0x1a8] sm:$0xff]
        %v542 = vld [vmem:[#allocation2 + $0x1b0] sm:$0xff]
        %v543 = vld [vmem:[#allocation2 + $0x1c8] sm:$0xff]
        %v544 = vld [vmem:[#allocation2 + $0x1d0] sm:$0xff]
        %v545 = vld [vmem:[#allocation2 + $0x1e8] sm:$0xff]
        %v546 = vld [vmem:[#allocation2 + $0x1f0] sm:$0xff]
        %s547 = scalar_lea.vmem [#allocation7], 128
        %v548 = vld [vmem:[%s547] sm:$0xff]
        %v549 = vld [vmem:[%s547 + $0x8] sm:$0xff]
        %v550 = vld [vmem:[%s547 + $0x10] sm:$0xff]
        %v551 = vld [vmem:[%s547 + $0x18] sm:$0xff]
        %v552 = vld [vmem:[%s547 + $0x20] sm:$0xff]
        %v553 = vld [vmem:[%s547 + $0x28] sm:$0xff]
        %v554 = vld [vmem:[%s547 + $0x30] sm:$0xff]
        %v555 = vld [vmem:[%s547 + $0x38] sm:$0xff]
        %v556 = vld [vmem:[%s547 + $0x40] sm:$0xff]
        %v557 = vld [vmem:[%s547 + $0x48] sm:$0xff]
        %v558 = vld [vmem:[%s547 + $0x50] sm:$0xff]
        %v559 = vld [vmem:[%s547 + $0x58] sm:$0xff]
        %v560 = vld [vmem:[%s547 + $0x60] sm:$0xff]
        %v561 = vld [vmem:[%s547 + $0x68] sm:$0xff]
        %v562 = vld [vmem:[%s547 + $0x70] sm:$0xff]
        %v563 = vld [vmem:[%s547 + $0x78] sm:$0xff]
        %564 = vmatprep.subr.mxu0 0.0
        %565 = vmatpush1.msra.mxu0 %v548
        %566 = vmatprep.subr.mxu0 0.0
        %567 = vmatpush1.msra.mxu0 %v549
        %568 = vmatprep.subr.mxu0 0.0
        %569 = vmatpush1.msra.mxu0 %v550
        %570 = vmatprep.subr.mxu0 0.0
        %571 = vmatpush1.msra.mxu0 %v551
        %572 = vmatprep.subr.mxu0 0.0
        %573 = vmatpush1.msra.mxu0 %v552
        %574 = vmatprep.subr.mxu0 0.0
        %575 = vmatpush1.msra.mxu0 %v553
        %576 = vmatprep.subr.mxu0 0.0
        %577 = vmatpush1.msra.mxu0 %v554
        %578 = vmatprep.subr.mxu0 0.0
        %579 = vmatpush1.msra.mxu0 %v555
        %580 = vmatprep.subr.mxu0 0.0
        %581 = vmatpush1.msra.mxu0 %v556
        %582 = vmatprep.subr.mxu0 0.0
        %583 = vmatpush1.msra.mxu0 %v557
        %584 = vmatprep.subr.mxu0 0.0
        %585 = vmatpush1.msra.mxu0 %v558
        %586 = vmatprep.subr.mxu0 0.0
        %587 = vmatpush1.msra.mxu0 %v559
        %588 = vmatprep.subr.mxu0 0.0
        %589 = vmatpush1.msra.mxu0 %v560
        %590 = vmatprep.subr.mxu0 0.0
        %591 = vmatpush1.msra.mxu0 %v561
        %592 = vmatprep.subr.mxu0 0.0
        %593 = vmatpush1.msra.mxu0 %v562
        %594 = vmatprep.subr.mxu0 0.0
        %595 = vmatpush1.msra.mxu0 %v563
        %596 = vmatprep.subr.mxu0 0.0
        %597 = vmatpush1.msra.mxu0 0.0
        %598 = vmatprep.subr.mxu0 0.0
        %599 = vmatpush1.msra.mxu0 0.0
        %600 = vmatprep.subr.mxu0 0.0
        %601 = vmatpush1.msra.mxu0 0.0
        %602 = vmatprep.subr.mxu0 0.0
        %603 = vmatpush1.msra.mxu0 0.0
        %604 = vmatprep.subr.mxu0 0.0
        %605 = vmatpush1.msra.mxu0 0.0
        %606 = vmatprep.subr.mxu0 0.0
        %607 = vmatpush1.msra.mxu0 0.0
        %608 = vmatprep.subr.mxu0 0.0
        %609 = vmatpush1.msra.mxu0 0.0
        %610 = vmatprep.subr.mxu0 0.0
        %611 = vmatpush1.msra.mxu0 0.0
        %612 = vmatprep.subr.mxu0 0.0
        %613 = vmatpush1.msra.mxu0 0.0
        %614 = vmatprep.subr.mxu0 0.0
        %615 = vmatpush1.msra.mxu0 0.0
        %616 = vmatprep.subr.mxu0 0.0
        %617 = vmatpush1.msra.mxu0 0.0
        %618 = vmatprep.subr.mxu0 0.0
        %619 = vmatpush1.msra.mxu0 0.0
        %620 = vmatprep.subr.mxu0 0.0
        %621 = vmatpush1.msra.mxu0 0.0
        %622 = vmatprep.subr.mxu0 0.0
        %623 = vmatpush1.msra.mxu0 0.0
        %624 = vmatprep.subr.mxu0 0.0
        %625 = vmatpush1.msra.mxu0 0.0
        %626 = vmatprep.subr.mxu0 0.0
        %627 = vmatpush1.msra.mxu0 0.0
        %628 = vmatprep.mubr.f32.mxu0 0.0
        %629 = vmatmul.mubr.f32.gmra.mrb[0].mxu0 %v515
        %v630 = vpop.f32.mrb[0].mxu0
        %v631 = vadd.f32 0.0, %v630
        %v632 = vpop.f32.mrb[0].mxu0
        %633 = vmatprep.mubr.f32.mxu0 0.0
        %634 = vmatmul.mubr.f32.gmra.mrb[0].mxu0 %v516
        %v635 = vpop.f32.mrb[0].mxu0
        %v636 = vadd.f32 0.0, %v635
        %v637 = vpop.f32.mrb[0].mxu0
        %638 = vmatprep.mubr.f32.mxu0 0.0
        %639 = vmatmul.mubr.f32.gmra.mrb[0].mxu0 %v517
        %v640 = vpop.f32.mrb[0].mxu0
        %v641 = vadd.f32 0.0, %v640
        %v642 = vpop.f32.mrb[0].mxu0
        %643 = vmatprep.mubr.f32.mxu0 0.0
        %644 = vmatmul.mubr.f32.gmra.mrb[0].mxu0 %v518
        %v645 = vpop.f32.mrb[0].mxu0
        %v646 = vadd.f32 0.0, %v645
        %v647 = vpop.f32.mrb[0].mxu0
        %648 = vmatprep.mubr.f32.mxu0 0.0
        %649 = vmatmul.mubr.f32.gmra.mrb[0].mxu0 %v519
        %v650 = vpop.f32.mrb[0].mxu0
        %v651 = vadd.f32 0.0, %v650
        %v652 = vpop.f32.mrb[0].mxu0
        %653 = vmatprep.mubr.f32.mxu0 0.0
        %654 = vmatmul.mubr.f32.gmra.mrb[0].mxu0 %v520
        %v655 = vpop.f32.mrb[0].mxu0
        %v656 = vadd.f32 0.0, %v655
        %v657 = vpop.f32.mrb[0].mxu0
        %658 = vmatprep.mubr.f32.mxu0 0.0
        %659 = vmatmul.mubr.f32.gmra.mrb[0].mxu0 %v521
        %v660 = vpop.f32.mrb[0].mxu0
        %v661 = vadd.f32 0.0, %v660
        %v662 = vpop.f32.mrb[0].mxu0
        %663 = vmatprep.mubr.f32.mxu0 0.0
        %664 = vmatmul.mubr.f32.gmra.mrb[0].mxu0 %v522
        %v665 = vpop.f32.mrb[0].mxu0
        %v666 = vadd.f32 0.0, %v665
        %v667 = vpop.f32.mrb[0].mxu0
        %668 = vmatprep.mubr.f32.mxu0 0.0
        %669 = vmatmul.mubr.f32.gmra.mrb[0].mxu0 %v523
        %v670 = vpop.f32.mrb[0].mxu0
        %v671 = vadd.f32 0.0, %v670
        %v672 = vpop.f32.mrb[0].mxu0
        %673 = vmatprep.mubr.f32.mxu0 0.0
        %674 = vmatmul.mubr.f32.gmra.mrb[0].mxu0 %v524
        %v675 = vpop.f32.mrb[0].mxu0
        %v676 = vadd.f32 0.0, %v675
        %v677 = vpop.f32.mrb[0].mxu0
        %678 = vmatprep.mubr.f32.mxu0 0.0
        %679 = vmatmul.mubr.f32.gmra.mrb[0].mxu0 %v525
        %v680 = vpop.f32.mrb[0].mxu0
        %v681 = vadd.f32 0.0, %v680
        %v682 = vpop.f32.mrb[0].mxu0
        %683 = vmatprep.mubr.f32.mxu0 0.0
        %684 = vmatmul.mubr.f32.gmra.mrb[0].mxu0 %v526
        %v685 = vpop.f32.mrb[0].mxu0
        %v686 = vadd.f32 0.0, %v685
        %v687 = vpop.f32.mrb[0].mxu0
        %688 = vmatprep.mubr.f32.mxu0 0.0
        %689 = vmatmul.mubr.f32.gmra.mrb[0].mxu0 %v527
        %v690 = vpop.f32.mrb[0].mxu0
        %v691 = vadd.f32 0.0, %v690
        %v692 = vpop.f32.mrb[0].mxu0
        %693 = vmatprep.mubr.f32.mxu0 0.0
        %694 = vmatmul.mubr.f32.gmra.mrb[0].mxu0 %v528
        %v695 = vpop.f32.mrb[0].mxu0
        %v696 = vadd.f32 0.0, %v695
        %v697 = vpop.f32.mrb[0].mxu0
        %698 = vmatprep.mubr.f32.mxu0 0.0
        %699 = vmatmul.mubr.f32.gmra.mrb[0].mxu0 %v529
        %v700 = vpop.f32.mrb[0].mxu0
        %v701 = vadd.f32 0.0, %v700
        %v702 = vpop.f32.mrb[0].mxu0
        %703 = vmatprep.mubr.f32.mxu0 0.0
        %704 = vmatmul.mubr.f32.gmra.mrb[0].mxu0 %v530
        %v705 = vpop.f32.mrb[0].mxu0
        %v706 = vadd.f32 0.0, %v705
        %v707 = vpop.f32.mrb[0].mxu0
        %708 = vmatprep.mubr.f32.mxu0 0.0
        %709 = vmatmul.mubr.f32.gmra.mrb[0].mxu0 %v531
        %v710 = vpop.f32.mrb[0].mxu0
        %v711 = vadd.f32 0.0, %v710
        %v712 = vpop.f32.mrb[0].mxu0
        %713 = vmatprep.mubr.f32.mxu0 0.0
        %714 = vmatmul.mubr.f32.gmra.mrb[0].mxu0 %v532
        %v715 = vpop.f32.mrb[0].mxu0
        %v716 = vadd.f32 0.0, %v715
        %v717 = vpop.f32.mrb[0].mxu0
        %718 = vmatprep.mubr.f32.mxu0 0.0
        %719 = vmatmul.mubr.f32.gmra.mrb[0].mxu0 %v533
        %v720 = vpop.f32.mrb[0].mxu0
        %v721 = vadd.f32 0.0, %v720
        %v722 = vpop.f32.mrb[0].mxu0
        %723 = vmatprep.mubr.f32.mxu0 0.0
        %724 = vmatmul.mubr.f32.gmra.mrb[0].mxu0 %v534
        %v725 = vpop.f32.mrb[0].mxu0
        %v726 = vadd.f32 0.0, %v725
        %v727 = vpop.f32.mrb[0].mxu0
        %728 = vmatprep.mubr.f32.mxu0 0.0
        %729 = vmatmul.mubr.f32.gmra.mrb[0].mxu0 %v535
        %v730 = vpop.f32.mrb[0].mxu0
        %v731 = vadd.f32 0.0, %v730
        %v732 = vpop.f32.mrb[0].mxu0
        %733 = vmatprep.mubr.f32.mxu0 0.0
        %734 = vmatmul.mubr.f32.gmra.mrb[0].mxu0 %v536
        %v735 = vpop.f32.mrb[0].mxu0
        %v736 = vadd.f32 0.0, %v735
        %v737 = vpop.f32.mrb[0].mxu0
        %738 = vmatprep.mubr.f32.mxu0 0.0
        %739 = vmatmul.mubr.f32.gmra.mrb[0].mxu0 %v537
        %v740 = vpop.f32.mrb[0].mxu0
        %v741 = vadd.f32 0.0, %v740
        %v742 = vpop.f32.mrb[0].mxu0
        %743 = vmatprep.mubr.f32.mxu0 0.0
        %744 = vmatmul.mubr.f32.gmra.mrb[0].mxu0 %v538
        %v745 = vpop.f32.mrb[0].mxu0
        %v746 = vadd.f32 0.0, %v745
        %v747 = vpop.f32.mrb[0].mxu0
        %748 = vmatprep.mubr.f32.mxu0 0.0
        %749 = vmatmul.mubr.f32.gmra.mrb[0].mxu0 %v539
        %v750 = vpop.f32.mrb[0].mxu0
        %v751 = vadd.f32 0.0, %v750
        %v752 = vpop.f32.mrb[0].mxu0
        %753 = vmatprep.mubr.f32.mxu0 0.0
        %754 = vmatmul.mubr.f32.gmra.mrb[0].mxu0 %v540
        %v755 = vpop.f32.mrb[0].mxu0
        %v756 = vadd.f32 0.0, %v755
        %v757 = vpop.f32.mrb[0].mxu0
        %758 = vmatprep.mubr.f32.mxu0 0.0
        %759 = vmatmul.mubr.f32.gmra.mrb[0].mxu0 %v541
        %v760 = vpop.f32.mrb[0].mxu0
        %v761 = vadd.f32 0.0, %v760
        %v762 = vpop.f32.mrb[0].mxu0
        %763 = vmatprep.mubr.f32.mxu0 0.0
        %764 = vmatmul.mubr.f32.gmra.mrb[0].mxu0 %v542
        %v765 = vpop.f32.mrb[0].mxu0
        %v766 = vadd.f32 0.0, %v765
        %v767 = vpop.f32.mrb[0].mxu0
        %768 = vmatprep.mubr.f32.mxu0 0.0
        %769 = vmatmul.mubr.f32.gmra.mrb[0].mxu0 %v543
        %v770 = vpop.f32.mrb[0].mxu0
        %v771 = vadd.f32 0.0, %v770
        %v772 = vpop.f32.mrb[0].mxu0
        %773 = vmatprep.mubr.f32.mxu0 0.0
        %774 = vmatmul.mubr.f32.gmra.mrb[0].mxu0 %v544
        %v775 = vpop.f32.mrb[0].mxu0
        %v776 = vadd.f32 0.0, %v775
        %v777 = vpop.f32.mrb[0].mxu0
        %778 = vmatprep.mubr.f32.mxu0 0.0
        %779 = vmatmul.mubr.f32.gmra.mrb[0].mxu0 %v545
        %v780 = vpop.f32.mrb[0].mxu0
        %v781 = vadd.f32 0.0, %v780
        %v782 = vpop.f32.mrb[0].mxu0
        %783 = vmatprep.mubr.f32.mxu0 0.0
        %784 = vmatmul.mubr.f32.gmra.mrb[0].mxu0 %v546
        %v785 = vpop.f32.mrb[0].mxu0
        %v786 = vadd.f32 0.0, %v785
        %v787 = vpop.f32.mrb[0].mxu0
        %788 = vdwg.mxu0
        %789 = vmatprep.subr.mxu0 0.0
        %790 = vmatpush1.msra.mxu0 %v499
        %791 = vmatprep.subr.mxu0 0.0
        %792 = vmatpush1.msra.mxu0 %v500
        %793 = vmatprep.subr.mxu0 0.0
        %794 = vmatpush1.msra.mxu0 %v501
        %795 = vmatprep.subr.mxu0 0.0
        %796 = vmatpush1.msra.mxu0 %v502
        %797 = vmatprep.subr.mxu0 0.0
        %798 = vmatpush1.msra.mxu0 %v503
        %799 = vmatprep.subr.mxu0 0.0
        %800 = vmatpush1.msra.mxu0 %v504
        %801 = vmatprep.subr.mxu0 0.0
        %802 = vmatpush1.msra.mxu0 %v505
        %803 = vmatprep.subr.mxu0 0.0
        %804 = vmatpush1.msra.mxu0 %v506
        %805 = vmatprep.subr.mxu0 0.0
        %806 = vmatpush1.msra.mxu0 %v507
        %807 = vmatprep.subr.mxu0 0.0
        %808 = vmatpush1.msra.mxu0 %v508
        %809 = vmatprep.subr.mxu0 0.0
        %810 = vmatpush1.msra.mxu0 %v509
        %811 = vmatprep.subr.mxu0 0.0
        %812 = vmatpush1.msra.mxu0 %v510
        %813 = vmatprep.subr.mxu0 0.0
        %814 = vmatpush1.msra.mxu0 %v511
        %815 = vmatprep.subr.mxu0 0.0
        %816 = vmatpush1.msra.mxu0 %v512
        %817 = vmatprep.subr.mxu0 0.0
        %818 = vmatpush1.msra.mxu0 %v513
        %819 = vmatprep.subr.mxu0 0.0
        %820 = vmatpush1.msra.mxu0 %v514
        %821 = vmatprep.subr.mxu0 0.0
        %822 = vmatpush1.msra.mxu0 0.0
        %823 = vmatprep.subr.mxu0 0.0
        %824 = vmatpush1.msra.mxu0 0.0
        %825 = vmatprep.subr.mxu0 0.0
        %826 = vmatpush1.msra.mxu0 0.0
        %827 = vmatprep.subr.mxu0 0.0
        %828 = vmatpush1.msra.mxu0 0.0
        %829 = vmatprep.subr.mxu0 0.0
        %830 = vmatpush1.msra.mxu0 0.0
        %831 = vmatprep.subr.mxu0 0.0
        %832 = vmatpush1.msra.mxu0 0.0
        %833 = vmatprep.subr.mxu0 0.0
        %834 = vmatpush1.msra.mxu0 0.0
        %835 = vmatprep.subr.mxu0 0.0
        %836 = vmatpush1.msra.mxu0 0.0
        %837 = vmatprep.subr.mxu0 0.0
        %838 = vmatpush1.msra.mxu0 0.0
        %839 = vmatprep.subr.mxu0 0.0
        %840 = vmatpush1.msra.mxu0 0.0
        %841 = vmatprep.subr.mxu0 0.0
        %842 = vmatpush1.msra.mxu0 0.0
        %843 = vmatprep.subr.mxu0 0.0
        %844 = vmatpush1.msra.mxu0 0.0
        %845 = vmatprep.subr.mxu0 0.0
        %846 = vmatpush1.msra.mxu0 0.0
        %847 = vmatprep.subr.mxu0 0.0
        %848 = vmatpush1.msra.mxu0 0.0
        %849 = vmatprep.subr.mxu0 0.0
        %850 = vmatpush1.msra.mxu0 0.0
        %851 = vmatprep.subr.mxu0 0.0
        %852 = vmatpush1.msra.mxu0 0.0
        %853 = vmatprep.mubr.f32.mxu0 0.0
        %854 = vmatmul.mubr.f32.gmra.mrb[0].mxu0 %v427
        %v855 = vpop.f32.mrb[0].mxu0
        %v856 = vadd.f32 %v631, %v855
        %v857 = vpop.f32.mrb[0].mxu0
        %858 = vmatprep.mubr.f32.mxu0 0.0
        %859 = vmatmul.mubr.f32.gmra.mrb[0].mxu0 %v428
        %v860 = vpop.f32.mrb[0].mxu0
        %v861 = vadd.f32 %v636, %v860
        %v862 = vpop.f32.mrb[0].mxu0
        %863 = vmatprep.mubr.f32.mxu0 0.0
        %864 = vmatmul.mubr.f32.gmra.mrb[0].mxu0 %v429
        %v865 = vpop.f32.mrb[0].mxu0
        %v866 = vadd.f32 %v641, %v865
        %v867 = vpop.f32.mrb[0].mxu0
        %868 = vmatprep.mubr.f32.mxu0 0.0
        %869 = vmatmul.mubr.f32.gmra.mrb[0].mxu0 %v430
        %v870 = vpop.f32.mrb[0].mxu0
        %v871 = vadd.f32 %v646, %v870
        %v872 = vpop.f32.mrb[0].mxu0
        %873 = vmatprep.mubr.f32.mxu0 0.0
        %874 = vmatmul.mubr.f32.gmra.mrb[0].mxu0 %v431
        %v875 = vpop.f32.mrb[0].mxu0
        %v876 = vadd.f32 %v651, %v875
        %v877 = vpop.f32.mrb[0].mxu0
        %878 = vmatprep.mubr.f32.mxu0 0.0
        %879 = vmatmul.mubr.f32.gmra.mrb[0].mxu0 %v432
        %v880 = vpop.f32.mrb[0].mxu0
        %v881 = vadd.f32 %v656, %v880
        %v882 = vpop.f32.mrb[0].mxu0
        %883 = vmatprep.mubr.f32.mxu0 0.0
        %884 = vmatmul.mubr.f32.gmra.mrb[0].mxu0 %v433
        %v885 = vpop.f32.mrb[0].mxu0
        %v886 = vadd.f32 %v661, %v885
        %v887 = vpop.f32.mrb[0].mxu0
        %888 = vmatprep.mubr.f32.mxu0 0.0
        %889 = vmatmul.mubr.f32.gmra.mrb[0].mxu0 %v434
        %v890 = vpop.f32.mrb[0].mxu0
        %v891 = vadd.f32 %v666, %v890
        %v892 = vpop.f32.mrb[0].mxu0
        %893 = vmatprep.mubr.f32.mxu0 0.0
        %894 = vmatmul.mubr.f32.gmra.mrb[0].mxu0 %v435
        %v895 = vpop.f32.mrb[0].mxu0
        %v896 = vadd.f32 %v671, %v895
        %v897 = vpop.f32.mrb[0].mxu0
        %898 = vmatprep.mubr.f32.mxu0 0.0
        %899 = vmatmul.mubr.f32.gmra.mrb[0].mxu0 %v436
        %v900 = vpop.f32.mrb[0].mxu0
        %v901 = vadd.f32 %v676, %v900
        %v902 = vpop.f32.mrb[0].mxu0
        %903 = vmatprep.mubr.f32.mxu0 0.0
        %904 = vmatmul.mubr.f32.gmra.mrb[0].mxu0 %v437
        %v905 = vpop.f32.mrb[0].mxu0
        %v906 = vadd.f32 %v681, %v905
        %v907 = vpop.f32.mrb[0].mxu0
        %908 = vmatprep.mubr.f32.mxu0 0.0
        %909 = vmatmul.mubr.f32.gmra.mrb[0].mxu0 %v438
        %v910 = vpop.f32.mrb[0].mxu0
        %v911 = vadd.f32 %v686, %v910
        %v912 = vpop.f32.mrb[0].mxu0
        %913 = vmatprep.mubr.f32.mxu0 0.0
        %914 = vmatmul.mubr.f32.gmra.mrb[0].mxu0 %v439
        %v915 = vpop.f32.mrb[0].mxu0
        %v916 = vadd.f32 %v691, %v915
        %v917 = vpop.f32.mrb[0].mxu0
        %918 = vmatprep.mubr.f32.mxu0 0.0
        %919 = vmatmul.mubr.f32.gmra.mrb[0].mxu0 %v440
        %v920 = vpop.f32.mrb[0].mxu0
        %v921 = vadd.f32 %v696, %v920
        %v922 = vpop.f32.mrb[0].mxu0
        %923 = vmatprep.mubr.f32.mxu0 0.0
        %924 = vmatmul.mubr.f32.gmra.mrb[0].mxu0 %v441
        %v925 = vpop.f32.mrb[0].mxu0
        %v926 = vadd.f32 %v701, %v925
        %v927 = vpop.f32.mrb[0].mxu0
        %928 = vmatprep.mubr.f32.mxu0 0.0
        %929 = vmatmul.mubr.f32.gmra.mrb[0].mxu0 %v442
        %v930 = vpop.f32.mrb[0].mxu0
        %v931 = vadd.f32 %v706, %v930
        %v932 = vpop.f32.mrb[0].mxu0
        %933 = vmatprep.mubr.f32.mxu0 0.0
        %934 = vmatmul.mubr.f32.gmra.mrb[0].mxu0 %v443
        %v935 = vpop.f32.mrb[0].mxu0
        %v936 = vadd.f32 %v711, %v935
        %v937 = vpop.f32.mrb[0].mxu0
        %938 = vmatprep.mubr.f32.mxu0 0.0
        %939 = vmatmul.mubr.f32.gmra.mrb[0].mxu0 %v444
        %v940 = vpop.f32.mrb[0].mxu0
        %v941 = vadd.f32 %v716, %v940
        %v942 = vpop.f32.mrb[0].mxu0
        %943 = vmatprep.mubr.f32.mxu0 0.0
        %944 = vmatmul.mubr.f32.gmra.mrb[0].mxu0 %v445
        %v945 = vpop.f32.mrb[0].mxu0
        %v946 = vadd.f32 %v721, %v945
        %v947 = vpop.f32.mrb[0].mxu0
        %948 = vmatprep.mubr.f32.mxu0 0.0
        %949 = vmatmul.mubr.f32.gmra.mrb[0].mxu0 %v446
        %v950 = vpop.f32.mrb[0].mxu0
        %v951 = vadd.f32 %v726, %v950
        %v952 = vpop.f32.mrb[0].mxu0
        %953 = vmatprep.mubr.f32.mxu0 0.0
        %954 = vmatmul.mubr.f32.gmra.mrb[0].mxu0 %v447
        %v955 = vpop.f32.mrb[0].mxu0
        %v956 = vadd.f32 %v731, %v955
        %v957 = vpop.f32.mrb[0].mxu0
        %958 = vmatprep.mubr.f32.mxu0 0.0
        %959 = vmatmul.mubr.f32.gmra.mrb[0].mxu0 %v448
        %v960 = vpop.f32.mrb[0].mxu0
        %v961 = vadd.f32 %v736, %v960
        %v962 = vpop.f32.mrb[0].mxu0
        %963 = vmatprep.mubr.f32.mxu0 0.0
        %964 = vmatmul.mubr.f32.gmra.mrb[0].mxu0 %v449
        %v965 = vpop.f32.mrb[0].mxu0
        %v966 = vadd.f32 %v741, %v965
        %v967 = vpop.f32.mrb[0].mxu0
        %968 = vmatprep.mubr.f32.mxu0 0.0
        %969 = vmatmul.mubr.f32.gmra.mrb[0].mxu0 %v450
        %v970 = vpop.f32.mrb[0].mxu0
        %v971 = vadd.f32 %v746, %v970
        %v972 = vpop.f32.mrb[0].mxu0
        %973 = vmatprep.mubr.f32.mxu0 0.0
        %974 = vmatmul.mubr.f32.gmra.mrb[0].mxu0 %v451
        %v975 = vpop.f32.mrb[0].mxu0
        %v976 = vadd.f32 %v751, %v975
        %v977 = vpop.f32.mrb[0].mxu0
        %978 = vmatprep.mubr.f32.mxu0 0.0
        %979 = vmatmul.mubr.f32.gmra.mrb[0].mxu0 %v452
        %v980 = vpop.f32.mrb[0].mxu0
        %v981 = vadd.f32 %v756, %v980
        %v982 = vpop.f32.mrb[0].mxu0
        %983 = vmatprep.mubr.f32.mxu0 0.0
        %984 = vmatmul.mubr.f32.gmra.mrb[0].mxu0 %v453
        %v985 = vpop.f32.mrb[0].mxu0
        %v986 = vadd.f32 %v761, %v985
        %v987 = vpop.f32.mrb[0].mxu0
        %988 = vmatprep.mubr.f32.mxu0 0.0
        %989 = vmatmul.mubr.f32.gmra.mrb[0].mxu0 %v454
        %v990 = vpop.f32.mrb[0].mxu0
        %v991 = vadd.f32 %v766, %v990
        %v992 = vpop.f32.mrb[0].mxu0
        %993 = vmatprep.mubr.f32.mxu0 0.0
        %994 = vmatmul.mubr.f32.gmra.mrb[0].mxu0 %v455
        %v995 = vpop.f32.mrb[0].mxu0
        %v996 = vadd.f32 %v771, %v995
        %v997 = vpop.f32.mrb[0].mxu0
        %998 = vmatprep.mubr.f32.mxu0 0.0
        %999 = vmatmul.mubr.f32.gmra.mrb[0].mxu0 %v456
        %v1000 = vpop.f32.mrb[0].mxu0
        %v1001 = vadd.f32 %v776, %v1000
        %v1002 = vpop.f32.mrb[0].mxu0
        %1003 = vmatprep.mubr.f32.mxu0 0.0
        %1004 = vmatmul.mubr.f32.gmra.mrb[0].mxu0 %v457
        %v1005 = vpop.f32.mrb[0].mxu0
        %v1006 = vadd.f32 %v781, %v1005
        %v1007 = vpop.f32.mrb[0].mxu0
        %1008 = vmatprep.mubr.f32.mxu0 0.0
        %1009 = vmatmul.mubr.f32.gmra.mrb[0].mxu0 %v458
        %v1010 = vpop.f32.mrb[0].mxu0
        %v1011 = vadd.f32 %v786, %v1010
        %v1012 = vpop.f32.mrb[0].mxu0
        %1013 = vdwg.mxu0
        %s1014 = scalar_lea.vmem [#allocation7], 256
        %v1015 = vld [vmem:[%s1014] sm:$0xff]
        %v1016 = vld [vmem:[%s1014 + $0x8] sm:$0xff]
        %v1017 = vld [vmem:[%s1014 + $0x10] sm:$0xff]
        %v1018 = vld [vmem:[%s1014 + $0x18] sm:$0xff]
        %v1019 = vld [vmem:[%s1014 + $0x20] sm:$0xff]
        %v1020 = vld [vmem:[%s1014 + $0x28] sm:$0xff]
        %v1021 = vld [vmem:[%s1014 + $0x30] sm:$0xff]
        %v1022 = vld [vmem:[%s1014 + $0x38] sm:$0xff]
        %v1023 = vld [vmem:[%s1014 + $0x40] sm:$0xff]
        %v1024 = vld [vmem:[%s1014 + $0x48] sm:$0xff]
        %v1025 = vld [vmem:[%s1014 + $0x50] sm:$0xff]
        %v1026 = vld [vmem:[%s1014 + $0x58] sm:$0xff]
        %v1027 = vld [vmem:[%s1014 + $0x60] sm:$0xff]
        %v1028 = vld [vmem:[%s1014 + $0x68] sm:$0xff]
        %v1029 = vld [vmem:[%s1014 + $0x70] sm:$0xff]
        %v1030 = vld [vmem:[%s1014 + $0x78] sm:$0xff]
        %1031 = vmatprep.subr.mxu0 0.0
        %1032 = vmatpush1.msra.mxu0 %v1015
        %1033 = vmatprep.subr.mxu0 0.0
        %1034 = vmatpush1.msra.mxu0 %v1016
        %1035 = vmatprep.subr.mxu0 0.0
        %1036 = vmatpush1.msra.mxu0 %v1017
        %1037 = vmatprep.subr.mxu0 0.0
        %1038 = vmatpush1.msra.mxu0 %v1018
        %1039 = vmatprep.subr.mxu0 0.0
        %1040 = vmatpush1.msra.mxu0 %v1019
        %1041 = vmatprep.subr.mxu0 0.0
        %1042 = vmatpush1.msra.mxu0 %v1020
        %1043 = vmatprep.subr.mxu0 0.0
        %1044 = vmatpush1.msra.mxu0 %v1021
        %1045 = vmatprep.subr.mxu0 0.0
        %1046 = vmatpush1.msra.mxu0 %v1022
        %1047 = vmatprep.subr.mxu0 0.0
        %1048 = vmatpush1.msra.mxu0 %v1023
        %1049 = vmatprep.subr.mxu0 0.0
        %1050 = vmatpush1.msra.mxu0 %v1024
        %1051 = vmatprep.subr.mxu0 0.0
        %1052 = vmatpush1.msra.mxu0 %v1025
        %1053 = vmatprep.subr.mxu0 0.0
        %1054 = vmatpush1.msra.mxu0 %v1026
        %1055 = vmatprep.subr.mxu0 0.0
        %1056 = vmatpush1.msra.mxu0 %v1027
        %1057 = vmatprep.subr.mxu0 0.0
        %1058 = vmatpush1.msra.mxu0 %v1028
        %1059 = vmatprep.subr.mxu0 0.0
        %1060 = vmatpush1.msra.mxu0 %v1029
        %1061 = vmatprep.subr.mxu0 0.0
        %1062 = vmatpush1.msra.mxu0 %v1030
        %1063 = vmatprep.subr.mxu0 0.0
        %1064 = vmatpush1.msra.mxu0 0.0
        %1065 = vmatprep.subr.mxu0 0.0
        %1066 = vmatpush1.msra.mxu0 0.0
        %1067 = vmatprep.subr.mxu0 0.0
        %1068 = vmatpush1.msra.mxu0 0.0
        %1069 = vmatprep.subr.mxu0 0.0
        %1070 = vmatpush1.msra.mxu0 0.0
        %1071 = vmatprep.subr.mxu0 0.0
        %1072 = vmatpush1.msra.mxu0 0.0
        %1073 = vmatprep.subr.mxu0 0.0
        %1074 = vmatpush1.msra.mxu0 0.0
        %1075 = vmatprep.subr.mxu0 0.0
        %1076 = vmatpush1.msra.mxu0 0.0
        %1077 = vmatprep.subr.mxu0 0.0
        %1078 = vmatpush1.msra.mxu0 0.0
        %1079 = vmatprep.subr.mxu0 0.0
        %1080 = vmatpush1.msra.mxu0 0.0
        %1081 = vmatprep.subr.mxu0 0.0
        %1082 = vmatpush1.msra.mxu0 0.0
        %1083 = vmatprep.subr.mxu0 0.0
        %1084 = vmatpush1.msra.mxu0 0.0
        %1085 = vmatprep.subr.mxu0 0.0
        %1086 = vmatpush1.msra.mxu0 0.0
        %1087 = vmatprep.subr.mxu0 0.0
        %1088 = vmatpush1.msra.mxu0 0.0
        %1089 = vmatprep.subr.mxu0 0.0
        %1090 = vmatpush1.msra.mxu0 0.0
        %1091 = vmatprep.subr.mxu0 0.0
        %1092 = vmatpush1.msra.mxu0 0.0
        %1093 = vmatprep.subr.mxu0 0.0
        %1094 = vmatpush1.msra.mxu0 0.0
        %1095 = vmatprep.mubr.f32.mxu0 0.0
        %1096 = vmatmul.mubr.f32.gmra.mrb[0].mxu0 %v463
        %v1097 = vpop.f32.mrb[0].mxu0
        %v1098 = vadd.f32 0.0, %v1097
        %v1099 = vpop.f32.mrb[0].mxu0
        %1100 = vmatprep.mubr.f32.mxu0 0.0
        %1101 = vmatmul.mubr.f32.gmra.mrb[0].mxu0 %v464
        %v1102 = vpop.f32.mrb[0].mxu0
        %v1103 = vadd.f32 0.0, %v1102
        %v1104 = vpop.f32.mrb[0].mxu0
        %1105 = vmatprep.mubr.f32.mxu0 0.0
        %1106 = vmatmul.mubr.f32.gmra.mrb[0].mxu0 %v465
        %v1107 = vpop.f32.mrb[0].mxu0
        %v1108 = vadd.f32 0.0, %v1107
        %v1109 = vpop.f32.mrb[0].mxu0
        %1110 = vmatprep.mubr.f32.mxu0 0.0
        %1111 = vmatmul.mubr.f32.gmra.mrb[0].mxu0 %v466
        %v1112 = vpop.f32.mrb[0].mxu0
        %v1113 = vadd.f32 0.0, %v1112
        %v1114 = vpop.f32.mrb[0].mxu0
        %1115 = vmatprep.mubr.f32.mxu0 0.0
        %1116 = vmatmul.mubr.f32.gmra.mrb[0].mxu0 %v467
        %v1117 = vpop.f32.mrb[0].mxu0
        %v1118 = vadd.f32 0.0, %v1117
        %v1119 = vpop.f32.mrb[0].mxu0
        %1120 = vmatprep.mubr.f32.mxu0 0.0
        %1121 = vmatmul.mubr.f32.gmra.mrb[0].mxu0 %v468
        %v1122 = vpop.f32.mrb[0].mxu0
        %v1123 = vadd.f32 0.0, %v1122
        %v1124 = vpop.f32.mrb[0].mxu0
        %1125 = vmatprep.mubr.f32.mxu0 0.0
        %1126 = vmatmul.mubr.f32.gmra.mrb[0].mxu0 %v469
        %v1127 = vpop.f32.mrb[0].mxu0
        %v1128 = vadd.f32 0.0, %v1127
        %v1129 = vpop.f32.mrb[0].mxu0
        %1130 = vmatprep.mubr.f32.mxu0 0.0
        %1131 = vmatmul.mubr.f32.gmra.mrb[0].mxu0 %v470
        %v1132 = vpop.f32.mrb[0].mxu0
        %v1133 = vadd.f32 0.0, %v1132
        %v1134 = vpop.f32.mrb[0].mxu0
        %1135 = vmatprep.mubr.f32.mxu0 0.0
        %1136 = vmatmul.mubr.f32.gmra.mrb[0].mxu0 %v471
        %v1137 = vpop.f32.mrb[0].mxu0
        %v1138 = vadd.f32 0.0, %v1137
        %v1139 = vpop.f32.mrb[0].mxu0
        %1140 = vmatprep.mubr.f32.mxu0 0.0
        %1141 = vmatmul.mubr.f32.gmra.mrb[0].mxu0 %v472
        %v1142 = vpop.f32.mrb[0].mxu0
        %v1143 = vadd.f32 0.0, %v1142
        %v1144 = vpop.f32.mrb[0].mxu0
        %1145 = vmatprep.mubr.f32.mxu0 0.0
        %1146 = vmatmul.mubr.f32.gmra.mrb[0].mxu0 %v473
        %v1147 = vpop.f32.mrb[0].mxu0
        %v1148 = vadd.f32 0.0, %v1147
        %v1149 = vpop.f32.mrb[0].mxu0
        %1150 = vmatprep.mubr.f32.mxu0 0.0
        %1151 = vmatmul.mubr.f32.gmra.mrb[0].mxu0 %v474
        %v1152 = vpop.f32.mrb[0].mxu0
        %v1153 = vadd.f32 0.0, %v1152
        %v1154 = vpop.f32.mrb[0].mxu0
        %1155 = vmatprep.mubr.f32.mxu0 0.0
        %1156 = vmatmul.mubr.f32.gmra.mrb[0].mxu0 %v475
        %v1157 = vpop.f32.mrb[0].mxu0
        %v1158 = vadd.f32 0.0, %v1157
        %v1159 = vpop.f32.mrb[0].mxu0
        %1160 = vmatprep.mubr.f32.mxu0 0.0
        %1161 = vmatmul.mubr.f32.gmra.mrb[0].mxu0 %v476
        %v1162 = vpop.f32.mrb[0].mxu0
        %v1163 = vadd.f32 0.0, %v1162
        %v1164 = vpop.f32.mrb[0].mxu0
        %1165 = vmatprep.mubr.f32.mxu0 0.0
        %1166 = vmatmul.mubr.f32.gmra.mrb[0].mxu0 %v477
        %v1167 = vpop.f32.mrb[0].mxu0
        %v1168 = vadd.f32 0.0, %v1167
        %v1169 = vpop.f32.mrb[0].mxu0
        %1170 = vmatprep.mubr.f32.mxu0 0.0
        %1171 = vmatmul.mubr.f32.gmra.mrb[0].mxu0 %v478
        %v1172 = vpop.f32.mrb[0].mxu0
        %v1173 = vadd.f32 0.0, %v1172
        %v1174 = vpop.f32.mrb[0].mxu0
        %1175 = vmatprep.mubr.f32.mxu0 0.0
        %1176 = vmatmul.mubr.f32.gmra.mrb[0].mxu0 %v479
        %v1177 = vpop.f32.mrb[0].mxu0
        %v1178 = vadd.f32 0.0, %v1177
        %v1179 = vpop.f32.mrb[0].mxu0
        %1180 = vmatprep.mubr.f32.mxu0 0.0
        %1181 = vmatmul.mubr.f32.gmra.mrb[0].mxu0 %v480
        %v1182 = vpop.f32.mrb[0].mxu0
        %v1183 = vadd.f32 0.0, %v1182
        %v1184 = vpop.f32.mrb[0].mxu0
        %1185 = vmatprep.mubr.f32.mxu0 0.0
        %1186 = vmatmul.mubr.f32.gmra.mrb[0].mxu0 %v481
        %v1187 = vpop.f32.mrb[0].mxu0
        %v1188 = vadd.f32 0.0, %v1187
        %v1189 = vpop.f32.mrb[0].mxu0
        %1190 = vmatprep.mubr.f32.mxu0 0.0
        %1191 = vmatmul.mubr.f32.gmra.mrb[0].mxu0 %v482
        %v1192 = vpop.f32.mrb[0].mxu0
        %v1193 = vadd.f32 0.0, %v1192
        %v1194 = vpop.f32.mrb[0].mxu0
        %1195 = vmatprep.mubr.f32.mxu0 0.0
        %1196 = vmatmul.mubr.f32.gmra.mrb[0].mxu0 %v483
        %v1197 = vpop.f32.mrb[0].mxu0
        %v1198 = vadd.f32 0.0, %v1197
        %v1199 = vpop.f32.mrb[0].mxu0
        %1200 = vmatprep.mubr.f32.mxu0 0.0
        %1201 = vmatmul.mubr.f32.gmra.mrb[0].mxu0 %v484
        %v1202 = vpop.f32.mrb[0].mxu0
        %v1203 = vadd.f32 0.0, %v1202
        %v1204 = vpop.f32.mrb[0].mxu0
        %1205 = vmatprep.mubr.f32.mxu0 0.0
        %1206 = vmatmul.mubr.f32.gmra.mrb[0].mxu0 %v485
        %v1207 = vpop.f32.mrb[0].mxu0
        %v1208 = vadd.f32 0.0, %v1207
        %v1209 = vpop.f32.mrb[0].mxu0
        %1210 = vmatprep.mubr.f32.mxu0 0.0
        %1211 = vmatmul.mubr.f32.gmra.mrb[0].mxu0 %v486
        %v1212 = vpop.f32.mrb[0].mxu0
        %v1213 = vadd.f32 0.0, %v1212
        %v1214 = vpop.f32.mrb[0].mxu0
        %1215 = vmatprep.mubr.f32.mxu0 0.0
        %1216 = vmatmul.mubr.f32.gmra.mrb[0].mxu0 %v487
        %v1217 = vpop.f32.mrb[0].mxu0
        %v1218 = vadd.f32 0.0, %v1217
        %v1219 = vpop.f32.mrb[0].mxu0
        %1220 = vmatprep.mubr.f32.mxu0 0.0
        %1221 = vmatmul.mubr.f32.gmra.mrb[0].mxu0 %v488
        %v1222 = vpop.f32.mrb[0].mxu0
        %v1223 = vadd.f32 0.0, %v1222
        %v1224 = vpop.f32.mrb[0].mxu0
        %1225 = vmatprep.mubr.f32.mxu0 0.0
        %1226 = vmatmul.mubr.f32.gmra.mrb[0].mxu0 %v489
        %v1227 = vpop.f32.mrb[0].mxu0
        %v1228 = vadd.f32 0.0, %v1227
        %v1229 = vpop.f32.mrb[0].mxu0
        %1230 = vmatprep.mubr.f32.mxu0 0.0
        %1231 = vmatmul.mubr.f32.gmra.mrb[0].mxu0 %v490
        %v1232 = vpop.f32.mrb[0].mxu0
        %v1233 = vadd.f32 0.0, %v1232
        %v1234 = vpop.f32.mrb[0].mxu0
        %1235 = vmatprep.mubr.f32.mxu0 0.0
        %1236 = vmatmul.mubr.f32.gmra.mrb[0].mxu0 %v491
        %v1237 = vpop.f32.mrb[0].mxu0
        %v1238 = vadd.f32 0.0, %v1237
        %v1239 = vpop.f32.mrb[0].mxu0
        %1240 = vmatprep.mubr.f32.mxu0 0.0
        %1241 = vmatmul.mubr.f32.gmra.mrb[0].mxu0 %v492
        %v1242 = vpop.f32.mrb[0].mxu0
        %v1243 = vadd.f32 0.0, %v1242
        %v1244 = vpop.f32.mrb[0].mxu0
        %1245 = vmatprep.mubr.f32.mxu0 0.0
        %1246 = vmatmul.mubr.f32.gmra.mrb[0].mxu0 %v493
        %v1247 = vpop.f32.mrb[0].mxu0
        %v1248 = vadd.f32 0.0, %v1247
        %v1249 = vpop.f32.mrb[0].mxu0
        %1250 = vmatprep.mubr.f32.mxu0 0.0
        %1251 = vmatmul.mubr.f32.gmra.mrb[0].mxu0 %v494
        %v1252 = vpop.f32.mrb[0].mxu0
        %v1253 = vadd.f32 0.0, %v1252
        %v1254 = vpop.f32.mrb[0].mxu0
        %1255 = vdwg.mxu0
        %v1256 = vadd.f32 %v856, %v1098
        %v1257 = vadd.f32 %v861, %v1103
        %v1258 = vadd.f32 %v866, %v1108
        %v1259 = vadd.f32 %v871, %v1113
        %v1260 = vadd.f32 %v876, %v1118
        %v1261 = vadd.f32 %v881, %v1123
        %v1262 = vadd.f32 %v886, %v1128
        %v1263 = vadd.f32 %v891, %v1133
        %v1264 = vadd.f32 %v896, %v1138
        %v1265 = vadd.f32 %v901, %v1143
        %v1266 = vadd.f32 %v906, %v1148
        %v1267 = vadd.f32 %v911, %v1153
        %v1268 = vadd.f32 %v916, %v1158
        %v1269 = vadd.f32 %v921, %v1163
        %v1270 = vadd.f32 %v926, %v1168
        %v1271 = vadd.f32 %v931, %v1173
        %v1272 = vadd.f32 %v936, %v1178
        %v1273 = vadd.f32 %v941, %v1183
        %v1274 = vadd.f32 %v946, %v1188
        %v1275 = vadd.f32 %v951, %v1193
        %v1276 = vadd.f32 %v956, %v1198
        %v1277 = vadd.f32 %v961, %v1203
        %v1278 = vadd.f32 %v966, %v1208
        %v1279 = vadd.f32 %v971, %v1213
        %v1280 = vadd.f32 %v976, %v1218
        %v1281 = vadd.f32 %v981, %v1223
        %v1282 = vadd.f32 %v986, %v1228
        %v1283 = vadd.f32 %v991, %v1233
        %v1284 = vadd.f32 %v996, %v1238
        %v1285 = vadd.f32 %v1001, %v1243
        %v1286 = vadd.f32 %v1006, %v1248
        %v1287 = vadd.f32 %v1011, %v1253
        %s1288 = scalar_lea.vmem [#allocation7], 384
        %v1289 = vld [vmem:[%s1288] sm:$0xff]
        %v1290 = vld [vmem:[%s1288 + $0x8] sm:$0xff]
        %v1291 = vld [vmem:[%s1288 + $0x10] sm:$0xff]
        %v1292 = vld [vmem:[%s1288 + $0x18] sm:$0xff]
        %v1293 = vld [vmem:[%s1288 + $0x20] sm:$0xff]
        %v1294 = vld [vmem:[%s1288 + $0x28] sm:$0xff]
        %v1295 = vld [vmem:[%s1288 + $0x30] sm:$0xff]
        %v1296 = vld [vmem:[%s1288 + $0x38] sm:$0xff]
        %v1297 = vld [vmem:[%s1288 + $0x40] sm:$0xff]
        %v1298 = vld [vmem:[%s1288 + $0x48] sm:$0xff]
        %v1299 = vld [vmem:[%s1288 + $0x50] sm:$0xff]
        %v1300 = vld [vmem:[%s1288 + $0x58] sm:$0xff]
        %v1301 = vld [vmem:[%s1288 + $0x60] sm:$0xff]
        %v1302 = vld [vmem:[%s1288 + $0x68] sm:$0xff]
        %v1303 = vld [vmem:[%s1288 + $0x70] sm:$0xff]
        %v1304 = vld [vmem:[%s1288 + $0x78] sm:$0xff]
        %1305 = vmatprep.subr.mxu0 0.0
        %1306 = vmatpush1.msra.mxu0 %v1289
        %1307 = vmatprep.subr.mxu0 0.0
        %1308 = vmatpush1.msra.mxu0 %v1290
        %1309 = vmatprep.subr.mxu0 0.0
        %1310 = vmatpush1.msra.mxu0 %v1291
        %1311 = vmatprep.subr.mxu0 0.0
        %1312 = vmatpush1.msra.mxu0 %v1292
        %1313 = vmatprep.subr.mxu0 0.0
        %1314 = vmatpush1.msra.mxu0 %v1293
        %1315 = vmatprep.subr.mxu0 0.0
        %1316 = vmatpush1.msra.mxu0 %v1294
        %1317 = vmatprep.subr.mxu0 0.0
        %1318 = vmatpush1.msra.mxu0 %v1295
        %1319 = vmatprep.subr.mxu0 0.0
        %1320 = vmatpush1.msra.mxu0 %v1296
        %1321 = vmatprep.subr.mxu0 0.0
        %1322 = vmatpush1.msra.mxu0 %v1297
        %1323 = vmatprep.subr.mxu0 0.0
        %1324 = vmatpush1.msra.mxu0 %v1298
        %1325 = vmatprep.subr.mxu0 0.0
        %1326 = vmatpush1.msra.mxu0 %v1299
        %1327 = vmatprep.subr.mxu0 0.0
        %1328 = vmatpush1.msra.mxu0 %v1300
        %1329 = vmatprep.subr.mxu0 0.0
        %1330 = vmatpush1.msra.mxu0 %v1301
        %1331 = vmatprep.subr.mxu0 0.0
        %1332 = vmatpush1.msra.mxu0 %v1302
        %1333 = vmatprep.subr.mxu0 0.0
        %1334 = vmatpush1.msra.mxu0 %v1303
        %1335 = vmatprep.subr.mxu0 0.0
        %1336 = vmatpush1.msra.mxu0 %v1304
        %1337 = vmatprep.subr.mxu0 0.0
        %1338 = vmatpush1.msra.mxu0 0.0
        %1339 = vmatprep.subr.mxu0 0.0
        %1340 = vmatpush1.msra.mxu0 0.0
        %1341 = vmatprep.subr.mxu0 0.0
        %1342 = vmatpush1.msra.mxu0 0.0
        %1343 = vmatprep.subr.mxu0 0.0
        %1344 = vmatpush1.msra.mxu0 0.0
        %1345 = vmatprep.subr.mxu0 0.0
        %1346 = vmatpush1.msra.mxu0 0.0
        %1347 = vmatprep.subr.mxu0 0.0
        %1348 = vmatpush1.msra.mxu0 0.0
        %1349 = vmatprep.subr.mxu0 0.0
        %1350 = vmatpush1.msra.mxu0 0.0
        %1351 = vmatprep.subr.mxu0 0.0
        %1352 = vmatpush1.msra.mxu0 0.0
        %1353 = vmatprep.subr.mxu0 0.0
        %1354 = vmatpush1.msra.mxu0 0.0
        %1355 = vmatprep.subr.mxu0 0.0
        %1356 = vmatpush1.msra.mxu0 0.0
        %1357 = vmatprep.subr.mxu0 0.0
        %1358 = vmatpush1.msra.mxu0 0.0
        %1359 = vmatprep.subr.mxu0 0.0
        %1360 = vmatpush1.msra.mxu0 0.0
        %1361 = vmatprep.subr.mxu0 0.0
        %1362 = vmatpush1.msra.mxu0 0.0
        %1363 = vmatprep.subr.mxu0 0.0
        %1364 = vmatpush1.msra.mxu0 0.0
        %1365 = vmatprep.subr.mxu0 0.0
        %1366 = vmatpush1.msra.mxu0 0.0
        %1367 = vmatprep.subr.mxu0 0.0
        %1368 = vmatpush1.msra.mxu0 0.0
        %1369 = vmatprep.mubr.f32.mxu0 0.0
        %1370 = vmatmul.mubr.f32.gmra.mrb[0].mxu0 %v429
        %v1371 = vpop.f32.mrb[0].mxu0
        %v1372 = vadd.f32 0.0, %v1371
        %v1373 = vpop.f32.mrb[0].mxu0
        %1374 = vmatprep.mubr.f32.mxu0 0.0
        %1375 = vmatmul.mubr.f32.gmra.mrb[0].mxu0 %v430
        %v1376 = vpop.f32.mrb[0].mxu0
        %v1377 = vadd.f32 0.0, %v1376
        %v1378 = vpop.f32.mrb[0].mxu0
        %1379 = vmatprep.mubr.f32.mxu0 0.0
        %1380 = vmatmul.mubr.f32.gmra.mrb[0].mxu0 %v431
        %v1381 = vpop.f32.mrb[0].mxu0
        %v1382 = vadd.f32 0.0, %v1381
        %v1383 = vpop.f32.mrb[0].mxu0
        %1384 = vmatprep.mubr.f32.mxu0 0.0
        %1385 = vmatmul.mubr.f32.gmra.mrb[0].mxu0 %v432
        %v1386 = vpop.f32.mrb[0].mxu0
        %v1387 = vadd.f32 0.0, %v1386
        %v1388 = vpop.f32.mrb[0].mxu0
        %1389 = vmatprep.mubr.f32.mxu0 0.0
        %1390 = vmatmul.mubr.f32.gmra.mrb[0].mxu0 %v433
        %v1391 = vpop.f32.mrb[0].mxu0
        %v1392 = vadd.f32 0.0, %v1391
        %v1393 = vpop.f32.mrb[0].mxu0
        %1394 = vmatprep.mubr.f32.mxu0 0.0
        %1395 = vmatmul.mubr.f32.gmra.mrb[0].mxu0 %v434
        %v1396 = vpop.f32.mrb[0].mxu0
        %v1397 = vadd.f32 0.0, %v1396
        %v1398 = vpop.f32.mrb[0].mxu0
        %1399 = vmatprep.mubr.f32.mxu0 0.0
        %1400 = vmatmul.mubr.f32.gmra.mrb[0].mxu0 %v435
        %v1401 = vpop.f32.mrb[0].mxu0
        %v1402 = vadd.f32 0.0, %v1401
        %v1403 = vpop.f32.mrb[0].mxu0
        %1404 = vmatprep.mubr.f32.mxu0 0.0
        %1405 = vmatmul.mubr.f32.gmra.mrb[0].mxu0 %v436
        %v1406 = vpop.f32.mrb[0].mxu0
        %v1407 = vadd.f32 0.0, %v1406
        %v1408 = vpop.f32.mrb[0].mxu0
        %1409 = vmatprep.mubr.f32.mxu0 0.0
        %1410 = vmatmul.mubr.f32.gmra.mrb[0].mxu0 %v437
        %v1411 = vpop.f32.mrb[0].mxu0
        %v1412 = vadd.f32 0.0, %v1411
        %v1413 = vpop.f32.mrb[0].mxu0
        %1414 = vmatprep.mubr.f32.mxu0 0.0
        %1415 = vmatmul.mubr.f32.gmra.mrb[0].mxu0 %v438
        %v1416 = vpop.f32.mrb[0].mxu0
        %v1417 = vadd.f32 0.0, %v1416
        %v1418 = vpop.f32.mrb[0].mxu0
        %1419 = vmatprep.mubr.f32.mxu0 0.0
        %1420 = vmatmul.mubr.f32.gmra.mrb[0].mxu0 %v439
        %v1421 = vpop.f32.mrb[0].mxu0
        %v1422 = vadd.f32 0.0, %v1421
        %v1423 = vpop.f32.mrb[0].mxu0
        %1424 = vmatprep.mubr.f32.mxu0 0.0
        %1425 = vmatmul.mubr.f32.gmra.mrb[0].mxu0 %v440
        %v1426 = vpop.f32.mrb[0].mxu0
        %v1427 = vadd.f32 0.0, %v1426
        %v1428 = vpop.f32.mrb[0].mxu0
        %1429 = vmatprep.mubr.f32.mxu0 0.0
        %1430 = vmatmul.mubr.f32.gmra.mrb[0].mxu0 %v441
        %v1431 = vpop.f32.mrb[0].mxu0
        %v1432 = vadd.f32 0.0, %v1431
        %v1433 = vpop.f32.mrb[0].mxu0
        %1434 = vmatprep.mubr.f32.mxu0 0.0
        %1435 = vmatmul.mubr.f32.gmra.mrb[0].mxu0 %v442
        %v1436 = vpop.f32.mrb[0].mxu0
        %v1437 = vadd.f32 0.0, %v1436
        %v1438 = vpop.f32.mrb[0].mxu0
        %1439 = vmatprep.mubr.f32.mxu0 0.0
        %1440 = vmatmul.mubr.f32.gmra.mrb[0].mxu0 %v443
        %v1441 = vpop.f32.mrb[0].mxu0
        %v1442 = vadd.f32 0.0, %v1441
        %v1443 = vpop.f32.mrb[0].mxu0
        %1444 = vmatprep.mubr.f32.mxu0 0.0
        %1445 = vmatmul.mubr.f32.gmra.mrb[0].mxu0 %v444
        %v1446 = vpop.f32.mrb[0].mxu0
        %v1447 = vadd.f32 0.0, %v1446
        %v1448 = vpop.f32.mrb[0].mxu0
        %1449 = vmatprep.mubr.f32.mxu0 0.0
        %1450 = vmatmul.mubr.f32.gmra.mrb[0].mxu0 %v445
        %v1451 = vpop.f32.mrb[0].mxu0
        %v1452 = vadd.f32 0.0, %v1451
        %v1453 = vpop.f32.mrb[0].mxu0
        %1454 = vmatprep.mubr.f32.mxu0 0.0
        %1455 = vmatmul.mubr.f32.gmra.mrb[0].mxu0 %v446
        %v1456 = vpop.f32.mrb[0].mxu0
        %v1457 = vadd.f32 0.0, %v1456
        %v1458 = vpop.f32.mrb[0].mxu0
        %1459 = vmatprep.mubr.f32.mxu0 0.0
        %1460 = vmatmul.mubr.f32.gmra.mrb[0].mxu0 %v447
        %v1461 = vpop.f32.mrb[0].mxu0
        %v1462 = vadd.f32 0.0, %v1461
        %v1463 = vpop.f32.mrb[0].mxu0
        %1464 = vmatprep.mubr.f32.mxu0 0.0
        %1465 = vmatmul.mubr.f32.gmra.mrb[0].mxu0 %v448
        %v1466 = vpop.f32.mrb[0].mxu0
        %v1467 = vadd.f32 0.0, %v1466
        %v1468 = vpop.f32.mrb[0].mxu0
        %1469 = vmatprep.mubr.f32.mxu0 0.0
        %1470 = vmatmul.mubr.f32.gmra.mrb[0].mxu0 %v449
        %v1471 = vpop.f32.mrb[0].mxu0
        %v1472 = vadd.f32 0.0, %v1471
        %v1473 = vpop.f32.mrb[0].mxu0
        %1474 = vmatprep.mubr.f32.mxu0 0.0
        %1475 = vmatmul.mubr.f32.gmra.mrb[0].mxu0 %v450
        %v1476 = vpop.f32.mrb[0].mxu0
        %v1477 = vadd.f32 0.0, %v1476
        %v1478 = vpop.f32.mrb[0].mxu0
        %1479 = vmatprep.mubr.f32.mxu0 0.0
        %1480 = vmatmul.mubr.f32.gmra.mrb[0].mxu0 %v451
        %v1481 = vpop.f32.mrb[0].mxu0
        %v1482 = vadd.f32 0.0, %v1481
        %v1483 = vpop.f32.mrb[0].mxu0
        %1484 = vmatprep.mubr.f32.mxu0 0.0
        %1485 = vmatmul.mubr.f32.gmra.mrb[0].mxu0 %v452
        %v1486 = vpop.f32.mrb[0].mxu0
        %v1487 = vadd.f32 0.0, %v1486
        %v1488 = vpop.f32.mrb[0].mxu0
        %1489 = vmatprep.mubr.f32.mxu0 0.0
        %1490 = vmatmul.mubr.f32.gmra.mrb[0].mxu0 %v453
        %v1491 = vpop.f32.mrb[0].mxu0
        %v1492 = vadd.f32 0.0, %v1491
        %v1493 = vpop.f32.mrb[0].mxu0
        %1494 = vmatprep.mubr.f32.mxu0 0.0
        %1495 = vmatmul.mubr.f32.gmra.mrb[0].mxu0 %v454
        %v1496 = vpop.f32.mrb[0].mxu0
        %v1497 = vadd.f32 0.0, %v1496
        %v1498 = vpop.f32.mrb[0].mxu0
        %1499 = vmatprep.mubr.f32.mxu0 0.0
        %1500 = vmatmul.mubr.f32.gmra.mrb[0].mxu0 %v455
        %v1501 = vpop.f32.mrb[0].mxu0
        %v1502 = vadd.f32 0.0, %v1501
        %v1503 = vpop.f32.mrb[0].mxu0
        %1504 = vmatprep.mubr.f32.mxu0 0.0
        %1505 = vmatmul.mubr.f32.gmra.mrb[0].mxu0 %v456
        %v1506 = vpop.f32.mrb[0].mxu0
        %v1507 = vadd.f32 0.0, %v1506
        %v1508 = vpop.f32.mrb[0].mxu0
        %1509 = vmatprep.mubr.f32.mxu0 0.0
        %1510 = vmatmul.mubr.f32.gmra.mrb[0].mxu0 %v457
        %v1511 = vpop.f32.mrb[0].mxu0
        %v1512 = vadd.f32 0.0, %v1511
        %v1513 = vpop.f32.mrb[0].mxu0
        %1514 = vmatprep.mubr.f32.mxu0 0.0
        %1515 = vmatmul.mubr.f32.gmra.mrb[0].mxu0 %v458
        %v1516 = vpop.f32.mrb[0].mxu0
        %v1517 = vadd.f32 0.0, %v1516
        %v1518 = vpop.f32.mrb[0].mxu0
        %1519 = vmatprep.mubr.f32.mxu0 0.0
        %1520 = vmatmul.mubr.f32.gmra.mrb[0].mxu0 %v459
        %v1521 = vpop.f32.mrb[0].mxu0
        %v1522 = vadd.f32 0.0, %v1521
        %v1523 = vpop.f32.mrb[0].mxu0
        %1524 = vmatprep.mubr.f32.mxu0 0.0
        %1525 = vmatmul.mubr.f32.gmra.mrb[0].mxu0 %v460
        %v1526 = vpop.f32.mrb[0].mxu0
        %v1527 = vadd.f32 0.0, %v1526
        %v1528 = vpop.f32.mrb[0].mxu0
        %1529 = vdwg.mxu0
        %v1530 = vadd.f32 %v1256, %v1372
        %v1531 = vadd.f32 %v1257, %v1377
        %v1532 = vadd.f32 %v1258, %v1382
        %v1533 = vadd.f32 %v1259, %v1387
        %v1534 = vadd.f32 %v1260, %v1392
        %v1535 = vadd.f32 %v1261, %v1397
        %v1536 = vadd.f32 %v1262, %v1402
        %v1537 = vadd.f32 %v1263, %v1407
        %v1538 = vadd.f32 %v1264, %v1412
        %v1539 = vadd.f32 %v1265, %v1417
        %v1540 = vadd.f32 %v1266, %v1422
        %v1541 = vadd.f32 %v1267, %v1427
        %v1542 = vadd.f32 %v1268, %v1432
        %v1543 = vadd.f32 %v1269, %v1437
        %v1544 = vadd.f32 %v1270, %v1442
        %v1545 = vadd.f32 %v1271, %v1447
        %v1546 = vadd.f32 %v1272, %v1452
        %v1547 = vadd.f32 %v1273, %v1457
        %v1548 = vadd.f32 %v1274, %v1462
        %v1549 = vadd.f32 %v1275, %v1467
        %v1550 = vadd.f32 %v1276, %v1472
        %v1551 = vadd.f32 %v1277, %v1477
        %v1552 = vadd.f32 %v1278, %v1482
        %v1553 = vadd.f32 %v1279, %v1487
        %v1554 = vadd.f32 %v1280, %v1492
        %v1555 = vadd.f32 %v1281, %v1497
        %v1556 = vadd.f32 %v1282, %v1502
        %v1557 = vadd.f32 %v1283, %v1507
        %v1558 = vadd.f32 %v1284, %v1512
        %v1559 = vadd.f32 %v1285, %v1517
        %v1560 = vadd.f32 %v1286, %v1522
        %v1561 = vadd.f32 %v1287, %v1527
        %v1562 = vld [vmem:[%s394 + $0x8] sm:$0xff]
        %v1563 = vld [vmem:[%s394 + $0x10] sm:$0xff]
        %v1564 = vld [vmem:[%s394 + $0x28] sm:$0xff]
        %v1565 = vld [vmem:[%s394 + $0x30] sm:$0xff]
        %v1566 = vld [vmem:[%s394 + $0x48] sm:$0xff]
        %v1567 = vld [vmem:[%s394 + $0x50] sm:$0xff]
        %v1568 = vld [vmem:[%s394 + $0x68] sm:$0xff]
        %v1569 = vld [vmem:[%s394 + $0x70] sm:$0xff]
        %v1570 = vld [vmem:[%s394 + $0x88] sm:$0xff]
        %v1571 = vld [vmem:[%s394 + $0x90] sm:$0xff]
        %v1572 = vld [vmem:[%s394 + $0xa8] sm:$0xff]
        %v1573 = vld [vmem:[%s394 + $0xb0] sm:$0xff]
        %v1574 = vld [vmem:[%s394 + $0xc8] sm:$0xff]
        %v1575 = vld [vmem:[%s394 + $0xd0] sm:$0xff]
        %v1576 = vld [vmem:[%s394 + $0xe8] sm:$0xff]
        %v1577 = vld [vmem:[%s394 + $0xf0] sm:$0xff]
        %v1578 = vld [vmem:[%s394 + $0x108] sm:$0xff]
        %v1579 = vld [vmem:[%s394 + $0x110] sm:$0xff]
        %v1580 = vld [vmem:[%s394 + $0x128] sm:$0xff]
        %v1581 = vld [vmem:[%s394 + $0x130] sm:$0xff]
        %v1582 = vld [vmem:[%s394 + $0x148] sm:$0xff]
        %v1583 = vld [vmem:[%s394 + $0x150] sm:$0xff]
        %v1584 = vld [vmem:[%s394 + $0x168] sm:$0xff]
        %v1585 = vld [vmem:[%s394 + $0x170] sm:$0xff]
        %v1586 = vld [vmem:[%s394 + $0x188] sm:$0xff]
        %v1587 = vld [vmem:[%s394 + $0x190] sm:$0xff]
        %v1588 = vld [vmem:[%s394 + $0x1a8] sm:$0xff]
        %v1589 = vld [vmem:[%s394 + $0x1b0] sm:$0xff]
        %v1590 = vld [vmem:[%s394 + $0x1c8] sm:$0xff]
        %v1591 = vld [vmem:[%s394 + $0x1d0] sm:$0xff]
        %v1592 = vld [vmem:[%s394 + $0x1e8] sm:$0xff]
        %v1593 = vld [vmem:[%s394 + $0x1f0] sm:$0xff]
        %s1594 = scalar_lea.vmem [#allocation7], 512
        %v1595 = vld [vmem:[%s1594] sm:$0xff]
        %v1596 = vld [vmem:[%s1594 + $0x8] sm:$0xff]
        %v1597 = vld [vmem:[%s1594 + $0x10] sm:$0xff]
        %v1598 = vld [vmem:[%s1594 + $0x18] sm:$0xff]
        %v1599 = vld [vmem:[%s1594 + $0x20] sm:$0xff]
        %v1600 = vld [vmem:[%s1594 + $0x28] sm:$0xff]
        %v1601 = vld [vmem:[%s1594 + $0x30] sm:$0xff]
        %v1602 = vld [vmem:[%s1594 + $0x38] sm:$0xff]
        %v1603 = vld [vmem:[%s1594 + $0x40] sm:$0xff]
        %v1604 = vld [vmem:[%s1594 + $0x48] sm:$0xff]
        %v1605 = vld [vmem:[%s1594 + $0x50] sm:$0xff]
        %v1606 = vld [vmem:[%s1594 + $0x58] sm:$0xff]
        %v1607 = vld [vmem:[%s1594 + $0x60] sm:$0xff]
        %v1608 = vld [vmem:[%s1594 + $0x68] sm:$0xff]
        %v1609 = vld [vmem:[%s1594 + $0x70] sm:$0xff]
        %v1610 = vld [vmem:[%s1594 + $0x78] sm:$0xff]
        %1611 = vmatprep.subr.mxu0 0.0
        %1612 = vmatpush1.msra.mxu0 %v1595
        %1613 = vmatprep.subr.mxu0 0.0
        %1614 = vmatpush1.msra.mxu0 %v1596
        %1615 = vmatprep.subr.mxu0 0.0
        %1616 = vmatpush1.msra.mxu0 %v1597
        %1617 = vmatprep.subr.mxu0 0.0
        %1618 = vmatpush1.msra.mxu0 %v1598
        %1619 = vmatprep.subr.mxu0 0.0
        %1620 = vmatpush1.msra.mxu0 %v1599
        %1621 = vmatprep.subr.mxu0 0.0
        %1622 = vmatpush1.msra.mxu0 %v1600
        %1623 = vmatprep.subr.mxu0 0.0
        %1624 = vmatpush1.msra.mxu0 %v1601
        %1625 = vmatprep.subr.mxu0 0.0
        %1626 = vmatpush1.msra.mxu0 %v1602
        %1627 = vmatprep.subr.mxu0 0.0
        %1628 = vmatpush1.msra.mxu0 %v1603
        %1629 = vmatprep.subr.mxu0 0.0
        %1630 = vmatpush1.msra.mxu0 %v1604
        %1631 = vmatprep.subr.mxu0 0.0
        %1632 = vmatpush1.msra.mxu0 %v1605
        %1633 = vmatprep.subr.mxu0 0.0
        %1634 = vmatpush1.msra.mxu0 %v1606
        %1635 = vmatprep.subr.mxu0 0.0
        %1636 = vmatpush1.msra.mxu0 %v1607
        %1637 = vmatprep.subr.mxu0 0.0
        %1638 = vmatpush1.msra.mxu0 %v1608
        %1639 = vmatprep.subr.mxu0 0.0
        %1640 = vmatpush1.msra.mxu0 %v1609
        %1641 = vmatprep.subr.mxu0 0.0
        %1642 = vmatpush1.msra.mxu0 %v1610
        %1643 = vmatprep.subr.mxu0 0.0
        %1644 = vmatpush1.msra.mxu0 0.0
        %1645 = vmatprep.subr.mxu0 0.0
        %1646 = vmatpush1.msra.mxu0 0.0
        %1647 = vmatprep.subr.mxu0 0.0
        %1648 = vmatpush1.msra.mxu0 0.0
        %1649 = vmatprep.subr.mxu0 0.0
        %1650 = vmatpush1.msra.mxu0 0.0
        %1651 = vmatprep.subr.mxu0 0.0
        %1652 = vmatpush1.msra.mxu0 0.0
        %1653 = vmatprep.subr.mxu0 0.0
        %1654 = vmatpush1.msra.mxu0 0.0
        %1655 = vmatprep.subr.mxu0 0.0
        %1656 = vmatpush1.msra.mxu0 0.0
        %1657 = vmatprep.subr.mxu0 0.0
        %1658 = vmatpush1.msra.mxu0 0.0
        %1659 = vmatprep.subr.mxu0 0.0
        %1660 = vmatpush1.msra.mxu0 0.0
        %1661 = vmatprep.subr.mxu0 0.0
        %1662 = vmatpush1.msra.mxu0 0.0
        %1663 = vmatprep.subr.mxu0 0.0
        %1664 = vmatpush1.msra.mxu0 0.0
        %1665 = vmatprep.subr.mxu0 0.0
        %1666 = vmatpush1.msra.mxu0 0.0
        %1667 = vmatprep.subr.mxu0 0.0
        %1668 = vmatpush1.msra.mxu0 0.0
        %1669 = vmatprep.subr.mxu0 0.0
        %1670 = vmatpush1.msra.mxu0 0.0
        %1671 = vmatprep.subr.mxu0 0.0
        %1672 = vmatpush1.msra.mxu0 0.0
        %1673 = vmatprep.subr.mxu0 0.0
        %1674 = vmatpush1.msra.mxu0 0.0
        %1675 = vmatprep.mubr.f32.mxu0 0.0
        %1676 = vmatmul.mubr.f32.gmra.mrb[0].mxu0 %v1562
        %v1677 = vpop.f32.mrb[0].mxu0
        %v1678 = vadd.f32 0.0, %v1677
        %v1679 = vpop.f32.mrb[0].mxu0
        %1680 = vmatprep.mubr.f32.mxu0 0.0
        %1681 = vmatmul.mubr.f32.gmra.mrb[0].mxu0 %v1563
        %v1682 = vpop.f32.mrb[0].mxu0
        %v1683 = vadd.f32 0.0, %v1682
        %v1684 = vpop.f32.mrb[0].mxu0
        %1685 = vmatprep.mubr.f32.mxu0 0.0
        %1686 = vmatmul.mubr.f32.gmra.mrb[0].mxu0 %v1564
        %v1687 = vpop.f32.mrb[0].mxu0
        %v1688 = vadd.f32 0.0, %v1687
        %v1689 = vpop.f32.mrb[0].mxu0
        %1690 = vmatprep.mubr.f32.mxu0 0.0
        %1691 = vmatmul.mubr.f32.gmra.mrb[0].mxu0 %v1565
        %v1692 = vpop.f32.mrb[0].mxu0
        %v1693 = vadd.f32 0.0, %v1692
        %v1694 = vpop.f32.mrb[0].mxu0
        %1695 = vmatprep.mubr.f32.mxu0 0.0
        %1696 = vmatmul.mubr.f32.gmra.mrb[0].mxu0 %v1566
        %v1697 = vpop.f32.mrb[0].mxu0
        %v1698 = vadd.f32 0.0, %v1697
        %v1699 = vpop.f32.mrb[0].mxu0
        %1700 = vmatprep.mubr.f32.mxu0 0.0
        %1701 = vmatmul.mubr.f32.gmra.mrb[0].mxu0 %v1567
        %v1702 = vpop.f32.mrb[0].mxu0
        %v1703 = vadd.f32 0.0, %v1702
        %v1704 = vpop.f32.mrb[0].mxu0
        %1705 = vmatprep.mubr.f32.mxu0 0.0
        %1706 = vmatmul.mubr.f32.gmra.mrb[0].mxu0 %v1568
        %v1707 = vpop.f32.mrb[0].mxu0
        %v1708 = vadd.f32 0.0, %v1707
        %v1709 = vpop.f32.mrb[0].mxu0
        %1710 = vmatprep.mubr.f32.mxu0 0.0
        %1711 = vmatmul.mubr.f32.gmra.mrb[0].mxu0 %v1569
        %v1712 = vpop.f32.mrb[0].mxu0
        %v1713 = vadd.f32 0.0, %v1712
        %v1714 = vpop.f32.mrb[0].mxu0
        %1715 = vmatprep.mubr.f32.mxu0 0.0
        %1716 = vmatmul.mubr.f32.gmra.mrb[0].mxu0 %v1570
        %v1717 = vpop.f32.mrb[0].mxu0
        %v1718 = vadd.f32 0.0, %v1717
        %v1719 = vpop.f32.mrb[0].mxu0
        %1720 = vmatprep.mubr.f32.mxu0 0.0
        %1721 = vmatmul.mubr.f32.gmra.mrb[0].mxu0 %v1571
        %v1722 = vpop.f32.mrb[0].mxu0
        %v1723 = vadd.f32 0.0, %v1722
        %v1724 = vpop.f32.mrb[0].mxu0
        %1725 = vmatprep.mubr.f32.mxu0 0.0
        %1726 = vmatmul.mubr.f32.gmra.mrb[0].mxu0 %v1572
        %v1727 = vpop.f32.mrb[0].mxu0
        %v1728 = vadd.f32 0.0, %v1727
        %v1729 = vpop.f32.mrb[0].mxu0
        %1730 = vmatprep.mubr.f32.mxu0 0.0
        %1731 = vmatmul.mubr.f32.gmra.mrb[0].mxu0 %v1573
        %v1732 = vpop.f32.mrb[0].mxu0
        %v1733 = vadd.f32 0.0, %v1732
        %v1734 = vpop.f32.mrb[0].mxu0
        %1735 = vmatprep.mubr.f32.mxu0 0.0
        %1736 = vmatmul.mubr.f32.gmra.mrb[0].mxu0 %v1574
        %v1737 = vpop.f32.mrb[0].mxu0
        %v1738 = vadd.f32 0.0, %v1737
        %v1739 = vpop.f32.mrb[0].mxu0
        %1740 = vmatprep.mubr.f32.mxu0 0.0
        %1741 = vmatmul.mubr.f32.gmra.mrb[0].mxu0 %v1575
        %v1742 = vpop.f32.mrb[0].mxu0
        %v1743 = vadd.f32 0.0, %v1742
        %v1744 = vpop.f32.mrb[0].mxu0
        %1745 = vmatprep.mubr.f32.mxu0 0.0
        %1746 = vmatmul.mubr.f32.gmra.mrb[0].mxu0 %v1576
        %v1747 = vpop.f32.mrb[0].mxu0
        %v1748 = vadd.f32 0.0, %v1747
        %v1749 = vpop.f32.mrb[0].mxu0
        %1750 = vmatprep.mubr.f32.mxu0 0.0
        %1751 = vmatmul.mubr.f32.gmra.mrb[0].mxu0 %v1577
        %v1752 = vpop.f32.mrb[0].mxu0
        %v1753 = vadd.f32 0.0, %v1752
        %v1754 = vpop.f32.mrb[0].mxu0
        %1755 = vmatprep.mubr.f32.mxu0 0.0
        %1756 = vmatmul.mubr.f32.gmra.mrb[0].mxu0 %v1578
        %v1757 = vpop.f32.mrb[0].mxu0
        %v1758 = vadd.f32 0.0, %v1757
        %v1759 = vpop.f32.mrb[0].mxu0
        %1760 = vmatprep.mubr.f32.mxu0 0.0
        %1761 = vmatmul.mubr.f32.gmra.mrb[0].mxu0 %v1579
        %v1762 = vpop.f32.mrb[0].mxu0
        %v1763 = vadd.f32 0.0, %v1762
        %v1764 = vpop.f32.mrb[0].mxu0
        %1765 = vmatprep.mubr.f32.mxu0 0.0
        %1766 = vmatmul.mubr.f32.gmra.mrb[0].mxu0 %v1580
        %v1767 = vpop.f32.mrb[0].mxu0
        %v1768 = vadd.f32 0.0, %v1767
        %v1769 = vpop.f32.mrb[0].mxu0
        %1770 = vmatprep.mubr.f32.mxu0 0.0
        %1771 = vmatmul.mubr.f32.gmra.mrb[0].mxu0 %v1581
        %v1772 = vpop.f32.mrb[0].mxu0
        %v1773 = vadd.f32 0.0, %v1772
        %v1774 = vpop.f32.mrb[0].mxu0
        %1775 = vmatprep.mubr.f32.mxu0 0.0
        %1776 = vmatmul.mubr.f32.gmra.mrb[0].mxu0 %v1582
        %v1777 = vpop.f32.mrb[0].mxu0
        %v1778 = vadd.f32 0.0, %v1777
        %v1779 = vpop.f32.mrb[0].mxu0
        %1780 = vmatprep.mubr.f32.mxu0 0.0
        %1781 = vmatmul.mubr.f32.gmra.mrb[0].mxu0 %v1583
        %v1782 = vpop.f32.mrb[0].mxu0
        %v1783 = vadd.f32 0.0, %v1782
        %v1784 = vpop.f32.mrb[0].mxu0
        %1785 = vmatprep.mubr.f32.mxu0 0.0
        %1786 = vmatmul.mubr.f32.gmra.mrb[0].mxu0 %v1584
        %v1787 = vpop.f32.mrb[0].mxu0
        %v1788 = vadd.f32 0.0, %v1787
        %v1789 = vpop.f32.mrb[0].mxu0
        %1790 = vmatprep.mubr.f32.mxu0 0.0
        %1791 = vmatmul.mubr.f32.gmra.mrb[0].mxu0 %v1585
        %v1792 = vpop.f32.mrb[0].mxu0
        %v1793 = vadd.f32 0.0, %v1792
        %v1794 = vpop.f32.mrb[0].mxu0
        %1795 = vmatprep.mubr.f32.mxu0 0.0
        %1796 = vmatmul.mubr.f32.gmra.mrb[0].mxu0 %v1586
        %v1797 = vpop.f32.mrb[0].mxu0
        %v1798 = vadd.f32 0.0, %v1797
        %v1799 = vpop.f32.mrb[0].mxu0
        %1800 = vmatprep.mubr.f32.mxu0 0.0
        %1801 = vmatmul.mubr.f32.gmra.mrb[0].mxu0 %v1587
        %v1802 = vpop.f32.mrb[0].mxu0
        %v1803 = vadd.f32 0.0, %v1802
        %v1804 = vpop.f32.mrb[0].mxu0
        %1805 = vmatprep.mubr.f32.mxu0 0.0
        %1806 = vmatmul.mubr.f32.gmra.mrb[0].mxu0 %v1588
        %v1807 = vpop.f32.mrb[0].mxu0
        %v1808 = vadd.f32 0.0, %v1807
        %v1809 = vpop.f32.mrb[0].mxu0
        %1810 = vmatprep.mubr.f32.mxu0 0.0
        %1811 = vmatmul.mubr.f32.gmra.mrb[0].mxu0 %v1589
        %v1812 = vpop.f32.mrb[0].mxu0
        %v1813 = vadd.f32 0.0, %v1812
        %v1814 = vpop.f32.mrb[0].mxu0
        %1815 = vmatprep.mubr.f32.mxu0 0.0
        %1816 = vmatmul.mubr.f32.gmra.mrb[0].mxu0 %v1590
        %v1817 = vpop.f32.mrb[0].mxu0
        %v1818 = vadd.f32 0.0, %v1817
        %v1819 = vpop.f32.mrb[0].mxu0
        %1820 = vmatprep.mubr.f32.mxu0 0.0
        %1821 = vmatmul.mubr.f32.gmra.mrb[0].mxu0 %v1591
        %v1822 = vpop.f32.mrb[0].mxu0
        %v1823 = vadd.f32 0.0, %v1822
        %v1824 = vpop.f32.mrb[0].mxu0
        %1825 = vmatprep.mubr.f32.mxu0 0.0
        %1826 = vmatmul.mubr.f32.gmra.mrb[0].mxu0 %v1592
        %v1827 = vpop.f32.mrb[0].mxu0
        %v1828 = vadd.f32 0.0, %v1827
        %v1829 = vpop.f32.mrb[0].mxu0
        %1830 = vmatprep.mubr.f32.mxu0 0.0
        %1831 = vmatmul.mubr.f32.gmra.mrb[0].mxu0 %v1593
        %v1832 = vpop.f32.mrb[0].mxu0
        %v1833 = vadd.f32 0.0, %v1832
        %v1834 = vpop.f32.mrb[0].mxu0
        %1835 = vdwg.mxu0
        %v1836 = vadd.f32 %v1530, %v1678
        %v1837 = vadd.f32 %v1531, %v1683
        %v1838 = vadd.f32 %v1532, %v1688
        %v1839 = vadd.f32 %v1533, %v1693
        %v1840 = vadd.f32 %v1534, %v1698
        %v1841 = vadd.f32 %v1535, %v1703
        %v1842 = vadd.f32 %v1536, %v1708
        %v1843 = vadd.f32 %v1537, %v1713
        %v1844 = vadd.f32 %v1538, %v1718
        %v1845 = vadd.f32 %v1539, %v1723
        %v1846 = vadd.f32 %v1540, %v1728
        %v1847 = vadd.f32 %v1541, %v1733
        %v1848 = vadd.f32 %v1542, %v1738
        %v1849 = vadd.f32 %v1543, %v1743
        %v1850 = vadd.f32 %v1544, %v1748
        %v1851 = vadd.f32 %v1545, %v1753
        %v1852 = vadd.f32 %v1546, %v1758
        %v1853 = vadd.f32 %v1547, %v1763
        %v1854 = vadd.f32 %v1548, %v1768
        %v1855 = vadd.f32 %v1549, %v1773
        %v1856 = vadd.f32 %v1550, %v1778
        %v1857 = vadd.f32 %v1551, %v1783
        %v1858 = vadd.f32 %v1552, %v1788
        %v1859 = vadd.f32 %v1553, %v1793
        %v1860 = vadd.f32 %v1554, %v1798
        %v1861 = vadd.f32 %v1555, %v1803
        %v1862 = vadd.f32 %v1556, %v1808
        %v1863 = vadd.f32 %v1557, %v1813
        %v1864 = vadd.f32 %v1558, %v1818
        %v1865 = vadd.f32 %v1559, %v1823
        %v1866 = vadd.f32 %v1560, %v1828
        %v1867 = vadd.f32 %v1561, %v1833
        %s1868 = scalar_lea.vmem [#allocation7], 640
        %v1869 = vld [vmem:[%s1868] sm:$0xff]
        %v1870 = vld [vmem:[%s1868 + $0x8] sm:$0xff]
        %v1871 = vld [vmem:[%s1868 + $0x10] sm:$0xff]
        %v1872 = vld [vmem:[%s1868 + $0x18] sm:$0xff]
        %v1873 = vld [vmem:[%s1868 + $0x20] sm:$0xff]
        %v1874 = vld [vmem:[%s1868 + $0x28] sm:$0xff]
        %v1875 = vld [vmem:[%s1868 + $0x30] sm:$0xff]
        %v1876 = vld [vmem:[%s1868 + $0x38] sm:$0xff]
        %v1877 = vld [vmem:[%s1868 + $0x40] sm:$0xff]
        %v1878 = vld [vmem:[%s1868 + $0x48] sm:$0xff]
        %v1879 = vld [vmem:[%s1868 + $0x50] sm:$0xff]
        %v1880 = vld [vmem:[%s1868 + $0x58] sm:$0xff]
        %v1881 = vld [vmem:[%s1868 + $0x60] sm:$0xff]
        %v1882 = vld [vmem:[%s1868 + $0x68] sm:$0xff]
        %v1883 = vld [vmem:[%s1868 + $0x70] sm:$0xff]
        %v1884 = vld [vmem:[%s1868 + $0x78] sm:$0xff]
        %1885 = vmatprep.subr.mxu0 0.0
        %1886 = vmatpush1.msra.mxu0 %v1869
        %1887 = vmatprep.subr.mxu0 0.0
        %1888 = vmatpush1.msra.mxu0 %v1870
        %1889 = vmatprep.subr.mxu0 0.0
        %1890 = vmatpush1.msra.mxu0 %v1871
        %1891 = vmatprep.subr.mxu0 0.0
        %1892 = vmatpush1.msra.mxu0 %v1872
        %1893 = vmatprep.subr.mxu0 0.0
        %1894 = vmatpush1.msra.mxu0 %v1873
        %1895 = vmatprep.subr.mxu0 0.0
        %1896 = vmatpush1.msra.mxu0 %v1874
        %1897 = vmatprep.subr.mxu0 0.0
        %1898 = vmatpush1.msra.mxu0 %v1875
        %1899 = vmatprep.subr.mxu0 0.0
        %1900 = vmatpush1.msra.mxu0 %v1876
        %1901 = vmatprep.subr.mxu0 0.0
        %1902 = vmatpush1.msra.mxu0 %v1877
        %1903 = vmatprep.subr.mxu0 0.0
        %1904 = vmatpush1.msra.mxu0 %v1878
        %1905 = vmatprep.subr.mxu0 0.0
        %1906 = vmatpush1.msra.mxu0 %v1879
        %1907 = vmatprep.subr.mxu0 0.0
        %1908 = vmatpush1.msra.mxu0 %v1880
        %1909 = vmatprep.subr.mxu0 0.0
        %1910 = vmatpush1.msra.mxu0 %v1881
        %1911 = vmatprep.subr.mxu0 0.0
        %1912 = vmatpush1.msra.mxu0 %v1882
        %1913 = vmatprep.subr.mxu0 0.0
        %1914 = vmatpush1.msra.mxu0 %v1883
        %1915 = vmatprep.subr.mxu0 0.0
        %1916 = vmatpush1.msra.mxu0 %v1884
        %1917 = vmatprep.subr.mxu0 0.0
        %1918 = vmatpush1.msra.mxu0 0.0
        %1919 = vmatprep.subr.mxu0 0.0
        %1920 = vmatpush1.msra.mxu0 0.0
        %1921 = vmatprep.subr.mxu0 0.0
        %1922 = vmatpush1.msra.mxu0 0.0
        %1923 = vmatprep.subr.mxu0 0.0
        %1924 = vmatpush1.msra.mxu0 0.0
        %1925 = vmatprep.subr.mxu0 0.0
        %1926 = vmatpush1.msra.mxu0 0.0
        %1927 = vmatprep.subr.mxu0 0.0
        %1928 = vmatpush1.msra.mxu0 0.0
        %1929 = vmatprep.subr.mxu0 0.0
        %1930 = vmatpush1.msra.mxu0 0.0
        %1931 = vmatprep.subr.mxu0 0.0
        %1932 = vmatpush1.msra.mxu0 0.0
        %1933 = vmatprep.subr.mxu0 0.0
        %1934 = vmatpush1.msra.mxu0 0.0
        %1935 = vmatprep.subr.mxu0 0.0
        %1936 = vmatpush1.msra.mxu0 0.0
        %1937 = vmatprep.subr.mxu0 0.0
        %1938 = vmatpush1.msra.mxu0 0.0
        %1939 = vmatprep.subr.mxu0 0.0
        %1940 = vmatpush1.msra.mxu0 0.0
        %1941 = vmatprep.subr.mxu0 0.0
        %1942 = vmatpush1.msra.mxu0 0.0
        %1943 = vmatprep.subr.mxu0 0.0
        %1944 = vmatpush1.msra.mxu0 0.0
        %1945 = vmatprep.subr.mxu0 0.0
        %1946 = vmatpush1.msra.mxu0 0.0
        %1947 = vmatprep.subr.mxu0 0.0
        %1948 = vmatpush1.msra.mxu0 0.0
        %1949 = vmatprep.mubr.f32.mxu0 0.0
        %1950 = vmatmul.mubr.f32.gmra.mrb[0].mxu0 %v465
        %v1951 = vpop.f32.mrb[0].mxu0
        %v1952 = vadd.f32 0.0, %v1951
        %v1953 = vpop.f32.mrb[0].mxu0
        %1954 = vmatprep.mubr.f32.mxu0 0.0
        %1955 = vmatmul.mubr.f32.gmra.mrb[0].mxu0 %v466
        %v1956 = vpop.f32.mrb[0].mxu0
        %v1957 = vadd.f32 0.0, %v1956
        %v1958 = vpop.f32.mrb[0].mxu0
        %1959 = vmatprep.mubr.f32.mxu0 0.0
        %1960 = vmatmul.mubr.f32.gmra.mrb[0].mxu0 %v467
        %v1961 = vpop.f32.mrb[0].mxu0
        %v1962 = vadd.f32 0.0, %v1961
        %v1963 = vpop.f32.mrb[0].mxu0
        %1964 = vmatprep.mubr.f32.mxu0 0.0
        %1965 = vmatmul.mubr.f32.gmra.mrb[0].mxu0 %v468
        %v1966 = vpop.f32.mrb[0].mxu0
        %v1967 = vadd.f32 0.0, %v1966
        %v1968 = vpop.f32.mrb[0].mxu0
        %1969 = vmatprep.mubr.f32.mxu0 0.0
        %1970 = vmatmul.mubr.f32.gmra.mrb[0].mxu0 %v469
        %v1971 = vpop.f32.mrb[0].mxu0
        %v1972 = vadd.f32 0.0, %v1971
        %v1973 = vpop.f32.mrb[0].mxu0
        %1974 = vmatprep.mubr.f32.mxu0 0.0
        %1975 = vmatmul.mubr.f32.gmra.mrb[0].mxu0 %v470
        %v1976 = vpop.f32.mrb[0].mxu0
        %v1977 = vadd.f32 0.0, %v1976
        %v1978 = vpop.f32.mrb[0].mxu0
        %1979 = vmatprep.mubr.f32.mxu0 0.0
        %1980 = vmatmul.mubr.f32.gmra.mrb[0].mxu0 %v471
        %v1981 = vpop.f32.mrb[0].mxu0
        %v1982 = vadd.f32 0.0, %v1981
        %v1983 = vpop.f32.mrb[0].mxu0
        %1984 = vmatprep.mubr.f32.mxu0 0.0
        %1985 = vmatmul.mubr.f32.gmra.mrb[0].mxu0 %v472
        %v1986 = vpop.f32.mrb[0].mxu0
        %v1987 = vadd.f32 0.0, %v1986
        %v1988 = vpop.f32.mrb[0].mxu0
        %1989 = vmatprep.mubr.f32.mxu0 0.0
        %1990 = vmatmul.mubr.f32.gmra.mrb[0].mxu0 %v473
        %v1991 = vpop.f32.mrb[0].mxu0
        %v1992 = vadd.f32 0.0, %v1991
        %v1993 = vpop.f32.mrb[0].mxu0
        %1994 = vmatprep.mubr.f32.mxu0 0.0
        %1995 = vmatmul.mubr.f32.gmra.mrb[0].mxu0 %v474
        %v1996 = vpop.f32.mrb[0].mxu0
        %v1997 = vadd.f32 0.0, %v1996
        %v1998 = vpop.f32.mrb[0].mxu0
        %1999 = vmatprep.mubr.f32.mxu0 0.0
        %2000 = vmatmul.mubr.f32.gmra.mrb[0].mxu0 %v475
        %v2001 = vpop.f32.mrb[0].mxu0
        %v2002 = vadd.f32 0.0, %v2001
        %v2003 = vpop.f32.mrb[0].mxu0
        %2004 = vmatprep.mubr.f32.mxu0 0.0
        %2005 = vmatmul.mubr.f32.gmra.mrb[0].mxu0 %v476
        %v2006 = vpop.f32.mrb[0].mxu0
        %v2007 = vadd.f32 0.0, %v2006
        %v2008 = vpop.f32.mrb[0].mxu0
        %2009 = vmatprep.mubr.f32.mxu0 0.0
        %2010 = vmatmul.mubr.f32.gmra.mrb[0].mxu0 %v477
        %v2011 = vpop.f32.mrb[0].mxu0
        %v2012 = vadd.f32 0.0, %v2011
        %v2013 = vpop.f32.mrb[0].mxu0
        %2014 = vmatprep.mubr.f32.mxu0 0.0
        %2015 = vmatmul.mubr.f32.gmra.mrb[0].mxu0 %v478
        %v2016 = vpop.f32.mrb[0].mxu0
        %v2017 = vadd.f32 0.0, %v2016
        %v2018 = vpop.f32.mrb[0].mxu0
        %2019 = vmatprep.mubr.f32.mxu0 0.0
        %2020 = vmatmul.mubr.f32.gmra.mrb[0].mxu0 %v479
        %v2021 = vpop.f32.mrb[0].mxu0
        %v2022 = vadd.f32 0.0, %v2021
        %v2023 = vpop.f32.mrb[0].mxu0
        %2024 = vmatprep.mubr.f32.mxu0 0.0
        %2025 = vmatmul.mubr.f32.gmra.mrb[0].mxu0 %v480
        %v2026 = vpop.f32.mrb[0].mxu0
        %v2027 = vadd.f32 0.0, %v2026
        %v2028 = vpop.f32.mrb[0].mxu0
        %2029 = vmatprep.mubr.f32.mxu0 0.0
        %2030 = vmatmul.mubr.f32.gmra.mrb[0].mxu0 %v481
        %v2031 = vpop.f32.mrb[0].mxu0
        %v2032 = vadd.f32 0.0, %v2031
        %v2033 = vpop.f32.mrb[0].mxu0
        %2034 = vmatprep.mubr.f32.mxu0 0.0
        %2035 = vmatmul.mubr.f32.gmra.mrb[0].mxu0 %v482
        %v2036 = vpop.f32.mrb[0].mxu0
        %v2037 = vadd.f32 0.0, %v2036
        %v2038 = vpop.f32.mrb[0].mxu0
        %2039 = vmatprep.mubr.f32.mxu0 0.0
        %2040 = vmatmul.mubr.f32.gmra.mrb[0].mxu0 %v483
        %v2041 = vpop.f32.mrb[0].mxu0
        %v2042 = vadd.f32 0.0, %v2041
        %v2043 = vpop.f32.mrb[0].mxu0
        %2044 = vmatprep.mubr.f32.mxu0 0.0
        %2045 = vmatmul.mubr.f32.gmra.mrb[0].mxu0 %v484
        %v2046 = vpop.f32.mrb[0].mxu0
        %v2047 = vadd.f32 0.0, %v2046
        %v2048 = vpop.f32.mrb[0].mxu0
        %2049 = vmatprep.mubr.f32.mxu0 0.0
        %2050 = vmatmul.mubr.f32.gmra.mrb[0].mxu0 %v485
        %v2051 = vpop.f32.mrb[0].mxu0
        %v2052 = vadd.f32 0.0, %v2051
        %v2053 = vpop.f32.mrb[0].mxu0
        %2054 = vmatprep.mubr.f32.mxu0 0.0
        %2055 = vmatmul.mubr.f32.gmra.mrb[0].mxu0 %v486
        %v2056 = vpop.f32.mrb[0].mxu0
        %v2057 = vadd.f32 0.0, %v2056
        %v2058 = vpop.f32.mrb[0].mxu0
        %2059 = vmatprep.mubr.f32.mxu0 0.0
        %2060 = vmatmul.mubr.f32.gmra.mrb[0].mxu0 %v487
        %v2061 = vpop.f32.mrb[0].mxu0
        %v2062 = vadd.f32 0.0, %v2061
        %v2063 = vpop.f32.mrb[0].mxu0
        %2064 = vmatprep.mubr.f32.mxu0 0.0
        %2065 = vmatmul.mubr.f32.gmra.mrb[0].mxu0 %v488
        %v2066 = vpop.f32.mrb[0].mxu0
        %v2067 = vadd.f32 0.0, %v2066
        %v2068 = vpop.f32.mrb[0].mxu0
        %2069 = vmatprep.mubr.f32.mxu0 0.0
        %2070 = vmatmul.mubr.f32.gmra.mrb[0].mxu0 %v489
        %v2071 = vpop.f32.mrb[0].mxu0
        %v2072 = vadd.f32 0.0, %v2071
        %v2073 = vpop.f32.mrb[0].mxu0
        %2074 = vmatprep.mubr.f32.mxu0 0.0
        %2075 = vmatmul.mubr.f32.gmra.mrb[0].mxu0 %v490
        %v2076 = vpop.f32.mrb[0].mxu0
        %v2077 = vadd.f32 0.0, %v2076
        %v2078 = vpop.f32.mrb[0].mxu0
        %2079 = vmatprep.mubr.f32.mxu0 0.0
        %2080 = vmatmul.mubr.f32.gmra.mrb[0].mxu0 %v491
        %v2081 = vpop.f32.mrb[0].mxu0
        %v2082 = vadd.f32 0.0, %v2081
        %v2083 = vpop.f32.mrb[0].mxu0
        %2084 = vmatprep.mubr.f32.mxu0 0.0
        %2085 = vmatmul.mubr.f32.gmra.mrb[0].mxu0 %v492
        %v2086 = vpop.f32.mrb[0].mxu0
        %v2087 = vadd.f32 0.0, %v2086
        %v2088 = vpop.f32.mrb[0].mxu0
        %2089 = vmatprep.mubr.f32.mxu0 0.0
        %2090 = vmatmul.mubr.f32.gmra.mrb[0].mxu0 %v493
        %v2091 = vpop.f32.mrb[0].mxu0
        %v2092 = vadd.f32 0.0, %v2091
        %v2093 = vpop.f32.mrb[0].mxu0
        %2094 = vmatprep.mubr.f32.mxu0 0.0
        %2095 = vmatmul.mubr.f32.gmra.mrb[0].mxu0 %v494
        %v2096 = vpop.f32.mrb[0].mxu0
        %v2097 = vadd.f32 0.0, %v2096
        %v2098 = vpop.f32.mrb[0].mxu0
        %2099 = vmatprep.mubr.f32.mxu0 0.0
        %2100 = vmatmul.mubr.f32.gmra.mrb[0].mxu0 %v495
        %v2101 = vpop.f32.mrb[0].mxu0
        %v2102 = vadd.f32 0.0, %v2101
        %v2103 = vpop.f32.mrb[0].mxu0
        %2104 = vmatprep.mubr.f32.mxu0 0.0
        %2105 = vmatmul.mubr.f32.gmra.mrb[0].mxu0 %v496
        %v2106 = vpop.f32.mrb[0].mxu0
        %v2107 = vadd.f32 0.0, %v2106
        %v2108 = vpop.f32.mrb[0].mxu0
        %2109 = vdwg.mxu0
        %v2110 = vadd.f32 %v1836, %v1952
        %v2111 = vadd.f32 %v1837, %v1957
        %v2112 = vadd.f32 %v1838, %v1962
        %v2113 = vadd.f32 %v1839, %v1967
        %v2114 = vadd.f32 %v1840, %v1972
        %v2115 = vadd.f32 %v1841, %v1977
        %v2116 = vadd.f32 %v1842, %v1982
        %v2117 = vadd.f32 %v1843, %v1987
        %v2118 = vadd.f32 %v1844, %v1992
        %v2119 = vadd.f32 %v1845, %v1997
        %v2120 = vadd.f32 %v1846, %v2002
        %v2121 = vadd.f32 %v1847, %v2007
        %v2122 = vadd.f32 %v1848, %v2012
        %v2123 = vadd.f32 %v1849, %v2017
        %v2124 = vadd.f32 %v1850, %v2022
        %v2125 = vadd.f32 %v1851, %v2027
        %v2126 = vadd.f32 %v1852, %v2032
        %v2127 = vadd.f32 %v1853, %v2037
        %v2128 = vadd.f32 %v1854, %v2042
        %v2129 = vadd.f32 %v1855, %v2047
        %v2130 = vadd.f32 %v1856, %v2052
        %v2131 = vadd.f32 %v1857, %v2057
        %v2132 = vadd.f32 %v1858, %v2062
        %v2133 = vadd.f32 %v1859, %v2067
        %v2134 = vadd.f32 %v1860, %v2072
        %v2135 = vadd.f32 %v1861, %v2077
        %v2136 = vadd.f32 %v1862, %v2082
        %v2137 = vadd.f32 %v1863, %v2087
        %v2138 = vadd.f32 %v1864, %v2092
        %v2139 = vadd.f32 %v1865, %v2097
        %v2140 = vadd.f32 %v1866, %v2102
        %v2141 = vadd.f32 %v1867, %v2107
        %s2142 = scalar_lea.vmem [#allocation7], 768
        %v2143 = vld [vmem:[%s2142] sm:$0xff]
        %v2144 = vld [vmem:[%s2142 + $0x8] sm:$0xff]
        %v2145 = vld [vmem:[%s2142 + $0x10] sm:$0xff]
        %v2146 = vld [vmem:[%s2142 + $0x18] sm:$0xff]
        %v2147 = vld [vmem:[%s2142 + $0x20] sm:$0xff]
        %v2148 = vld [vmem:[%s2142 + $0x28] sm:$0xff]
        %v2149 = vld [vmem:[%s2142 + $0x30] sm:$0xff]
        %v2150 = vld [vmem:[%s2142 + $0x38] sm:$0xff]
        %v2151 = vld [vmem:[%s2142 + $0x40] sm:$0xff]
        %v2152 = vld [vmem:[%s2142 + $0x48] sm:$0xff]
        %v2153 = vld [vmem:[%s2142 + $0x50] sm:$0xff]
        %v2154 = vld [vmem:[%s2142 + $0x58] sm:$0xff]
        %v2155 = vld [vmem:[%s2142 + $0x60] sm:$0xff]
        %v2156 = vld [vmem:[%s2142 + $0x68] sm:$0xff]
        %v2157 = vld [vmem:[%s2142 + $0x70] sm:$0xff]
        %v2158 = vld [vmem:[%s2142 + $0x78] sm:$0xff]
        %2159 = vmatprep.subr.mxu0 0.0
        %2160 = vmatpush1.msra.mxu0 %v2143
        %2161 = vmatprep.subr.mxu0 0.0
        %2162 = vmatpush1.msra.mxu0 %v2144
        %2163 = vmatprep.subr.mxu0 0.0
        %2164 = vmatpush1.msra.mxu0 %v2145
        %2165 = vmatprep.subr.mxu0 0.0
        %2166 = vmatpush1.msra.mxu0 %v2146
        %2167 = vmatprep.subr.mxu0 0.0
        %2168 = vmatpush1.msra.mxu0 %v2147
        %2169 = vmatprep.subr.mxu0 0.0
        %2170 = vmatpush1.msra.mxu0 %v2148
        %2171 = vmatprep.subr.mxu0 0.0
        %2172 = vmatpush1.msra.mxu0 %v2149
        %2173 = vmatprep.subr.mxu0 0.0
        %2174 = vmatpush1.msra.mxu0 %v2150
        %2175 = vmatprep.subr.mxu0 0.0
        %2176 = vmatpush1.msra.mxu0 %v2151
        %2177 = vmatprep.subr.mxu0 0.0
        %2178 = vmatpush1.msra.mxu0 %v2152
        %2179 = vmatprep.subr.mxu0 0.0
        %2180 = vmatpush1.msra.mxu0 %v2153
        %2181 = vmatprep.subr.mxu0 0.0
        %2182 = vmatpush1.msra.mxu0 %v2154
        %2183 = vmatprep.subr.mxu0 0.0
        %2184 = vmatpush1.msra.mxu0 %v2155
        %2185 = vmatprep.subr.mxu0 0.0
        %2186 = vmatpush1.msra.mxu0 %v2156
        %2187 = vmatprep.subr.mxu0 0.0
        %2188 = vmatpush1.msra.mxu0 %v2157
        %2189 = vmatprep.subr.mxu0 0.0
        %2190 = vmatpush1.msra.mxu0 %v2158
        %2191 = vmatprep.subr.mxu0 0.0
        %2192 = vmatpush1.msra.mxu0 0.0
        %2193 = vmatprep.subr.mxu0 0.0
        %2194 = vmatpush1.msra.mxu0 0.0
        %2195 = vmatprep.subr.mxu0 0.0
        %2196 = vmatpush1.msra.mxu0 0.0
        %2197 = vmatprep.subr.mxu0 0.0
        %2198 = vmatpush1.msra.mxu0 0.0
        %2199 = vmatprep.subr.mxu0 0.0
        %2200 = vmatpush1.msra.mxu0 0.0
        %2201 = vmatprep.subr.mxu0 0.0
        %2202 = vmatpush1.msra.mxu0 0.0
        %2203 = vmatprep.subr.mxu0 0.0
        %2204 = vmatpush1.msra.mxu0 0.0
        %2205 = vmatprep.subr.mxu0 0.0
        %2206 = vmatpush1.msra.mxu0 0.0
        %2207 = vmatprep.subr.mxu0 0.0
        %2208 = vmatpush1.msra.mxu0 0.0
        %2209 = vmatprep.subr.mxu0 0.0
        %2210 = vmatpush1.msra.mxu0 0.0
        %2211 = vmatprep.subr.mxu0 0.0
        %2212 = vmatpush1.msra.mxu0 0.0
        %2213 = vmatprep.subr.mxu0 0.0
        %2214 = vmatpush1.msra.mxu0 0.0
        %2215 = vmatprep.subr.mxu0 0.0
        %2216 = vmatpush1.msra.mxu0 0.0
        %2217 = vmatprep.subr.mxu0 0.0
        %2218 = vmatpush1.msra.mxu0 0.0
        %2219 = vmatprep.subr.mxu0 0.0
        %2220 = vmatpush1.msra.mxu0 0.0
        %2221 = vmatprep.subr.mxu0 0.0
        %2222 = vmatpush1.msra.mxu0 0.0
        %2223 = vmatprep.mubr.f32.mxu0 0.0
        %2224 = vmatmul.mubr.f32.gmra.mrb[0].mxu0 %v431
        %v2225 = vpop.f32.mrb[0].mxu0
        %v2226 = vadd.f32 0.0, %v2225
        %v2227 = vpop.f32.mrb[0].mxu0
        %2228 = vmatprep.mubr.f32.mxu0 0.0
        %2229 = vmatmul.mubr.f32.gmra.mrb[0].mxu0 %v432
        %v2230 = vpop.f32.mrb[0].mxu0
        %v2231 = vadd.f32 0.0, %v2230
        %v2232 = vpop.f32.mrb[0].mxu0
        %2233 = vmatprep.mubr.f32.mxu0 0.0
        %2234 = vmatmul.mubr.f32.gmra.mrb[0].mxu0 %v433
        %v2235 = vpop.f32.mrb[0].mxu0
        %v2236 = vadd.f32 0.0, %v2235
        %v2237 = vpop.f32.mrb[0].mxu0
        %2238 = vmatprep.mubr.f32.mxu0 0.0
        %2239 = vmatmul.mubr.f32.gmra.mrb[0].mxu0 %v434
        %v2240 = vpop.f32.mrb[0].mxu0
        %v2241 = vadd.f32 0.0, %v2240
        %v2242 = vpop.f32.mrb[0].mxu0
        %2243 = vmatprep.mubr.f32.mxu0 0.0
        %2244 = vmatmul.mubr.f32.gmra.mrb[0].mxu0 %v435
        %v2245 = vpop.f32.mrb[0].mxu0
        %v2246 = vadd.f32 0.0, %v2245
        %v2247 = vpop.f32.mrb[0].mxu0
        %2248 = vmatprep.mubr.f32.mxu0 0.0
        %2249 = vmatmul.mubr.f32.gmra.mrb[0].mxu0 %v436
        %v2250 = vpop.f32.mrb[0].mxu0
        %v2251 = vadd.f32 0.0, %v2250
        %v2252 = vpop.f32.mrb[0].mxu0
        %2253 = vmatprep.mubr.f32.mxu0 0.0
        %2254 = vmatmul.mubr.f32.gmra.mrb[0].mxu0 %v437
        %v2255 = vpop.f32.mrb[0].mxu0
        %v2256 = vadd.f32 0.0, %v2255
        %v2257 = vpop.f32.mrb[0].mxu0
        %2258 = vmatprep.mubr.f32.mxu0 0.0
        %2259 = vmatmul.mubr.f32.gmra.mrb[0].mxu0 %v438
        %v2260 = vpop.f32.mrb[0].mxu0
        %v2261 = vadd.f32 0.0, %v2260
        %v2262 = vpop.f32.mrb[0].mxu0
        %2263 = vmatprep.mubr.f32.mxu0 0.0
        %2264 = vmatmul.mubr.f32.gmra.mrb[0].mxu0 %v439
        %v2265 = vpop.f32.mrb[0].mxu0
        %v2266 = vadd.f32 0.0, %v2265
        %v2267 = vpop.f32.mrb[0].mxu0
        %2268 = vmatprep.mubr.f32.mxu0 0.0
        %2269 = vmatmul.mubr.f32.gmra.mrb[0].mxu0 %v440
        %v2270 = vpop.f32.mrb[0].mxu0
        %v2271 = vadd.f32 0.0, %v2270
        %v2272 = vpop.f32.mrb[0].mxu0
        %2273 = vmatprep.mubr.f32.mxu0 0.0
        %2274 = vmatmul.mubr.f32.gmra.mrb[0].mxu0 %v441
        %v2275 = vpop.f32.mrb[0].mxu0
        %v2276 = vadd.f32 0.0, %v2275
        %v2277 = vpop.f32.mrb[0].mxu0
        %2278 = vmatprep.mubr.f32.mxu0 0.0
        %2279 = vmatmul.mubr.f32.gmra.mrb[0].mxu0 %v442
        %v2280 = vpop.f32.mrb[0].mxu0
        %v2281 = vadd.f32 0.0, %v2280
        %v2282 = vpop.f32.mrb[0].mxu0
        %2283 = vmatprep.mubr.f32.mxu0 0.0
        %2284 = vmatmul.mubr.f32.gmra.mrb[0].mxu0 %v443
        %v2285 = vpop.f32.mrb[0].mxu0
        %v2286 = vadd.f32 0.0, %v2285
        %v2287 = vpop.f32.mrb[0].mxu0
        %2288 = vmatprep.mubr.f32.mxu0 0.0
        %2289 = vmatmul.mubr.f32.gmra.mrb[0].mxu0 %v444
        %v2290 = vpop.f32.mrb[0].mxu0
        %v2291 = vadd.f32 0.0, %v2290
        %v2292 = vpop.f32.mrb[0].mxu0
        %2293 = vmatprep.mubr.f32.mxu0 0.0
        %2294 = vmatmul.mubr.f32.gmra.mrb[0].mxu0 %v445
        %v2295 = vpop.f32.mrb[0].mxu0
        %v2296 = vadd.f32 0.0, %v2295
        %v2297 = vpop.f32.mrb[0].mxu0
        %2298 = vmatprep.mubr.f32.mxu0 0.0
        %2299 = vmatmul.mubr.f32.gmra.mrb[0].mxu0 %v446
        %v2300 = vpop.f32.mrb[0].mxu0
        %v2301 = vadd.f32 0.0, %v2300
        %v2302 = vpop.f32.mrb[0].mxu0
        %2303 = vmatprep.mubr.f32.mxu0 0.0
        %2304 = vmatmul.mubr.f32.gmra.mrb[0].mxu0 %v447
        %v2305 = vpop.f32.mrb[0].mxu0
        %v2306 = vadd.f32 0.0, %v2305
        %v2307 = vpop.f32.mrb[0].mxu0
        %2308 = vmatprep.mubr.f32.mxu0 0.0
        %2309 = vmatmul.mubr.f32.gmra.mrb[0].mxu0 %v448
        %v2310 = vpop.f32.mrb[0].mxu0
        %v2311 = vadd.f32 0.0, %v2310
        %v2312 = vpop.f32.mrb[0].mxu0
        %2313 = vmatprep.mubr.f32.mxu0 0.0
        %2314 = vmatmul.mubr.f32.gmra.mrb[0].mxu0 %v449
        %v2315 = vpop.f32.mrb[0].mxu0
        %v2316 = vadd.f32 0.0, %v2315
        %v2317 = vpop.f32.mrb[0].mxu0
        %2318 = vmatprep.mubr.f32.mxu0 0.0
        %2319 = vmatmul.mubr.f32.gmra.mrb[0].mxu0 %v450
        %v2320 = vpop.f32.mrb[0].mxu0
        %v2321 = vadd.f32 0.0, %v2320
        %v2322 = vpop.f32.mrb[0].mxu0
        %2323 = vmatprep.mubr.f32.mxu0 0.0
        %2324 = vmatmul.mubr.f32.gmra.mrb[0].mxu0 %v451
        %v2325 = vpop.f32.mrb[0].mxu0
        %v2326 = vadd.f32 0.0, %v2325
        %v2327 = vpop.f32.mrb[0].mxu0
        %2328 = vmatprep.mubr.f32.mxu0 0.0
        %2329 = vmatmul.mubr.f32.gmra.mrb[0].mxu0 %v452
        %v2330 = vpop.f32.mrb[0].mxu0
        %v2331 = vadd.f32 0.0, %v2330
        %v2332 = vpop.f32.mrb[0].mxu0
        %2333 = vmatprep.mubr.f32.mxu0 0.0
        %2334 = vmatmul.mubr.f32.gmra.mrb[0].mxu0 %v453
        %v2335 = vpop.f32.mrb[0].mxu0
        %v2336 = vadd.f32 0.0, %v2335
        %v2337 = vpop.f32.mrb[0].mxu0
        %2338 = vmatprep.mubr.f32.mxu0 0.0
        %2339 = vmatmul.mubr.f32.gmra.mrb[0].mxu0 %v454
        %v2340 = vpop.f32.mrb[0].mxu0
        %v2341 = vadd.f32 0.0, %v2340
        %v2342 = vpop.f32.mrb[0].mxu0
        %2343 = vmatprep.mubr.f32.mxu0 0.0
        %2344 = vmatmul.mubr.f32.gmra.mrb[0].mxu0 %v455
        %v2345 = vpop.f32.mrb[0].mxu0
        %v2346 = vadd.f32 0.0, %v2345
        %v2347 = vpop.f32.mrb[0].mxu0
        %2348 = vmatprep.mubr.f32.mxu0 0.0
        %2349 = vmatmul.mubr.f32.gmra.mrb[0].mxu0 %v456
        %v2350 = vpop.f32.mrb[0].mxu0
        %v2351 = vadd.f32 0.0, %v2350
        %v2352 = vpop.f32.mrb[0].mxu0
        %2353 = vmatprep.mubr.f32.mxu0 0.0
        %2354 = vmatmul.mubr.f32.gmra.mrb[0].mxu0 %v457
        %v2355 = vpop.f32.mrb[0].mxu0
        %v2356 = vadd.f32 0.0, %v2355
        %v2357 = vpop.f32.mrb[0].mxu0
        %2358 = vmatprep.mubr.f32.mxu0 0.0
        %2359 = vmatmul.mubr.f32.gmra.mrb[0].mxu0 %v458
        %v2360 = vpop.f32.mrb[0].mxu0
        %v2361 = vadd.f32 0.0, %v2360
        %v2362 = vpop.f32.mrb[0].mxu0
        %2363 = vmatprep.mubr.f32.mxu0 0.0
        %2364 = vmatmul.mubr.f32.gmra.mrb[0].mxu0 %v459
        %v2365 = vpop.f32.mrb[0].mxu0
        %v2366 = vadd.f32 0.0, %v2365
        %v2367 = vpop.f32.mrb[0].mxu0
        %2368 = vmatprep.mubr.f32.mxu0 0.0
        %2369 = vmatmul.mubr.f32.gmra.mrb[0].mxu0 %v460
        %v2370 = vpop.f32.mrb[0].mxu0
        %v2371 = vadd.f32 0.0, %v2370
        %v2372 = vpop.f32.mrb[0].mxu0
        %2373 = vmatprep.mubr.f32.mxu0 0.0
        %2374 = vmatmul.mubr.f32.gmra.mrb[0].mxu0 %v461
        %v2375 = vpop.f32.mrb[0].mxu0
        %v2376 = vadd.f32 0.0, %v2375
        %v2377 = vpop.f32.mrb[0].mxu0
        %2378 = vmatprep.mubr.f32.mxu0 0.0
        %2379 = vmatmul.mubr.f32.gmra.mrb[0].mxu0 %v462
        %v2380 = vpop.f32.mrb[0].mxu0
        %v2381 = vadd.f32 0.0, %v2380
        %v2382 = vpop.f32.mrb[0].mxu0
        %2383 = vdwg.mxu0
        %v2384 = vadd.f32 %v2110, %v2226
        %v2385 = vadd.f32 %v2111, %v2231
        %v2386 = vadd.f32 %v2112, %v2236
        %v2387 = vadd.f32 %v2113, %v2241
        %v2388 = vadd.f32 %v2114, %v2246
        %v2389 = vadd.f32 %v2115, %v2251
        %v2390 = vadd.f32 %v2116, %v2256
        %v2391 = vadd.f32 %v2117, %v2261
        %v2392 = vadd.f32 %v2118, %v2266
        %v2393 = vadd.f32 %v2119, %v2271
        %v2394 = vadd.f32 %v2120, %v2276
        %v2395 = vadd.f32 %v2121, %v2281
        %v2396 = vadd.f32 %v2122, %v2286
        %v2397 = vadd.f32 %v2123, %v2291
        %v2398 = vadd.f32 %v2124, %v2296
        %v2399 = vadd.f32 %v2125, %v2301
        %v2400 = vadd.f32 %v2126, %v2306
        %v2401 = vadd.f32 %v2127, %v2311
        %v2402 = vadd.f32 %v2128, %v2316
        %v2403 = vadd.f32 %v2129, %v2321
        %v2404 = vadd.f32 %v2130, %v2326
        %v2405 = vadd.f32 %v2131, %v2331
        %v2406 = vadd.f32 %v2132, %v2336
        %v2407 = vadd.f32 %v2133, %v2341
        %v2408 = vadd.f32 %v2134, %v2346
        %v2409 = vadd.f32 %v2135, %v2351
        %v2410 = vadd.f32 %v2136, %v2356
        %v2411 = vadd.f32 %v2137, %v2361
        %v2412 = vadd.f32 %v2138, %v2366
        %v2413 = vadd.f32 %v2139, %v2371
        %v2414 = vadd.f32 %v2140, %v2376
        %v2415 = vadd.f32 %v2141, %v2381
        %s2416 = scalar_lea.vmem [#allocation2], 64
        %v2417 = vld [vmem:[%s2416 + $0x8] sm:$0xff]
        %v2418 = vld [vmem:[%s2416 + $0x10] sm:$0xff]
        %v2419 = vld [vmem:[%s2416 + $0x28] sm:$0xff]
        %v2420 = vld [vmem:[%s2416 + $0x30] sm:$0xff]
        %v2421 = vld [vmem:[%s2416 + $0x48] sm:$0xff]
        %v2422 = vld [vmem:[%s2416 + $0x50] sm:$0xff]
        %v2423 = vld [vmem:[%s2416 + $0x68] sm:$0xff]
        %v2424 = vld [vmem:[%s2416 + $0x70] sm:$0xff]
        %v2425 = vld [vmem:[%s2416 + $0x88] sm:$0xff]
        %v2426 = vld [vmem:[%s2416 + $0x90] sm:$0xff]
        %v2427 = vld [vmem:[%s2416 + $0xa8] sm:$0xff]
        %v2428 = vld [vmem:[%s2416 + $0xb0] sm:$0xff]
        %v2429 = vld [vmem:[%s2416 + $0xc8] sm:$0xff]
        %v2430 = vld [vmem:[%s2416 + $0xd0] sm:$0xff]
        %v2431 = vld [vmem:[%s2416 + $0xe8] sm:$0xff]
        %v2432 = vld [vmem:[%s2416 + $0xf0] sm:$0xff]
        %v2433 = vld [vmem:[%s2416 + $0x108] sm:$0xff]
        %v2434 = vld [vmem:[%s2416 + $0x110] sm:$0xff]
        %v2435 = vld [vmem:[%s2416 + $0x128] sm:$0xff]
        %v2436 = vld [vmem:[%s2416 + $0x130] sm:$0xff]
        %v2437 = vld [vmem:[%s2416 + $0x148] sm:$0xff]
        %v2438 = vld [vmem:[%s2416 + $0x150] sm:$0xff]
        %v2439 = vld [vmem:[%s2416 + $0x168] sm:$0xff]
        %v2440 = vld [vmem:[%s2416 + $0x170] sm:$0xff]
        %v2441 = vld [vmem:[%s2416 + $0x188] sm:$0xff]
        %v2442 = vld [vmem:[%s2416 + $0x190] sm:$0xff]
        %v2443 = vld [vmem:[%s2416 + $0x1a8] sm:$0xff]
        %v2444 = vld [vmem:[%s2416 + $0x1b0] sm:$0xff]
        %v2445 = vld [vmem:[%s2416 + $0x1c8] sm:$0xff]
        %v2446 = vld [vmem:[%s2416 + $0x1d0] sm:$0xff]
        %v2447 = vld [vmem:[%s2416 + $0x1e8] sm:$0xff]
        %v2448 = vld [vmem:[%s2416 + $0x1f0] sm:$0xff]
        %s2449 = scalar_lea.vmem [#allocation7], 896
        %v2450 = vld [vmem:[%s2449] sm:$0xff]
        %v2451 = vld [vmem:[%s2449 + $0x8] sm:$0xff]
        %v2452 = vld [vmem:[%s2449 + $0x10] sm:$0xff]
        %v2453 = vld [vmem:[%s2449 + $0x18] sm:$0xff]
        %v2454 = vld [vmem:[%s2449 + $0x20] sm:$0xff]
        %v2455 = vld [vmem:[%s2449 + $0x28] sm:$0xff]
        %v2456 = vld [vmem:[%s2449 + $0x30] sm:$0xff]
        %v2457 = vld [vmem:[%s2449 + $0x38] sm:$0xff]
        %v2458 = vld [vmem:[%s2449 + $0x40] sm:$0xff]
        %v2459 = vld [vmem:[%s2449 + $0x48] sm:$0xff]
        %v2460 = vld [vmem:[%s2449 + $0x50] sm:$0xff]
        %v2461 = vld [vmem:[%s2449 + $0x58] sm:$0xff]
        %v2462 = vld [vmem:[%s2449 + $0x60] sm:$0xff]
        %v2463 = vld [vmem:[%s2449 + $0x68] sm:$0xff]
        %v2464 = vld [vmem:[%s2449 + $0x70] sm:$0xff]
        %v2465 = vld [vmem:[%s2449 + $0x78] sm:$0xff]
        %2466 = vmatprep.subr.mxu0 0.0
        %2467 = vmatpush1.msra.mxu0 %v2450
        %2468 = vmatprep.subr.mxu0 0.0
        %2469 = vmatpush1.msra.mxu0 %v2451
        %2470 = vmatprep.subr.mxu0 0.0
        %2471 = vmatpush1.msra.mxu0 %v2452
        %2472 = vmatprep.subr.mxu0 0.0
        %2473 = vmatpush1.msra.mxu0 %v2453
        %2474 = vmatprep.subr.mxu0 0.0
        %2475 = vmatpush1.msra.mxu0 %v2454
        %2476 = vmatprep.subr.mxu0 0.0
        %2477 = vmatpush1.msra.mxu0 %v2455
        %2478 = vmatprep.subr.mxu0 0.0
        %2479 = vmatpush1.msra.mxu0 %v2456
        %2480 = vmatprep.subr.mxu0 0.0
        %2481 = vmatpush1.msra.mxu0 %v2457
        %2482 = vmatprep.subr.mxu0 0.0
        %2483 = vmatpush1.msra.mxu0 %v2458
        %2484 = vmatprep.subr.mxu0 0.0
        %2485 = vmatpush1.msra.mxu0 %v2459
        %2486 = vmatprep.subr.mxu0 0.0
        %2487 = vmatpush1.msra.mxu0 %v2460
        %2488 = vmatprep.subr.mxu0 0.0
        %2489 = vmatpush1.msra.mxu0 %v2461
        %2490 = vmatprep.subr.mxu0 0.0
        %2491 = vmatpush1.msra.mxu0 %v2462
        %2492 = vmatprep.subr.mxu0 0.0
        %2493 = vmatpush1.msra.mxu0 %v2463
        %2494 = vmatprep.subr.mxu0 0.0
        %2495 = vmatpush1.msra.mxu0 %v2464
        %2496 = vmatprep.subr.mxu0 0.0
        %2497 = vmatpush1.msra.mxu0 %v2465
        %2498 = vmatprep.subr.mxu0 0.0
        %2499 = vmatpush1.msra.mxu0 0.0
        %2500 = vmatprep.subr.mxu0 0.0
        %2501 = vmatpush1.msra.mxu0 0.0
        %2502 = vmatprep.subr.mxu0 0.0
        %2503 = vmatpush1.msra.mxu0 0.0
        %2504 = vmatprep.subr.mxu0 0.0
        %2505 = vmatpush1.msra.mxu0 0.0
        %2506 = vmatprep.subr.mxu0 0.0
        %2507 = vmatpush1.msra.mxu0 0.0
        %2508 = vmatprep.subr.mxu0 0.0
        %2509 = vmatpush1.msra.mxu0 0.0
        %2510 = vmatprep.subr.mxu0 0.0
        %2511 = vmatpush1.msra.mxu0 0.0
        %2512 = vmatprep.subr.mxu0 0.0
        %2513 = vmatpush1.msra.mxu0 0.0
        %2514 = vmatprep.subr.mxu0 0.0
        %2515 = vmatpush1.msra.mxu0 0.0
        %2516 = vmatprep.subr.mxu0 0.0
        %2517 = vmatpush1.msra.mxu0 0.0
        %2518 = vmatprep.subr.mxu0 0.0
        %2519 = vmatpush1.msra.mxu0 0.0
        %2520 = vmatprep.subr.mxu0 0.0
        %2521 = vmatpush1.msra.mxu0 0.0
        %2522 = vmatprep.subr.mxu0 0.0
        %2523 = vmatpush1.msra.mxu0 0.0
        %2524 = vmatprep.subr.mxu0 0.0
        %2525 = vmatpush1.msra.mxu0 0.0
        %2526 = vmatprep.subr.mxu0 0.0
        %2527 = vmatpush1.msra.mxu0 0.0
        %2528 = vmatprep.subr.mxu0 0.0
        %2529 = vmatpush1.msra.mxu0 0.0
        %2530 = vmatprep.mubr.f32.mxu0 0.0
        %2531 = vmatmul.mubr.f32.gmra.mrb[0].mxu0 %v2417
        %v2532 = vpop.f32.mrb[0].mxu0
        %v2533 = vadd.f32 0.0, %v2532
        %v2534 = vpop.f32.mrb[0].mxu0
        %2535 = vmatprep.mubr.f32.mxu0 0.0
        %2536 = vmatmul.mubr.f32.gmra.mrb[0].mxu0 %v2418
        %v2537 = vpop.f32.mrb[0].mxu0
        %v2538 = vadd.f32 0.0, %v2537
        %v2539 = vpop.f32.mrb[0].mxu0
        %2540 = vmatprep.mubr.f32.mxu0 0.0
        %2541 = vmatmul.mubr.f32.gmra.mrb[0].mxu0 %v2419
        %v2542 = vpop.f32.mrb[0].mxu0
        %v2543 = vadd.f32 0.0, %v2542
        %v2544 = vpop.f32.mrb[0].mxu0
        %2545 = vmatprep.mubr.f32.mxu0 0.0
        %2546 = vmatmul.mubr.f32.gmra.mrb[0].mxu0 %v2420
        %v2547 = vpop.f32.mrb[0].mxu0
        %v2548 = vadd.f32 0.0, %v2547
        %v2549 = vpop.f32.mrb[0].mxu0
        %2550 = vmatprep.mubr.f32.mxu0 0.0
        %2551 = vmatmul.mubr.f32.gmra.mrb[0].mxu0 %v2421
        %v2552 = vpop.f32.mrb[0].mxu0
        %v2553 = vadd.f32 0.0, %v2552
        %v2554 = vpop.f32.mrb[0].mxu0
        %2555 = vmatprep.mubr.f32.mxu0 0.0
        %2556 = vmatmul.mubr.f32.gmra.mrb[0].mxu0 %v2422
        %v2557 = vpop.f32.mrb[0].mxu0
        %v2558 = vadd.f32 0.0, %v2557
        %v2559 = vpop.f32.mrb[0].mxu0
        %2560 = vmatprep.mubr.f32.mxu0 0.0
        %2561 = vmatmul.mubr.f32.gmra.mrb[0].mxu0 %v2423
        %v2562 = vpop.f32.mrb[0].mxu0
        %v2563 = vadd.f32 0.0, %v2562
        %v2564 = vpop.f32.mrb[0].mxu0
        %2565 = vmatprep.mubr.f32.mxu0 0.0
        %2566 = vmatmul.mubr.f32.gmra.mrb[0].mxu0 %v2424
        %v2567 = vpop.f32.mrb[0].mxu0
        %v2568 = vadd.f32 0.0, %v2567
        %v2569 = vpop.f32.mrb[0].mxu0
        %2570 = vmatprep.mubr.f32.mxu0 0.0
        %2571 = vmatmul.mubr.f32.gmra.mrb[0].mxu0 %v2425
        %v2572 = vpop.f32.mrb[0].mxu0
        %v2573 = vadd.f32 0.0, %v2572
        %v2574 = vpop.f32.mrb[0].mxu0
        %2575 = vmatprep.mubr.f32.mxu0 0.0
        %2576 = vmatmul.mubr.f32.gmra.mrb[0].mxu0 %v2426
        %v2577 = vpop.f32.mrb[0].mxu0
        %v2578 = vadd.f32 0.0, %v2577
        %v2579 = vpop.f32.mrb[0].mxu0
        %2580 = vmatprep.mubr.f32.mxu0 0.0
        %2581 = vmatmul.mubr.f32.gmra.mrb[0].mxu0 %v2427
        %v2582 = vpop.f32.mrb[0].mxu0
        %v2583 = vadd.f32 0.0, %v2582
        %v2584 = vpop.f32.mrb[0].mxu0
        %2585 = vmatprep.mubr.f32.mxu0 0.0
        %2586 = vmatmul.mubr.f32.gmra.mrb[0].mxu0 %v2428
        %v2587 = vpop.f32.mrb[0].mxu0
        %v2588 = vadd.f32 0.0, %v2587
        %v2589 = vpop.f32.mrb[0].mxu0
        %2590 = vmatprep.mubr.f32.mxu0 0.0
        %2591 = vmatmul.mubr.f32.gmra.mrb[0].mxu0 %v2429
        %v2592 = vpop.f32.mrb[0].mxu0
        %v2593 = vadd.f32 0.0, %v2592
        %v2594 = vpop.f32.mrb[0].mxu0
        %2595 = vmatprep.mubr.f32.mxu0 0.0
        %2596 = vmatmul.mubr.f32.gmra.mrb[0].mxu0 %v2430
        %v2597 = vpop.f32.mrb[0].mxu0
        %v2598 = vadd.f32 0.0, %v2597
        %v2599 = vpop.f32.mrb[0].mxu0
        %2600 = vmatprep.mubr.f32.mxu0 0.0
        %2601 = vmatmul.mubr.f32.gmra.mrb[0].mxu0 %v2431
        %v2602 = vpop.f32.mrb[0].mxu0
        %v2603 = vadd.f32 0.0, %v2602
        %v2604 = vpop.f32.mrb[0].mxu0
        %2605 = vmatprep.mubr.f32.mxu0 0.0
        %2606 = vmatmul.mubr.f32.gmra.mrb[0].mxu0 %v2432
        %v2607 = vpop.f32.mrb[0].mxu0
        %v2608 = vadd.f32 0.0, %v2607
        %v2609 = vpop.f32.mrb[0].mxu0
        %2610 = vmatprep.mubr.f32.mxu0 0.0
        %2611 = vmatmul.mubr.f32.gmra.mrb[0].mxu0 %v2433
        %v2612 = vpop.f32.mrb[0].mxu0
        %v2613 = vadd.f32 0.0, %v2612
        %v2614 = vpop.f32.mrb[0].mxu0
        %2615 = vmatprep.mubr.f32.mxu0 0.0
        %2616 = vmatmul.mubr.f32.gmra.mrb[0].mxu0 %v2434
        %v2617 = vpop.f32.mrb[0].mxu0
        %v2618 = vadd.f32 0.0, %v2617
        %v2619 = vpop.f32.mrb[0].mxu0
        %2620 = vmatprep.mubr.f32.mxu0 0.0
        %2621 = vmatmul.mubr.f32.gmra.mrb[0].mxu0 %v2435
        %v2622 = vpop.f32.mrb[0].mxu0
        %v2623 = vadd.f32 0.0, %v2622
        %v2624 = vpop.f32.mrb[0].mxu0
        %2625 = vmatprep.mubr.f32.mxu0 0.0
        %2626 = vmatmul.mubr.f32.gmra.mrb[0].mxu0 %v2436
        %v2627 = vpop.f32.mrb[0].mxu0
        %v2628 = vadd.f32 0.0, %v2627
        %v2629 = vpop.f32.mrb[0].mxu0
        %2630 = vmatprep.mubr.f32.mxu0 0.0
        %2631 = vmatmul.mubr.f32.gmra.mrb[0].mxu0 %v2437
        %v2632 = vpop.f32.mrb[0].mxu0
        %v2633 = vadd.f32 0.0, %v2632
        %v2634 = vpop.f32.mrb[0].mxu0
        %2635 = vmatprep.mubr.f32.mxu0 0.0
        %2636 = vmatmul.mubr.f32.gmra.mrb[0].mxu0 %v2438
        %v2637 = vpop.f32.mrb[0].mxu0
        %v2638 = vadd.f32 0.0, %v2637
        %v2639 = vpop.f32.mrb[0].mxu0
        %2640 = vmatprep.mubr.f32.mxu0 0.0
        %2641 = vmatmul.mubr.f32.gmra.mrb[0].mxu0 %v2439
        %v2642 = vpop.f32.mrb[0].mxu0
        %v2643 = vadd.f32 0.0, %v2642
        %v2644 = vpop.f32.mrb[0].mxu0
        %2645 = vmatprep.mubr.f32.mxu0 0.0
        %2646 = vmatmul.mubr.f32.gmra.mrb[0].mxu0 %v2440
        %v2647 = vpop.f32.mrb[0].mxu0
        %v2648 = vadd.f32 0.0, %v2647
        %v2649 = vpop.f32.mrb[0].mxu0
        %2650 = vmatprep.mubr.f32.mxu0 0.0
        %2651 = vmatmul.mubr.f32.gmra.mrb[0].mxu0 %v2441
        %v2652 = vpop.f32.mrb[0].mxu0
        %v2653 = vadd.f32 0.0, %v2652
        %v2654 = vpop.f32.mrb[0].mxu0
        %2655 = vmatprep.mubr.f32.mxu0 0.0
        %2656 = vmatmul.mubr.f32.gmra.mrb[0].mxu0 %v2442
        %v2657 = vpop.f32.mrb[0].mxu0
        %v2658 = vadd.f32 0.0, %v2657
        %v2659 = vpop.f32.mrb[0].mxu0
        %2660 = vmatprep.mubr.f32.mxu0 0.0
        %2661 = vmatmul.mubr.f32.gmra.mrb[0].mxu0 %v2443
        %v2662 = vpop.f32.mrb[0].mxu0
        %v2663 = vadd.f32 0.0, %v2662
        %v2664 = vpop.f32.mrb[0].mxu0
        %2665 = vmatprep.mubr.f32.mxu0 0.0
        %2666 = vmatmul.mubr.f32.gmra.mrb[0].mxu0 %v2444
        %v2667 = vpop.f32.mrb[0].mxu0
        %v2668 = vadd.f32 0.0, %v2667
        %v2669 = vpop.f32.mrb[0].mxu0
        %2670 = vmatprep.mubr.f32.mxu0 0.0
        %2671 = vmatmul.mubr.f32.gmra.mrb[0].mxu0 %v2445
        %v2672 = vpop.f32.mrb[0].mxu0
        %v2673 = vadd.f32 0.0, %v2672
        %v2674 = vpop.f32.mrb[0].mxu0
        %2675 = vmatprep.mubr.f32.mxu0 0.0
        %2676 = vmatmul.mubr.f32.gmra.mrb[0].mxu0 %v2446
        %v2677 = vpop.f32.mrb[0].mxu0
        %v2678 = vadd.f32 0.0, %v2677
        %v2679 = vpop.f32.mrb[0].mxu0
        %2680 = vmatprep.mubr.f32.mxu0 0.0
        %2681 = vmatmul.mubr.f32.gmra.mrb[0].mxu0 %v2447
        %v2682 = vpop.f32.mrb[0].mxu0
        %v2683 = vadd.f32 0.0, %v2682
        %v2684 = vpop.f32.mrb[0].mxu0
        %2685 = vmatprep.mubr.f32.mxu0 0.0
        %2686 = vmatmul.mubr.f32.gmra.mrb[0].mxu0 %v2448
        %v2687 = vpop.f32.mrb[0].mxu0
        %v2688 = vadd.f32 0.0, %v2687
        %v2689 = vpop.f32.mrb[0].mxu0
        %2690 = vdwg.mxu0
        %v2691 = vadd.f32 %v2384, %v2533
        %v2692 = vadd.f32 %v2385, %v2538
        %v2693 = vadd.f32 %v2386, %v2543
        %v2694 = vadd.f32 %v2387, %v2548
        %v2695 = vadd.f32 %v2388, %v2553
        %v2696 = vadd.f32 %v2389, %v2558
        %v2697 = vadd.f32 %v2390, %v2563
        %v2698 = vadd.f32 %v2391, %v2568
        %v2699 = vadd.f32 %v2392, %v2573
        %v2700 = vadd.f32 %v2393, %v2578
        %v2701 = vadd.f32 %v2394, %v2583
        %v2702 = vadd.f32 %v2395, %v2588
        %v2703 = vadd.f32 %v2396, %v2593
        %v2704 = vadd.f32 %v2397, %v2598
        %v2705 = vadd.f32 %v2398, %v2603
        %v2706 = vadd.f32 %v2399, %v2608
        %v2707 = vadd.f32 %v2400, %v2613
        %v2708 = vadd.f32 %v2401, %v2618
        %v2709 = vadd.f32 %v2402, %v2623
        %v2710 = vadd.f32 %v2403, %v2628
        %v2711 = vadd.f32 %v2404, %v2633
        %v2712 = vadd.f32 %v2405, %v2638
        %v2713 = vadd.f32 %v2406, %v2643
        %v2714 = vadd.f32 %v2407, %v2648
        %v2715 = vadd.f32 %v2408, %v2653
        %v2716 = vadd.f32 %v2409, %v2658
        %v2717 = vadd.f32 %v2410, %v2663
        %v2718 = vadd.f32 %v2411, %v2668
        %v2719 = vadd.f32 %v2412, %v2673
        %v2720 = vadd.f32 %v2413, %v2678
        %v2721 = vadd.f32 %v2414, %v2683
        %v2722 = vadd.f32 %v2415, %v2688
        %s2723 = scalar_lea.vmem [#allocation7], 1024
        %v2724 = vld [vmem:[%s2723] sm:$0xff]
        %v2725 = vld [vmem:[%s2723 + $0x8] sm:$0xff]
        %v2726 = vld [vmem:[%s2723 + $0x10] sm:$0xff]
        %v2727 = vld [vmem:[%s2723 + $0x18] sm:$0xff]
        %v2728 = vld [vmem:[%s2723 + $0x20] sm:$0xff]
        %v2729 = vld [vmem:[%s2723 + $0x28] sm:$0xff]
        %v2730 = vld [vmem:[%s2723 + $0x30] sm:$0xff]
        %v2731 = vld [vmem:[%s2723 + $0x38] sm:$0xff]
        %v2732 = vld [vmem:[%s2723 + $0x40] sm:$0xff]
        %v2733 = vld [vmem:[%s2723 + $0x48] sm:$0xff]
        %v2734 = vld [vmem:[%s2723 + $0x50] sm:$0xff]
        %v2735 = vld [vmem:[%s2723 + $0x58] sm:$0xff]
        %v2736 = vld [vmem:[%s2723 + $0x60] sm:$0xff]
        %v2737 = vld [vmem:[%s2723 + $0x68] sm:$0xff]
        %v2738 = vld [vmem:[%s2723 + $0x70] sm:$0xff]
        %v2739 = vld [vmem:[%s2723 + $0x78] sm:$0xff]
        %2740 = vmatprep.subr.mxu0 0.0
        %2741 = vmatpush1.msra.mxu0 %v2724
        %2742 = vmatprep.subr.mxu0 0.0
        %2743 = vmatpush1.msra.mxu0 %v2725
        %2744 = vmatprep.subr.mxu0 0.0
        %2745 = vmatpush1.msra.mxu0 %v2726
        %2746 = vmatprep.subr.mxu0 0.0
        %2747 = vmatpush1.msra.mxu0 %v2727
        %2748 = vmatprep.subr.mxu0 0.0
        %2749 = vmatpush1.msra.mxu0 %v2728
        %2750 = vmatprep.subr.mxu0 0.0
        %2751 = vmatpush1.msra.mxu0 %v2729
        %2752 = vmatprep.subr.mxu0 0.0
        %2753 = vmatpush1.msra.mxu0 %v2730
        %2754 = vmatprep.subr.mxu0 0.0
        %2755 = vmatpush1.msra.mxu0 %v2731
        %2756 = vmatprep.subr.mxu0 0.0
        %2757 = vmatpush1.msra.mxu0 %v2732
        %2758 = vmatprep.subr.mxu0 0.0
        %2759 = vmatpush1.msra.mxu0 %v2733
        %2760 = vmatprep.subr.mxu0 0.0
        %2761 = vmatpush1.msra.mxu0 %v2734
        %2762 = vmatprep.subr.mxu0 0.0
        %2763 = vmatpush1.msra.mxu0 %v2735
        %2764 = vmatprep.subr.mxu0 0.0
        %2765 = vmatpush1.msra.mxu0 %v2736
        %2766 = vmatprep.subr.mxu0 0.0
        %2767 = vmatpush1.msra.mxu0 %v2737
        %2768 = vmatprep.subr.mxu0 0.0
        %2769 = vmatpush1.msra.mxu0 %v2738
        %2770 = vmatprep.subr.mxu0 0.0
        %2771 = vmatpush1.msra.mxu0 %v2739
        %2772 = vmatprep.subr.mxu0 0.0
        %2773 = vmatpush1.msra.mxu0 0.0
        %2774 = vmatprep.subr.mxu0 0.0
        %2775 = vmatpush1.msra.mxu0 0.0
        %2776 = vmatprep.subr.mxu0 0.0
        %2777 = vmatpush1.msra.mxu0 0.0
        %2778 = vmatprep.subr.mxu0 0.0
        %2779 = vmatpush1.msra.mxu0 0.0
        %2780 = vmatprep.subr.mxu0 0.0
        %2781 = vmatpush1.msra.mxu0 0.0
        %2782 = vmatprep.subr.mxu0 0.0
        %2783 = vmatpush1.msra.mxu0 0.0
        %2784 = vmatprep.subr.mxu0 0.0
        %2785 = vmatpush1.msra.mxu0 0.0
        %2786 = vmatprep.subr.mxu0 0.0
        %2787 = vmatpush1.msra.mxu0 0.0
        %2788 = vmatprep.subr.mxu0 0.0
        %2789 = vmatpush1.msra.mxu0 0.0
        %2790 = vmatprep.subr.mxu0 0.0
        %2791 = vmatpush1.msra.mxu0 0.0
        %2792 = vmatprep.subr.mxu0 0.0
        %2793 = vmatpush1.msra.mxu0 0.0
        %2794 = vmatprep.subr.mxu0 0.0
        %2795 = vmatpush1.msra.mxu0 0.0
        %2796 = vmatprep.subr.mxu0 0.0
        %2797 = vmatpush1.msra.mxu0 0.0
        %2798 = vmatprep.subr.mxu0 0.0
        %2799 = vmatpush1.msra.mxu0 0.0
        %2800 = vmatprep.subr.mxu0 0.0
        %2801 = vmatpush1.msra.mxu0 0.0
        %2802 = vmatprep.subr.mxu0 0.0
        %2803 = vmatpush1.msra.mxu0 0.0
        %2804 = vmatprep.mubr.f32.mxu0 0.0
        %2805 = vmatmul.mubr.f32.gmra.mrb[0].mxu0 %v467
        %v2806 = vpop.f32.mrb[0].mxu0
        %v2807 = vadd.f32 0.0, %v2806
        %v2808 = vpop.f32.mrb[0].mxu0
        %2809 = vmatprep.mubr.f32.mxu0 0.0
        %2810 = vmatmul.mubr.f32.gmra.mrb[0].mxu0 %v468
        %v2811 = vpop.f32.mrb[0].mxu0
        %v2812 = vadd.f32 0.0, %v2811
        %v2813 = vpop.f32.mrb[0].mxu0
        %2814 = vmatprep.mubr.f32.mxu0 0.0
        %2815 = vmatmul.mubr.f32.gmra.mrb[0].mxu0 %v469
        %v2816 = vpop.f32.mrb[0].mxu0
        %v2817 = vadd.f32 0.0, %v2816
        %v2818 = vpop.f32.mrb[0].mxu0
        %2819 = vmatprep.mubr.f32.mxu0 0.0
        %2820 = vmatmul.mubr.f32.gmra.mrb[0].mxu0 %v470
        %v2821 = vpop.f32.mrb[0].mxu0
        %v2822 = vadd.f32 0.0, %v2821
        %v2823 = vpop.f32.mrb[0].mxu0
        %2824 = vmatprep.mubr.f32.mxu0 0.0
        %2825 = vmatmul.mubr.f32.gmra.mrb[0].mxu0 %v471
        %v2826 = vpop.f32.mrb[0].mxu0
        %v2827 = vadd.f32 0.0, %v2826
        %v2828 = vpop.f32.mrb[0].mxu0
        %2829 = vmatprep.mubr.f32.mxu0 0.0
        %2830 = vmatmul.mubr.f32.gmra.mrb[0].mxu0 %v472
        %v2831 = vpop.f32.mrb[0].mxu0
        %v2832 = vadd.f32 0.0, %v2831
        %v2833 = vpop.f32.mrb[0].mxu0
        %2834 = vmatprep.mubr.f32.mxu0 0.0
        %2835 = vmatmul.mubr.f32.gmra.mrb[0].mxu0 %v473
        %v2836 = vpop.f32.mrb[0].mxu0
        %v2837 = vadd.f32 0.0, %v2836
        %v2838 = vpop.f32.mrb[0].mxu0
        %2839 = vmatprep.mubr.f32.mxu0 0.0
        %2840 = vmatmul.mubr.f32.gmra.mrb[0].mxu0 %v474
        %v2841 = vpop.f32.mrb[0].mxu0
        %v2842 = vadd.f32 0.0, %v2841
        %v2843 = vpop.f32.mrb[0].mxu0
        %2844 = vmatprep.mubr.f32.mxu0 0.0
        %2845 = vmatmul.mubr.f32.gmra.mrb[0].mxu0 %v475
        %v2846 = vpop.f32.mrb[0].mxu0
        %v2847 = vadd.f32 0.0, %v2846
        %v2848 = vpop.f32.mrb[0].mxu0
        %2849 = vmatprep.mubr.f32.mxu0 0.0
        %2850 = vmatmul.mubr.f32.gmra.mrb[0].mxu0 %v476
        %v2851 = vpop.f32.mrb[0].mxu0
        %v2852 = vadd.f32 0.0, %v2851
        %v2853 = vpop.f32.mrb[0].mxu0
        %2854 = vmatprep.mubr.f32.mxu0 0.0
        %2855 = vmatmul.mubr.f32.gmra.mrb[0].mxu0 %v477
        %v2856 = vpop.f32.mrb[0].mxu0
        %v2857 = vadd.f32 0.0, %v2856
        %v2858 = vpop.f32.mrb[0].mxu0
        %2859 = vmatprep.mubr.f32.mxu0 0.0
        %2860 = vmatmul.mubr.f32.gmra.mrb[0].mxu0 %v478
        %v2861 = vpop.f32.mrb[0].mxu0
        %v2862 = vadd.f32 0.0, %v2861
        %v2863 = vpop.f32.mrb[0].mxu0
        %2864 = vmatprep.mubr.f32.mxu0 0.0
        %2865 = vmatmul.mubr.f32.gmra.mrb[0].mxu0 %v479
        %v2866 = vpop.f32.mrb[0].mxu0
        %v2867 = vadd.f32 0.0, %v2866
        %v2868 = vpop.f32.mrb[0].mxu0
        %2869 = vmatprep.mubr.f32.mxu0 0.0
        %2870 = vmatmul.mubr.f32.gmra.mrb[0].mxu0 %v480
        %v2871 = vpop.f32.mrb[0].mxu0
        %v2872 = vadd.f32 0.0, %v2871
        %v2873 = vpop.f32.mrb[0].mxu0
        %2874 = vmatprep.mubr.f32.mxu0 0.0
        %2875 = vmatmul.mubr.f32.gmra.mrb[0].mxu0 %v481
        %v2876 = vpop.f32.mrb[0].mxu0
        %v2877 = vadd.f32 0.0, %v2876
        %v2878 = vpop.f32.mrb[0].mxu0
        %2879 = vmatprep.mubr.f32.mxu0 0.0
        %2880 = vmatmul.mubr.f32.gmra.mrb[0].mxu0 %v482
        %v2881 = vpop.f32.mrb[0].mxu0
        %v2882 = vadd.f32 0.0, %v2881
        %v2883 = vpop.f32.mrb[0].mxu0
        %2884 = vmatprep.mubr.f32.mxu0 0.0
        %2885 = vmatmul.mubr.f32.gmra.mrb[0].mxu0 %v483
        %v2886 = vpop.f32.mrb[0].mxu0
        %v2887 = vadd.f32 0.0, %v2886
        %v2888 = vpop.f32.mrb[0].mxu0
        %2889 = vmatprep.mubr.f32.mxu0 0.0
        %2890 = vmatmul.mubr.f32.gmra.mrb[0].mxu0 %v484
        %v2891 = vpop.f32.mrb[0].mxu0
        %v2892 = vadd.f32 0.0, %v2891
        %v2893 = vpop.f32.mrb[0].mxu0
        %2894 = vmatprep.mubr.f32.mxu0 0.0
        %2895 = vmatmul.mubr.f32.gmra.mrb[0].mxu0 %v485
        %v2896 = vpop.f32.mrb[0].mxu0
        %v2897 = vadd.f32 0.0, %v2896
        %v2898 = vpop.f32.mrb[0].mxu0
        %2899 = vmatprep.mubr.f32.mxu0 0.0
        %2900 = vmatmul.mubr.f32.gmra.mrb[0].mxu0 %v486
        %v2901 = vpop.f32.mrb[0].mxu0
        %v2902 = vadd.f32 0.0, %v2901
        %v2903 = vpop.f32.mrb[0].mxu0
        %2904 = vmatprep.mubr.f32.mxu0 0.0
        %2905 = vmatmul.mubr.f32.gmra.mrb[0].mxu0 %v487
        %v2906 = vpop.f32.mrb[0].mxu0
        %v2907 = vadd.f32 0.0, %v2906
        %v2908 = vpop.f32.mrb[0].mxu0
        %2909 = vmatprep.mubr.f32.mxu0 0.0
        %2910 = vmatmul.mubr.f32.gmra.mrb[0].mxu0 %v488
        %v2911 = vpop.f32.mrb[0].mxu0
        %v2912 = vadd.f32 0.0, %v2911
        %v2913 = vpop.f32.mrb[0].mxu0
        %2914 = vmatprep.mubr.f32.mxu0 0.0
        %2915 = vmatmul.mubr.f32.gmra.mrb[0].mxu0 %v489
        %v2916 = vpop.f32.mrb[0].mxu0
        %v2917 = vadd.f32 0.0, %v2916
        %v2918 = vpop.f32.mrb[0].mxu0
        %2919 = vmatprep.mubr.f32.mxu0 0.0
        %2920 = vmatmul.mubr.f32.gmra.mrb[0].mxu0 %v490
        %v2921 = vpop.f32.mrb[0].mxu0
        %v2922 = vadd.f32 0.0, %v2921
        %v2923 = vpop.f32.mrb[0].mxu0
        %2924 = vmatprep.mubr.f32.mxu0 0.0
        %2925 = vmatmul.mubr.f32.gmra.mrb[0].mxu0 %v491
        %v2926 = vpop.f32.mrb[0].mxu0
        %v2927 = vadd.f32 0.0, %v2926
        %v2928 = vpop.f32.mrb[0].mxu0
        %2929 = vmatprep.mubr.f32.mxu0 0.0
        %2930 = vmatmul.mubr.f32.gmra.mrb[0].mxu0 %v492
        %v2931 = vpop.f32.mrb[0].mxu0
        %v2932 = vadd.f32 0.0, %v2931
        %v2933 = vpop.f32.mrb[0].mxu0
        %2934 = vmatprep.mubr.f32.mxu0 0.0
        %2935 = vmatmul.mubr.f32.gmra.mrb[0].mxu0 %v493
        %v2936 = vpop.f32.mrb[0].mxu0
        %v2937 = vadd.f32 0.0, %v2936
        %v2938 = vpop.f32.mrb[0].mxu0
        %2939 = vmatprep.mubr.f32.mxu0 0.0
        %2940 = vmatmul.mubr.f32.gmra.mrb[0].mxu0 %v494
        %v2941 = vpop.f32.mrb[0].mxu0
        %v2942 = vadd.f32 0.0, %v2941
        %v2943 = vpop.f32.mrb[0].mxu0
        %2944 = vmatprep.mubr.f32.mxu0 0.0
        %2945 = vmatmul.mubr.f32.gmra.mrb[0].mxu0 %v495
        %v2946 = vpop.f32.mrb[0].mxu0
        %v2947 = vadd.f32 0.0, %v2946
        %v2948 = vpop.f32.mrb[0].mxu0
        %2949 = vmatprep.mubr.f32.mxu0 0.0
        %2950 = vmatmul.mubr.f32.gmra.mrb[0].mxu0 %v496
        %v2951 = vpop.f32.mrb[0].mxu0
        %v2952 = vadd.f32 0.0, %v2951
        %v2953 = vpop.f32.mrb[0].mxu0
        %2954 = vmatprep.mubr.f32.mxu0 0.0
        %2955 = vmatmul.mubr.f32.gmra.mrb[0].mxu0 %v497
        %v2956 = vpop.f32.mrb[0].mxu0
        %v2957 = vadd.f32 0.0, %v2956
        %v2958 = vpop.f32.mrb[0].mxu0
        %2959 = vmatprep.mubr.f32.mxu0 0.0
        %2960 = vmatmul.mubr.f32.gmra.mrb[0].mxu0 %v498
        %v2961 = vpop.f32.mrb[0].mxu0
        %v2962 = vadd.f32 0.0, %v2961
        %v2963 = vpop.f32.mrb[0].mxu0
        %2964 = vdwg.mxu0
        %v2965 = vadd.f32 %v2691, %v2807
        %v2966 = vadd.f32 %v2692, %v2812
        %v2967 = vadd.f32 %v2693, %v2817
        %v2968 = vadd.f32 %v2694, %v2822
        %v2969 = vadd.f32 %v2695, %v2827
        %v2970 = vadd.f32 %v2696, %v2832
        %v2971 = vadd.f32 %v2697, %v2837
        %v2972 = vadd.f32 %v2698, %v2842
        %v2973 = vadd.f32 %v2699, %v2847
        %v2974 = vadd.f32 %v2700, %v2852
        %v2975 = vadd.f32 %v2701, %v2857
        %v2976 = vadd.f32 %v2702, %v2862
        %v2977 = vadd.f32 %v2703, %v2867
        %v2978 = vadd.f32 %v2704, %v2872
        %v2979 = vadd.f32 %v2705, %v2877
        %v2980 = vadd.f32 %v2706, %v2882
        %v2981 = vadd.f32 %v2707, %v2887
        %v2982 = vadd.f32 %v2708, %v2892
        %v2983 = vadd.f32 %v2709, %v2897
        %v2984 = vadd.f32 %v2710, %v2902
        %v2985 = vadd.f32 %v2711, %v2907
        %v2986 = vadd.f32 %v2712, %v2912
        %v2987 = vadd.f32 %v2713, %v2917
        %v2988 = vadd.f32 %v2714, %v2922
        %v2989 = vadd.f32 %v2715, %v2927
        %v2990 = vadd.f32 %v2716, %v2932
        %v2991 = vadd.f32 %v2717, %v2937
        %v2992 = vadd.f32 %v2718, %v2942
        %v2993 = vadd.f32 %v2719, %v2947
        %v2994 = vadd.f32 %v2720, %v2952
        %v2995 = vadd.f32 %v2721, %v2957
        %v2996 = vadd.f32 %v2722, %v2962
        %v2997 = vld [vmem:[%s2] sm:$0x1]
        %v2999 = vlaneseq
        %v3000 = vshrl.u32 %v2999, 7
        %v3001 = vsub.s32 0, %v3000
        %v3002 = vrot.slane %v2997, %v3001
        %v3004 = vadd.f32 %v2965, %v3002
        %v3005 = vadd.f32 %v2966, %v3002
        %v3006 = vadd.f32 %v2967, %v3002
        %v3007 = vadd.f32 %v2968, %v3002
        %v3008 = vadd.f32 %v2969, %v3002
        %v3009 = vadd.f32 %v2970, %v3002
        %v3010 = vadd.f32 %v2971, %v3002
        %v3011 = vadd.f32 %v2972, %v3002
        %v3012 = vadd.f32 %v2973, %v3002
        %v3013 = vadd.f32 %v2974, %v3002
        %v3014 = vadd.f32 %v2975, %v3002
        %v3015 = vadd.f32 %v2976, %v3002
        %v3016 = vadd.f32 %v2977, %v3002
        %v3017 = vadd.f32 %v2978, %v3002
        %v3018 = vadd.f32 %v2979, %v3002
        %v3019 = vadd.f32 %v2980, %v3002
        %v3020 = vadd.f32 %v2981, %v3002
        %v3021 = vadd.f32 %v2982, %v3002
        %v3022 = vadd.f32 %v2983, %v3002
        %v3023 = vadd.f32 %v2984, %v3002
        %v3024 = vadd.f32 %v2985, %v3002
        %v3025 = vadd.f32 %v2986, %v3002
        %v3026 = vadd.f32 %v2987, %v3002
        %v3027 = vadd.f32 %v2988, %v3002
        %v3028 = vadd.f32 %v2989, %v3002
        %v3029 = vadd.f32 %v2990, %v3002
        %v3030 = vadd.f32 %v2991, %v3002
        %v3031 = vadd.f32 %v2992, %v3002
        %v3032 = vadd.f32 %v2993, %v3002
        %v3033 = vadd.f32 %v2994, %v3002
        %v3034 = vadd.f32 %v2995, %v3002
        %v3035 = vadd.f32 %v2996, %v3002
        %v3036 = vmax.f32 %v3004, 0.0
        %v3037 = vmax.f32 %v3005, 0.0
        %v3038 = vmax.f32 %v3006, 0.0
        %v3039 = vmax.f32 %v3007, 0.0
        %v3040 = vmax.f32 %v3008, 0.0
        %v3041 = vmax.f32 %v3009, 0.0
        %v3042 = vmax.f32 %v3010, 0.0
        %v3043 = vmax.f32 %v3011, 0.0
        %v3044 = vmax.f32 %v3012, 0.0
        %v3045 = vmax.f32 %v3013, 0.0
        %v3046 = vmax.f32 %v3014, 0.0
        %v3047 = vmax.f32 %v3015, 0.0
        %v3048 = vmax.f32 %v3016, 0.0
        %v3049 = vmax.f32 %v3017, 0.0
        %v3050 = vmax.f32 %v3018, 0.0
        %v3051 = vmax.f32 %v3019, 0.0
        %v3052 = vmax.f32 %v3020, 0.0
        %v3053 = vmax.f32 %v3021, 0.0
        %v3054 = vmax.f32 %v3022, 0.0
        %v3055 = vmax.f32 %v3023, 0.0
        %v3056 = vmax.f32 %v3024, 0.0
        %v3057 = vmax.f32 %v3025, 0.0
        %v3058 = vmax.f32 %v3026, 0.0
        %v3059 = vmax.f32 %v3027, 0.0
        %v3060 = vmax.f32 %v3028, 0.0
        %v3061 = vmax.f32 %v3029, 0.0
        %v3062 = vmax.f32 %v3030, 0.0
        %v3063 = vmax.f32 %v3031, 0.0
        %v3064 = vmax.f32 %v3032, 0.0
        %v3065 = vmax.f32 %v3033, 0.0
        %v3066 = vmax.f32 %v3034, 0.0
        %v3067 = vmax.f32 %v3035, 0.0
        %s3068 = scalar_lea.vmem [#allocation3], 32
        %3069 = vst [vmem:[%s3068 + $0x8] sm:$0xff] %v3036
        %3070 = vst [vmem:[%s3068 + $0x10] sm:$0xff] %v3037
        %3071 = vst [vmem:[%s3068 + $0x28] sm:$0xff] %v3038
        %3072 = vst [vmem:[%s3068 + $0x30] sm:$0xff] %v3039
        %3073 = vst [vmem:[%s3068 + $0x48] sm:$0xff] %v3040
        %3074 = vst [vmem:[%s3068 + $0x50] sm:$0xff] %v3041
        %3075 = vst [vmem:[%s3068 + $0x68] sm:$0xff] %v3042
        %3076 = vst [vmem:[%s3068 + $0x70] sm:$0xff] %v3043
        %3077 = vst [vmem:[%s3068 + $0x88] sm:$0xff] %v3044
        %3078 = vst [vmem:[%s3068 + $0x90] sm:$0xff] %v3045
        %3079 = vst [vmem:[%s3068 + $0xa8] sm:$0xff] %v3046
        %3080 = vst [vmem:[%s3068 + $0xb0] sm:$0xff] %v3047
        %3081 = vst [vmem:[%s3068 + $0xc8] sm:$0xff] %v3048
        %3082 = vst [vmem:[%s3068 + $0xd0] sm:$0xff] %v3049
        %3083 = vst [vmem:[%s3068 + $0xe8] sm:$0xff] %v3050
        %3084 = vst [vmem:[%s3068 + $0xf0] sm:$0xff] %v3051
        %3085 = vst [vmem:[%s3068 + $0x108] sm:$0xff] %v3052
        %3086 = vst [vmem:[%s3068 + $0x110] sm:$0xff] %v3053
        %3087 = vst [vmem:[%s3068 + $0x128] sm:$0xff] %v3054
        %3088 = vst [vmem:[%s3068 + $0x130] sm:$0xff] %v3055
        %3089 = vst [vmem:[%s3068 + $0x148] sm:$0xff] %v3056
        %3090 = vst [vmem:[%s3068 + $0x150] sm:$0xff] %v3057
        %3091 = vst [vmem:[%s3068 + $0x168] sm:$0xff] %v3058
        %3092 = vst [vmem:[%s3068 + $0x170] sm:$0xff] %v3059
        %3093 = vst [vmem:[%s3068 + $0x188] sm:$0xff] %v3060
        %3094 = vst [vmem:[%s3068 + $0x190] sm:$0xff] %v3061
        %3095 = vst [vmem:[%s3068 + $0x1a8] sm:$0xff] %v3062
        %3096 = vst [vmem:[%s3068 + $0x1b0] sm:$0xff] %v3063
        %3097 = vst [vmem:[%s3068 + $0x1c8] sm:$0xff] %v3064
        %3098 = vst [vmem:[%s3068 + $0x1d0] sm:$0xff] %v3065
        %3099 = vst [vmem:[%s3068 + $0x1e8] sm:$0xff] %v3066
        %3100 = vst [vmem:[%s3068 + $0x1f0] sm:$0xff] %v3067
        %v3101 = vld [vmem:[#allocation3 + $0x7] sm:$0xff]
        %v3102 = vld [vmem:[#allocation3 + $0xf] sm:$0xff]
        %v3103 = vld [vmem:[#allocation3 + $0x27] sm:$0xff]
        %v3104 = vld [vmem:[#allocation3 + $0x2f] sm:$0xff]
        %v3105 = vld [vmem:[#allocation3 + $0x47] sm:$0xff]
        %v3106 = vld [vmem:[#allocation3 + $0x4f] sm:$0xff]
        %v3107 = vld [vmem:[#allocation3 + $0x67] sm:$0xff]
        %v3108 = vld [vmem:[#allocation3 + $0x6f] sm:$0xff]
        %v3109 = vld [vmem:[#allocation3 + $0x87] sm:$0xff]
        %v3110 = vld [vmem:[#allocation3 + $0x8f] sm:$0xff]
        %v3111 = vld [vmem:[#allocation3 + $0xa7] sm:$0xff]
        %v3112 = vld [vmem:[#allocation3 + $0xaf] sm:$0xff]
        %v3113 = vld [vmem:[#allocation3 + $0xc7] sm:$0xff]
        %v3114 = vld [vmem:[#allocation3 + $0xcf] sm:$0xff]
        %v3115 = vld [vmem:[#allocation3 + $0xe7] sm:$0xff]
        %v3116 = vld [vmem:[#allocation3 + $0xef] sm:$0xff]
        %v3117 = vld [vmem:[#allocation3 + $0x107] sm:$0xff]
        %v3118 = vld [vmem:[#allocation3 + $0x10f] sm:$0xff]
        %v3119 = vld [vmem:[#allocation3 + $0x127] sm:$0xff]
        %v3120 = vld [vmem:[#allocation3 + $0x12f] sm:$0xff]
        %v3121 = vld [vmem:[#allocation3 + $0x147] sm:$0xff]
        %v3122 = vld [vmem:[#allocation3 + $0x14f] sm:$0xff]
        %v3123 = vld [vmem:[#allocation3 + $0x167] sm:$0xff]
        %v3124 = vld [vmem:[#allocation3 + $0x16f] sm:$0xff]
        %v3125 = vld [vmem:[#allocation3 + $0x187] sm:$0xff]
        %v3126 = vld [vmem:[#allocation3 + $0x18f] sm:$0xff]
        %v3127 = vld [vmem:[#allocation3 + $0x1a7] sm:$0xff]
        %v3128 = vld [vmem:[#allocation3 + $0x1af] sm:$0xff]
        %v3129 = vld [vmem:[#allocation3 + $0x1c7] sm:$0xff]
        %v3130 = vld [vmem:[#allocation3 + $0x1cf] sm:$0xff]
        %v3131 = vld [vmem:[#allocation3 + $0x1e7] sm:$0xff]
        %v3132 = vld [vmem:[#allocation3 + $0x1ef] sm:$0xff]
        %v3133 = vld [vmem:[#allocation3 + $0x207] sm:$0xff]
        %v3134 = vld [vmem:[#allocation3 + $0x20f] sm:$0xff]
        %v3135 = vld [vmem:[#allocation3 + $0x227] sm:$0xff]
        %v3136 = vld [vmem:[#allocation3 + $0x22f] sm:$0xff]
        %v3137 = vld [vmem:[#allocation3 + $0x9] sm:$0xff]
        %v3138 = vld [vmem:[#allocation3 + $0x11] sm:$0xff]
        %v3139 = vld [vmem:[#allocation3 + $0x29] sm:$0xff]
        %v3140 = vld [vmem:[#allocation3 + $0x31] sm:$0xff]
        %v3141 = vld [vmem:[#allocation3 + $0x49] sm:$0xff]
        %v3142 = vld [vmem:[#allocation3 + $0x51] sm:$0xff]
        %v3143 = vld [vmem:[#allocation3 + $0x69] sm:$0xff]
        %v3144 = vld [vmem:[#allocation3 + $0x71] sm:$0xff]
        %v3145 = vld [vmem:[#allocation3 + $0x89] sm:$0xff]
        %v3146 = vld [vmem:[#allocation3 + $0x91] sm:$0xff]
        %v3147 = vld [vmem:[#allocation3 + $0xa9] sm:$0xff]
        %v3148 = vld [vmem:[#allocation3 + $0xb1] sm:$0xff]
        %v3149 = vld [vmem:[#allocation3 + $0xc9] sm:$0xff]
        %v3150 = vld [vmem:[#allocation3 + $0xd1] sm:$0xff]
        %v3151 = vld [vmem:[#allocation3 + $0xe9] sm:$0xff]
        %v3152 = vld [vmem:[#allocation3 + $0xf1] sm:$0xff]
        %v3153 = vld [vmem:[#allocation3 + $0x109] sm:$0xff]
        %v3154 = vld [vmem:[#allocation3 + $0x111] sm:$0xff]
        %v3155 = vld [vmem:[#allocation3 + $0x129] sm:$0xff]
        %v3156 = vld [vmem:[#allocation3 + $0x131] sm:$0xff]
        %v3157 = vld [vmem:[#allocation3 + $0x149] sm:$0xff]
        %v3158 = vld [vmem:[#allocation3 + $0x151] sm:$0xff]
        %v3159 = vld [vmem:[#allocation3 + $0x169] sm:$0xff]
        %v3160 = vld [vmem:[#allocation3 + $0x171] sm:$0xff]
        %v3161 = vld [vmem:[#allocation3 + $0x189] sm:$0xff]
        %v3162 = vld [vmem:[#allocation3 + $0x191] sm:$0xff]
        %v3163 = vld [vmem:[#allocation3 + $0x1a9] sm:$0xff]
        %v3164 = vld [vmem:[#allocation3 + $0x1b1] sm:$0xff]
        %v3165 = vld [vmem:[#allocation3 + $0x1c9] sm:$0xff]
        %v3166 = vld [vmem:[#allocation3 + $0x1d1] sm:$0xff]
        %v3167 = vld [vmem:[#allocation3 + $0x1e9] sm:$0xff]
        %v3168 = vld [vmem:[#allocation3 + $0x1f1] sm:$0xff]
        %v3169 = vld [vmem:[#allocation3 + $0x209] sm:$0xff]
        %v3170 = vld [vmem:[#allocation3 + $0x211] sm:$0xff]
        %v3171 = vld [vmem:[#allocation3 + $0x229] sm:$0xff]
        %v3172 = vld [vmem:[#allocation3 + $0x231] sm:$0xff]
        %v3173 = vld [vmem:[#allocation9] sm:$0xff]
        %v3174 = vld [vmem:[#allocation9 + $0x8] sm:$0xff]
        %v3175 = vld [vmem:[#allocation9 + $0x10] sm:$0xff]
        %v3176 = vld [vmem:[#allocation9 + $0x18] sm:$0xff]
        %v3177 = vld [vmem:[#allocation9 + $0x20] sm:$0xff]
        %v3178 = vld [vmem:[#allocation9 + $0x28] sm:$0xff]
        %v3179 = vld [vmem:[#allocation9 + $0x30] sm:$0xff]
        %v3180 = vld [vmem:[#allocation9 + $0x38] sm:$0xff]
        %v3181 = vld [vmem:[#allocation9 + $0x40] sm:$0xff]
        %v3182 = vld [vmem:[#allocation9 + $0x48] sm:$0xff]
        %v3183 = vld [vmem:[#allocation9 + $0x50] sm:$0xff]
        %v3184 = vld [vmem:[#allocation9 + $0x58] sm:$0xff]
        %v3185 = vld [vmem:[#allocation9 + $0x60] sm:$0xff]
        %v3186 = vld [vmem:[#allocation9 + $0x68] sm:$0xff]
        %v3187 = vld [vmem:[#allocation9 + $0x70] sm:$0xff]
        %v3188 = vld [vmem:[#allocation9 + $0x78] sm:$0xff]
        %v3189 = vld [vmem:[#allocation3 + $0x8] sm:$0xff]
        %v3190 = vld [vmem:[#allocation3 + $0x10] sm:$0xff]
        %v3191 = vld [vmem:[#allocation3 + $0x28] sm:$0xff]
        %v3192 = vld [vmem:[#allocation3 + $0x30] sm:$0xff]
        %v3193 = vld [vmem:[#allocation3 + $0x48] sm:$0xff]
        %v3194 = vld [vmem:[#allocation3 + $0x50] sm:$0xff]
        %v3195 = vld [vmem:[#allocation3 + $0x68] sm:$0xff]
        %v3196 = vld [vmem:[#allocation3 + $0x70] sm:$0xff]
        %v3197 = vld [vmem:[#allocation3 + $0x88] sm:$0xff]
        %v3198 = vld [vmem:[#allocation3 + $0x90] sm:$0xff]
        %v3199 = vld [vmem:[#allocation3 + $0xa8] sm:$0xff]
        %v3200 = vld [vmem:[#allocation3 + $0xb0] sm:$0xff]
        %v3201 = vld [vmem:[#allocation3 + $0xc8] sm:$0xff]
        %v3202 = vld [vmem:[#allocation3 + $0xd0] sm:$0xff]
        %v3203 = vld [vmem:[#allocation3 + $0xe8] sm:$0xff]
        %v3204 = vld [vmem:[#allocation3 + $0xf0] sm:$0xff]
        %v3205 = vld [vmem:[#allocation3 + $0x108] sm:$0xff]
        %v3206 = vld [vmem:[#allocation3 + $0x110] sm:$0xff]
        %v3207 = vld [vmem:[#allocation3 + $0x128] sm:$0xff]
        %v3208 = vld [vmem:[#allocation3 + $0x130] sm:$0xff]
        %v3209 = vld [vmem:[#allocation3 + $0x148] sm:$0xff]
        %v3210 = vld [vmem:[#allocation3 + $0x150] sm:$0xff]
        %v3211 = vld [vmem:[#allocation3 + $0x168] sm:$0xff]
        %v3212 = vld [vmem:[#allocation3 + $0x170] sm:$0xff]
        %v3213 = vld [vmem:[#allocation3 + $0x188] sm:$0xff]
        %v3214 = vld [vmem:[#allocation3 + $0x190] sm:$0xff]
        %v3215 = vld [vmem:[#allocation3 + $0x1a8] sm:$0xff]
        %v3216 = vld [vmem:[#allocation3 + $0x1b0] sm:$0xff]
        %v3217 = vld [vmem:[#allocation3 + $0x1c8] sm:$0xff]
        %v3218 = vld [vmem:[#allocation3 + $0x1d0] sm:$0xff]
        %v3219 = vld [vmem:[#allocation3 + $0x1e8] sm:$0xff]
        %v3220 = vld [vmem:[#allocation3 + $0x1f0] sm:$0xff]
        %s3221 = scalar_lea.vmem [#allocation9], 128
        %v3222 = vld [vmem:[%s3221] sm:$0xff]
        %v3223 = vld [vmem:[%s3221 + $0x8] sm:$0xff]
        %v3224 = vld [vmem:[%s3221 + $0x10] sm:$0xff]
        %v3225 = vld [vmem:[%s3221 + $0x18] sm:$0xff]
        %v3226 = vld [vmem:[%s3221 + $0x20] sm:$0xff]
        %v3227 = vld [vmem:[%s3221 + $0x28] sm:$0xff]
        %v3228 = vld [vmem:[%s3221 + $0x30] sm:$0xff]
        %v3229 = vld [vmem:[%s3221 + $0x38] sm:$0xff]
        %v3230 = vld [vmem:[%s3221 + $0x40] sm:$0xff]
        %v3231 = vld [vmem:[%s3221 + $0x48] sm:$0xff]
        %v3232 = vld [vmem:[%s3221 + $0x50] sm:$0xff]
        %v3233 = vld [vmem:[%s3221 + $0x58] sm:$0xff]
        %v3234 = vld [vmem:[%s3221 + $0x60] sm:$0xff]
        %v3235 = vld [vmem:[%s3221 + $0x68] sm:$0xff]
        %v3236 = vld [vmem:[%s3221 + $0x70] sm:$0xff]
        %v3237 = vld [vmem:[%s3221 + $0x78] sm:$0xff]
        %3238 = vmatprep.subr.mxu0 0.0
        %3239 = vmatpush1.msra.mxu0 %v3222
        %3240 = vmatprep.subr.mxu0 0.0
        %3241 = vmatpush1.msra.mxu0 %v3223
        %3242 = vmatprep.subr.mxu0 0.0
        %3243 = vmatpush1.msra.mxu0 %v3224
        %3244 = vmatprep.subr.mxu0 0.0
        %3245 = vmatpush1.msra.mxu0 %v3225
        %3246 = vmatprep.subr.mxu0 0.0
        %3247 = vmatpush1.msra.mxu0 %v3226
        %3248 = vmatprep.subr.mxu0 0.0
        %3249 = vmatpush1.msra.mxu0 %v3227
        %3250 = vmatprep.subr.mxu0 0.0
        %3251 = vmatpush1.msra.mxu0 %v3228
        %3252 = vmatprep.subr.mxu0 0.0
        %3253 = vmatpush1.msra.mxu0 %v3229
        %3254 = vmatprep.subr.mxu0 0.0
        %3255 = vmatpush1.msra.mxu0 %v3230
        %3256 = vmatprep.subr.mxu0 0.0
        %3257 = vmatpush1.msra.mxu0 %v3231
        %3258 = vmatprep.subr.mxu0 0.0
        %3259 = vmatpush1.msra.mxu0 %v3232
        %3260 = vmatprep.subr.mxu0 0.0
        %3261 = vmatpush1.msra.mxu0 %v3233
        %3262 = vmatprep.subr.mxu0 0.0
        %3263 = vmatpush1.msra.mxu0 %v3234
        %3264 = vmatprep.subr.mxu0 0.0
        %3265 = vmatpush1.msra.mxu0 %v3235
        %3266 = vmatprep.subr.mxu0 0.0
        %3267 = vmatpush1.msra.mxu0 %v3236
        %3268 = vmatprep.subr.mxu0 0.0
        %3269 = vmatpush1.msra.mxu0 %v3237
        %3270 = vmatprep.subr.mxu0 0.0
        %3271 = vmatpush1.msra.mxu0 0.0
        %3272 = vmatprep.subr.mxu0 0.0
        %3273 = vmatpush1.msra.mxu0 0.0
        %3274 = vmatprep.subr.mxu0 0.0
        %3275 = vmatpush1.msra.mxu0 0.0
        %3276 = vmatprep.subr.mxu0 0.0
        %3277 = vmatpush1.msra.mxu0 0.0
        %3278 = vmatprep.subr.mxu0 0.0
        %3279 = vmatpush1.msra.mxu0 0.0
        %3280 = vmatprep.subr.mxu0 0.0
        %3281 = vmatpush1.msra.mxu0 0.0
        %3282 = vmatprep.subr.mxu0 0.0
        %3283 = vmatpush1.msra.mxu0 0.0
        %3284 = vmatprep.subr.mxu0 0.0
        %3285 = vmatpush1.msra.mxu0 0.0
        %3286 = vmatprep.subr.mxu0 0.0
        %3287 = vmatpush1.msra.mxu0 0.0
        %3288 = vmatprep.subr.mxu0 0.0
        %3289 = vmatpush1.msra.mxu0 0.0
        %3290 = vmatprep.subr.mxu0 0.0
        %3291 = vmatpush1.msra.mxu0 0.0
        %3292 = vmatprep.subr.mxu0 0.0
        %3293 = vmatpush1.msra.mxu0 0.0
        %3294 = vmatprep.subr.mxu0 0.0
        %3295 = vmatpush1.msra.mxu0 0.0
        %3296 = vmatprep.subr.mxu0 0.0
        %3297 = vmatpush1.msra.mxu0 0.0
        %3298 = vmatprep.subr.mxu0 0.0
        %3299 = vmatpush1.msra.mxu0 0.0
        %3300 = vmatprep.subr.mxu0 0.0
        %3301 = vmatpush1.msra.mxu0 0.0
        %3302 = vmatprep.mubr.f32.mxu0 0.0
        %3303 = vmatmul.mubr.f32.gmra.mrb[0].mxu0 %v3189
        %v3304 = vpop.f32.mrb[0].mxu0
        %v3305 = vadd.f32 0.0, %v3304
        %v3306 = vpop.f32.mrb[0].mxu0
        %3307 = vmatprep.mubr.f32.mxu0 0.0
        %3308 = vmatmul.mubr.f32.gmra.mrb[0].mxu0 %v3190
        %v3309 = vpop.f32.mrb[0].mxu0
        %v3310 = vadd.f32 0.0, %v3309
        %v3311 = vpop.f32.mrb[0].mxu0
        %3312 = vmatprep.mubr.f32.mxu0 0.0
        %3313 = vmatmul.mubr.f32.gmra.mrb[0].mxu0 %v3191
        %v3314 = vpop.f32.mrb[0].mxu0
        %v3315 = vadd.f32 0.0, %v3314
        %v3316 = vpop.f32.mrb[0].mxu0
        %3317 = vmatprep.mubr.f32.mxu0 0.0
        %3318 = vmatmul.mubr.f32.gmra.mrb[0].mxu0 %v3192
        %v3319 = vpop.f32.mrb[0].mxu0
        %v3320 = vadd.f32 0.0, %v3319
        %v3321 = vpop.f32.mrb[0].mxu0
        %3322 = vmatprep.mubr.f32.mxu0 0.0
        %3323 = vmatmul.mubr.f32.gmra.mrb[0].mxu0 %v3193
        %v3324 = vpop.f32.mrb[0].mxu0
        %v3325 = vadd.f32 0.0, %v3324
        %v3326 = vpop.f32.mrb[0].mxu0
        %3327 = vmatprep.mubr.f32.mxu0 0.0
        %3328 = vmatmul.mubr.f32.gmra.mrb[0].mxu0 %v3194
        %v3329 = vpop.f32.mrb[0].mxu0
        %v3330 = vadd.f32 0.0, %v3329
        %v3331 = vpop.f32.mrb[0].mxu0
        %3332 = vmatprep.mubr.f32.mxu0 0.0
        %3333 = vmatmul.mubr.f32.gmra.mrb[0].mxu0 %v3195
        %v3334 = vpop.f32.mrb[0].mxu0
        %v3335 = vadd.f32 0.0, %v3334
        %v3336 = vpop.f32.mrb[0].mxu0
        %3337 = vmatprep.mubr.f32.mxu0 0.0
        %3338 = vmatmul.mubr.f32.gmra.mrb[0].mxu0 %v3196
        %v3339 = vpop.f32.mrb[0].mxu0
        %v3340 = vadd.f32 0.0, %v3339
        %v3341 = vpop.f32.mrb[0].mxu0
        %3342 = vmatprep.mubr.f32.mxu0 0.0
        %3343 = vmatmul.mubr.f32.gmra.mrb[0].mxu0 %v3197
        %v3344 = vpop.f32.mrb[0].mxu0
        %v3345 = vadd.f32 0.0, %v3344
        %v3346 = vpop.f32.mrb[0].mxu0
        %3347 = vmatprep.mubr.f32.mxu0 0.0
        %3348 = vmatmul.mubr.f32.gmra.mrb[0].mxu0 %v3198
        %v3349 = vpop.f32.mrb[0].mxu0
        %v3350 = vadd.f32 0.0, %v3349
        %v3351 = vpop.f32.mrb[0].mxu0
        %3352 = vmatprep.mubr.f32.mxu0 0.0
        %3353 = vmatmul.mubr.f32.gmra.mrb[0].mxu0 %v3199
        %v3354 = vpop.f32.mrb[0].mxu0
        %v3355 = vadd.f32 0.0, %v3354
        %v3356 = vpop.f32.mrb[0].mxu0
        %3357 = vmatprep.mubr.f32.mxu0 0.0
        %3358 = vmatmul.mubr.f32.gmra.mrb[0].mxu0 %v3200
        %v3359 = vpop.f32.mrb[0].mxu0
        %v3360 = vadd.f32 0.0, %v3359
        %v3361 = vpop.f32.mrb[0].mxu0
        %3362 = vmatprep.mubr.f32.mxu0 0.0
        %3363 = vmatmul.mubr.f32.gmra.mrb[0].mxu0 %v3201
        %v3364 = vpop.f32.mrb[0].mxu0
        %v3365 = vadd.f32 0.0, %v3364
        %v3366 = vpop.f32.mrb[0].mxu0
        %3367 = vmatprep.mubr.f32.mxu0 0.0
        %3368 = vmatmul.mubr.f32.gmra.mrb[0].mxu0 %v3202
        %v3369 = vpop.f32.mrb[0].mxu0
        %v3370 = vadd.f32 0.0, %v3369
        %v3371 = vpop.f32.mrb[0].mxu0
        %3372 = vmatprep.mubr.f32.mxu0 0.0
        %3373 = vmatmul.mubr.f32.gmra.mrb[0].mxu0 %v3203
        %v3374 = vpop.f32.mrb[0].mxu0
        %v3375 = vadd.f32 0.0, %v3374
        %v3376 = vpop.f32.mrb[0].mxu0
        %3377 = vmatprep.mubr.f32.mxu0 0.0
        %3378 = vmatmul.mubr.f32.gmra.mrb[0].mxu0 %v3204
        %v3379 = vpop.f32.mrb[0].mxu0
        %v3380 = vadd.f32 0.0, %v3379
        %v3381 = vpop.f32.mrb[0].mxu0
        %3382 = vmatprep.mubr.f32.mxu0 0.0
        %3383 = vmatmul.mubr.f32.gmra.mrb[0].mxu0 %v3205
        %v3384 = vpop.f32.mrb[0].mxu0
        %v3385 = vadd.f32 0.0, %v3384
        %v3386 = vpop.f32.mrb[0].mxu0
        %3387 = vmatprep.mubr.f32.mxu0 0.0
        %3388 = vmatmul.mubr.f32.gmra.mrb[0].mxu0 %v3206
        %v3389 = vpop.f32.mrb[0].mxu0
        %v3390 = vadd.f32 0.0, %v3389
        %v3391 = vpop.f32.mrb[0].mxu0
        %3392 = vmatprep.mubr.f32.mxu0 0.0
        %3393 = vmatmul.mubr.f32.gmra.mrb[0].mxu0 %v3207
        %v3394 = vpop.f32.mrb[0].mxu0
        %v3395 = vadd.f32 0.0, %v3394
        %v3396 = vpop.f32.mrb[0].mxu0
        %3397 = vmatprep.mubr.f32.mxu0 0.0
        %3398 = vmatmul.mubr.f32.gmra.mrb[0].mxu0 %v3208
        %v3399 = vpop.f32.mrb[0].mxu0
        %v3400 = vadd.f32 0.0, %v3399
        %v3401 = vpop.f32.mrb[0].mxu0
        %3402 = vmatprep.mubr.f32.mxu0 0.0
        %3403 = vmatmul.mubr.f32.gmra.mrb[0].mxu0 %v3209
        %v3404 = vpop.f32.mrb[0].mxu0
        %v3405 = vadd.f32 0.0, %v3404
        %v3406 = vpop.f32.mrb[0].mxu0
        %3407 = vmatprep.mubr.f32.mxu0 0.0
        %3408 = vmatmul.mubr.f32.gmra.mrb[0].mxu0 %v3210
        %v3409 = vpop.f32.mrb[0].mxu0
        %v3410 = vadd.f32 0.0, %v3409
        %v3411 = vpop.f32.mrb[0].mxu0
        %3412 = vmatprep.mubr.f32.mxu0 0.0
        %3413 = vmatmul.mubr.f32.gmra.mrb[0].mxu0 %v3211
        %v3414 = vpop.f32.mrb[0].mxu0
        %v3415 = vadd.f32 0.0, %v3414
        %v3416 = vpop.f32.mrb[0].mxu0
        %3417 = vmatprep.mubr.f32.mxu0 0.0
        %3418 = vmatmul.mubr.f32.gmra.mrb[0].mxu0 %v3212
        %v3419 = vpop.f32.mrb[0].mxu0
        %v3420 = vadd.f32 0.0, %v3419
        %v3421 = vpop.f32.mrb[0].mxu0
        %3422 = vmatprep.mubr.f32.mxu0 0.0
        %3423 = vmatmul.mubr.f32.gmra.mrb[0].mxu0 %v3213
        %v3424 = vpop.f32.mrb[0].mxu0
        %v3425 = vadd.f32 0.0, %v3424
        %v3426 = vpop.f32.mrb[0].mxu0
        %3427 = vmatprep.mubr.f32.mxu0 0.0
        %3428 = vmatmul.mubr.f32.gmra.mrb[0].mxu0 %v3214
        %v3429 = vpop.f32.mrb[0].mxu0
        %v3430 = vadd.f32 0.0, %v3429
        %v3431 = vpop.f32.mrb[0].mxu0
        %3432 = vmatprep.mubr.f32.mxu0 0.0
        %3433 = vmatmul.mubr.f32.gmra.mrb[0].mxu0 %v3215
        %v3434 = vpop.f32.mrb[0].mxu0
        %v3435 = vadd.f32 0.0, %v3434
        %v3436 = vpop.f32.mrb[0].mxu0
        %3437 = vmatprep.mubr.f32.mxu0 0.0
        %3438 = vmatmul.mubr.f32.gmra.mrb[0].mxu0 %v3216
        %v3439 = vpop.f32.mrb[0].mxu0
        %v3440 = vadd.f32 0.0, %v3439
        %v3441 = vpop.f32.mrb[0].mxu0
        %3442 = vmatprep.mubr.f32.mxu0 0.0
        %3443 = vmatmul.mubr.f32.gmra.mrb[0].mxu0 %v3217
        %v3444 = vpop.f32.mrb[0].mxu0
        %v3445 = vadd.f32 0.0, %v3444
        %v3446 = vpop.f32.mrb[0].mxu0
        %3447 = vmatprep.mubr.f32.mxu0 0.0
        %3448 = vmatmul.mubr.f32.gmra.mrb[0].mxu0 %v3218
        %v3449 = vpop.f32.mrb[0].mxu0
        %v3450 = vadd.f32 0.0, %v3449
        %v3451 = vpop.f32.mrb[0].mxu0
        %3452 = vmatprep.mubr.f32.mxu0 0.0
        %3453 = vmatmul.mubr.f32.gmra.mrb[0].mxu0 %v3219
        %v3454 = vpop.f32.mrb[0].mxu0
        %v3455 = vadd.f32 0.0, %v3454
        %v3456 = vpop.f32.mrb[0].mxu0
        %3457 = vmatprep.mubr.f32.mxu0 0.0
        %3458 = vmatmul.mubr.f32.gmra.mrb[0].mxu0 %v3220
        %v3459 = vpop.f32.mrb[0].mxu0
        %v3460 = vadd.f32 0.0, %v3459
        %v3461 = vpop.f32.mrb[0].mxu0
        %3462 = vdwg.mxu0
        %3463 = vmatprep.subr.mxu0 0.0
        %3464 = vmatpush1.msra.mxu0 %v3173
        %3465 = vmatprep.subr.mxu0 0.0
        %3466 = vmatpush1.msra.mxu0 %v3174
        %3467 = vmatprep.subr.mxu0 0.0
        %3468 = vmatpush1.msra.mxu0 %v3175
        %3469 = vmatprep.subr.mxu0 0.0
        %3470 = vmatpush1.msra.mxu0 %v3176
        %3471 = vmatprep.subr.mxu0 0.0
        %3472 = vmatpush1.msra.mxu0 %v3177
        %3473 = vmatprep.subr.mxu0 0.0
        %3474 = vmatpush1.msra.mxu0 %v3178
        %3475 = vmatprep.subr.mxu0 0.0
        %3476 = vmatpush1.msra.mxu0 %v3179
        %3477 = vmatprep.subr.mxu0 0.0
        %3478 = vmatpush1.msra.mxu0 %v3180
        %3479 = vmatprep.subr.mxu0 0.0
        %3480 = vmatpush1.msra.mxu0 %v3181
        %3481 = vmatprep.subr.mxu0 0.0
        %3482 = vmatpush1.msra.mxu0 %v3182
        %3483 = vmatprep.subr.mxu0 0.0
        %3484 = vmatpush1.msra.mxu0 %v3183
        %3485 = vmatprep.subr.mxu0 0.0
        %3486 = vmatpush1.msra.mxu0 %v3184
        %3487 = vmatprep.subr.mxu0 0.0
        %3488 = vmatpush1.msra.mxu0 %v3185
        %3489 = vmatprep.subr.mxu0 0.0
        %3490 = vmatpush1.msra.mxu0 %v3186
        %3491 = vmatprep.subr.mxu0 0.0
        %3492 = vmatpush1.msra.mxu0 %v3187
        %3493 = vmatprep.subr.mxu0 0.0
        %3494 = vmatpush1.msra.mxu0 %v3188
        %3495 = vmatprep.subr.mxu0 0.0
        %3496 = vmatpush1.msra.mxu0 0.0
        %3497 = vmatprep.subr.mxu0 0.0
        %3498 = vmatpush1.msra.mxu0 0.0
        %3499 = vmatprep.subr.mxu0 0.0
        %3500 = vmatpush1.msra.mxu0 0.0
        %3501 = vmatprep.subr.mxu0 0.0
        %3502 = vmatpush1.msra.mxu0 0.0
        %3503 = vmatprep.subr.mxu0 0.0
        %3504 = vmatpush1.msra.mxu0 0.0
        %3505 = vmatprep.subr.mxu0 0.0
        %3506 = vmatpush1.msra.mxu0 0.0
        %3507 = vmatprep.subr.mxu0 0.0
        %3508 = vmatpush1.msra.mxu0 0.0
        %3509 = vmatprep.subr.mxu0 0.0
        %3510 = vmatpush1.msra.mxu0 0.0
        %3511 = vmatprep.subr.mxu0 0.0
        %3512 = vmatpush1.msra.mxu0 0.0
        %3513 = vmatprep.subr.mxu0 0.0
        %3514 = vmatpush1.msra.mxu0 0.0
        %3515 = vmatprep.subr.mxu0 0.0
        %3516 = vmatpush1.msra.mxu0 0.0
        %3517 = vmatprep.subr.mxu0 0.0
        %3518 = vmatpush1.msra.mxu0 0.0
        %3519 = vmatprep.subr.mxu0 0.0
        %3520 = vmatpush1.msra.mxu0 0.0
        %3521 = vmatprep.subr.mxu0 0.0
        %3522 = vmatpush1.msra.mxu0 0.0
        %3523 = vmatprep.subr.mxu0 0.0
        %3524 = vmatpush1.msra.mxu0 0.0
        %3525 = vmatprep.subr.mxu0 0.0
        %3526 = vmatpush1.msra.mxu0 0.0
        %3527 = vmatprep.mubr.f32.mxu0 0.0
        %3528 = vmatmul.mubr.f32.gmra.mrb[0].mxu0 %v3101
        %v3529 = vpop.f32.mrb[0].mxu0
        %v3530 = vadd.f32 %v3305, %v3529
        %v3531 = vpop.f32.mrb[0].mxu0
        %3532 = vmatprep.mubr.f32.mxu0 0.0
        %3533 = vmatmul.mubr.f32.gmra.mrb[0].mxu0 %v3102
        %v3534 = vpop.f32.mrb[0].mxu0
        %v3535 = vadd.f32 %v3310, %v3534
        %v3536 = vpop.f32.mrb[0].mxu0
        %3537 = vmatprep.mubr.f32.mxu0 0.0
        %3538 = vmatmul.mubr.f32.gmra.mrb[0].mxu0 %v3103
        %v3539 = vpop.f32.mrb[0].mxu0
        %v3540 = vadd.f32 %v3315, %v3539
        %v3541 = vpop.f32.mrb[0].mxu0
        %3542 = vmatprep.mubr.f32.mxu0 0.0
        %3543 = vmatmul.mubr.f32.gmra.mrb[0].mxu0 %v3104
        %v3544 = vpop.f32.mrb[0].mxu0
        %v3545 = vadd.f32 %v3320, %v3544
        %v3546 = vpop.f32.mrb[0].mxu0
        %3547 = vmatprep.mubr.f32.mxu0 0.0
        %3548 = vmatmul.mubr.f32.gmra.mrb[0].mxu0 %v3105
        %v3549 = vpop.f32.mrb[0].mxu0
        %v3550 = vadd.f32 %v3325, %v3549
        %v3551 = vpop.f32.mrb[0].mxu0
        %3552 = vmatprep.mubr.f32.mxu0 0.0
        %3553 = vmatmul.mubr.f32.gmra.mrb[0].mxu0 %v3106
        %v3554 = vpop.f32.mrb[0].mxu0
        %v3555 = vadd.f32 %v3330, %v3554
        %v3556 = vpop.f32.mrb[0].mxu0
        %3557 = vmatprep.mubr.f32.mxu0 0.0
        %3558 = vmatmul.mubr.f32.gmra.mrb[0].mxu0 %v3107
        %v3559 = vpop.f32.mrb[0].mxu0
        %v3560 = vadd.f32 %v3335, %v3559
        %v3561 = vpop.f32.mrb[0].mxu0
        %3562 = vmatprep.mubr.f32.mxu0 0.0
        %3563 = vmatmul.mubr.f32.gmra.mrb[0].mxu0 %v3108
        %v3564 = vpop.f32.mrb[0].mxu0
        %v3565 = vadd.f32 %v3340, %v3564
        %v3566 = vpop.f32.mrb[0].mxu0
        %3567 = vmatprep.mubr.f32.mxu0 0.0
        %3568 = vmatmul.mubr.f32.gmra.mrb[0].mxu0 %v3109
        %v3569 = vpop.f32.mrb[0].mxu0
        %v3570 = vadd.f32 %v3345, %v3569
        %v3571 = vpop.f32.mrb[0].mxu0
        %3572 = vmatprep.mubr.f32.mxu0 0.0
        %3573 = vmatmul.mubr.f32.gmra.mrb[0].mxu0 %v3110
        %v3574 = vpop.f32.mrb[0].mxu0
        %v3575 = vadd.f32 %v3350, %v3574
        %v3576 = vpop.f32.mrb[0].mxu0
        %3577 = vmatprep.mubr.f32.mxu0 0.0
        %3578 = vmatmul.mubr.f32.gmra.mrb[0].mxu0 %v3111
        %v3579 = vpop.f32.mrb[0].mxu0
        %v3580 = vadd.f32 %v3355, %v3579
        %v3581 = vpop.f32.mrb[0].mxu0
        %3582 = vmatprep.mubr.f32.mxu0 0.0
        %3583 = vmatmul.mubr.f32.gmra.mrb[0].mxu0 %v3112
        %v3584 = vpop.f32.mrb[0].mxu0
        %v3585 = vadd.f32 %v3360, %v3584
        %v3586 = vpop.f32.mrb[0].mxu0
        %3587 = vmatprep.mubr.f32.mxu0 0.0
        %3588 = vmatmul.mubr.f32.gmra.mrb[0].mxu0 %v3113
        %v3589 = vpop.f32.mrb[0].mxu0
        %v3590 = vadd.f32 %v3365, %v3589
        %v3591 = vpop.f32.mrb[0].mxu0
        %3592 = vmatprep.mubr.f32.mxu0 0.0
        %3593 = vmatmul.mubr.f32.gmra.mrb[0].mxu0 %v3114
        %v3594 = vpop.f32.mrb[0].mxu0
        %v3595 = vadd.f32 %v3370, %v3594
        %v3596 = vpop.f32.mrb[0].mxu0
        %3597 = vmatprep.mubr.f32.mxu0 0.0
        %3598 = vmatmul.mubr.f32.gmra.mrb[0].mxu0 %v3115
        %v3599 = vpop.f32.mrb[0].mxu0
        %v3600 = vadd.f32 %v3375, %v3599
        %v3601 = vpop.f32.mrb[0].mxu0
        %3602 = vmatprep.mubr.f32.mxu0 0.0
        %3603 = vmatmul.mubr.f32.gmra.mrb[0].mxu0 %v3116
        %v3604 = vpop.f32.mrb[0].mxu0
        %v3605 = vadd.f32 %v3380, %v3604
        %v3606 = vpop.f32.mrb[0].mxu0
        %3607 = vmatprep.mubr.f32.mxu0 0.0
        %3608 = vmatmul.mubr.f32.gmra.mrb[0].mxu0 %v3117
        %v3609 = vpop.f32.mrb[0].mxu0
        %v3610 = vadd.f32 %v3385, %v3609
        %v3611 = vpop.f32.mrb[0].mxu0
        %3612 = vmatprep.mubr.f32.mxu0 0.0
        %3613 = vmatmul.mubr.f32.gmra.mrb[0].mxu0 %v3118
        %v3614 = vpop.f32.mrb[0].mxu0
        %v3615 = vadd.f32 %v3390, %v3614
        %v3616 = vpop.f32.mrb[0].mxu0
        %3617 = vmatprep.mubr.f32.mxu0 0.0
        %3618 = vmatmul.mubr.f32.gmra.mrb[0].mxu0 %v3119
        %v3619 = vpop.f32.mrb[0].mxu0
        %v3620 = vadd.f32 %v3395, %v3619
        %v3621 = vpop.f32.mrb[0].mxu0
        %3622 = vmatprep.mubr.f32.mxu0 0.0
        %3623 = vmatmul.mubr.f32.gmra.mrb[0].mxu0 %v3120
        %v3624 = vpop.f32.mrb[0].mxu0
        %v3625 = vadd.f32 %v3400, %v3624
        %v3626 = vpop.f32.mrb[0].mxu0
        %3627 = vmatprep.mubr.f32.mxu0 0.0
        %3628 = vmatmul.mubr.f32.gmra.mrb[0].mxu0 %v3121
        %v3629 = vpop.f32.mrb[0].mxu0
        %v3630 = vadd.f32 %v3405, %v3629
        %v3631 = vpop.f32.mrb[0].mxu0
        %3632 = vmatprep.mubr.f32.mxu0 0.0
        %3633 = vmatmul.mubr.f32.gmra.mrb[0].mxu0 %v3122
        %v3634 = vpop.f32.mrb[0].mxu0
        %v3635 = vadd.f32 %v3410, %v3634
        %v3636 = vpop.f32.mrb[0].mxu0
        %3637 = vmatprep.mubr.f32.mxu0 0.0
        %3638 = vmatmul.mubr.f32.gmra.mrb[0].mxu0 %v3123
        %v3639 = vpop.f32.mrb[0].mxu0
        %v3640 = vadd.f32 %v3415, %v3639
        %v3641 = vpop.f32.mrb[0].mxu0
        %3642 = vmatprep.mubr.f32.mxu0 0.0
        %3643 = vmatmul.mubr.f32.gmra.mrb[0].mxu0 %v3124
        %v3644 = vpop.f32.mrb[0].mxu0
        %v3645 = vadd.f32 %v3420, %v3644
        %v3646 = vpop.f32.mrb[0].mxu0
        %3647 = vmatprep.mubr.f32.mxu0 0.0
        %3648 = vmatmul.mubr.f32.gmra.mrb[0].mxu0 %v3125
        %v3649 = vpop.f32.mrb[0].mxu0
        %v3650 = vadd.f32 %v3425, %v3649
        %v3651 = vpop.f32.mrb[0].mxu0
        %3652 = vmatprep.mubr.f32.mxu0 0.0
        %3653 = vmatmul.mubr.f32.gmra.mrb[0].mxu0 %v3126
        %v3654 = vpop.f32.mrb[0].mxu0
        %v3655 = vadd.f32 %v3430, %v3654
        %v3656 = vpop.f32.mrb[0].mxu0
        %3657 = vmatprep.mubr.f32.mxu0 0.0
        %3658 = vmatmul.mubr.f32.gmra.mrb[0].mxu0 %v3127
        %v3659 = vpop.f32.mrb[0].mxu0
        %v3660 = vadd.f32 %v3435, %v3659
        %v3661 = vpop.f32.mrb[0].mxu0
        %3662 = vmatprep.mubr.f32.mxu0 0.0
        %3663 = vmatmul.mubr.f32.gmra.mrb[0].mxu0 %v3128
        %v3664 = vpop.f32.mrb[0].mxu0
        %v3665 = vadd.f32 %v3440, %v3664
        %v3666 = vpop.f32.mrb[0].mxu0
        %3667 = vmatprep.mubr.f32.mxu0 0.0
        %3668 = vmatmul.mubr.f32.gmra.mrb[0].mxu0 %v3129
        %v3669 = vpop.f32.mrb[0].mxu0
        %v3670 = vadd.f32 %v3445, %v3669
        %v3671 = vpop.f32.mrb[0].mxu0
        %3672 = vmatprep.mubr.f32.mxu0 0.0
        %3673 = vmatmul.mubr.f32.gmra.mrb[0].mxu0 %v3130
        %v3674 = vpop.f32.mrb[0].mxu0
        %v3675 = vadd.f32 %v3450, %v3674
        %v3676 = vpop.f32.mrb[0].mxu0
        %3677 = vmatprep.mubr.f32.mxu0 0.0
        %3678 = vmatmul.mubr.f32.gmra.mrb[0].mxu0 %v3131
        %v3679 = vpop.f32.mrb[0].mxu0
        %v3680 = vadd.f32 %v3455, %v3679
        %v3681 = vpop.f32.mrb[0].mxu0
        %3682 = vmatprep.mubr.f32.mxu0 0.0
        %3683 = vmatmul.mubr.f32.gmra.mrb[0].mxu0 %v3132
        %v3684 = vpop.f32.mrb[0].mxu0
        %v3685 = vadd.f32 %v3460, %v3684
        %v3686 = vpop.f32.mrb[0].mxu0
        %3687 = vdwg.mxu0
        %s3688 = scalar_lea.vmem [#allocation9], 256
        %v3689 = vld [vmem:[%s3688] sm:$0xff]
        %v3690 = vld [vmem:[%s3688 + $0x8] sm:$0xff]
        %v3691 = vld [vmem:[%s3688 + $0x10] sm:$0xff]
        %v3692 = vld [vmem:[%s3688 + $0x18] sm:$0xff]
        %v3693 = vld [vmem:[%s3688 + $0x20] sm:$0xff]
        %v3694 = vld [vmem:[%s3688 + $0x28] sm:$0xff]
        %v3695 = vld [vmem:[%s3688 + $0x30] sm:$0xff]
        %v3696 = vld [vmem:[%s3688 + $0x38] sm:$0xff]
        %v3697 = vld [vmem:[%s3688 + $0x40] sm:$0xff]
        %v3698 = vld [vmem:[%s3688 + $0x48] sm:$0xff]
        %v3699 = vld [vmem:[%s3688 + $0x50] sm:$0xff]
        %v3700 = vld [vmem:[%s3688 + $0x58] sm:$0xff]
        %v3701 = vld [vmem:[%s3688 + $0x60] sm:$0xff]
        %v3702 = vld [vmem:[%s3688 + $0x68] sm:$0xff]
        %v3703 = vld [vmem:[%s3688 + $0x70] sm:$0xff]
        %v3704 = vld [vmem:[%s3688 + $0x78] sm:$0xff]
        %3705 = vmatprep.subr.mxu0 0.0
        %3706 = vmatpush1.msra.mxu0 %v3689
        %3707 = vmatprep.subr.mxu0 0.0
        %3708 = vmatpush1.msra.mxu0 %v3690
        %3709 = vmatprep.subr.mxu0 0.0
        %3710 = vmatpush1.msra.mxu0 %v3691
        %3711 = vmatprep.subr.mxu0 0.0
        %3712 = vmatpush1.msra.mxu0 %v3692
        %3713 = vmatprep.subr.mxu0 0.0
        %3714 = vmatpush1.msra.mxu0 %v3693
        %3715 = vmatprep.subr.mxu0 0.0
        %3716 = vmatpush1.msra.mxu0 %v3694
        %3717 = vmatprep.subr.mxu0 0.0
        %3718 = vmatpush1.msra.mxu0 %v3695
        %3719 = vmatprep.subr.mxu0 0.0
        %3720 = vmatpush1.msra.mxu0 %v3696
        %3721 = vmatprep.subr.mxu0 0.0
        %3722 = vmatpush1.msra.mxu0 %v3697
        %3723 = vmatprep.subr.mxu0 0.0
        %3724 = vmatpush1.msra.mxu0 %v3698
        %3725 = vmatprep.subr.mxu0 0.0
        %3726 = vmatpush1.msra.mxu0 %v3699
        %3727 = vmatprep.subr.mxu0 0.0
        %3728 = vmatpush1.msra.mxu0 %v3700
        %3729 = vmatprep.subr.mxu0 0.0
        %3730 = vmatpush1.msra.mxu0 %v3701
        %3731 = vmatprep.subr.mxu0 0.0
        %3732 = vmatpush1.msra.mxu0 %v3702
        %3733 = vmatprep.subr.mxu0 0.0
        %3734 = vmatpush1.msra.mxu0 %v3703
        %3735 = vmatprep.subr.mxu0 0.0
        %3736 = vmatpush1.msra.mxu0 %v3704
        %3737 = vmatprep.subr.mxu0 0.0
        %3738 = vmatpush1.msra.mxu0 0.0
        %3739 = vmatprep.subr.mxu0 0.0
        %3740 = vmatpush1.msra.mxu0 0.0
        %3741 = vmatprep.subr.mxu0 0.0
        %3742 = vmatpush1.msra.mxu0 0.0
        %3743 = vmatprep.subr.mxu0 0.0
        %3744 = vmatpush1.msra.mxu0 0.0
        %3745 = vmatprep.subr.mxu0 0.0
        %3746 = vmatpush1.msra.mxu0 0.0
        %3747 = vmatprep.subr.mxu0 0.0
        %3748 = vmatpush1.msra.mxu0 0.0
        %3749 = vmatprep.subr.mxu0 0.0
        %3750 = vmatpush1.msra.mxu0 0.0
        %3751 = vmatprep.subr.mxu0 0.0
        %3752 = vmatpush1.msra.mxu0 0.0
        %3753 = vmatprep.subr.mxu0 0.0
        %3754 = vmatpush1.msra.mxu0 0.0
        %3755 = vmatprep.subr.mxu0 0.0
        %3756 = vmatpush1.msra.mxu0 0.0
        %3757 = vmatprep.subr.mxu0 0.0
        %3758 = vmatpush1.msra.mxu0 0.0
        %3759 = vmatprep.subr.mxu0 0.0
        %3760 = vmatpush1.msra.mxu0 0.0
        %3761 = vmatprep.subr.mxu0 0.0
        %3762 = vmatpush1.msra.mxu0 0.0
        %3763 = vmatprep.subr.mxu0 0.0
        %3764 = vmatpush1.msra.mxu0 0.0
        %3765 = vmatprep.subr.mxu0 0.0
        %3766 = vmatpush1.msra.mxu0 0.0
        %3767 = vmatprep.subr.mxu0 0.0
        %3768 = vmatpush1.msra.mxu0 0.0
        %3769 = vmatprep.mubr.f32.mxu0 0.0
        %3770 = vmatmul.mubr.f32.gmra.mrb[0].mxu0 %v3137
        %v3771 = vpop.f32.mrb[0].mxu0
        %v3772 = vadd.f32 0.0, %v3771
        %v3773 = vpop.f32.mrb[0].mxu0
        %3774 = vmatprep.mubr.f32.mxu0 0.0
        %3775 = vmatmul.mubr.f32.gmra.mrb[0].mxu0 %v3138
        %v3776 = vpop.f32.mrb[0].mxu0
        %v3777 = vadd.f32 0.0, %v3776
        %v3778 = vpop.f32.mrb[0].mxu0
        %3779 = vmatprep.mubr.f32.mxu0 0.0
        %3780 = vmatmul.mubr.f32.gmra.mrb[0].mxu0 %v3139
        %v3781 = vpop.f32.mrb[0].mxu0
        %v3782 = vadd.f32 0.0, %v3781
        %v3783 = vpop.f32.mrb[0].mxu0
        %3784 = vmatprep.mubr.f32.mxu0 0.0
        %3785 = vmatmul.mubr.f32.gmra.mrb[0].mxu0 %v3140
        %v3786 = vpop.f32.mrb[0].mxu0
        %v3787 = vadd.f32 0.0, %v3786
        %v3788 = vpop.f32.mrb[0].mxu0
        %3789 = vmatprep.mubr.f32.mxu0 0.0
        %3790 = vmatmul.mubr.f32.gmra.mrb[0].mxu0 %v3141
        %v3791 = vpop.f32.mrb[0].mxu0
        %v3792 = vadd.f32 0.0, %v3791
        %v3793 = vpop.f32.mrb[0].mxu0
        %3794 = vmatprep.mubr.f32.mxu0 0.0
        %3795 = vmatmul.mubr.f32.gmra.mrb[0].mxu0 %v3142
        %v3796 = vpop.f32.mrb[0].mxu0
        %v3797 = vadd.f32 0.0, %v3796
        %v3798 = vpop.f32.mrb[0].mxu0
        %3799 = vmatprep.mubr.f32.mxu0 0.0
        %3800 = vmatmul.mubr.f32.gmra.mrb[0].mxu0 %v3143
        %v3801 = vpop.f32.mrb[0].mxu0
        %v3802 = vadd.f32 0.0, %v3801
        %v3803 = vpop.f32.mrb[0].mxu0
        %3804 = vmatprep.mubr.f32.mxu0 0.0
        %3805 = vmatmul.mubr.f32.gmra.mrb[0].mxu0 %v3144
        %v3806 = vpop.f32.mrb[0].mxu0
        %v3807 = vadd.f32 0.0, %v3806
        %v3808 = vpop.f32.mrb[0].mxu0
        %3809 = vmatprep.mubr.f32.mxu0 0.0
        %3810 = vmatmul.mubr.f32.gmra.mrb[0].mxu0 %v3145
        %v3811 = vpop.f32.mrb[0].mxu0
        %v3812 = vadd.f32 0.0, %v3811
        %v3813 = vpop.f32.mrb[0].mxu0
        %3814 = vmatprep.mubr.f32.mxu0 0.0
        %3815 = vmatmul.mubr.f32.gmra.mrb[0].mxu0 %v3146
        %v3816 = vpop.f32.mrb[0].mxu0
        %v3817 = vadd.f32 0.0, %v3816
        %v3818 = vpop.f32.mrb[0].mxu0
        %3819 = vmatprep.mubr.f32.mxu0 0.0
        %3820 = vmatmul.mubr.f32.gmra.mrb[0].mxu0 %v3147
        %v3821 = vpop.f32.mrb[0].mxu0
        %v3822 = vadd.f32 0.0, %v3821
        %v3823 = vpop.f32.mrb[0].mxu0
        %3824 = vmatprep.mubr.f32.mxu0 0.0
        %3825 = vmatmul.mubr.f32.gmra.mrb[0].mxu0 %v3148
        %v3826 = vpop.f32.mrb[0].mxu0
        %v3827 = vadd.f32 0.0, %v3826
        %v3828 = vpop.f32.mrb[0].mxu0
        %3829 = vmatprep.mubr.f32.mxu0 0.0
        %3830 = vmatmul.mubr.f32.gmra.mrb[0].mxu0 %v3149
        %v3831 = vpop.f32.mrb[0].mxu0
        %v3832 = vadd.f32 0.0, %v3831
        %v3833 = vpop.f32.mrb[0].mxu0
        %3834 = vmatprep.mubr.f32.mxu0 0.0
        %3835 = vmatmul.mubr.f32.gmra.mrb[0].mxu0 %v3150
        %v3836 = vpop.f32.mrb[0].mxu0
        %v3837 = vadd.f32 0.0, %v3836
        %v3838 = vpop.f32.mrb[0].mxu0
        %3839 = vmatprep.mubr.f32.mxu0 0.0
        %3840 = vmatmul.mubr.f32.gmra.mrb[0].mxu0 %v3151
        %v3841 = vpop.f32.mrb[0].mxu0
        %v3842 = vadd.f32 0.0, %v3841
        %v3843 = vpop.f32.mrb[0].mxu0
        %3844 = vmatprep.mubr.f32.mxu0 0.0
        %3845 = vmatmul.mubr.f32.gmra.mrb[0].mxu0 %v3152
        %v3846 = vpop.f32.mrb[0].mxu0
        %v3847 = vadd.f32 0.0, %v3846
        %v3848 = vpop.f32.mrb[0].mxu0
        %3849 = vmatprep.mubr.f32.mxu0 0.0
        %3850 = vmatmul.mubr.f32.gmra.mrb[0].mxu0 %v3153
        %v3851 = vpop.f32.mrb[0].mxu0
        %v3852 = vadd.f32 0.0, %v3851
        %v3853 = vpop.f32.mrb[0].mxu0
        %3854 = vmatprep.mubr.f32.mxu0 0.0
        %3855 = vmatmul.mubr.f32.gmra.mrb[0].mxu0 %v3154
        %v3856 = vpop.f32.mrb[0].mxu0
        %v3857 = vadd.f32 0.0, %v3856
        %v3858 = vpop.f32.mrb[0].mxu0
        %3859 = vmatprep.mubr.f32.mxu0 0.0
        %3860 = vmatmul.mubr.f32.gmra.mrb[0].mxu0 %v3155
        %v3861 = vpop.f32.mrb[0].mxu0
        %v3862 = vadd.f32 0.0, %v3861
        %v3863 = vpop.f32.mrb[0].mxu0
        %3864 = vmatprep.mubr.f32.mxu0 0.0
        %3865 = vmatmul.mubr.f32.gmra.mrb[0].mxu0 %v3156
        %v3866 = vpop.f32.mrb[0].mxu0
        %v3867 = vadd.f32 0.0, %v3866
        %v3868 = vpop.f32.mrb[0].mxu0
        %3869 = vmatprep.mubr.f32.mxu0 0.0
        %3870 = vmatmul.mubr.f32.gmra.mrb[0].mxu0 %v3157
        %v3871 = vpop.f32.mrb[0].mxu0
        %v3872 = vadd.f32 0.0, %v3871
        %v3873 = vpop.f32.mrb[0].mxu0
        %3874 = vmatprep.mubr.f32.mxu0 0.0
        %3875 = vmatmul.mubr.f32.gmra.mrb[0].mxu0 %v3158
        %v3876 = vpop.f32.mrb[0].mxu0
        %v3877 = vadd.f32 0.0, %v3876
        %v3878 = vpop.f32.mrb[0].mxu0
        %3879 = vmatprep.mubr.f32.mxu0 0.0
        %3880 = vmatmul.mubr.f32.gmra.mrb[0].mxu0 %v3159
        %v3881 = vpop.f32.mrb[0].mxu0
        %v3882 = vadd.f32 0.0, %v3881
        %v3883 = vpop.f32.mrb[0].mxu0
        %3884 = vmatprep.mubr.f32.mxu0 0.0
        %3885 = vmatmul.mubr.f32.gmra.mrb[0].mxu0 %v3160
        %v3886 = vpop.f32.mrb[0].mxu0
        %v3887 = vadd.f32 0.0, %v3886
        %v3888 = vpop.f32.mrb[0].mxu0
        %3889 = vmatprep.mubr.f32.mxu0 0.0
        %3890 = vmatmul.mubr.f32.gmra.mrb[0].mxu0 %v3161
        %v3891 = vpop.f32.mrb[0].mxu0
        %v3892 = vadd.f32 0.0, %v3891
        %v3893 = vpop.f32.mrb[0].mxu0
        %3894 = vmatprep.mubr.f32.mxu0 0.0
        %3895 = vmatmul.mubr.f32.gmra.mrb[0].mxu0 %v3162
        %v3896 = vpop.f32.mrb[0].mxu0
        %v3897 = vadd.f32 0.0, %v3896
        %v3898 = vpop.f32.mrb[0].mxu0
        %3899 = vmatprep.mubr.f32.mxu0 0.0
        %3900 = vmatmul.mubr.f32.gmra.mrb[0].mxu0 %v3163
        %v3901 = vpop.f32.mrb[0].mxu0
        %v3902 = vadd.f32 0.0, %v3901
        %v3903 = vpop.f32.mrb[0].mxu0
        %3904 = vmatprep.mubr.f32.mxu0 0.0
        %3905 = vmatmul.mubr.f32.gmra.mrb[0].mxu0 %v3164
        %v3906 = vpop.f32.mrb[0].mxu0
        %v3907 = vadd.f32 0.0, %v3906
        %v3908 = vpop.f32.mrb[0].mxu0
        %3909 = vmatprep.mubr.f32.mxu0 0.0
        %3910 = vmatmul.mubr.f32.gmra.mrb[0].mxu0 %v3165
        %v3911 = vpop.f32.mrb[0].mxu0
        %v3912 = vadd.f32 0.0, %v3911
        %v3913 = vpop.f32.mrb[0].mxu0
        %3914 = vmatprep.mubr.f32.mxu0 0.0
        %3915 = vmatmul.mubr.f32.gmra.mrb[0].mxu0 %v3166
        %v3916 = vpop.f32.mrb[0].mxu0
        %v3917 = vadd.f32 0.0, %v3916
        %v3918 = vpop.f32.mrb[0].mxu0
        %3919 = vmatprep.mubr.f32.mxu0 0.0
        %3920 = vmatmul.mubr.f32.gmra.mrb[0].mxu0 %v3167
        %v3921 = vpop.f32.mrb[0].mxu0
        %v3922 = vadd.f32 0.0, %v3921
        %v3923 = vpop.f32.mrb[0].mxu0
        %3924 = vmatprep.mubr.f32.mxu0 0.0
        %3925 = vmatmul.mubr.f32.gmra.mrb[0].mxu0 %v3168
        %v3926 = vpop.f32.mrb[0].mxu0
        %v3927 = vadd.f32 0.0, %v3926
        %v3928 = vpop.f32.mrb[0].mxu0
        %3929 = vdwg.mxu0
        %v3930 = vadd.f32 %v3530, %v3772
        %v3931 = vadd.f32 %v3535, %v3777
        %v3932 = vadd.f32 %v3540, %v3782
        %v3933 = vadd.f32 %v3545, %v3787
        %v3934 = vadd.f32 %v3550, %v3792
        %v3935 = vadd.f32 %v3555, %v3797
        %v3936 = vadd.f32 %v3560, %v3802
        %v3937 = vadd.f32 %v3565, %v3807
        %v3938 = vadd.f32 %v3570, %v3812
        %v3939 = vadd.f32 %v3575, %v3817
        %v3940 = vadd.f32 %v3580, %v3822
        %v3941 = vadd.f32 %v3585, %v3827
        %v3942 = vadd.f32 %v3590, %v3832
        %v3943 = vadd.f32 %v3595, %v3837
        %v3944 = vadd.f32 %v3600, %v3842
        %v3945 = vadd.f32 %v3605, %v3847
        %v3946 = vadd.f32 %v3610, %v3852
        %v3947 = vadd.f32 %v3615, %v3857
        %v3948 = vadd.f32 %v3620, %v3862
        %v3949 = vadd.f32 %v3625, %v3867
        %v3950 = vadd.f32 %v3630, %v3872
        %v3951 = vadd.f32 %v3635, %v3877
        %v3952 = vadd.f32 %v3640, %v3882
        %v3953 = vadd.f32 %v3645, %v3887
        %v3954 = vadd.f32 %v3650, %v3892
        %v3955 = vadd.f32 %v3655, %v3897
        %v3956 = vadd.f32 %v3660, %v3902
        %v3957 = vadd.f32 %v3665, %v3907
        %v3958 = vadd.f32 %v3670, %v3912
        %v3959 = vadd.f32 %v3675, %v3917
        %v3960 = vadd.f32 %v3680, %v3922
        %v3961 = vadd.f32 %v3685, %v3927
        %s3962 = scalar_lea.vmem [#allocation9], 384
        %v3963 = vld [vmem:[%s3962] sm:$0xff]
        %v3964 = vld [vmem:[%s3962 + $0x8] sm:$0xff]
        %v3965 = vld [vmem:[%s3962 + $0x10] sm:$0xff]
        %v3966 = vld [vmem:[%s3962 + $0x18] sm:$0xff]
        %v3967 = vld [vmem:[%s3962 + $0x20] sm:$0xff]
        %v3968 = vld [vmem:[%s3962 + $0x28] sm:$0xff]
        %v3969 = vld [vmem:[%s3962 + $0x30] sm:$0xff]
        %v3970 = vld [vmem:[%s3962 + $0x38] sm:$0xff]
        %v3971 = vld [vmem:[%s3962 + $0x40] sm:$0xff]
        %v3972 = vld [vmem:[%s3962 + $0x48] sm:$0xff]
        %v3973 = vld [vmem:[%s3962 + $0x50] sm:$0xff]
        %v3974 = vld [vmem:[%s3962 + $0x58] sm:$0xff]
        %v3975 = vld [vmem:[%s3962 + $0x60] sm:$0xff]
        %v3976 = vld [vmem:[%s3962 + $0x68] sm:$0xff]
        %v3977 = vld [vmem:[%s3962 + $0x70] sm:$0xff]
        %v3978 = vld [vmem:[%s3962 + $0x78] sm:$0xff]
        %3979 = vmatprep.subr.mxu0 0.0
        %3980 = vmatpush1.msra.mxu0 %v3963
        %3981 = vmatprep.subr.mxu0 0.0
        %3982 = vmatpush1.msra.mxu0 %v3964
        %3983 = vmatprep.subr.mxu0 0.0
        %3984 = vmatpush1.msra.mxu0 %v3965
        %3985 = vmatprep.subr.mxu0 0.0
        %3986 = vmatpush1.msra.mxu0 %v3966
        %3987 = vmatprep.subr.mxu0 0.0
        %3988 = vmatpush1.msra.mxu0 %v3967
        %3989 = vmatprep.subr.mxu0 0.0
        %3990 = vmatpush1.msra.mxu0 %v3968
        %3991 = vmatprep.subr.mxu0 0.0
        %3992 = vmatpush1.msra.mxu0 %v3969
        %3993 = vmatprep.subr.mxu0 0.0
        %3994 = vmatpush1.msra.mxu0 %v3970
        %3995 = vmatprep.subr.mxu0 0.0
        %3996 = vmatpush1.msra.mxu0 %v3971
        %3997 = vmatprep.subr.mxu0 0.0
        %3998 = vmatpush1.msra.mxu0 %v3972
        %3999 = vmatprep.subr.mxu0 0.0
        %4000 = vmatpush1.msra.mxu0 %v3973
        %4001 = vmatprep.subr.mxu0 0.0
        %4002 = vmatpush1.msra.mxu0 %v3974
        %4003 = vmatprep.subr.mxu0 0.0
        %4004 = vmatpush1.msra.mxu0 %v3975
        %4005 = vmatprep.subr.mxu0 0.0
        %4006 = vmatpush1.msra.mxu0 %v3976
        %4007 = vmatprep.subr.mxu0 0.0
        %4008 = vmatpush1.msra.mxu0 %v3977
        %4009 = vmatprep.subr.mxu0 0.0
        %4010 = vmatpush1.msra.mxu0 %v3978
        %4011 = vmatprep.subr.mxu0 0.0
        %4012 = vmatpush1.msra.mxu0 0.0
        %4013 = vmatprep.subr.mxu0 0.0
        %4014 = vmatpush1.msra.mxu0 0.0
        %4015 = vmatprep.subr.mxu0 0.0
        %4016 = vmatpush1.msra.mxu0 0.0
        %4017 = vmatprep.subr.mxu0 0.0
        %4018 = vmatpush1.msra.mxu0 0.0
        %4019 = vmatprep.subr.mxu0 0.0
        %4020 = vmatpush1.msra.mxu0 0.0
        %4021 = vmatprep.subr.mxu0 0.0
        %4022 = vmatpush1.msra.mxu0 0.0
        %4023 = vmatprep.subr.mxu0 0.0
        %4024 = vmatpush1.msra.mxu0 0.0
        %4025 = vmatprep.subr.mxu0 0.0
        %4026 = vmatpush1.msra.mxu0 0.0
        %4027 = vmatprep.subr.mxu0 0.0
        %4028 = vmatpush1.msra.mxu0 0.0
        %4029 = vmatprep.subr.mxu0 0.0
        %4030 = vmatpush1.msra.mxu0 0.0
        %4031 = vmatprep.subr.mxu0 0.0
        %4032 = vmatpush1.msra.mxu0 0.0
        %4033 = vmatprep.subr.mxu0 0.0
        %4034 = vmatpush1.msra.mxu0 0.0
        %4035 = vmatprep.subr.mxu0 0.0
        %4036 = vmatpush1.msra.mxu0 0.0
        %4037 = vmatprep.subr.mxu0 0.0
        %4038 = vmatpush1.msra.mxu0 0.0
        %4039 = vmatprep.subr.mxu0 0.0
        %4040 = vmatpush1.msra.mxu0 0.0
        %4041 = vmatprep.subr.mxu0 0.0
        %4042 = vmatpush1.msra.mxu0 0.0
        %4043 = vmatprep.mubr.f32.mxu0 0.0
        %4044 = vmatmul.mubr.f32.gmra.mrb[0].mxu0 %v3103
        %v4045 = vpop.f32.mrb[0].mxu0
        %v4046 = vadd.f32 0.0, %v4045
        %v4047 = vpop.f32.mrb[0].mxu0
        %4048 = vmatprep.mubr.f32.mxu0 0.0
        %4049 = vmatmul.mubr.f32.gmra.mrb[0].mxu0 %v3104
        %v4050 = vpop.f32.mrb[0].mxu0
        %v4051 = vadd.f32 0.0, %v4050
        %v4052 = vpop.f32.mrb[0].mxu0
        %4053 = vmatprep.mubr.f32.mxu0 0.0
        %4054 = vmatmul.mubr.f32.gmra.mrb[0].mxu0 %v3105
        %v4055 = vpop.f32.mrb[0].mxu0
        %v4056 = vadd.f32 0.0, %v4055
        %v4057 = vpop.f32.mrb[0].mxu0
        %4058 = vmatprep.mubr.f32.mxu0 0.0
        %4059 = vmatmul.mubr.f32.gmra.mrb[0].mxu0 %v3106
        %v4060 = vpop.f32.mrb[0].mxu0
        %v4061 = vadd.f32 0.0, %v4060
        %v4062 = vpop.f32.mrb[0].mxu0
        %4063 = vmatprep.mubr.f32.mxu0 0.0
        %4064 = vmatmul.mubr.f32.gmra.mrb[0].mxu0 %v3107
        %v4065 = vpop.f32.mrb[0].mxu0
        %v4066 = vadd.f32 0.0, %v4065
        %v4067 = vpop.f32.mrb[0].mxu0
        %4068 = vmatprep.mubr.f32.mxu0 0.0
        %4069 = vmatmul.mubr.f32.gmra.mrb[0].mxu0 %v3108
        %v4070 = vpop.f32.mrb[0].mxu0
        %v4071 = vadd.f32 0.0, %v4070
        %v4072 = vpop.f32.mrb[0].mxu0
        %4073 = vmatprep.mubr.f32.mxu0 0.0
        %4074 = vmatmul.mubr.f32.gmra.mrb[0].mxu0 %v3109
        %v4075 = vpop.f32.mrb[0].mxu0
        %v4076 = vadd.f32 0.0, %v4075
        %v4077 = vpop.f32.mrb[0].mxu0
        %4078 = vmatprep.mubr.f32.mxu0 0.0
        %4079 = vmatmul.mubr.f32.gmra.mrb[0].mxu0 %v3110
        %v4080 = vpop.f32.mrb[0].mxu0
        %v4081 = vadd.f32 0.0, %v4080
        %v4082 = vpop.f32.mrb[0].mxu0
        %4083 = vmatprep.mubr.f32.mxu0 0.0
        %4084 = vmatmul.mubr.f32.gmra.mrb[0].mxu0 %v3111
        %v4085 = vpop.f32.mrb[0].mxu0
        %v4086 = vadd.f32 0.0, %v4085
        %v4087 = vpop.f32.mrb[0].mxu0
        %4088 = vmatprep.mubr.f32.mxu0 0.0
        %4089 = vmatmul.mubr.f32.gmra.mrb[0].mxu0 %v3112
        %v4090 = vpop.f32.mrb[0].mxu0
        %v4091 = vadd.f32 0.0, %v4090
        %v4092 = vpop.f32.mrb[0].mxu0
        %4093 = vmatprep.mubr.f32.mxu0 0.0
        %4094 = vmatmul.mubr.f32.gmra.mrb[0].mxu0 %v3113
        %v4095 = vpop.f32.mrb[0].mxu0
        %v4096 = vadd.f32 0.0, %v4095
        %v4097 = vpop.f32.mrb[0].mxu0
        %4098 = vmatprep.mubr.f32.mxu0 0.0
        %4099 = vmatmul.mubr.f32.gmra.mrb[0].mxu0 %v3114
        %v4100 = vpop.f32.mrb[0].mxu0
        %v4101 = vadd.f32 0.0, %v4100
        %v4102 = vpop.f32.mrb[0].mxu0
        %4103 = vmatprep.mubr.f32.mxu0 0.0
        %4104 = vmatmul.mubr.f32.gmra.mrb[0].mxu0 %v3115
        %v4105 = vpop.f32.mrb[0].mxu0
        %v4106 = vadd.f32 0.0, %v4105
        %v4107 = vpop.f32.mrb[0].mxu0
        %4108 = vmatprep.mubr.f32.mxu0 0.0
        %4109 = vmatmul.mubr.f32.gmra.mrb[0].mxu0 %v3116
        %v4110 = vpop.f32.mrb[0].mxu0
        %v4111 = vadd.f32 0.0, %v4110
        %v4112 = vpop.f32.mrb[0].mxu0
        %4113 = vmatprep.mubr.f32.mxu0 0.0
        %4114 = vmatmul.mubr.f32.gmra.mrb[0].mxu0 %v3117
        %v4115 = vpop.f32.mrb[0].mxu0
        %v4116 = vadd.f32 0.0, %v4115
        %v4117 = vpop.f32.mrb[0].mxu0
        %4118 = vmatprep.mubr.f32.mxu0 0.0
        %4119 = vmatmul.mubr.f32.gmra.mrb[0].mxu0 %v3118
        %v4120 = vpop.f32.mrb[0].mxu0
        %v4121 = vadd.f32 0.0, %v4120
        %v4122 = vpop.f32.mrb[0].mxu0
        %4123 = vmatprep.mubr.f32.mxu0 0.0
        %4124 = vmatmul.mubr.f32.gmra.mrb[0].mxu0 %v3119
        %v4125 = vpop.f32.mrb[0].mxu0
        %v4126 = vadd.f32 0.0, %v4125
        %v4127 = vpop.f32.mrb[0].mxu0
        %4128 = vmatprep.mubr.f32.mxu0 0.0
        %4129 = vmatmul.mubr.f32.gmra.mrb[0].mxu0 %v3120
        %v4130 = vpop.f32.mrb[0].mxu0
        %v4131 = vadd.f32 0.0, %v4130
        %v4132 = vpop.f32.mrb[0].mxu0
        %4133 = vmatprep.mubr.f32.mxu0 0.0
        %4134 = vmatmul.mubr.f32.gmra.mrb[0].mxu0 %v3121
        %v4135 = vpop.f32.mrb[0].mxu0
        %v4136 = vadd.f32 0.0, %v4135
        %v4137 = vpop.f32.mrb[0].mxu0
        %4138 = vmatprep.mubr.f32.mxu0 0.0
        %4139 = vmatmul.mubr.f32.gmra.mrb[0].mxu0 %v3122
        %v4140 = vpop.f32.mrb[0].mxu0
        %v4141 = vadd.f32 0.0, %v4140
        %v4142 = vpop.f32.mrb[0].mxu0
        %4143 = vmatprep.mubr.f32.mxu0 0.0
        %4144 = vmatmul.mubr.f32.gmra.mrb[0].mxu0 %v3123
        %v4145 = vpop.f32.mrb[0].mxu0
        %v4146 = vadd.f32 0.0, %v4145
        %v4147 = vpop.f32.mrb[0].mxu0
        %4148 = vmatprep.mubr.f32.mxu0 0.0
        %4149 = vmatmul.mubr.f32.gmra.mrb[0].mxu0 %v3124
        %v4150 = vpop.f32.mrb[0].mxu0
        %v4151 = vadd.f32 0.0, %v4150
        %v4152 = vpop.f32.mrb[0].mxu0
        %4153 = vmatprep.mubr.f32.mxu0 0.0
        %4154 = vmatmul.mubr.f32.gmra.mrb[0].mxu0 %v3125
        %v4155 = vpop.f32.mrb[0].mxu0
        %v4156 = vadd.f32 0.0, %v4155
        %v4157 = vpop.f32.mrb[0].mxu0
        %4158 = vmatprep.mubr.f32.mxu0 0.0
        %4159 = vmatmul.mubr.f32.gmra.mrb[0].mxu0 %v3126
        %v4160 = vpop.f32.mrb[0].mxu0
        %v4161 = vadd.f32 0.0, %v4160
        %v4162 = vpop.f32.mrb[0].mxu0
        %4163 = vmatprep.mubr.f32.mxu0 0.0
        %4164 = vmatmul.mubr.f32.gmra.mrb[0].mxu0 %v3127
        %v4165 = vpop.f32.mrb[0].mxu0
        %v4166 = vadd.f32 0.0, %v4165
        %v4167 = vpop.f32.mrb[0].mxu0
        %4168 = vmatprep.mubr.f32.mxu0 0.0
        %4169 = vmatmul.mubr.f32.gmra.mrb[0].mxu0 %v3128
        %v4170 = vpop.f32.mrb[0].mxu0
        %v4171 = vadd.f32 0.0, %v4170
        %v4172 = vpop.f32.mrb[0].mxu0
        %4173 = vmatprep.mubr.f32.mxu0 0.0
        %4174 = vmatmul.mubr.f32.gmra.mrb[0].mxu0 %v3129
        %v4175 = vpop.f32.mrb[0].mxu0
        %v4176 = vadd.f32 0.0, %v4175
        %v4177 = vpop.f32.mrb[0].mxu0
        %4178 = vmatprep.mubr.f32.mxu0 0.0
        %4179 = vmatmul.mubr.f32.gmra.mrb[0].mxu0 %v3130
        %v4180 = vpop.f32.mrb[0].mxu0
        %v4181 = vadd.f32 0.0, %v4180
        %v4182 = vpop.f32.mrb[0].mxu0
        %4183 = vmatprep.mubr.f32.mxu0 0.0
        %4184 = vmatmul.mubr.f32.gmra.mrb[0].mxu0 %v3131
        %v4185 = vpop.f32.mrb[0].mxu0
        %v4186 = vadd.f32 0.0, %v4185
        %v4187 = vpop.f32.mrb[0].mxu0
        %4188 = vmatprep.mubr.f32.mxu0 0.0
        %4189 = vmatmul.mubr.f32.gmra.mrb[0].mxu0 %v3132
        %v4190 = vpop.f32.mrb[0].mxu0
        %v4191 = vadd.f32 0.0, %v4190
        %v4192 = vpop.f32.mrb[0].mxu0
        %4193 = vmatprep.mubr.f32.mxu0 0.0
        %4194 = vmatmul.mubr.f32.gmra.mrb[0].mxu0 %v3133
        %v4195 = vpop.f32.mrb[0].mxu0
        %v4196 = vadd.f32 0.0, %v4195
        %v4197 = vpop.f32.mrb[0].mxu0
        %4198 = vmatprep.mubr.f32.mxu0 0.0
        %4199 = vmatmul.mubr.f32.gmra.mrb[0].mxu0 %v3134
        %v4200 = vpop.f32.mrb[0].mxu0
        %v4201 = vadd.f32 0.0, %v4200
        %v4202 = vpop.f32.mrb[0].mxu0
        %4203 = vdwg.mxu0
        %v4204 = vadd.f32 %v3930, %v4046
        %v4205 = vadd.f32 %v3931, %v4051
        %v4206 = vadd.f32 %v3932, %v4056
        %v4207 = vadd.f32 %v3933, %v4061
        %v4208 = vadd.f32 %v3934, %v4066
        %v4209 = vadd.f32 %v3935, %v4071
        %v4210 = vadd.f32 %v3936, %v4076
        %v4211 = vadd.f32 %v3937, %v4081
        %v4212 = vadd.f32 %v3938, %v4086
        %v4213 = vadd.f32 %v3939, %v4091
        %v4214 = vadd.f32 %v3940, %v4096
        %v4215 = vadd.f32 %v3941, %v4101
        %v4216 = vadd.f32 %v3942, %v4106
        %v4217 = vadd.f32 %v3943, %v4111
        %v4218 = vadd.f32 %v3944, %v4116
        %v4219 = vadd.f32 %v3945, %v4121
        %v4220 = vadd.f32 %v3946, %v4126
        %v4221 = vadd.f32 %v3947, %v4131
        %v4222 = vadd.f32 %v3948, %v4136
        %v4223 = vadd.f32 %v3949, %v4141
        %v4224 = vadd.f32 %v3950, %v4146
        %v4225 = vadd.f32 %v3951, %v4151
        %v4226 = vadd.f32 %v3952, %v4156
        %v4227 = vadd.f32 %v3953, %v4161
        %v4228 = vadd.f32 %v3954, %v4166
        %v4229 = vadd.f32 %v3955, %v4171
        %v4230 = vadd.f32 %v3956, %v4176
        %v4231 = vadd.f32 %v3957, %v4181
        %v4232 = vadd.f32 %v3958, %v4186
        %v4233 = vadd.f32 %v3959, %v4191
        %v4234 = vadd.f32 %v3960, %v4196
        %v4235 = vadd.f32 %v3961, %v4201
        %v4236 = vld [vmem:[%s3068 + $0x8] sm:$0xff]
        %v4237 = vld [vmem:[%s3068 + $0x10] sm:$0xff]
        %v4238 = vld [vmem:[%s3068 + $0x28] sm:$0xff]
        %v4239 = vld [vmem:[%s3068 + $0x30] sm:$0xff]
        %v4240 = vld [vmem:[%s3068 + $0x48] sm:$0xff]
        %v4241 = vld [vmem:[%s3068 + $0x50] sm:$0xff]
        %v4242 = vld [vmem:[%s3068 + $0x68] sm:$0xff]
        %v4243 = vld [vmem:[%s3068 + $0x70] sm:$0xff]
        %v4244 = vld [vmem:[%s3068 + $0x88] sm:$0xff]
        %v4245 = vld [vmem:[%s3068 + $0x90] sm:$0xff]
        %v4246 = vld [vmem:[%s3068 + $0xa8] sm:$0xff]
        %v4247 = vld [vmem:[%s3068 + $0xb0] sm:$0xff]
        %v4248 = vld [vmem:[%s3068 + $0xc8] sm:$0xff]
        %v4249 = vld [vmem:[%s3068 + $0xd0] sm:$0xff]
        %v4250 = vld [vmem:[%s3068 + $0xe8] sm:$0xff]
        %v4251 = vld [vmem:[%s3068 + $0xf0] sm:$0xff]
        %v4252 = vld [vmem:[%s3068 + $0x108] sm:$0xff]
        %v4253 = vld [vmem:[%s3068 + $0x110] sm:$0xff]
        %v4254 = vld [vmem:[%s3068 + $0x128] sm:$0xff]
        %v4255 = vld [vmem:[%s3068 + $0x130] sm:$0xff]
        %v4256 = vld [vmem:[%s3068 + $0x148] sm:$0xff]
        %v4257 = vld [vmem:[%s3068 + $0x150] sm:$0xff]
        %v4258 = vld [vmem:[%s3068 + $0x168] sm:$0xff]
        %v4259 = vld [vmem:[%s3068 + $0x170] sm:$0xff]
        %v4260 = vld [vmem:[%s3068 + $0x188] sm:$0xff]
        %v4261 = vld [vmem:[%s3068 + $0x190] sm:$0xff]
        %v4262 = vld [vmem:[%s3068 + $0x1a8] sm:$0xff]
        %v4263 = vld [vmem:[%s3068 + $0x1b0] sm:$0xff]
        %v4264 = vld [vmem:[%s3068 + $0x1c8] sm:$0xff]
        %v4265 = vld [vmem:[%s3068 + $0x1d0] sm:$0xff]
        %v4266 = vld [vmem:[%s3068 + $0x1e8] sm:$0xff]
        %v4267 = vld [vmem:[%s3068 + $0x1f0] sm:$0xff]
        %s4268 = scalar_lea.vmem [#allocation9], 512
        %v4269 = vld [vmem:[%s4268] sm:$0xff]
        %v4270 = vld [vmem:[%s4268 + $0x8] sm:$0xff]
        %v4271 = vld [vmem:[%s4268 + $0x10] sm:$0xff]
        %v4272 = vld [vmem:[%s4268 + $0x18] sm:$0xff]
        %v4273 = vld [vmem:[%s4268 + $0x20] sm:$0xff]
        %v4274 = vld [vmem:[%s4268 + $0x28] sm:$0xff]
        %v4275 = vld [vmem:[%s4268 + $0x30] sm:$0xff]
        %v4276 = vld [vmem:[%s4268 + $0x38] sm:$0xff]
        %v4277 = vld [vmem:[%s4268 + $0x40] sm:$0xff]
        %v4278 = vld [vmem:[%s4268 + $0x48] sm:$0xff]
        %v4279 = vld [vmem:[%s4268 + $0x50] sm:$0xff]
        %v4280 = vld [vmem:[%s4268 + $0x58] sm:$0xff]
        %v4281 = vld [vmem:[%s4268 + $0x60] sm:$0xff]
        %v4282 = vld [vmem:[%s4268 + $0x68] sm:$0xff]
        %v4283 = vld [vmem:[%s4268 + $0x70] sm:$0xff]
        %v4284 = vld [vmem:[%s4268 + $0x78] sm:$0xff]
        %4285 = vmatprep.subr.mxu0 0.0
        %4286 = vmatpush1.msra.mxu0 %v4269
        %4287 = vmatprep.subr.mxu0 0.0
        %4288 = vmatpush1.msra.mxu0 %v4270
        %4289 = vmatprep.subr.mxu0 0.0
        %4290 = vmatpush1.msra.mxu0 %v4271
        %4291 = vmatprep.subr.mxu0 0.0
        %4292 = vmatpush1.msra.mxu0 %v4272
        %4293 = vmatprep.subr.mxu0 0.0
        %4294 = vmatpush1.msra.mxu0 %v4273
        %4295 = vmatprep.subr.mxu0 0.0
        %4296 = vmatpush1.msra.mxu0 %v4274
        %4297 = vmatprep.subr.mxu0 0.0
        %4298 = vmatpush1.msra.mxu0 %v4275
        %4299 = vmatprep.subr.mxu0 0.0
        %4300 = vmatpush1.msra.mxu0 %v4276
        %4301 = vmatprep.subr.mxu0 0.0
        %4302 = vmatpush1.msra.mxu0 %v4277
        %4303 = vmatprep.subr.mxu0 0.0
        %4304 = vmatpush1.msra.mxu0 %v4278
        %4305 = vmatprep.subr.mxu0 0.0
        %4306 = vmatpush1.msra.mxu0 %v4279
        %4307 = vmatprep.subr.mxu0 0.0
        %4308 = vmatpush1.msra.mxu0 %v4280
        %4309 = vmatprep.subr.mxu0 0.0
        %4310 = vmatpush1.msra.mxu0 %v4281
        %4311 = vmatprep.subr.mxu0 0.0
        %4312 = vmatpush1.msra.mxu0 %v4282
        %4313 = vmatprep.subr.mxu0 0.0
        %4314 = vmatpush1.msra.mxu0 %v4283
        %4315 = vmatprep.subr.mxu0 0.0
        %4316 = vmatpush1.msra.mxu0 %v4284
        %4317 = vmatprep.subr.mxu0 0.0
        %4318 = vmatpush1.msra.mxu0 0.0
        %4319 = vmatprep.subr.mxu0 0.0
        %4320 = vmatpush1.msra.mxu0 0.0
        %4321 = vmatprep.subr.mxu0 0.0
        %4322 = vmatpush1.msra.mxu0 0.0
        %4323 = vmatprep.subr.mxu0 0.0
        %4324 = vmatpush1.msra.mxu0 0.0
        %4325 = vmatprep.subr.mxu0 0.0
        %4326 = vmatpush1.msra.mxu0 0.0
        %4327 = vmatprep.subr.mxu0 0.0
        %4328 = vmatpush1.msra.mxu0 0.0
        %4329 = vmatprep.subr.mxu0 0.0
        %4330 = vmatpush1.msra.mxu0 0.0
        %4331 = vmatprep.subr.mxu0 0.0
        %4332 = vmatpush1.msra.mxu0 0.0
        %4333 = vmatprep.subr.mxu0 0.0
        %4334 = vmatpush1.msra.mxu0 0.0
        %4335 = vmatprep.subr.mxu0 0.0
        %4336 = vmatpush1.msra.mxu0 0.0
        %4337 = vmatprep.subr.mxu0 0.0
        %4338 = vmatpush1.msra.mxu0 0.0
        %4339 = vmatprep.subr.mxu0 0.0
        %4340 = vmatpush1.msra.mxu0 0.0
        %4341 = vmatprep.subr.mxu0 0.0
        %4342 = vmatpush1.msra.mxu0 0.0
        %4343 = vmatprep.subr.mxu0 0.0
        %4344 = vmatpush1.msra.mxu0 0.0
        %4345 = vmatprep.subr.mxu0 0.0
        %4346 = vmatpush1.msra.mxu0 0.0
        %4347 = vmatprep.subr.mxu0 0.0
        %4348 = vmatpush1.msra.mxu0 0.0
        %4349 = vmatprep.mubr.f32.mxu0 0.0
        %4350 = vmatmul.mubr.f32.gmra.mrb[0].mxu0 %v4236
        %v4351 = vpop.f32.mrb[0].mxu0
        %v4352 = vadd.f32 0.0, %v4351
        %v4353 = vpop.f32.mrb[0].mxu0
        %4354 = vmatprep.mubr.f32.mxu0 0.0
        %4355 = vmatmul.mubr.f32.gmra.mrb[0].mxu0 %v4237
        %v4356 = vpop.f32.mrb[0].mxu0
        %v4357 = vadd.f32 0.0, %v4356
        %v4358 = vpop.f32.mrb[0].mxu0
        %4359 = vmatprep.mubr.f32.mxu0 0.0
        %4360 = vmatmul.mubr.f32.gmra.mrb[0].mxu0 %v4238
        %v4361 = vpop.f32.mrb[0].mxu0
        %v4362 = vadd.f32 0.0, %v4361
        %v4363 = vpop.f32.mrb[0].mxu0
        %4364 = vmatprep.mubr.f32.mxu0 0.0
        %4365 = vmatmul.mubr.f32.gmra.mrb[0].mxu0 %v4239
        %v4366 = vpop.f32.mrb[0].mxu0
        %v4367 = vadd.f32 0.0, %v4366
        %v4368 = vpop.f32.mrb[0].mxu0
        %4369 = vmatprep.mubr.f32.mxu0 0.0
        %4370 = vmatmul.mubr.f32.gmra.mrb[0].mxu0 %v4240
        %v4371 = vpop.f32.mrb[0].mxu0
        %v4372 = vadd.f32 0.0, %v4371
        %v4373 = vpop.f32.mrb[0].mxu0
        %4374 = vmatprep.mubr.f32.mxu0 0.0
        %4375 = vmatmul.mubr.f32.gmra.mrb[0].mxu0 %v4241
        %v4376 = vpop.f32.mrb[0].mxu0
        %v4377 = vadd.f32 0.0, %v4376
        %v4378 = vpop.f32.mrb[0].mxu0
        %4379 = vmatprep.mubr.f32.mxu0 0.0
        %4380 = vmatmul.mubr.f32.gmra.mrb[0].mxu0 %v4242
        %v4381 = vpop.f32.mrb[0].mxu0
        %v4382 = vadd.f32 0.0, %v4381
        %v4383 = vpop.f32.mrb[0].mxu0
        %4384 = vmatprep.mubr.f32.mxu0 0.0
        %4385 = vmatmul.mubr.f32.gmra.mrb[0].mxu0 %v4243
        %v4386 = vpop.f32.mrb[0].mxu0
        %v4387 = vadd.f32 0.0, %v4386
        %v4388 = vpop.f32.mrb[0].mxu0
        %4389 = vmatprep.mubr.f32.mxu0 0.0
        %4390 = vmatmul.mubr.f32.gmra.mrb[0].mxu0 %v4244
        %v4391 = vpop.f32.mrb[0].mxu0
        %v4392 = vadd.f32 0.0, %v4391
        %v4393 = vpop.f32.mrb[0].mxu0
        %4394 = vmatprep.mubr.f32.mxu0 0.0
        %4395 = vmatmul.mubr.f32.gmra.mrb[0].mxu0 %v4245
        %v4396 = vpop.f32.mrb[0].mxu0
        %v4397 = vadd.f32 0.0, %v4396
        %v4398 = vpop.f32.mrb[0].mxu0
        %4399 = vmatprep.mubr.f32.mxu0 0.0
        %4400 = vmatmul.mubr.f32.gmra.mrb[0].mxu0 %v4246
        %v4401 = vpop.f32.mrb[0].mxu0
        %v4402 = vadd.f32 0.0, %v4401
        %v4403 = vpop.f32.mrb[0].mxu0
        %4404 = vmatprep.mubr.f32.mxu0 0.0
        %4405 = vmatmul.mubr.f32.gmra.mrb[0].mxu0 %v4247
        %v4406 = vpop.f32.mrb[0].mxu0
        %v4407 = vadd.f32 0.0, %v4406
        %v4408 = vpop.f32.mrb[0].mxu0
        %4409 = vmatprep.mubr.f32.mxu0 0.0
        %4410 = vmatmul.mubr.f32.gmra.mrb[0].mxu0 %v4248
        %v4411 = vpop.f32.mrb[0].mxu0
        %v4412 = vadd.f32 0.0, %v4411
        %v4413 = vpop.f32.mrb[0].mxu0
        %4414 = vmatprep.mubr.f32.mxu0 0.0
        %4415 = vmatmul.mubr.f32.gmra.mrb[0].mxu0 %v4249
        %v4416 = vpop.f32.mrb[0].mxu0
        %v4417 = vadd.f32 0.0, %v4416
        %v4418 = vpop.f32.mrb[0].mxu0
        %4419 = vmatprep.mubr.f32.mxu0 0.0
        %4420 = vmatmul.mubr.f32.gmra.mrb[0].mxu0 %v4250
        %v4421 = vpop.f32.mrb[0].mxu0
        %v4422 = vadd.f32 0.0, %v4421
        %v4423 = vpop.f32.mrb[0].mxu0
        %4424 = vmatprep.mubr.f32.mxu0 0.0
        %4425 = vmatmul.mubr.f32.gmra.mrb[0].mxu0 %v4251
        %v4426 = vpop.f32.mrb[0].mxu0
        %v4427 = vadd.f32 0.0, %v4426
        %v4428 = vpop.f32.mrb[0].mxu0
        %4429 = vmatprep.mubr.f32.mxu0 0.0
        %4430 = vmatmul.mubr.f32.gmra.mrb[0].mxu0 %v4252
        %v4431 = vpop.f32.mrb[0].mxu0
        %v4432 = vadd.f32 0.0, %v4431
        %v4433 = vpop.f32.mrb[0].mxu0
        %4434 = vmatprep.mubr.f32.mxu0 0.0
        %4435 = vmatmul.mubr.f32.gmra.mrb[0].mxu0 %v4253
        %v4436 = vpop.f32.mrb[0].mxu0
        %v4437 = vadd.f32 0.0, %v4436
        %v4438 = vpop.f32.mrb[0].mxu0
        %4439 = vmatprep.mubr.f32.mxu0 0.0
        %4440 = vmatmul.mubr.f32.gmra.mrb[0].mxu0 %v4254
        %v4441 = vpop.f32.mrb[0].mxu0
        %v4442 = vadd.f32 0.0, %v4441
        %v4443 = vpop.f32.mrb[0].mxu0
        %4444 = vmatprep.mubr.f32.mxu0 0.0
        %4445 = vmatmul.mubr.f32.gmra.mrb[0].mxu0 %v4255
        %v4446 = vpop.f32.mrb[0].mxu0
        %v4447 = vadd.f32 0.0, %v4446
        %v4448 = vpop.f32.mrb[0].mxu0
        %4449 = vmatprep.mubr.f32.mxu0 0.0
        %4450 = vmatmul.mubr.f32.gmra.mrb[0].mxu0 %v4256
        %v4451 = vpop.f32.mrb[0].mxu0
        %v4452 = vadd.f32 0.0, %v4451
        %v4453 = vpop.f32.mrb[0].mxu0
        %4454 = vmatprep.mubr.f32.mxu0 0.0
        %4455 = vmatmul.mubr.f32.gmra.mrb[0].mxu0 %v4257
        %v4456 = vpop.f32.mrb[0].mxu0
        %v4457 = vadd.f32 0.0, %v4456
        %v4458 = vpop.f32.mrb[0].mxu0
        %4459 = vmatprep.mubr.f32.mxu0 0.0
        %4460 = vmatmul.mubr.f32.gmra.mrb[0].mxu0 %v4258
        %v4461 = vpop.f32.mrb[0].mxu0
        %v4462 = vadd.f32 0.0, %v4461
        %v4463 = vpop.f32.mrb[0].mxu0
        %4464 = vmatprep.mubr.f32.mxu0 0.0
        %4465 = vmatmul.mubr.f32.gmra.mrb[0].mxu0 %v4259
        %v4466 = vpop.f32.mrb[0].mxu0
        %v4467 = vadd.f32 0.0, %v4466
        %v4468 = vpop.f32.mrb[0].mxu0
        %4469 = vmatprep.mubr.f32.mxu0 0.0
        %4470 = vmatmul.mubr.f32.gmra.mrb[0].mxu0 %v4260
        %v4471 = vpop.f32.mrb[0].mxu0
        %v4472 = vadd.f32 0.0, %v4471
        %v4473 = vpop.f32.mrb[0].mxu0
        %4474 = vmatprep.mubr.f32.mxu0 0.0
        %4475 = vmatmul.mubr.f32.gmra.mrb[0].mxu0 %v4261
        %v4476 = vpop.f32.mrb[0].mxu0
        %v4477 = vadd.f32 0.0, %v4476
        %v4478 = vpop.f32.mrb[0].mxu0
        %4479 = vmatprep.mubr.f32.mxu0 0.0
        %4480 = vmatmul.mubr.f32.gmra.mrb[0].mxu0 %v4262
        %v4481 = vpop.f32.mrb[0].mxu0
        %v4482 = vadd.f32 0.0, %v4481
        %v4483 = vpop.f32.mrb[0].mxu0
        %4484 = vmatprep.mubr.f32.mxu0 0.0
        %4485 = vmatmul.mubr.f32.gmra.mrb[0].mxu0 %v4263
        %v4486 = vpop.f32.mrb[0].mxu0
        %v4487 = vadd.f32 0.0, %v4486
        %v4488 = vpop.f32.mrb[0].mxu0
        %4489 = vmatprep.mubr.f32.mxu0 0.0
        %4490 = vmatmul.mubr.f32.gmra.mrb[0].mxu0 %v4264
        %v4491 = vpop.f32.mrb[0].mxu0
        %v4492 = vadd.f32 0.0, %v4491
        %v4493 = vpop.f32.mrb[0].mxu0
        %4494 = vmatprep.mubr.f32.mxu0 0.0
        %4495 = vmatmul.mubr.f32.gmra.mrb[0].mxu0 %v4265
        %v4496 = vpop.f32.mrb[0].mxu0
        %v4497 = vadd.f32 0.0, %v4496
        %v4498 = vpop.f32.mrb[0].mxu0
        %4499 = vmatprep.mubr.f32.mxu0 0.0
        %4500 = vmatmul.mubr.f32.gmra.mrb[0].mxu0 %v4266
        %v4501 = vpop.f32.mrb[0].mxu0
        %v4502 = vadd.f32 0.0, %v4501
        %v4503 = vpop.f32.mrb[0].mxu0
        %4504 = vmatprep.mubr.f32.mxu0 0.0
        %4505 = vmatmul.mubr.f32.gmra.mrb[0].mxu0 %v4267
        %v4506 = vpop.f32.mrb[0].mxu0
        %v4507 = vadd.f32 0.0, %v4506
        %v4508 = vpop.f32.mrb[0].mxu0
        %4509 = vdwg.mxu0
        %v4510 = vadd.f32 %v4204, %v4352
        %v4511 = vadd.f32 %v4205, %v4357
        %v4512 = vadd.f32 %v4206, %v4362
        %v4513 = vadd.f32 %v4207, %v4367
        %v4514 = vadd.f32 %v4208, %v4372
        %v4515 = vadd.f32 %v4209, %v4377
        %v4516 = vadd.f32 %v4210, %v4382
        %v4517 = vadd.f32 %v4211, %v4387
        %v4518 = vadd.f32 %v4212, %v4392
        %v4519 = vadd.f32 %v4213, %v4397
        %v4520 = vadd.f32 %v4214, %v4402
        %v4521 = vadd.f32 %v4215, %v4407
        %v4522 = vadd.f32 %v4216, %v4412
        %v4523 = vadd.f32 %v4217, %v4417
        %v4524 = vadd.f32 %v4218, %v4422
        %v4525 = vadd.f32 %v4219, %v4427
        %v4526 = vadd.f32 %v4220, %v4432
        %v4527 = vadd.f32 %v4221, %v4437
        %v4528 = vadd.f32 %v4222, %v4442
        %v4529 = vadd.f32 %v4223, %v4447
        %v4530 = vadd.f32 %v4224, %v4452
        %v4531 = vadd.f32 %v4225, %v4457
        %v4532 = vadd.f32 %v4226, %v4462
        %v4533 = vadd.f32 %v4227, %v4467
        %v4534 = vadd.f32 %v4228, %v4472
        %v4535 = vadd.f32 %v4229, %v4477
        %v4536 = vadd.f32 %v4230, %v4482
        %v4537 = vadd.f32 %v4231, %v4487
        %v4538 = vadd.f32 %v4232, %v4492
        %v4539 = vadd.f32 %v4233, %v4497
        %v4540 = vadd.f32 %v4234, %v4502
        %v4541 = vadd.f32 %v4235, %v4507
        %s4542 = scalar_lea.vmem [#allocation9], 640
        %v4543 = vld [vmem:[%s4542] sm:$0xff]
        %v4544 = vld [vmem:[%s4542 + $0x8] sm:$0xff]
        %v4545 = vld [vmem:[%s4542 + $0x10] sm:$0xff]
        %v4546 = vld [vmem:[%s4542 + $0x18] sm:$0xff]
        %v4547 = vld [vmem:[%s4542 + $0x20] sm:$0xff]
        %v4548 = vld [vmem:[%s4542 + $0x28] sm:$0xff]
        %v4549 = vld [vmem:[%s4542 + $0x30] sm:$0xff]
        %v4550 = vld [vmem:[%s4542 + $0x38] sm:$0xff]
        %v4551 = vld [vmem:[%s4542 + $0x40] sm:$0xff]
        %v4552 = vld [vmem:[%s4542 + $0x48] sm:$0xff]
        %v4553 = vld [vmem:[%s4542 + $0x50] sm:$0xff]
        %v4554 = vld [vmem:[%s4542 + $0x58] sm:$0xff]
        %v4555 = vld [vmem:[%s4542 + $0x60] sm:$0xff]
        %v4556 = vld [vmem:[%s4542 + $0x68] sm:$0xff]
        %v4557 = vld [vmem:[%s4542 + $0x70] sm:$0xff]
        %v4558 = vld [vmem:[%s4542 + $0x78] sm:$0xff]
        %4559 = vmatprep.subr.mxu0 0.0
        %4560 = vmatpush1.msra.mxu0 %v4543
        %4561 = vmatprep.subr.mxu0 0.0
        %4562 = vmatpush1.msra.mxu0 %v4544
        %4563 = vmatprep.subr.mxu0 0.0
        %4564 = vmatpush1.msra.mxu0 %v4545
        %4565 = vmatprep.subr.mxu0 0.0
        %4566 = vmatpush1.msra.mxu0 %v4546
        %4567 = vmatprep.subr.mxu0 0.0
        %4568 = vmatpush1.msra.mxu0 %v4547
        %4569 = vmatprep.subr.mxu0 0.0
        %4570 = vmatpush1.msra.mxu0 %v4548
        %4571 = vmatprep.subr.mxu0 0.0
        %4572 = vmatpush1.msra.mxu0 %v4549
        %4573 = vmatprep.subr.mxu0 0.0
        %4574 = vmatpush1.msra.mxu0 %v4550
        %4575 = vmatprep.subr.mxu0 0.0
        %4576 = vmatpush1.msra.mxu0 %v4551
        %4577 = vmatprep.subr.mxu0 0.0
        %4578 = vmatpush1.msra.mxu0 %v4552
        %4579 = vmatprep.subr.mxu0 0.0
        %4580 = vmatpush1.msra.mxu0 %v4553
        %4581 = vmatprep.subr.mxu0 0.0
        %4582 = vmatpush1.msra.mxu0 %v4554
        %4583 = vmatprep.subr.mxu0 0.0
        %4584 = vmatpush1.msra.mxu0 %v4555
        %4585 = vmatprep.subr.mxu0 0.0
        %4586 = vmatpush1.msra.mxu0 %v4556
        %4587 = vmatprep.subr.mxu0 0.0
        %4588 = vmatpush1.msra.mxu0 %v4557
        %4589 = vmatprep.subr.mxu0 0.0
        %4590 = vmatpush1.msra.mxu0 %v4558
        %4591 = vmatprep.subr.mxu0 0.0
        %4592 = vmatpush1.msra.mxu0 0.0
        %4593 = vmatprep.subr.mxu0 0.0
        %4594 = vmatpush1.msra.mxu0 0.0
        %4595 = vmatprep.subr.mxu0 0.0
        %4596 = vmatpush1.msra.mxu0 0.0
        %4597 = vmatprep.subr.mxu0 0.0
        %4598 = vmatpush1.msra.mxu0 0.0
        %4599 = vmatprep.subr.mxu0 0.0
        %4600 = vmatpush1.msra.mxu0 0.0
        %4601 = vmatprep.subr.mxu0 0.0
        %4602 = vmatpush1.msra.mxu0 0.0
        %4603 = vmatprep.subr.mxu0 0.0
        %4604 = vmatpush1.msra.mxu0 0.0
        %4605 = vmatprep.subr.mxu0 0.0
        %4606 = vmatpush1.msra.mxu0 0.0
        %4607 = vmatprep.subr.mxu0 0.0
        %4608 = vmatpush1.msra.mxu0 0.0
        %4609 = vmatprep.subr.mxu0 0.0
        %4610 = vmatpush1.msra.mxu0 0.0
        %4611 = vmatprep.subr.mxu0 0.0
        %4612 = vmatpush1.msra.mxu0 0.0
        %4613 = vmatprep.subr.mxu0 0.0
        %4614 = vmatpush1.msra.mxu0 0.0
        %4615 = vmatprep.subr.mxu0 0.0
        %4616 = vmatpush1.msra.mxu0 0.0
        %4617 = vmatprep.subr.mxu0 0.0
        %4618 = vmatpush1.msra.mxu0 0.0
        %4619 = vmatprep.subr.mxu0 0.0
        %4620 = vmatpush1.msra.mxu0 0.0
        %4621 = vmatprep.subr.mxu0 0.0
        %4622 = vmatpush1.msra.mxu0 0.0
        %4623 = vmatprep.mubr.f32.mxu0 0.0
        %4624 = vmatmul.mubr.f32.gmra.mrb[0].mxu0 %v3139
        %v4625 = vpop.f32.mrb[0].mxu0
        %v4626 = vadd.f32 0.0, %v4625
        %v4627 = vpop.f32.mrb[0].mxu0
        %4628 = vmatprep.mubr.f32.mxu0 0.0
        %4629 = vmatmul.mubr.f32.gmra.mrb[0].mxu0 %v3140
        %v4630 = vpop.f32.mrb[0].mxu0
        %v4631 = vadd.f32 0.0, %v4630
        %v4632 = vpop.f32.mrb[0].mxu0
        %4633 = vmatprep.mubr.f32.mxu0 0.0
        %4634 = vmatmul.mubr.f32.gmra.mrb[0].mxu0 %v3141
        %v4635 = vpop.f32.mrb[0].mxu0
        %v4636 = vadd.f32 0.0, %v4635
        %v4637 = vpop.f32.mrb[0].mxu0
        %4638 = vmatprep.mubr.f32.mxu0 0.0
        %4639 = vmatmul.mubr.f32.gmra.mrb[0].mxu0 %v3142
        %v4640 = vpop.f32.mrb[0].mxu0
        %v4641 = vadd.f32 0.0, %v4640
        %v4642 = vpop.f32.mrb[0].mxu0
        %4643 = vmatprep.mubr.f32.mxu0 0.0
        %4644 = vmatmul.mubr.f32.gmra.mrb[0].mxu0 %v3143
        %v4645 = vpop.f32.mrb[0].mxu0
        %v4646 = vadd.f32 0.0, %v4645
        %v4647 = vpop.f32.mrb[0].mxu0
        %4648 = vmatprep.mubr.f32.mxu0 0.0
        %4649 = vmatmul.mubr.f32.gmra.mrb[0].mxu0 %v3144
        %v4650 = vpop.f32.mrb[0].mxu0
        %v4651 = vadd.f32 0.0, %v4650
        %v4652 = vpop.f32.mrb[0].mxu0
        %4653 = vmatprep.mubr.f32.mxu0 0.0
        %4654 = vmatmul.mubr.f32.gmra.mrb[0].mxu0 %v3145
        %v4655 = vpop.f32.mrb[0].mxu0
        %v4656 = vadd.f32 0.0, %v4655
        %v4657 = vpop.f32.mrb[0].mxu0
        %4658 = vmatprep.mubr.f32.mxu0 0.0
        %4659 = vmatmul.mubr.f32.gmra.mrb[0].mxu0 %v3146
        %v4660 = vpop.f32.mrb[0].mxu0
        %v4661 = vadd.f32 0.0, %v4660
        %v4662 = vpop.f32.mrb[0].mxu0
        %4663 = vmatprep.mubr.f32.mxu0 0.0
        %4664 = vmatmul.mubr.f32.gmra.mrb[0].mxu0 %v3147
        %v4665 = vpop.f32.mrb[0].mxu0
        %v4666 = vadd.f32 0.0, %v4665
        %v4667 = vpop.f32.mrb[0].mxu0
        %4668 = vmatprep.mubr.f32.mxu0 0.0
        %4669 = vmatmul.mubr.f32.gmra.mrb[0].mxu0 %v3148
        %v4670 = vpop.f32.mrb[0].mxu0
        %v4671 = vadd.f32 0.0, %v4670
        %v4672 = vpop.f32.mrb[0].mxu0
        %4673 = vmatprep.mubr.f32.mxu0 0.0
        %4674 = vmatmul.mubr.f32.gmra.mrb[0].mxu0 %v3149
        %v4675 = vpop.f32.mrb[0].mxu0
        %v4676 = vadd.f32 0.0, %v4675
        %v4677 = vpop.f32.mrb[0].mxu0
        %4678 = vmatprep.mubr.f32.mxu0 0.0
        %4679 = vmatmul.mubr.f32.gmra.mrb[0].mxu0 %v3150
        %v4680 = vpop.f32.mrb[0].mxu0
        %v4681 = vadd.f32 0.0, %v4680
        %v4682 = vpop.f32.mrb[0].mxu0
        %4683 = vmatprep.mubr.f32.mxu0 0.0
        %4684 = vmatmul.mubr.f32.gmra.mrb[0].mxu0 %v3151
        %v4685 = vpop.f32.mrb[0].mxu0
        %v4686 = vadd.f32 0.0, %v4685
        %v4687 = vpop.f32.mrb[0].mxu0
        %4688 = vmatprep.mubr.f32.mxu0 0.0
        %4689 = vmatmul.mubr.f32.gmra.mrb[0].mxu0 %v3152
        %v4690 = vpop.f32.mrb[0].mxu0
        %v4691 = vadd.f32 0.0, %v4690
        %v4692 = vpop.f32.mrb[0].mxu0
        %4693 = vmatprep.mubr.f32.mxu0 0.0
        %4694 = vmatmul.mubr.f32.gmra.mrb[0].mxu0 %v3153
        %v4695 = vpop.f32.mrb[0].mxu0
        %v4696 = vadd.f32 0.0, %v4695
        %v4697 = vpop.f32.mrb[0].mxu0
        %4698 = vmatprep.mubr.f32.mxu0 0.0
        %4699 = vmatmul.mubr.f32.gmra.mrb[0].mxu0 %v3154
        %v4700 = vpop.f32.mrb[0].mxu0
        %v4701 = vadd.f32 0.0, %v4700
        %v4702 = vpop.f32.mrb[0].mxu0
        %4703 = vmatprep.mubr.f32.mxu0 0.0
        %4704 = vmatmul.mubr.f32.gmra.mrb[0].mxu0 %v3155
        %v4705 = vpop.f32.mrb[0].mxu0
        %v4706 = vadd.f32 0.0, %v4705
        %v4707 = vpop.f32.mrb[0].mxu0
        %4708 = vmatprep.mubr.f32.mxu0 0.0
        %4709 = vmatmul.mubr.f32.gmra.mrb[0].mxu0 %v3156
        %v4710 = vpop.f32.mrb[0].mxu0
        %v4711 = vadd.f32 0.0, %v4710
        %v4712 = vpop.f32.mrb[0].mxu0
        %4713 = vmatprep.mubr.f32.mxu0 0.0
        %4714 = vmatmul.mubr.f32.gmra.mrb[0].mxu0 %v3157
        %v4715 = vpop.f32.mrb[0].mxu0
        %v4716 = vadd.f32 0.0, %v4715
        %v4717 = vpop.f32.mrb[0].mxu0
        %4718 = vmatprep.mubr.f32.mxu0 0.0
        %4719 = vmatmul.mubr.f32.gmra.mrb[0].mxu0 %v3158
        %v4720 = vpop.f32.mrb[0].mxu0
        %v4721 = vadd.f32 0.0, %v4720
        %v4722 = vpop.f32.mrb[0].mxu0
        %4723 = vmatprep.mubr.f32.mxu0 0.0
        %4724 = vmatmul.mubr.f32.gmra.mrb[0].mxu0 %v3159
        %v4725 = vpop.f32.mrb[0].mxu0
        %v4726 = vadd.f32 0.0, %v4725
        %v4727 = vpop.f32.mrb[0].mxu0
        %4728 = vmatprep.mubr.f32.mxu0 0.0
        %4729 = vmatmul.mubr.f32.gmra.mrb[0].mxu0 %v3160
        %v4730 = vpop.f32.mrb[0].mxu0
        %v4731 = vadd.f32 0.0, %v4730
        %v4732 = vpop.f32.mrb[0].mxu0
        %4733 = vmatprep.mubr.f32.mxu0 0.0
        %4734 = vmatmul.mubr.f32.gmra.mrb[0].mxu0 %v3161
        %v4735 = vpop.f32.mrb[0].mxu0
        %v4736 = vadd.f32 0.0, %v4735
        %v4737 = vpop.f32.mrb[0].mxu0
        %4738 = vmatprep.mubr.f32.mxu0 0.0
        %4739 = vmatmul.mubr.f32.gmra.mrb[0].mxu0 %v3162
        %v4740 = vpop.f32.mrb[0].mxu0
        %v4741 = vadd.f32 0.0, %v4740
        %v4742 = vpop.f32.mrb[0].mxu0
        %4743 = vmatprep.mubr.f32.mxu0 0.0
        %4744 = vmatmul.mubr.f32.gmra.mrb[0].mxu0 %v3163
        %v4745 = vpop.f32.mrb[0].mxu0
        %v4746 = vadd.f32 0.0, %v4745
        %v4747 = vpop.f32.mrb[0].mxu0
        %4748 = vmatprep.mubr.f32.mxu0 0.0
        %4749 = vmatmul.mubr.f32.gmra.mrb[0].mxu0 %v3164
        %v4750 = vpop.f32.mrb[0].mxu0
        %v4751 = vadd.f32 0.0, %v4750
        %v4752 = vpop.f32.mrb[0].mxu0
        %4753 = vmatprep.mubr.f32.mxu0 0.0
        %4754 = vmatmul.mubr.f32.gmra.mrb[0].mxu0 %v3165
        %v4755 = vpop.f32.mrb[0].mxu0
        %v4756 = vadd.f32 0.0, %v4755
        %v4757 = vpop.f32.mrb[0].mxu0
        %4758 = vmatprep.mubr.f32.mxu0 0.0
        %4759 = vmatmul.mubr.f32.gmra.mrb[0].mxu0 %v3166
        %v4760 = vpop.f32.mrb[0].mxu0
        %v4761 = vadd.f32 0.0, %v4760
        %v4762 = vpop.f32.mrb[0].mxu0
        %4763 = vmatprep.mubr.f32.mxu0 0.0
        %4764 = vmatmul.mubr.f32.gmra.mrb[0].mxu0 %v3167
        %v4765 = vpop.f32.mrb[0].mxu0
        %v4766 = vadd.f32 0.0, %v4765
        %v4767 = vpop.f32.mrb[0].mxu0
        %4768 = vmatprep.mubr.f32.mxu0 0.0
        %4769 = vmatmul.mubr.f32.gmra.mrb[0].mxu0 %v3168
        %v4770 = vpop.f32.mrb[0].mxu0
        %v4771 = vadd.f32 0.0, %v4770
        %v4772 = vpop.f32.mrb[0].mxu0
        %4773 = vmatprep.mubr.f32.mxu0 0.0
        %4774 = vmatmul.mubr.f32.gmra.mrb[0].mxu0 %v3169
        %v4775 = vpop.f32.mrb[0].mxu0
        %v4776 = vadd.f32 0.0, %v4775
        %v4777 = vpop.f32.mrb[0].mxu0
        %4778 = vmatprep.mubr.f32.mxu0 0.0
        %4779 = vmatmul.mubr.f32.gmra.mrb[0].mxu0 %v3170
        %v4780 = vpop.f32.mrb[0].mxu0
        %v4781 = vadd.f32 0.0, %v4780
        %v4782 = vpop.f32.mrb[0].mxu0
        %4783 = vdwg.mxu0
        %v4784 = vadd.f32 %v4510, %v4626
        %v4785 = vadd.f32 %v4511, %v4631
        %v4786 = vadd.f32 %v4512, %v4636
        %v4787 = vadd.f32 %v4513, %v4641
        %v4788 = vadd.f32 %v4514, %v4646
        %v4789 = vadd.f32 %v4515, %v4651
        %v4790 = vadd.f32 %v4516, %v4656
        %v4791 = vadd.f32 %v4517, %v4661
        %v4792 = vadd.f32 %v4518, %v4666
        %v4793 = vadd.f32 %v4519, %v4671
        %v4794 = vadd.f32 %v4520, %v4676
        %v4795 = vadd.f32 %v4521, %v4681
        %v4796 = vadd.f32 %v4522, %v4686
        %v4797 = vadd.f32 %v4523, %v4691
        %v4798 = vadd.f32 %v4524, %v4696
        %v4799 = vadd.f32 %v4525, %v4701
        %v4800 = vadd.f32 %v4526, %v4706
        %v4801 = vadd.f32 %v4527, %v4711
        %v4802 = vadd.f32 %v4528, %v4716
        %v4803 = vadd.f32 %v4529, %v4721
        %v4804 = vadd.f32 %v4530, %v4726
        %v4805 = vadd.f32 %v4531, %v4731
        %v4806 = vadd.f32 %v4532, %v4736
        %v4807 = vadd.f32 %v4533, %v4741
        %v4808 = vadd.f32 %v4534, %v4746
        %v4809 = vadd.f32 %v4535, %v4751
        %v4810 = vadd.f32 %v4536, %v4756
        %v4811 = vadd.f32 %v4537, %v4761
        %v4812 = vadd.f32 %v4538, %v4766
        %v4813 = vadd.f32 %v4539, %v4771
        %v4814 = vadd.f32 %v4540, %v4776
        %v4815 = vadd.f32 %v4541, %v4781
        %s4816 = scalar_lea.vmem [#allocation9], 768
        %v4817 = vld [vmem:[%s4816] sm:$0xff]
        %v4818 = vld [vmem:[%s4816 + $0x8] sm:$0xff]
        %v4819 = vld [vmem:[%s4816 + $0x10] sm:$0xff]
        %v4820 = vld [vmem:[%s4816 + $0x18] sm:$0xff]
        %v4821 = vld [vmem:[%s4816 + $0x20] sm:$0xff]
        %v4822 = vld [vmem:[%s4816 + $0x28] sm:$0xff]
        %v4823 = vld [vmem:[%s4816 + $0x30] sm:$0xff]
        %v4824 = vld [vmem:[%s4816 + $0x38] sm:$0xff]
        %v4825 = vld [vmem:[%s4816 + $0x40] sm:$0xff]
        %v4826 = vld [vmem:[%s4816 + $0x48] sm:$0xff]
        %v4827 = vld [vmem:[%s4816 + $0x50] sm:$0xff]
        %v4828 = vld [vmem:[%s4816 + $0x58] sm:$0xff]
        %v4829 = vld [vmem:[%s4816 + $0x60] sm:$0xff]
        %v4830 = vld [vmem:[%s4816 + $0x68] sm:$0xff]
        %v4831 = vld [vmem:[%s4816 + $0x70] sm:$0xff]
        %v4832 = vld [vmem:[%s4816 + $0x78] sm:$0xff]
        %4833 = vmatprep.subr.mxu0 0.0
        %4834 = vmatpush1.msra.mxu0 %v4817
        %4835 = vmatprep.subr.mxu0 0.0
        %4836 = vmatpush1.msra.mxu0 %v4818
        %4837 = vmatprep.subr.mxu0 0.0
        %4838 = vmatpush1.msra.mxu0 %v4819
        %4839 = vmatprep.subr.mxu0 0.0
        %4840 = vmatpush1.msra.mxu0 %v4820
        %4841 = vmatprep.subr.mxu0 0.0
        %4842 = vmatpush1.msra.mxu0 %v4821
        %4843 = vmatprep.subr.mxu0 0.0
        %4844 = vmatpush1.msra.mxu0 %v4822
        %4845 = vmatprep.subr.mxu0 0.0
        %4846 = vmatpush1.msra.mxu0 %v4823
        %4847 = vmatprep.subr.mxu0 0.0
        %4848 = vmatpush1.msra.mxu0 %v4824
        %4849 = vmatprep.subr.mxu0 0.0
        %4850 = vmatpush1.msra.mxu0 %v4825
        %4851 = vmatprep.subr.mxu0 0.0
        %4852 = vmatpush1.msra.mxu0 %v4826
        %4853 = vmatprep.subr.mxu0 0.0
        %4854 = vmatpush1.msra.mxu0 %v4827
        %4855 = vmatprep.subr.mxu0 0.0
        %4856 = vmatpush1.msra.mxu0 %v4828
        %4857 = vmatprep.subr.mxu0 0.0
        %4858 = vmatpush1.msra.mxu0 %v4829
        %4859 = vmatprep.subr.mxu0 0.0
        %4860 = vmatpush1.msra.mxu0 %v4830
        %4861 = vmatprep.subr.mxu0 0.0
        %4862 = vmatpush1.msra.mxu0 %v4831
        %4863 = vmatprep.subr.mxu0 0.0
        %4864 = vmatpush1.msra.mxu0 %v4832
        %4865 = vmatprep.subr.mxu0 0.0
        %4866 = vmatpush1.msra.mxu0 0.0
        %4867 = vmatprep.subr.mxu0 0.0
        %4868 = vmatpush1.msra.mxu0 0.0
        %4869 = vmatprep.subr.mxu0 0.0
        %4870 = vmatpush1.msra.mxu0 0.0
        %4871 = vmatprep.subr.mxu0 0.0
        %4872 = vmatpush1.msra.mxu0 0.0
        %4873 = vmatprep.subr.mxu0 0.0
        %4874 = vmatpush1.msra.mxu0 0.0
        %4875 = vmatprep.subr.mxu0 0.0
        %4876 = vmatpush1.msra.mxu0 0.0
        %4877 = vmatprep.subr.mxu0 0.0
        %4878 = vmatpush1.msra.mxu0 0.0
        %4879 = vmatprep.subr.mxu0 0.0
        %4880 = vmatpush1.msra.mxu0 0.0
        %4881 = vmatprep.subr.mxu0 0.0
        %4882 = vmatpush1.msra.mxu0 0.0
        %4883 = vmatprep.subr.mxu0 0.0
        %4884 = vmatpush1.msra.mxu0 0.0
        %4885 = vmatprep.subr.mxu0 0.0
        %4886 = vmatpush1.msra.mxu0 0.0
        %4887 = vmatprep.subr.mxu0 0.0
        %4888 = vmatpush1.msra.mxu0 0.0
        %4889 = vmatprep.subr.mxu0 0.0
        %4890 = vmatpush1.msra.mxu0 0.0
        %4891 = vmatprep.subr.mxu0 0.0
        %4892 = vmatpush1.msra.mxu0 0.0
        %4893 = vmatprep.subr.mxu0 0.0
        %4894 = vmatpush1.msra.mxu0 0.0
        %4895 = vmatprep.subr.mxu0 0.0
        %4896 = vmatpush1.msra.mxu0 0.0
        %4897 = vmatprep.mubr.f32.mxu0 0.0
        %4898 = vmatmul.mubr.f32.gmra.mrb[0].mxu0 %v3105
        %v4899 = vpop.f32.mrb[0].mxu0
        %v4900 = vadd.f32 0.0, %v4899
        %v4901 = vpop.f32.mrb[0].mxu0
        %4902 = vmatprep.mubr.f32.mxu0 0.0
        %4903 = vmatmul.mubr.f32.gmra.mrb[0].mxu0 %v3106
        %v4904 = vpop.f32.mrb[0].mxu0
        %v4905 = vadd.f32 0.0, %v4904
        %v4906 = vpop.f32.mrb[0].mxu0
        %4907 = vmatprep.mubr.f32.mxu0 0.0
        %4908 = vmatmul.mubr.f32.gmra.mrb[0].mxu0 %v3107
        %v4909 = vpop.f32.mrb[0].mxu0
        %v4910 = vadd.f32 0.0, %v4909
        %v4911 = vpop.f32.mrb[0].mxu0
        %4912 = vmatprep.mubr.f32.mxu0 0.0
        %4913 = vmatmul.mubr.f32.gmra.mrb[0].mxu0 %v3108
        %v4914 = vpop.f32.mrb[0].mxu0
        %v4915 = vadd.f32 0.0, %v4914
        %v4916 = vpop.f32.mrb[0].mxu0
        %4917 = vmatprep.mubr.f32.mxu0 0.0
        %4918 = vmatmul.mubr.f32.gmra.mrb[0].mxu0 %v3109
        %v4919 = vpop.f32.mrb[0].mxu0
        %v4920 = vadd.f32 0.0, %v4919
        %v4921 = vpop.f32.mrb[0].mxu0
        %4922 = vmatprep.mubr.f32.mxu0 0.0
        %4923 = vmatmul.mubr.f32.gmra.mrb[0].mxu0 %v3110
        %v4924 = vpop.f32.mrb[0].mxu0
        %v4925 = vadd.f32 0.0, %v4924
        %v4926 = vpop.f32.mrb[0].mxu0
        %4927 = vmatprep.mubr.f32.mxu0 0.0
        %4928 = vmatmul.mubr.f32.gmra.mrb[0].mxu0 %v3111
        %v4929 = vpop.f32.mrb[0].mxu0
        %v4930 = vadd.f32 0.0, %v4929
        %v4931 = vpop.f32.mrb[0].mxu0
        %4932 = vmatprep.mubr.f32.mxu0 0.0
        %4933 = vmatmul.mubr.f32.gmra.mrb[0].mxu0 %v3112
        %v4934 = vpop.f32.mrb[0].mxu0
        %v4935 = vadd.f32 0.0, %v4934
        %v4936 = vpop.f32.mrb[0].mxu0
        %4937 = vmatprep.mubr.f32.mxu0 0.0
        %4938 = vmatmul.mubr.f32.gmra.mrb[0].mxu0 %v3113
        %v4939 = vpop.f32.mrb[0].mxu0
        %v4940 = vadd.f32 0.0, %v4939
        %v4941 = vpop.f32.mrb[0].mxu0
        %4942 = vmatprep.mubr.f32.mxu0 0.0
        %4943 = vmatmul.mubr.f32.gmra.mrb[0].mxu0 %v3114
        %v4944 = vpop.f32.mrb[0].mxu0
        %v4945 = vadd.f32 0.0, %v4944
        %v4946 = vpop.f32.mrb[0].mxu0
        %4947 = vmatprep.mubr.f32.mxu0 0.0
        %4948 = vmatmul.mubr.f32.gmra.mrb[0].mxu0 %v3115
        %v4949 = vpop.f32.mrb[0].mxu0
        %v4950 = vadd.f32 0.0, %v4949
        %v4951 = vpop.f32.mrb[0].mxu0
        %4952 = vmatprep.mubr.f32.mxu0 0.0
        %4953 = vmatmul.mubr.f32.gmra.mrb[0].mxu0 %v3116
        %v4954 = vpop.f32.mrb[0].mxu0
        %v4955 = vadd.f32 0.0, %v4954
        %v4956 = vpop.f32.mrb[0].mxu0
        %4957 = vmatprep.mubr.f32.mxu0 0.0
        %4958 = vmatmul.mubr.f32.gmra.mrb[0].mxu0 %v3117
        %v4959 = vpop.f32.mrb[0].mxu0
        %v4960 = vadd.f32 0.0, %v4959
        %v4961 = vpop.f32.mrb[0].mxu0
        %4962 = vmatprep.mubr.f32.mxu0 0.0
        %4963 = vmatmul.mubr.f32.gmra.mrb[0].mxu0 %v3118
        %v4964 = vpop.f32.mrb[0].mxu0
        %v4965 = vadd.f32 0.0, %v4964
        %v4966 = vpop.f32.mrb[0].mxu0
        %4967 = vmatprep.mubr.f32.mxu0 0.0
        %4968 = vmatmul.mubr.f32.gmra.mrb[0].mxu0 %v3119
        %v4969 = vpop.f32.mrb[0].mxu0
        %v4970 = vadd.f32 0.0, %v4969
        %v4971 = vpop.f32.mrb[0].mxu0
        %4972 = vmatprep.mubr.f32.mxu0 0.0
        %4973 = vmatmul.mubr.f32.gmra.mrb[0].mxu0 %v3120
        %v4974 = vpop.f32.mrb[0].mxu0
        %v4975 = vadd.f32 0.0, %v4974
        %v4976 = vpop.f32.mrb[0].mxu0
        %4977 = vmatprep.mubr.f32.mxu0 0.0
        %4978 = vmatmul.mubr.f32.gmra.mrb[0].mxu0 %v3121
        %v4979 = vpop.f32.mrb[0].mxu0
        %v4980 = vadd.f32 0.0, %v4979
        %v4981 = vpop.f32.mrb[0].mxu0
        %4982 = vmatprep.mubr.f32.mxu0 0.0
        %4983 = vmatmul.mubr.f32.gmra.mrb[0].mxu0 %v3122
        %v4984 = vpop.f32.mrb[0].mxu0
        %v4985 = vadd.f32 0.0, %v4984
        %v4986 = vpop.f32.mrb[0].mxu0
        %4987 = vmatprep.mubr.f32.mxu0 0.0
        %4988 = vmatmul.mubr.f32.gmra.mrb[0].mxu0 %v3123
        %v4989 = vpop.f32.mrb[0].mxu0
        %v4990 = vadd.f32 0.0, %v4989
        %v4991 = vpop.f32.mrb[0].mxu0
        %4992 = vmatprep.mubr.f32.mxu0 0.0
        %4993 = vmatmul.mubr.f32.gmra.mrb[0].mxu0 %v3124
        %v4994 = vpop.f32.mrb[0].mxu0
        %v4995 = vadd.f32 0.0, %v4994
        %v4996 = vpop.f32.mrb[0].mxu0
        %4997 = vmatprep.mubr.f32.mxu0 0.0
        %4998 = vmatmul.mubr.f32.gmra.mrb[0].mxu0 %v3125
        %v4999 = vpop.f32.mrb[0].mxu0
        %v5000 = vadd.f32 0.0, %v4999
        %v5001 = vpop.f32.mrb[0].mxu0
        %5002 = vmatprep.mubr.f32.mxu0 0.0
        %5003 = vmatmul.mubr.f32.gmra.mrb[0].mxu0 %v3126
        %v5004 = vpop.f32.mrb[0].mxu0
        %v5005 = vadd.f32 0.0, %v5004
        %v5006 = vpop.f32.mrb[0].mxu0
        %5007 = vmatprep.mubr.f32.mxu0 0.0
        %5008 = vmatmul.mubr.f32.gmra.mrb[0].mxu0 %v3127
        %v5009 = vpop.f32.mrb[0].mxu0
        %v5010 = vadd.f32 0.0, %v5009
        %v5011 = vpop.f32.mrb[0].mxu0
        %5012 = vmatprep.mubr.f32.mxu0 0.0
        %5013 = vmatmul.mubr.f32.gmra.mrb[0].mxu0 %v3128
        %v5014 = vpop.f32.mrb[0].mxu0
        %v5015 = vadd.f32 0.0, %v5014
        %v5016 = vpop.f32.mrb[0].mxu0
        %5017 = vmatprep.mubr.f32.mxu0 0.0
        %5018 = vmatmul.mubr.f32.gmra.mrb[0].mxu0 %v3129
        %v5019 = vpop.f32.mrb[0].mxu0
        %v5020 = vadd.f32 0.0, %v5019
        %v5021 = vpop.f32.mrb[0].mxu0
        %5022 = vmatprep.mubr.f32.mxu0 0.0
        %5023 = vmatmul.mubr.f32.gmra.mrb[0].mxu0 %v3130
        %v5024 = vpop.f32.mrb[0].mxu0
        %v5025 = vadd.f32 0.0, %v5024
        %v5026 = vpop.f32.mrb[0].mxu0
        %5027 = vmatprep.mubr.f32.mxu0 0.0
        %5028 = vmatmul.mubr.f32.gmra.mrb[0].mxu0 %v3131
        %v5029 = vpop.f32.mrb[0].mxu0
        %v5030 = vadd.f32 0.0, %v5029
        %v5031 = vpop.f32.mrb[0].mxu0
        %5032 = vmatprep.mubr.f32.mxu0 0.0
        %5033 = vmatmul.mubr.f32.gmra.mrb[0].mxu0 %v3132
        %v5034 = vpop.f32.mrb[0].mxu0
        %v5035 = vadd.f32 0.0, %v5034
        %v5036 = vpop.f32.mrb[0].mxu0
        %5037 = vmatprep.mubr.f32.mxu0 0.0
        %5038 = vmatmul.mubr.f32.gmra.mrb[0].mxu0 %v3133
        %v5039 = vpop.f32.mrb[0].mxu0
        %v5040 = vadd.f32 0.0, %v5039
        %v5041 = vpop.f32.mrb[0].mxu0
        %5042 = vmatprep.mubr.f32.mxu0 0.0
        %5043 = vmatmul.mubr.f32.gmra.mrb[0].mxu0 %v3134
        %v5044 = vpop.f32.mrb[0].mxu0
        %v5045 = vadd.f32 0.0, %v5044
        %v5046 = vpop.f32.mrb[0].mxu0
        %5047 = vmatprep.mubr.f32.mxu0 0.0
        %5048 = vmatmul.mubr.f32.gmra.mrb[0].mxu0 %v3135
        %v5049 = vpop.f32.mrb[0].mxu0
        %v5050 = vadd.f32 0.0, %v5049
        %v5051 = vpop.f32.mrb[0].mxu0
        %5052 = vmatprep.mubr.f32.mxu0 0.0
        %5053 = vmatmul.mubr.f32.gmra.mrb[0].mxu0 %v3136
        %v5054 = vpop.f32.mrb[0].mxu0
        %v5055 = vadd.f32 0.0, %v5054
        %v5056 = vpop.f32.mrb[0].mxu0
        %5057 = vdwg.mxu0
        %v5058 = vadd.f32 %v4784, %v4900
        %v5059 = vadd.f32 %v4785, %v4905
        %v5060 = vadd.f32 %v4786, %v4910
        %v5061 = vadd.f32 %v4787, %v4915
        %v5062 = vadd.f32 %v4788, %v4920
        %v5063 = vadd.f32 %v4789, %v4925
        %v5064 = vadd.f32 %v4790, %v4930
        %v5065 = vadd.f32 %v4791, %v4935
        %v5066 = vadd.f32 %v4792, %v4940
        %v5067 = vadd.f32 %v4793, %v4945
        %v5068 = vadd.f32 %v4794, %v4950
        %v5069 = vadd.f32 %v4795, %v4955
        %v5070 = vadd.f32 %v4796, %v4960
        %v5071 = vadd.f32 %v4797, %v4965
        %v5072 = vadd.f32 %v4798, %v4970
        %v5073 = vadd.f32 %v4799, %v4975
        %v5074 = vadd.f32 %v4800, %v4980
        %v5075 = vadd.f32 %v4801, %v4985
        %v5076 = vadd.f32 %v4802, %v4990
        %v5077 = vadd.f32 %v4803, %v4995
        %v5078 = vadd.f32 %v4804, %v5000
        %v5079 = vadd.f32 %v4805, %v5005
        %v5080 = vadd.f32 %v4806, %v5010
        %v5081 = vadd.f32 %v4807, %v5015
        %v5082 = vadd.f32 %v4808, %v5020
        %v5083 = vadd.f32 %v4809, %v5025
        %v5084 = vadd.f32 %v4810, %v5030
        %v5085 = vadd.f32 %v4811, %v5035
        %v5086 = vadd.f32 %v4812, %v5040
        %v5087 = vadd.f32 %v4813, %v5045
        %v5088 = vadd.f32 %v4814, %v5050
        %v5089 = vadd.f32 %v4815, %v5055
        %s5090 = scalar_lea.vmem [#allocation3], 64
        %v5091 = vld [vmem:[%s5090 + $0x8] sm:$0xff]
        %v5092 = vld [vmem:[%s5090 + $0x10] sm:$0xff]
        %v5093 = vld [vmem:[%s5090 + $0x28] sm:$0xff]
        %v5094 = vld [vmem:[%s5090 + $0x30] sm:$0xff]
        %v5095 = vld [vmem:[%s5090 + $0x48] sm:$0xff]
        %v5096 = vld [vmem:[%s5090 + $0x50] sm:$0xff]
        %v5097 = vld [vmem:[%s5090 + $0x68] sm:$0xff]
        %v5098 = vld [vmem:[%s5090 + $0x70] sm:$0xff]
        %v5099 = vld [vmem:[%s5090 + $0x88] sm:$0xff]
        %v5100 = vld [vmem:[%s5090 + $0x90] sm:$0xff]
        %v5101 = vld [vmem:[%s5090 + $0xa8] sm:$0xff]
        %v5102 = vld [vmem:[%s5090 + $0xb0] sm:$0xff]
        %v5103 = vld [vmem:[%s5090 + $0xc8] sm:$0xff]
        %v5104 = vld [vmem:[%s5090 + $0xd0] sm:$0xff]
        %v5105 = vld [vmem:[%s5090 + $0xe8] sm:$0xff]
        %v5106 = vld [vmem:[%s5090 + $0xf0] sm:$0xff]
        %v5107 = vld [vmem:[%s5090 + $0x108] sm:$0xff]
        %v5108 = vld [vmem:[%s5090 + $0x110] sm:$0xff]
        %v5109 = vld [vmem:[%s5090 + $0x128] sm:$0xff]
        %v5110 = vld [vmem:[%s5090 + $0x130] sm:$0xff]
        %v5111 = vld [vmem:[%s5090 + $0x148] sm:$0xff]
        %v5112 = vld [vmem:[%s5090 + $0x150] sm:$0xff]
        %v5113 = vld [vmem:[%s5090 + $0x168] sm:$0xff]
        %v5114 = vld [vmem:[%s5090 + $0x170] sm:$0xff]
        %v5115 = vld [vmem:[%s5090 + $0x188] sm:$0xff]
        %v5116 = vld [vmem:[%s5090 + $0x190] sm:$0xff]
        %v5117 = vld [vmem:[%s5090 + $0x1a8] sm:$0xff]
        %v5118 = vld [vmem:[%s5090 + $0x1b0] sm:$0xff]
        %v5119 = vld [vmem:[%s5090 + $0x1c8] sm:$0xff]
        %v5120 = vld [vmem:[%s5090 + $0x1d0] sm:$0xff]
        %v5121 = vld [vmem:[%s5090 + $0x1e8] sm:$0xff]
        %v5122 = vld [vmem:[%s5090 + $0x1f0] sm:$0xff]
        %s5123 = scalar_lea.vmem [#allocation9], 896
        %v5124 = vld [vmem:[%s5123] sm:$0xff]
        %v5125 = vld [vmem:[%s5123 + $0x8] sm:$0xff]
        %v5126 = vld [vmem:[%s5123 + $0x10] sm:$0xff]
        %v5127 = vld [vmem:[%s5123 + $0x18] sm:$0xff]
        %v5128 = vld [vmem:[%s5123 + $0x20] sm:$0xff]
        %v5129 = vld [vmem:[%s5123 + $0x28] sm:$0xff]
        %v5130 = vld [vmem:[%s5123 + $0x30] sm:$0xff]
        %v5131 = vld [vmem:[%s5123 + $0x38] sm:$0xff]
        %v5132 = vld [vmem:[%s5123 + $0x40] sm:$0xff]
        %v5133 = vld [vmem:[%s5123 + $0x48] sm:$0xff]
        %v5134 = vld [vmem:[%s5123 + $0x50] sm:$0xff]
        %v5135 = vld [vmem:[%s5123 + $0x58] sm:$0xff]
        %v5136 = vld [vmem:[%s5123 + $0x60] sm:$0xff]
        %v5137 = vld [vmem:[%s5123 + $0x68] sm:$0xff]
        %v5138 = vld [vmem:[%s5123 + $0x70] sm:$0xff]
        %v5139 = vld [vmem:[%s5123 + $0x78] sm:$0xff]
        %5140 = vmatprep.subr.mxu0 0.0
        %5141 = vmatpush1.msra.mxu0 %v5124
        %5142 = vmatprep.subr.mxu0 0.0
        %5143 = vmatpush1.msra.mxu0 %v5125
        %5144 = vmatprep.subr.mxu0 0.0
        %5145 = vmatpush1.msra.mxu0 %v5126
        %5146 = vmatprep.subr.mxu0 0.0
        %5147 = vmatpush1.msra.mxu0 %v5127
        %5148 = vmatprep.subr.mxu0 0.0
        %5149 = vmatpush1.msra.mxu0 %v5128
        %5150 = vmatprep.subr.mxu0 0.0
        %5151 = vmatpush1.msra.mxu0 %v5129
        %5152 = vmatprep.subr.mxu0 0.0
        %5153 = vmatpush1.msra.mxu0 %v5130
        %5154 = vmatprep.subr.mxu0 0.0
        %5155 = vmatpush1.msra.mxu0 %v5131
        %5156 = vmatprep.subr.mxu0 0.0
        %5157 = vmatpush1.msra.mxu0 %v5132
        %5158 = vmatprep.subr.mxu0 0.0
        %5159 = vmatpush1.msra.mxu0 %v5133
        %5160 = vmatprep.subr.mxu0 0.0
        %5161 = vmatpush1.msra.mxu0 %v5134
        %5162 = vmatprep.subr.mxu0 0.0
        %5163 = vmatpush1.msra.mxu0 %v5135
        %5164 = vmatprep.subr.mxu0 0.0
        %5165 = vmatpush1.msra.mxu0 %v5136
        %5166 = vmatprep.subr.mxu0 0.0
        %5167 = vmatpush1.msra.mxu0 %v5137
        %5168 = vmatprep.subr.mxu0 0.0
        %5169 = vmatpush1.msra.mxu0 %v5138
        %5170 = vmatprep.subr.mxu0 0.0
        %5171 = vmatpush1.msra.mxu0 %v5139
        %5172 = vmatprep.subr.mxu0 0.0
        %5173 = vmatpush1.msra.mxu0 0.0
        %5174 = vmatprep.subr.mxu0 0.0
        %5175 = vmatpush1.msra.mxu0 0.0
        %5176 = vmatprep.subr.mxu0 0.0
        %5177 = vmatpush1.msra.mxu0 0.0
        %5178 = vmatprep.subr.mxu0 0.0
        %5179 = vmatpush1.msra.mxu0 0.0
        %5180 = vmatprep.subr.mxu0 0.0
        %5181 = vmatpush1.msra.mxu0 0.0
        %5182 = vmatprep.subr.mxu0 0.0
        %5183 = vmatpush1.msra.mxu0 0.0
        %5184 = vmatprep.subr.mxu0 0.0
        %5185 = vmatpush1.msra.mxu0 0.0
        %5186 = vmatprep.subr.mxu0 0.0
        %5187 = vmatpush1.msra.mxu0 0.0
        %5188 = vmatprep.subr.mxu0 0.0
        %5189 = vmatpush1.msra.mxu0 0.0
        %5190 = vmatprep.subr.mxu0 0.0
        %5191 = vmatpush1.msra.mxu0 0.0
        %5192 = vmatprep.subr.mxu0 0.0
        %5193 = vmatpush1.msra.mxu0 0.0
        %5194 = vmatprep.subr.mxu0 0.0
        %5195 = vmatpush1.msra.mxu0 0.0
        %5196 = vmatprep.subr.mxu0 0.0
        %5197 = vmatpush1.msra.mxu0 0.0
        %5198 = vmatprep.subr.mxu0 0.0
        %5199 = vmatpush1.msra.mxu0 0.0
        %5200 = vmatprep.subr.mxu0 0.0
        %5201 = vmatpush1.msra.mxu0 0.0
        %5202 = vmatprep.subr.mxu0 0.0
        %5203 = vmatpush1.msra.mxu0 0.0
        %5204 = vmatprep.mubr.f32.mxu0 0.0
        %5205 = vmatmul.mubr.f32.gmra.mrb[0].mxu0 %v5091
        %v5206 = vpop.f32.mrb[0].mxu0
        %v5207 = vadd.f32 0.0, %v5206
        %v5208 = vpop.f32.mrb[0].mxu0
        %5209 = vmatprep.mubr.f32.mxu0 0.0
        %5210 = vmatmul.mubr.f32.gmra.mrb[0].mxu0 %v5092
        %v5211 = vpop.f32.mrb[0].mxu0
        %v5212 = vadd.f32 0.0, %v5211
        %v5213 = vpop.f32.mrb[0].mxu0
        %5214 = vmatprep.mubr.f32.mxu0 0.0
        %5215 = vmatmul.mubr.f32.gmra.mrb[0].mxu0 %v5093
        %v5216 = vpop.f32.mrb[0].mxu0
        %v5217 = vadd.f32 0.0, %v5216
        %v5218 = vpop.f32.mrb[0].mxu0
        %5219 = vmatprep.mubr.f32.mxu0 0.0
        %5220 = vmatmul.mubr.f32.gmra.mrb[0].mxu0 %v5094
        %v5221 = vpop.f32.mrb[0].mxu0
        %v5222 = vadd.f32 0.0, %v5221
        %v5223 = vpop.f32.mrb[0].mxu0
        %5224 = vmatprep.mubr.f32.mxu0 0.0
        %5225 = vmatmul.mubr.f32.gmra.mrb[0].mxu0 %v5095
        %v5226 = vpop.f32.mrb[0].mxu0
        %v5227 = vadd.f32 0.0, %v5226
        %v5228 = vpop.f32.mrb[0].mxu0
        %5229 = vmatprep.mubr.f32.mxu0 0.0
        %5230 = vmatmul.mubr.f32.gmra.mrb[0].mxu0 %v5096
        %v5231 = vpop.f32.mrb[0].mxu0
        %v5232 = vadd.f32 0.0, %v5231
        %v5233 = vpop.f32.mrb[0].mxu0
        %5234 = vmatprep.mubr.f32.mxu0 0.0
        %5235 = vmatmul.mubr.f32.gmra.mrb[0].mxu0 %v5097
        %v5236 = vpop.f32.mrb[0].mxu0
        %v5237 = vadd.f32 0.0, %v5236
        %v5238 = vpop.f32.mrb[0].mxu0
        %5239 = vmatprep.mubr.f32.mxu0 0.0
        %5240 = vmatmul.mubr.f32.gmra.mrb[0].mxu0 %v5098
        %v5241 = vpop.f32.mrb[0].mxu0
        %v5242 = vadd.f32 0.0, %v5241
        %v5243 = vpop.f32.mrb[0].mxu0
        %5244 = vmatprep.mubr.f32.mxu0 0.0
        %5245 = vmatmul.mubr.f32.gmra.mrb[0].mxu0 %v5099
        %v5246 = vpop.f32.mrb[0].mxu0
        %v5247 = vadd.f32 0.0, %v5246
        %v5248 = vpop.f32.mrb[0].mxu0
        %5249 = vmatprep.mubr.f32.mxu0 0.0
        %5250 = vmatmul.mubr.f32.gmra.mrb[0].mxu0 %v5100
        %v5251 = vpop.f32.mrb[0].mxu0
        %v5252 = vadd.f32 0.0, %v5251
        %v5253 = vpop.f32.mrb[0].mxu0
        %5254 = vmatprep.mubr.f32.mxu0 0.0
        %5255 = vmatmul.mubr.f32.gmra.mrb[0].mxu0 %v5101
        %v5256 = vpop.f32.mrb[0].mxu0
        %v5257 = vadd.f32 0.0, %v5256
        %v5258 = vpop.f32.mrb[0].mxu0
        %5259 = vmatprep.mubr.f32.mxu0 0.0
        %5260 = vmatmul.mubr.f32.gmra.mrb[0].mxu0 %v5102
        %v5261 = vpop.f32.mrb[0].mxu0
        %v5262 = vadd.f32 0.0, %v5261
        %v5263 = vpop.f32.mrb[0].mxu0
        %5264 = vmatprep.mubr.f32.mxu0 0.0
        %5265 = vmatmul.mubr.f32.gmra.mrb[0].mxu0 %v5103
        %v5266 = vpop.f32.mrb[0].mxu0
        %v5267 = vadd.f32 0.0, %v5266
        %v5268 = vpop.f32.mrb[0].mxu0
        %5269 = vmatprep.mubr.f32.mxu0 0.0
        %5270 = vmatmul.mubr.f32.gmra.mrb[0].mxu0 %v5104
        %v5271 = vpop.f32.mrb[0].mxu0
        %v5272 = vadd.f32 0.0, %v5271
        %v5273 = vpop.f32.mrb[0].mxu0
        %5274 = vmatprep.mubr.f32.mxu0 0.0
        %5275 = vmatmul.mubr.f32.gmra.mrb[0].mxu0 %v5105
        %v5276 = vpop.f32.mrb[0].mxu0
        %v5277 = vadd.f32 0.0, %v5276
        %v5278 = vpop.f32.mrb[0].mxu0
        %5279 = vmatprep.mubr.f32.mxu0 0.0
        %5280 = vmatmul.mubr.f32.gmra.mrb[0].mxu0 %v5106
        %v5281 = vpop.f32.mrb[0].mxu0
        %v5282 = vadd.f32 0.0, %v5281
        %v5283 = vpop.f32.mrb[0].mxu0
        %5284 = vmatprep.mubr.f32.mxu0 0.0
        %5285 = vmatmul.mubr.f32.gmra.mrb[0].mxu0 %v5107
        %v5286 = vpop.f32.mrb[0].mxu0
        %v5287 = vadd.f32 0.0, %v5286
        %v5288 = vpop.f32.mrb[0].mxu0
        %5289 = vmatprep.mubr.f32.mxu0 0.0
        %5290 = vmatmul.mubr.f32.gmra.mrb[0].mxu0 %v5108
        %v5291 = vpop.f32.mrb[0].mxu0
        %v5292 = vadd.f32 0.0, %v5291
        %v5293 = vpop.f32.mrb[0].mxu0
        %5294 = vmatprep.mubr.f32.mxu0 0.0
        %5295 = vmatmul.mubr.f32.gmra.mrb[0].mxu0 %v5109
        %v5296 = vpop.f32.mrb[0].mxu0
        %v5297 = vadd.f32 0.0, %v5296
        %v5298 = vpop.f32.mrb[0].mxu0
        %5299 = vmatprep.mubr.f32.mxu0 0.0
        %5300 = vmatmul.mubr.f32.gmra.mrb[0].mxu0 %v5110
        %v5301 = vpop.f32.mrb[0].mxu0
        %v5302 = vadd.f32 0.0, %v5301
        %v5303 = vpop.f32.mrb[0].mxu0
        %5304 = vmatprep.mubr.f32.mxu0 0.0
        %5305 = vmatmul.mubr.f32.gmra.mrb[0].mxu0 %v5111
        %v5306 = vpop.f32.mrb[0].mxu0
        %v5307 = vadd.f32 0.0, %v5306
        %v5308 = vpop.f32.mrb[0].mxu0
        %5309 = vmatprep.mubr.f32.mxu0 0.0
        %5310 = vmatmul.mubr.f32.gmra.mrb[0].mxu0 %v5112
        %v5311 = vpop.f32.mrb[0].mxu0
        %v5312 = vadd.f32 0.0, %v5311
        %v5313 = vpop.f32.mrb[0].mxu0
        %5314 = vmatprep.mubr.f32.mxu0 0.0
        %5315 = vmatmul.mubr.f32.gmra.mrb[0].mxu0 %v5113
        %v5316 = vpop.f32.mrb[0].mxu0
        %v5317 = vadd.f32 0.0, %v5316
        %v5318 = vpop.f32.mrb[0].mxu0
        %5319 = vmatprep.mubr.f32.mxu0 0.0
        %5320 = vmatmul.mubr.f32.gmra.mrb[0].mxu0 %v5114
        %v5321 = vpop.f32.mrb[0].mxu0
        %v5322 = vadd.f32 0.0, %v5321
        %v5323 = vpop.f32.mrb[0].mxu0
        %5324 = vmatprep.mubr.f32.mxu0 0.0
        %5325 = vmatmul.mubr.f32.gmra.mrb[0].mxu0 %v5115
        %v5326 = vpop.f32.mrb[0].mxu0
        %v5327 = vadd.f32 0.0, %v5326
        %v5328 = vpop.f32.mrb[0].mxu0
        %5329 = vmatprep.mubr.f32.mxu0 0.0
        %5330 = vmatmul.mubr.f32.gmra.mrb[0].mxu0 %v5116
        %v5331 = vpop.f32.mrb[0].mxu0
        %v5332 = vadd.f32 0.0, %v5331
        %v5333 = vpop.f32.mrb[0].mxu0
        %5334 = vmatprep.mubr.f32.mxu0 0.0
        %5335 = vmatmul.mubr.f32.gmra.mrb[0].mxu0 %v5117
        %v5336 = vpop.f32.mrb[0].mxu0
        %v5337 = vadd.f32 0.0, %v5336
        %v5338 = vpop.f32.mrb[0].mxu0
        %5339 = vmatprep.mubr.f32.mxu0 0.0
        %5340 = vmatmul.mubr.f32.gmra.mrb[0].mxu0 %v5118
        %v5341 = vpop.f32.mrb[0].mxu0
        %v5342 = vadd.f32 0.0, %v5341
        %v5343 = vpop.f32.mrb[0].mxu0
        %5344 = vmatprep.mubr.f32.mxu0 0.0
        %5345 = vmatmul.mubr.f32.gmra.mrb[0].mxu0 %v5119
        %v5346 = vpop.f32.mrb[0].mxu0
        %v5347 = vadd.f32 0.0, %v5346
        %v5348 = vpop.f32.mrb[0].mxu0
        %5349 = vmatprep.mubr.f32.mxu0 0.0
        %5350 = vmatmul.mubr.f32.gmra.mrb[0].mxu0 %v5120
        %v5351 = vpop.f32.mrb[0].mxu0
        %v5352 = vadd.f32 0.0, %v5351
        %v5353 = vpop.f32.mrb[0].mxu0
        %5354 = vmatprep.mubr.f32.mxu0 0.0
        %5355 = vmatmul.mubr.f32.gmra.mrb[0].mxu0 %v5121
        %v5356 = vpop.f32.mrb[0].mxu0
        %v5357 = vadd.f32 0.0, %v5356
        %v5358 = vpop.f32.mrb[0].mxu0
        %5359 = vmatprep.mubr.f32.mxu0 0.0
        %5360 = vmatmul.mubr.f32.gmra.mrb[0].mxu0 %v5122
        %v5361 = vpop.f32.mrb[0].mxu0
        %v5362 = vadd.f32 0.0, %v5361
        %v5363 = vpop.f32.mrb[0].mxu0
        %5364 = vdwg.mxu0
        %v5365 = vadd.f32 %v5058, %v5207
        %v5366 = vadd.f32 %v5059, %v5212
        %v5367 = vadd.f32 %v5060, %v5217
        %v5368 = vadd.f32 %v5061, %v5222
        %v5369 = vadd.f32 %v5062, %v5227
        %v5370 = vadd.f32 %v5063, %v5232
        %v5371 = vadd.f32 %v5064, %v5237
        %v5372 = vadd.f32 %v5065, %v5242
        %v5373 = vadd.f32 %v5066, %v5247
        %v5374 = vadd.f32 %v5067, %v5252
        %v5375 = vadd.f32 %v5068, %v5257
        %v5376 = vadd.f32 %v5069, %v5262
        %v5377 = vadd.f32 %v5070, %v5267
        %v5378 = vadd.f32 %v5071, %v5272
        %v5379 = vadd.f32 %v5072, %v5277
        %v5380 = vadd.f32 %v5073, %v5282
        %v5381 = vadd.f32 %v5074, %v5287
        %v5382 = vadd.f32 %v5075, %v5292
        %v5383 = vadd.f32 %v5076, %v5297
        %v5384 = vadd.f32 %v5077, %v5302
        %v5385 = vadd.f32 %v5078, %v5307
        %v5386 = vadd.f32 %v5079, %v5312
        %v5387 = vadd.f32 %v5080, %v5317
        %v5388 = vadd.f32 %v5081, %v5322
        %v5389 = vadd.f32 %v5082, %v5327
        %v5390 = vadd.f32 %v5083, %v5332
        %v5391 = vadd.f32 %v5084, %v5337
        %v5392 = vadd.f32 %v5085, %v5342
        %v5393 = vadd.f32 %v5086, %v5347
        %v5394 = vadd.f32 %v5087, %v5352
        %v5395 = vadd.f32 %v5088, %v5357
        %v5396 = vadd.f32 %v5089, %v5362
        %s5397 = scalar_lea.vmem [#allocation9], 1024
        %v5398 = vld [vmem:[%s5397] sm:$0xff]
        %v5399 = vld [vmem:[%s5397 + $0x8] sm:$0xff]
        %v5400 = vld [vmem:[%s5397 + $0x10] sm:$0xff]
        %v5401 = vld [vmem:[%s5397 + $0x18] sm:$0xff]
        %v5402 = vld [vmem:[%s5397 + $0x20] sm:$0xff]
        %v5403 = vld [vmem:[%s5397 + $0x28] sm:$0xff]
        %v5404 = vld [vmem:[%s5397 + $0x30] sm:$0xff]
        %v5405 = vld [vmem:[%s5397 + $0x38] sm:$0xff]
        %v5406 = vld [vmem:[%s5397 + $0x40] sm:$0xff]
        %v5407 = vld [vmem:[%s5397 + $0x48] sm:$0xff]
        %v5408 = vld [vmem:[%s5397 + $0x50] sm:$0xff]
        %v5409 = vld [vmem:[%s5397 + $0x58] sm:$0xff]
        %v5410 = vld [vmem:[%s5397 + $0x60] sm:$0xff]
        %v5411 = vld [vmem:[%s5397 + $0x68] sm:$0xff]
        %v5412 = vld [vmem:[%s5397 + $0x70] sm:$0xff]
        %v5413 = vld [vmem:[%s5397 + $0x78] sm:$0xff]
        %5414 = vmatprep.subr.mxu0 0.0
        %5415 = vmatpush1.msra.mxu0 %v5398
        %5416 = vmatprep.subr.mxu0 0.0
        %5417 = vmatpush1.msra.mxu0 %v5399
        %5418 = vmatprep.subr.mxu0 0.0
        %5419 = vmatpush1.msra.mxu0 %v5400
        %5420 = vmatprep.subr.mxu0 0.0
        %5421 = vmatpush1.msra.mxu0 %v5401
        %5422 = vmatprep.subr.mxu0 0.0
        %5423 = vmatpush1.msra.mxu0 %v5402
        %5424 = vmatprep.subr.mxu0 0.0
        %5425 = vmatpush1.msra.mxu0 %v5403
        %5426 = vmatprep.subr.mxu0 0.0
        %5427 = vmatpush1.msra.mxu0 %v5404
        %5428 = vmatprep.subr.mxu0 0.0
        %5429 = vmatpush1.msra.mxu0 %v5405
        %5430 = vmatprep.subr.mxu0 0.0
        %5431 = vmatpush1.msra.mxu0 %v5406
        %5432 = vmatprep.subr.mxu0 0.0
        %5433 = vmatpush1.msra.mxu0 %v5407
        %5434 = vmatprep.subr.mxu0 0.0
        %5435 = vmatpush1.msra.mxu0 %v5408
        %5436 = vmatprep.subr.mxu0 0.0
        %5437 = vmatpush1.msra.mxu0 %v5409
        %5438 = vmatprep.subr.mxu0 0.0
        %5439 = vmatpush1.msra.mxu0 %v5410
        %5440 = vmatprep.subr.mxu0 0.0
        %5441 = vmatpush1.msra.mxu0 %v5411
        %5442 = vmatprep.subr.mxu0 0.0
        %5443 = vmatpush1.msra.mxu0 %v5412
        %5444 = vmatprep.subr.mxu0 0.0
        %5445 = vmatpush1.msra.mxu0 %v5413
        %5446 = vmatprep.subr.mxu0 0.0
        %5447 = vmatpush1.msra.mxu0 0.0
        %5448 = vmatprep.subr.mxu0 0.0
        %5449 = vmatpush1.msra.mxu0 0.0
        %5450 = vmatprep.subr.mxu0 0.0
        %5451 = vmatpush1.msra.mxu0 0.0
        %5452 = vmatprep.subr.mxu0 0.0
        %5453 = vmatpush1.msra.mxu0 0.0
        %5454 = vmatprep.subr.mxu0 0.0
        %5455 = vmatpush1.msra.mxu0 0.0
        %5456 = vmatprep.subr.mxu0 0.0
        %5457 = vmatpush1.msra.mxu0 0.0
        %5458 = vmatprep.subr.mxu0 0.0
        %5459 = vmatpush1.msra.mxu0 0.0
        %5460 = vmatprep.subr.mxu0 0.0
        %5461 = vmatpush1.msra.mxu0 0.0
        %5462 = vmatprep.subr.mxu0 0.0
        %5463 = vmatpush1.msra.mxu0 0.0
        %5464 = vmatprep.subr.mxu0 0.0
        %5465 = vmatpush1.msra.mxu0 0.0
        %5466 = vmatprep.subr.mxu0 0.0
        %5467 = vmatpush1.msra.mxu0 0.0
        %5468 = vmatprep.subr.mxu0 0.0
        %5469 = vmatpush1.msra.mxu0 0.0
        %5470 = vmatprep.subr.mxu0 0.0
        %5471 = vmatpush1.msra.mxu0 0.0
        %5472 = vmatprep.subr.mxu0 0.0
        %5473 = vmatpush1.msra.mxu0 0.0
        %5474 = vmatprep.subr.mxu0 0.0
        %5475 = vmatpush1.msra.mxu0 0.0
        %5476 = vmatprep.subr.mxu0 0.0
        %5477 = vmatpush1.msra.mxu0 0.0
        %5478 = vmatprep.mubr.f32.mxu0 0.0
        %5479 = vmatmul.mubr.f32.gmra.mrb[0].mxu0 %v3141
        %v5480 = vpop.f32.mrb[0].mxu0
        %v5481 = vadd.f32 0.0, %v5480
        %v5482 = vpop.f32.mrb[0].mxu0
        %5483 = vmatprep.mubr.f32.mxu0 0.0
        %5484 = vmatmul.mubr.f32.gmra.mrb[0].mxu0 %v3142
        %v5485 = vpop.f32.mrb[0].mxu0
        %v5486 = vadd.f32 0.0, %v5485
        %v5487 = vpop.f32.mrb[0].mxu0
        %5488 = vmatprep.mubr.f32.mxu0 0.0
        %5489 = vmatmul.mubr.f32.gmra.mrb[0].mxu0 %v3143
        %v5490 = vpop.f32.mrb[0].mxu0
        %v5491 = vadd.f32 0.0, %v5490
        %v5492 = vpop.f32.mrb[0].mxu0
        %5493 = vmatprep.mubr.f32.mxu0 0.0
        %5494 = vmatmul.mubr.f32.gmra.mrb[0].mxu0 %v3144
        %v5495 = vpop.f32.mrb[0].mxu0
        %v5496 = vadd.f32 0.0, %v5495
        %v5497 = vpop.f32.mrb[0].mxu0
        %5498 = vmatprep.mubr.f32.mxu0 0.0
        %5499 = vmatmul.mubr.f32.gmra.mrb[0].mxu0 %v3145
        %v5500 = vpop.f32.mrb[0].mxu0
        %v5501 = vadd.f32 0.0, %v5500
        %v5502 = vpop.f32.mrb[0].mxu0
        %5503 = vmatprep.mubr.f32.mxu0 0.0
        %5504 = vmatmul.mubr.f32.gmra.mrb[0].mxu0 %v3146
        %v5505 = vpop.f32.mrb[0].mxu0
        %v5506 = vadd.f32 0.0, %v5505
        %v5507 = vpop.f32.mrb[0].mxu0
        %5508 = vmatprep.mubr.f32.mxu0 0.0
        %5509 = vmatmul.mubr.f32.gmra.mrb[0].mxu0 %v3147
        %v5510 = vpop.f32.mrb[0].mxu0
        %v5511 = vadd.f32 0.0, %v5510
        %v5512 = vpop.f32.mrb[0].mxu0
        %5513 = vmatprep.mubr.f32.mxu0 0.0
        %5514 = vmatmul.mubr.f32.gmra.mrb[0].mxu0 %v3148
        %v5515 = vpop.f32.mrb[0].mxu0
        %v5516 = vadd.f32 0.0, %v5515
        %v5517 = vpop.f32.mrb[0].mxu0
        %5518 = vmatprep.mubr.f32.mxu0 0.0
        %5519 = vmatmul.mubr.f32.gmra.mrb[0].mxu0 %v3149
        %v5520 = vpop.f32.mrb[0].mxu0
        %v5521 = vadd.f32 0.0, %v5520
        %v5522 = vpop.f32.mrb[0].mxu0
        %5523 = vmatprep.mubr.f32.mxu0 0.0
        %5524 = vmatmul.mubr.f32.gmra.mrb[0].mxu0 %v3150
        %v5525 = vpop.f32.mrb[0].mxu0
        %v5526 = vadd.f32 0.0, %v5525
        %v5527 = vpop.f32.mrb[0].mxu0
        %5528 = vmatprep.mubr.f32.mxu0 0.0
        %5529 = vmatmul.mubr.f32.gmra.mrb[0].mxu0 %v3151
        %v5530 = vpop.f32.mrb[0].mxu0
        %v5531 = vadd.f32 0.0, %v5530
        %v5532 = vpop.f32.mrb[0].mxu0
        %5533 = vmatprep.mubr.f32.mxu0 0.0
        %5534 = vmatmul.mubr.f32.gmra.mrb[0].mxu0 %v3152
        %v5535 = vpop.f32.mrb[0].mxu0
        %v5536 = vadd.f32 0.0, %v5535
        %v5537 = vpop.f32.mrb[0].mxu0
        %5538 = vmatprep.mubr.f32.mxu0 0.0
        %5539 = vmatmul.mubr.f32.gmra.mrb[0].mxu0 %v3153
        %v5540 = vpop.f32.mrb[0].mxu0
        %v5541 = vadd.f32 0.0, %v5540
        %v5542 = vpop.f32.mrb[0].mxu0
        %5543 = vmatprep.mubr.f32.mxu0 0.0
        %5544 = vmatmul.mubr.f32.gmra.mrb[0].mxu0 %v3154
        %v5545 = vpop.f32.mrb[0].mxu0
        %v5546 = vadd.f32 0.0, %v5545
        %v5547 = vpop.f32.mrb[0].mxu0
        %5548 = vmatprep.mubr.f32.mxu0 0.0
        %5549 = vmatmul.mubr.f32.gmra.mrb[0].mxu0 %v3155
        %v5550 = vpop.f32.mrb[0].mxu0
        %v5551 = vadd.f32 0.0, %v5550
        %v5552 = vpop.f32.mrb[0].mxu0
        %5553 = vmatprep.mubr.f32.mxu0 0.0
        %5554 = vmatmul.mubr.f32.gmra.mrb[0].mxu0 %v3156
        %v5555 = vpop.f32.mrb[0].mxu0
        %v5556 = vadd.f32 0.0, %v5555
        %v5557 = vpop.f32.mrb[0].mxu0
        %5558 = vmatprep.mubr.f32.mxu0 0.0
        %5559 = vmatmul.mubr.f32.gmra.mrb[0].mxu0 %v3157
        %v5560 = vpop.f32.mrb[0].mxu0
        %v5561 = vadd.f32 0.0, %v5560
        %v5562 = vpop.f32.mrb[0].mxu0
        %5563 = vmatprep.mubr.f32.mxu0 0.0
        %5564 = vmatmul.mubr.f32.gmra.mrb[0].mxu0 %v3158
        %v5565 = vpop.f32.mrb[0].mxu0
        %v5566 = vadd.f32 0.0, %v5565
        %v5567 = vpop.f32.mrb[0].mxu0
        %5568 = vmatprep.mubr.f32.mxu0 0.0
        %5569 = vmatmul.mubr.f32.gmra.mrb[0].mxu0 %v3159
        %v5570 = vpop.f32.mrb[0].mxu0
        %v5571 = vadd.f32 0.0, %v5570
        %v5572 = vpop.f32.mrb[0].mxu0
        %5573 = vmatprep.mubr.f32.mxu0 0.0
        %5574 = vmatmul.mubr.f32.gmra.mrb[0].mxu0 %v3160
        %v5575 = vpop.f32.mrb[0].mxu0
        %v5576 = vadd.f32 0.0, %v5575
        %v5577 = vpop.f32.mrb[0].mxu0
        %5578 = vmatprep.mubr.f32.mxu0 0.0
        %5579 = vmatmul.mubr.f32.gmra.mrb[0].mxu0 %v3161
        %v5580 = vpop.f32.mrb[0].mxu0
        %v5581 = vadd.f32 0.0, %v5580
        %v5582 = vpop.f32.mrb[0].mxu0
        %5583 = vmatprep.mubr.f32.mxu0 0.0
        %5584 = vmatmul.mubr.f32.gmra.mrb[0].mxu0 %v3162
        %v5585 = vpop.f32.mrb[0].mxu0
        %v5586 = vadd.f32 0.0, %v5585
        %v5587 = vpop.f32.mrb[0].mxu0
        %5588 = vmatprep.mubr.f32.mxu0 0.0
        %5589 = vmatmul.mubr.f32.gmra.mrb[0].mxu0 %v3163
        %v5590 = vpop.f32.mrb[0].mxu0
        %v5591 = vadd.f32 0.0, %v5590
        %v5592 = vpop.f32.mrb[0].mxu0
        %5593 = vmatprep.mubr.f32.mxu0 0.0
        %5594 = vmatmul.mubr.f32.gmra.mrb[0].mxu0 %v3164
        %v5595 = vpop.f32.mrb[0].mxu0
        %v5596 = vadd.f32 0.0, %v5595
        %v5597 = vpop.f32.mrb[0].mxu0
        %5598 = vmatprep.mubr.f32.mxu0 0.0
        %5599 = vmatmul.mubr.f32.gmra.mrb[0].mxu0 %v3165
        %v5600 = vpop.f32.mrb[0].mxu0
        %v5601 = vadd.f32 0.0, %v5600
        %v5602 = vpop.f32.mrb[0].mxu0
        %5603 = vmatprep.mubr.f32.mxu0 0.0
        %5604 = vmatmul.mubr.f32.gmra.mrb[0].mxu0 %v3166
        %v5605 = vpop.f32.mrb[0].mxu0
        %v5606 = vadd.f32 0.0, %v5605
        %v5607 = vpop.f32.mrb[0].mxu0
        %5608 = vmatprep.mubr.f32.mxu0 0.0
        %5609 = vmatmul.mubr.f32.gmra.mrb[0].mxu0 %v3167
        %v5610 = vpop.f32.mrb[0].mxu0
        %v5611 = vadd.f32 0.0, %v5610
        %v5612 = vpop.f32.mrb[0].mxu0
        %5613 = vmatprep.mubr.f32.mxu0 0.0
        %5614 = vmatmul.mubr.f32.gmra.mrb[0].mxu0 %v3168
        %v5615 = vpop.f32.mrb[0].mxu0
        %v5616 = vadd.f32 0.0, %v5615
        %v5617 = vpop.f32.mrb[0].mxu0
        %5618 = vmatprep.mubr.f32.mxu0 0.0
        %5619 = vmatmul.mubr.f32.gmra.mrb[0].mxu0 %v3169
        %v5620 = vpop.f32.mrb[0].mxu0
        %v5621 = vadd.f32 0.0, %v5620
        %v5622 = vpop.f32.mrb[0].mxu0
        %5623 = vmatprep.mubr.f32.mxu0 0.0
        %5624 = vmatmul.mubr.f32.gmra.mrb[0].mxu0 %v3170
        %v5625 = vpop.f32.mrb[0].mxu0
        %v5626 = vadd.f32 0.0, %v5625
        %v5627 = vpop.f32.mrb[0].mxu0
        %5628 = vmatprep.mubr.f32.mxu0 0.0
        %5629 = vmatmul.mubr.f32.gmra.mrb[0].mxu0 %v3171
        %v5630 = vpop.f32.mrb[0].mxu0
        %v5631 = vadd.f32 0.0, %v5630
        %v5632 = vpop.f32.mrb[0].mxu0
        %5633 = vmatprep.mubr.f32.mxu0 0.0
        %5634 = vmatmul.mubr.f32.gmra.mrb[0].mxu0 %v3172
        %v5635 = vpop.f32.mrb[0].mxu0
        %v5636 = vadd.f32 0.0, %v5635
        %v5637 = vpop.f32.mrb[0].mxu0
        %5638 = vdwg.mxu0
        %v5639 = vadd.f32 %v5365, %v5481
        %v5640 = vadd.f32 %v5366, %v5486
        %v5641 = vadd.f32 %v5367, %v5491
        %v5642 = vadd.f32 %v5368, %v5496
        %v5643 = vadd.f32 %v5369, %v5501
        %v5644 = vadd.f32 %v5370, %v5506
        %v5645 = vadd.f32 %v5371, %v5511
        %v5646 = vadd.f32 %v5372, %v5516
        %v5647 = vadd.f32 %v5373, %v5521
        %v5648 = vadd.f32 %v5374, %v5526
        %v5649 = vadd.f32 %v5375, %v5531
        %v5650 = vadd.f32 %v5376, %v5536
        %v5651 = vadd.f32 %v5377, %v5541
        %v5652 = vadd.f32 %v5378, %v5546
        %v5653 = vadd.f32 %v5379, %v5551
        %v5654 = vadd.f32 %v5380, %v5556
        %v5655 = vadd.f32 %v5381, %v5561
        %v5656 = vadd.f32 %v5382, %v5566
        %v5657 = vadd.f32 %v5383, %v5571
        %v5658 = vadd.f32 %v5384, %v5576
        %v5659 = vadd.f32 %v5385, %v5581
        %v5660 = vadd.f32 %v5386, %v5586
        %v5661 = vadd.f32 %v5387, %v5591
        %v5662 = vadd.f32 %v5388, %v5596
        %v5663 = vadd.f32 %v5389, %v5601
        %v5664 = vadd.f32 %v5390, %v5606
        %v5665 = vadd.f32 %v5391, %v5611
        %v5666 = vadd.f32 %v5392, %v5616
        %v5667 = vadd.f32 %v5393, %v5621
        %v5668 = vadd.f32 %v5394, %v5626
        %v5669 = vadd.f32 %v5395, %v5631
        %v5670 = vadd.f32 %v5396, %v5636
        %v5671 = vld [vmem:[%s4] sm:$0x1]
        %v5673 = vlaneseq
        %v5674 = vshrl.u32 %v5673, 7
        %v5675 = vsub.s32 0, %v5674
        %v5676 = vrot.slane %v5671, %v5675
        %v5678 = vadd.f32 %v5639, %v5676
        %v5679 = vadd.f32 %v5640, %v5676
        %v5680 = vadd.f32 %v5641, %v5676
        %v5681 = vadd.f32 %v5642, %v5676
        %v5682 = vadd.f32 %v5643, %v5676
        %v5683 = vadd.f32 %v5644, %v5676
        %v5684 = vadd.f32 %v5645, %v5676
        %v5685 = vadd.f32 %v5646, %v5676
        %v5686 = vadd.f32 %v5647, %v5676
        %v5687 = vadd.f32 %v5648, %v5676
        %v5688 = vadd.f32 %v5649, %v5676
        %v5689 = vadd.f32 %v5650, %v5676
        %v5690 = vadd.f32 %v5651, %v5676
        %v5691 = vadd.f32 %v5652, %v5676
        %v5692 = vadd.f32 %v5653, %v5676
        %v5693 = vadd.f32 %v5654, %v5676
        %v5694 = vadd.f32 %v5655, %v5676
        %v5695 = vadd.f32 %v5656, %v5676
        %v5696 = vadd.f32 %v5657, %v5676
        %v5697 = vadd.f32 %v5658, %v5676
        %v5698 = vadd.f32 %v5659, %v5676
        %v5699 = vadd.f32 %v5660, %v5676
        %v5700 = vadd.f32 %v5661, %v5676
        %v5701 = vadd.f32 %v5662, %v5676
        %v5702 = vadd.f32 %v5663, %v5676
        %v5703 = vadd.f32 %v5664, %v5676
        %v5704 = vadd.f32 %v5665, %v5676
        %v5705 = vadd.f32 %v5666, %v5676
        %v5706 = vadd.f32 %v5667, %v5676
        %v5707 = vadd.f32 %v5668, %v5676
        %v5708 = vadd.f32 %v5669, %v5676
        %v5709 = vadd.f32 %v5670, %v5676
        %v5710 = vmul.f32 %v5678, 0.2
        %v5711 = vmul.f32 %v5679, 0.2
        %v5712 = vmul.f32 %v5680, 0.2
        %v5713 = vmul.f32 %v5681, 0.2
        %v5714 = vmul.f32 %v5682, 0.2
        %v5715 = vmul.f32 %v5683, 0.2
        %v5716 = vmul.f32 %v5684, 0.2
        %v5717 = vmul.f32 %v5685, 0.2
        %v5718 = vmul.f32 %v5686, 0.2
        %v5719 = vmul.f32 %v5687, 0.2
        %v5720 = vmul.f32 %v5688, 0.2
        %v5721 = vmul.f32 %v5689, 0.2
        %v5722 = vmul.f32 %v5690, 0.2
        %v5723 = vmul.f32 %v5691, 0.2
        %v5724 = vmul.f32 %v5692, 0.2
        %v5725 = vmul.f32 %v5693, 0.2
        %v5726 = vmul.f32 %v5694, 0.2
        %v5727 = vmul.f32 %v5695, 0.2
        %v5728 = vmul.f32 %v5696, 0.2
        %v5729 = vmul.f32 %v5697, 0.2
        %v5730 = vmul.f32 %v5698, 0.2
        %v5731 = vmul.f32 %v5699, 0.2
        %v5732 = vmul.f32 %v5700, 0.2
        %v5733 = vmul.f32 %v5701, 0.2
        %v5734 = vmul.f32 %v5702, 0.2
        %v5735 = vmul.f32 %v5703, 0.2
        %v5736 = vmul.f32 %v5704, 0.2
        %v5737 = vmul.f32 %v5705, 0.2
        %v5738 = vmul.f32 %v5706, 0.2
        %v5739 = vmul.f32 %v5707, 0.2
        %v5740 = vmul.f32 %v5708, 0.2
        %v5741 = vmul.f32 %v5709, 0.2
        %v5742 = vld [vmem:[%s237] sm:$0xff]
        %v5743 = vld [vmem:[%s237 + $0x8] sm:$0xff]
        %v5744 = vld [vmem:[%s237 + $0x10] sm:$0xff]
        %v5745 = vld [vmem:[%s237 + $0x18] sm:$0xff]
        %v5746 = vld [vmem:[%s237 + $0x20] sm:$0xff]
        %v5747 = vld [vmem:[%s237 + $0x28] sm:$0xff]
        %v5748 = vld [vmem:[%s237 + $0x30] sm:$0xff]
        %v5749 = vld [vmem:[%s237 + $0x38] sm:$0xff]
        %v5750 = vld [vmem:[%s237 + $0x40] sm:$0xff]
        %v5751 = vld [vmem:[%s237 + $0x48] sm:$0xff]
        %v5752 = vld [vmem:[%s237 + $0x50] sm:$0xff]
        %v5753 = vld [vmem:[%s237 + $0x58] sm:$0xff]
        %v5754 = vld [vmem:[%s237 + $0x60] sm:$0xff]
        %v5755 = vld [vmem:[%s237 + $0x68] sm:$0xff]
        %v5756 = vld [vmem:[%s237 + $0x70] sm:$0xff]
        %v5757 = vld [vmem:[%s237 + $0x78] sm:$0xff]
        %v5758 = vld [vmem:[%s237 + $0x80] sm:$0xff]
        %v5759 = vld [vmem:[%s237 + $0x88] sm:$0xff]
        %v5760 = vld [vmem:[%s237 + $0x90] sm:$0xff]
        %v5761 = vld [vmem:[%s237 + $0x98] sm:$0xff]
        %v5762 = vld [vmem:[%s237 + $0xa0] sm:$0xff]
        %v5763 = vld [vmem:[%s237 + $0xa8] sm:$0xff]
        %v5764 = vld [vmem:[%s237 + $0xb0] sm:$0xff]
        %v5765 = vld [vmem:[%s237 + $0xb8] sm:$0xff]
        %v5766 = vld [vmem:[%s237 + $0xc0] sm:$0xff]
        %v5767 = vld [vmem:[%s237 + $0xc8] sm:$0xff]
        %v5768 = vld [vmem:[%s237 + $0xd0] sm:$0xff]
        %v5769 = vld [vmem:[%s237 + $0xd8] sm:$0xff]
        %v5770 = vld [vmem:[%s237 + $0xe0] sm:$0xff]
        %v5771 = vld [vmem:[%s237 + $0xe8] sm:$0xff]
        %v5772 = vld [vmem:[%s237 + $0xf0] sm:$0xff]
        %v5773 = vld [vmem:[%s237 + $0xf8] sm:$0xff]
        %v5774 = vadd.f32 %v5710, %v5742
        %v5775 = vadd.f32 %v5711, %v5743
        %v5776 = vadd.f32 %v5712, %v5744
        %v5777 = vadd.f32 %v5713, %v5745
        %v5778 = vadd.f32 %v5714, %v5746
        %v5779 = vadd.f32 %v5715, %v5747
        %v5780 = vadd.f32 %v5716, %v5748
        %v5781 = vadd.f32 %v5717, %v5749
        %v5782 = vadd.f32 %v5718, %v5750
        %v5783 = vadd.f32 %v5719, %v5751
        %v5784 = vadd.f32 %v5720, %v5752
        %v5785 = vadd.f32 %v5721, %v5753
        %v5786 = vadd.f32 %v5722, %v5754
        %v5787 = vadd.f32 %v5723, %v5755
        %v5788 = vadd.f32 %v5724, %v5756
        %v5789 = vadd.f32 %v5725, %v5757
        %v5790 = vadd.f32 %v5726, %v5758
        %v5791 = vadd.f32 %v5727, %v5759
        %v5792 = vadd.f32 %v5728, %v5760
        %v5793 = vadd.f32 %v5729, %v5761
        %v5794 = vadd.f32 %v5730, %v5762
        %v5795 = vadd.f32 %v5731, %v5763
        %v5796 = vadd.f32 %v5732, %v5764
        %v5797 = vadd.f32 %v5733, %v5765
        %v5798 = vadd.f32 %v5734, %v5766
        %v5799 = vadd.f32 %v5735, %v5767
        %v5800 = vadd.f32 %v5736, %v5768
        %v5801 = vadd.f32 %v5737, %v5769
        %v5802 = vadd.f32 %v5738, %v5770
        %v5803 = vadd.f32 %v5739, %v5771
        %v5804 = vadd.f32 %v5740, %v5772
        %v5805 = vadd.f32 %v5741, %v5773
        %5806 = vst [vmem:[%s271] sm:$0xff] %v5774
        %5807 = vst [vmem:[%s271 + $0x8] sm:$0xff] %v5775
        %5808 = vst [vmem:[%s271 + $0x10] sm:$0xff] %v5776
        %5809 = vst [vmem:[%s271 + $0x18] sm:$0xff] %v5777
        %5810 = vst [vmem:[%s271 + $0x20] sm:$0xff] %v5778
        %5811 = vst [vmem:[%s271 + $0x28] sm:$0xff] %v5779
        %5812 = vst [vmem:[%s271 + $0x30] sm:$0xff] %v5780
        %5813 = vst [vmem:[%s271 + $0x38] sm:$0xff] %v5781
        %5814 = vst [vmem:[%s271 + $0x40] sm:$0xff] %v5782
        %5815 = vst [vmem:[%s271 + $0x48] sm:$0xff] %v5783
        %5816 = vst [vmem:[%s271 + $0x50] sm:$0xff] %v5784
        %5817 = vst [vmem:[%s271 + $0x58] sm:$0xff] %v5785
        %5818 = vst [vmem:[%s271 + $0x60] sm:$0xff] %v5786
        %5819 = vst [vmem:[%s271 + $0x68] sm:$0xff] %v5787
        %5820 = vst [vmem:[%s271 + $0x70] sm:$0xff] %v5788
        %5821 = vst [vmem:[%s271 + $0x78] sm:$0xff] %v5789
        %5822 = vst [vmem:[%s271 + $0x80] sm:$0xff] %v5790
        %5823 = vst [vmem:[%s271 + $0x88] sm:$0xff] %v5791
        %5824 = vst [vmem:[%s271 + $0x90] sm:$0xff] %v5792
        %5825 = vst [vmem:[%s271 + $0x98] sm:$0xff] %v5793
        %5826 = vst [vmem:[%s271 + $0xa0] sm:$0xff] %v5794
        %5827 = vst [vmem:[%s271 + $0xa8] sm:$0xff] %v5795
        %5828 = vst [vmem:[%s271 + $0xb0] sm:$0xff] %v5796
        %5829 = vst [vmem:[%s271 + $0xb8] sm:$0xff] %v5797
        %5830 = vst [vmem:[%s271 + $0xc0] sm:$0xff] %v5798
        %5831 = vst [vmem:[%s271 + $0xc8] sm:$0xff] %v5799
        %5832 = vst [vmem:[%s271 + $0xd0] sm:$0xff] %v5800
        %5833 = vst [vmem:[%s271 + $0xd8] sm:$0xff] %v5801
        %5834 = vst [vmem:[%s271 + $0xe0] sm:$0xff] %v5802
        %5835 = vst [vmem:[%s271 + $0xe8] sm:$0xff] %v5803
        %5836 = vst [vmem:[%s271 + $0xf0] sm:$0xff] %v5804
        %5837 = vst [vmem:[%s271 + $0xf8] sm:$0xff] %v5805
        %s5838 = sand.u32 %s141, 1
        %s5839 = scalar_lea.sflag [#allocation6], %s5838
        %s5840 = sand.u32 %s141, 1
        %s5841 = smul.addr %s5840, 256
        %s5842 = scalar_lea.vmem [#allocation10], %s5841
        // Predicated region
        $region53: #{tpu_custom_call.1} parent=39 // pred_check
          %p5843 = pneg %p151
        $region54: #{tpu_custom_call.1} parent=39 // pred_check_branch
          %5845 = sbr.rel (%p5843) target = $region56
        $region55: #{tpu_custom_call.1} parent=39 // pred_region
          %s5847 = ssub.s32 4096, 4096
          %5848 = vsyncadd %s5839, %s5847
          %s5849 = smul.addr %s23, 32
          %s5850 = smul.addr %s5849, 128
          %s5851 = scalar_lea.hbm %s5, %s5850
          %s5852 = sshll.u32 %s5842, 4
          %s5853 = int_to_ptr.vmem [resolvable:$true] %s5852
          %5858 = dma.vmem_to_hbm [thread:$0]  %s5853, 4096, %s5851, %s5839, 128, 128, 8
        $region56: #{tpu_custom_call.1} parent=39 // pred_fallthru
          _
      $region40: #{tpu_custom_call.1} parent=5 // pred_fallthru
        _
      %p5859 = scmp.le.s32.totalorder 2, %s18
      // Predicated region
      $region57: #{tpu_custom_call.1} parent=5 // pred_check
        %p5860 = pneg %p5859
      $region58: #{tpu_custom_call.1} parent=5 // pred_check_branch
        %5862 = sbr.rel (%p5860) target = $region60
      $region59: #{tpu_custom_call.1} parent=5 // pred_region
        %s5863 = ssub.s32 %s18, 2
        // Predicated region
        $region61: #{tpu_custom_call.1} parent=59 // pred_check
          %p5864 = pneg %p157
        $region62: #{tpu_custom_call.1} parent=59 // pred_check_branch
          %5866 = sbr.rel (%p5864) target = $region64
        $region63: #{tpu_custom_call.1} parent=59 // pred_region
          %s5867 = sand.u32 %s142, 1
          %s5868 = scalar_lea.sflag [#allocation6], %s5867
          %s5869 = sand.u32 %s142, 1
          %s5870 = smul.addr %s5869, 256
          %s5871 = scalar_lea.vmem [#allocation10], %s5870
          %5872 = dma.done %s5868, 4096
        $region64: #{tpu_custom_call.1} parent=59 // pred_fallthru
          _
      $region60: #{tpu_custom_call.1} parent=5 // pred_fallthru
        _
    $region6: #{tpu_custom_call.1} parent=1 // loop_footer
      %s22 = sadd.s32 1, %s18
    $region7: #{tpu_custom_call.1} parent=1 // loop_footer_branch
      %17 = sbr.rel target = $region3
    $region8: #{tpu_custom_call.1} parent=1 // loop_exit
      _
    %5873 = vsyncpa [#allocation5], 1
    %s5874 = scalar_lea.sflag [#allocation5], 1
    %5875 = vsyncpa %s5874, 1
    %5876 = vsyncpa [#allocation8], 1
    %5877 = vsyncpa [#allocation6], 1
    %s5878 = scalar_lea.sflag [#allocation6], 1
    %5879 = vsyncpa %s5878, 1

</llo_original>
